<compile_context>
chip_gen: v7x
topology: tpu7x:2x2x1
jax: 0.10.0
libtpu: 0.0.40
codegen_flags: <defaults>
</compile_context>

<pallas_src>
import jax
import jax.numpy as jnp
from jax.experimental import pallas as pl
from jax.experimental.pallas import tpu as pltpu

IN_FEATURES = 2048            # scaled-down stand-in for the real 176000 (see TODO)
H1, H2, H3, OUT = 1024, 1024, 512, 1

# 256 fills the 256-wide v6e/v7x MXU; use 128 when tuning for v5e.
BATCH_TILE = 256


def _make_mlp_kernel(lane_dense_out):
    """Fused fc1..fc4 kernel; `lane_dense_out` picks the output store layout."""

    def kernel(x_ref, w1_ref, b1_ref, w2_ref, b2_ref, w3_ref, b3_ref,
               w4_ref, b4_ref, o_ref):
        # x arrives in its native dtype; cast to bf16 here (hidden under the
        # MXU) instead of a separate wrapper-side cast + HBM round trip.
        x = x_ref[...].astype(jnp.bfloat16)

        # fc1 + bias + ReLU (dropout p=0.0 -> identity). bf16 MXU inputs, f32 acc.
        h = jnp.dot(x, w1_ref[...], preferred_element_type=jnp.float32)
        h = jnp.maximum(h + b1_ref[...], 0.0)
        # fc2 + ReLU
        h = jnp.dot(h.astype(jnp.bfloat16), w2_ref[...],
                    preferred_element_type=jnp.float32)
        h = jnp.maximum(h + b2_ref[...], 0.0)
        # fc3 + ReLU
        h = jnp.dot(h.astype(jnp.bfloat16), w3_ref[...],
                    preferred_element_type=jnp.float32)
        h = jnp.maximum(h + b3_ref[...], 0.0)

        # fc4: N=1 matmul replaced by a VPU multiply + cross-lane (XLU)
        # reduction; b4 is a scalar read from SMEM.  Element-wise math in f32.
        w4_row = w4_ref[...].astype(jnp.float32)                        # (1, H3)
        y = jnp.sum(h * w4_row, axis=-1, keepdims=True) + b4_ref[0, 0]  # (tb, 1)

        if lane_dense_out:
            # Store as a (1, tb) row so the vst is lane-dense (no masked
            # last-dim-1 partial stores).
            o_ref[...] = jnp.transpose(y).astype(o_ref.dtype)
        else:
            o_ref[...] = y.astype(o_ref.dtype)

    return kernel


def prepare_params(params):
    """One-time conversion of f32 (in, out)-layout Linear params into the
    kernel format: bf16 weights (MXU-native, halves weight DMA), f32 biases,
    fc4 weight as a (1, H3) bf16 row and fc4 bias as a (1, 1) f32 SMEM scalar.

    Call once at init and reuse — casting per forward call would re-read every
    weight from HBM on every step (the dominant cost at small batch).
    """
    w1, b1, w2, b2, w3, b3, w4, b4 = params
    bf = jnp.bfloat16
    return (w1.astype(bf), b1.astype(jnp.float32),
            w2.astype(bf), b2.astype(jnp.float32),
            w3.astype(bf), b3.astype(jnp.float32),
            w4.reshape(1, H3).astype(bf),
            b4.reshape(1, 1).astype(jnp.float32))


def attnmodel1_forward(protein_batch, ligand_batch, prepared_params):
    """Matches attnmodel1.forward: flatten -> fc1..fc4 (ReLU between) -> squeeze.

    `prepared_params` must come from prepare_params() (bf16 weights, cast
    once).  `ligand_batch` is accepted for signature parity but — exactly like
    the torch forward — is never used.
    """
    del ligand_batch
    B = protein_batch.shape[0]
    x = protein_batch.reshape(B, -1)  # torch.flatten(protein_batch, start_dim=1)
    assert x.shape[1] == IN_FEATURES, f"expected {IN_FEATURES} flattened features"

    w1, b1, w2, b2, w3, b3, w4_row, b4 = prepared_params

    # Batch tiling: one full-batch block for small B, 256-row tiles otherwise.
    # Pallas masks partial edge blocks, so there is no wrapper-side pad copy.
    tb = BATCH_TILE if B >= BATCH_TILE else B
    n_tiles = pl.cdiv(B, tb)

    # Weights / biases: constant index_map -> fetched once and VMEM-resident
    # across batch tiles; Buffered(1) drops the pointless second buffer.
    def _const_spec(shape):
        return pl.BlockSpec(shape, lambda i: (0, 0), pipeline_mode=pl.Buffered(1))

    # Lane-dense (1, tb) row output when the batch tile is lane-aligned (the
    # large-batch regime where store layout matters); tiny batches keep the
    # trivial (tb, 1) column store.
    lane_dense = (tb % 128 == 0)
    if lane_dense:
        out_shape = jax.ShapeDtypeStruct((1, B), jnp.float32)
        out_spec = pl.BlockSpec((1, tb), lambda i: (0, i))
    else:
        out_shape = jax.ShapeDtypeStruct((B, 1), jnp.float32)
        out_spec = pl.BlockSpec((tb, 1), lambda i: (i, 0))

    out = pl.pallas_call(
        _make_mlp_kernel(lane_dense),
        out_shape=out_shape,
        grid=(n_tiles,),
        in_specs=[
            pl.BlockSpec((tb, IN_FEATURES), lambda i: (i, 0)),   # x tile (native f32)
            _const_spec((IN_FEATURES, H1)),                      # w1 (bf16)
            _const_spec((1, H1)),                                # b1 (f32)
            _const_spec((H1, H2)),                               # w2 (bf16)
            _const_spec((1, H2)),                                # b2 (f32)
            _const_spec((H2, H3)),                               # w3 (bf16)
            _const_spec((1, H3)),                                # b3 (f32)
            _const_spec((1, H3)),                                # w4 row (bf16)
            pl.BlockSpec(memory_space=pltpu.MemorySpace.SMEM),   # b4 scalar (1,1)
        ],
        out_specs=out_spec,
        compiler_params=pltpu.CompilerParams(
            dimension_semantics=("parallel",),   # megacore split on v7x when >1 tile
            vmem_limit_bytes=32 * 1024 * 1024),
    )(x, w1, b1, w2, b2, w3, b3, w4_row, b4)

    return jnp.squeeze(out)  # (B,) for B > 1, scalar for B == 1 (matches torch)


def init_params(key, in_features=IN_FEATURES, dtype=jnp.float32):
    """Deterministic torch-style Linear init: U(-1/sqrt(fan_in), 1/sqrt(fan_in)),
    weights stored (in_features, out_features) so `x @ W + b` == torch Linear."""
    dims = [(in_features, H1), (H1, H2), (H2, H3), (H3, OUT)]
    params = []
    for i, (fan_in, fan_out) in enumerate(dims):
        kw, kb = jax.random.split(jax.random.fold_in(key, i))
        bound = 1.0 / (fan_in ** 0.5)
        w = jax.random.uniform(kw, (fan_in, fan_out), dtype, -bound, bound)
        b = jax.random.uniform(kb, (1, fan_out), dtype, -bound, bound)
        params += [w, b]
    return tuple(params)


def _reference_forward(protein_batch, params):
    """Pure-JAX, full-f32 reference (mirrors the original torch f32 model); used
    to bound the kernel's bf16-weight/activation quantization error."""
    w1, b1, w2, b2, w3, b3, w4, b4 = params
    x = protein_batch.reshape(protein_batch.shape[0], -1)
    h = jnp.maximum(x @ w1 + b1, 0.0)
    h = jnp.maximum(h @ w2 + b2, 0.0)
    h = jnp.maximum(h @ w3 + b3, 0.0)
    y = h @ w4 + b4
    return jnp.squeeze(y)


if __name__ == "__main__":
    B = 2
    root = jax.random.PRNGKey(0)
    kprot, klig, kparam = jax.random.split(root, 3)

    # (B, C, L) protein features; flattens to (B, 2048)
    protein_batch = jax.random.normal(kprot, (B, 16, 128), jnp.float32)
    # ligand batch is unused by the torch forward; included for signature parity
    ligand_batch = jax.random.normal(klig, (B, 8, 32), jnp.float32)

    params_f32 = init_params(kparam)
    kernel_params = prepare_params(params_f32)   # one-time bf16 cast, reused every call

    fwd = jax.jit(attnmodel1_forward)
    y = jax.block_until_ready(fwd(protein_batch, ligand_batch, kernel_params))

    # Validate against the true f32 reference.  bf16 weights/activations at the
    # MXU with f32 accumulation give ~1e-3 absolute error through this 4-layer
    # stack; 2e-2 leaves a wide margin while still catching real bugs.
    y_ref = _reference_forward(protein_batch, params_f32)
    assert y.shape == (B,), y.shape
    assert jnp.allclose(y, y_ref, atol=2e-2, rtol=2e-2), (y, y_ref)

    print("KERNEL_OK")
</pallas_src>

<mosaic_0001>
module attributes {stable_mosaic.version = 11 : i64} {
  func.func @kernel(%arg0: i32, %arg1: memref<2x2048xf32, #tpu.memory_space<vmem>>, %arg2: memref<2048x1024xbf16, #tpu.memory_space<vmem>>, %arg3: memref<1x1024xf32, #tpu.memory_space<vmem>>, %arg4: memref<1024x1024xbf16, #tpu.memory_space<vmem>>, %arg5: memref<1x1024xf32, #tpu.memory_space<vmem>>, %arg6: memref<1024x512xbf16, #tpu.memory_space<vmem>>, %arg7: memref<1x512xf32, #tpu.memory_space<vmem>>, %arg8: memref<1x512xbf16, #tpu.memory_space<vmem>>, %arg9: memref<1x1xf32, #tpu.memory_space<smem>>, %arg10: memref<2x1xf32, #tpu.memory_space<vmem>>) attributes {dimension_semantics = [#tpu.dimension_semantics<parallel>], iteration_bounds = array<i64: 1>, scalar_prefetch = 0 : i64, scratch_operands = 0 : i64, tpu.core_type = #tpu.core_type<tc>, window_params = [{transform_indices = @transform_0, window_bounds = array<i64: 2, 2048>}, {pipeline_mode = #tpu.pipeline_mode<synchronous>, transform_indices = @transform_1, window_bounds = array<i64: 2048, 1024>}, {pipeline_mode = #tpu.pipeline_mode<synchronous>, transform_indices = @transform_2, window_bounds = array<i64: 1, 1024>}, {pipeline_mode = #tpu.pipeline_mode<synchronous>, transform_indices = @transform_3, window_bounds = array<i64: 1024, 1024>}, {pipeline_mode = #tpu.pipeline_mode<synchronous>, transform_indices = @transform_4, window_bounds = array<i64: 1, 1024>}, {pipeline_mode = #tpu.pipeline_mode<synchronous>, transform_indices = @transform_5, window_bounds = array<i64: 1024, 512>}, {pipeline_mode = #tpu.pipeline_mode<synchronous>, transform_indices = @transform_6, window_bounds = array<i64: 1, 512>}, {pipeline_mode = #tpu.pipeline_mode<synchronous>, transform_indices = @transform_7, window_bounds = array<i64: 1, 512>}, {transform_indices = @transform_8, window_bounds = array<i64: 1, 1>}, {transform_indices = @transform_9, window_bounds = array<i64: 2, 1>}]} {
    %c0 = arith.constant 0 : index
    %c0_0 = arith.constant 0 : index
    %0 = vector.load %arg1[%c0, %c0_0] : memref<2x2048xf32, #tpu.memory_space<vmem>>, vector<2x2048xf32>
    %1 = arith.truncf %0 : vector<2x2048xf32> to vector<2x2048xbf16>
    %c0_1 = arith.constant 0 : index
    %c0_2 = arith.constant 0 : index
    %2 = vector.load %arg2[%c0_1, %c0_2] : memref<2048x1024xbf16, #tpu.memory_space<vmem>>, vector<2048x1024xbf16>
    %cst = arith.constant dense<0.000000e+00> : vector<2x1024xf32>
    %3 = tpu.matmul %1, %2, %cst {dimension_numbers = #tpu.dot_dimension_numbers<[1], [0], [0], [1], [0, 0, 1, 1], [], []>} : vector<2x2048xbf16>, vector<2048x1024xbf16>, vector<2x1024xf32> -> vector<2x1024xf32>
    %c0_3 = arith.constant 0 : index
    %c0_4 = arith.constant 0 : index
    %4 = vector.load %arg3[%c0_3, %c0_4] : memref<1x1024xf32, #tpu.memory_space<vmem>>, vector<1x1024xf32>
    %5 = vector.broadcast %4 : vector<1x1024xf32> to vector<2x1024xf32>
    %6 = arith.addf %3, %5 : vector<2x1024xf32>
    %cst_5 = arith.constant 0.000000e+00 : f32
    %7 = vector.broadcast %cst_5 : f32 to vector<2x1024xf32>
    %8 = arith.maximumf %6, %7 : vector<2x1024xf32>
    %9 = arith.truncf %8 : vector<2x1024xf32> to vector<2x1024xbf16>
    %c0_6 = arith.constant 0 : index
    %c0_7 = arith.constant 0 : index
    %10 = vector.load %arg4[%c0_6, %c0_7] : memref<1024x1024xbf16, #tpu.memory_space<vmem>>, vector<1024x1024xbf16>
    %cst_8 = arith.constant dense<0.000000e+00> : vector<2x1024xf32>
    %11 = tpu.matmul %9, %10, %cst_8 {dimension_numbers = #tpu.dot_dimension_numbers<[1], [0], [0], [1], [0, 0, 1, 1], [], []>} : vector<2x1024xbf16>, vector<1024x1024xbf16>, vector<2x1024xf32> -> vector<2x1024xf32>
    %c0_9 = arith.constant 0 : index
    %c0_10 = arith.constant 0 : index
    %12 = vector.load %arg5[%c0_9, %c0_10] : memref<1x1024xf32, #tpu.memory_space<vmem>>, vector<1x1024xf32>
    %13 = vector.broadcast %12 : vector<1x1024xf32> to vector<2x1024xf32>
    %14 = arith.addf %11, %13 : vector<2x1024xf32>
    %cst_11 = arith.constant 0.000000e+00 : f32
    %15 = vector.broadcast %cst_11 : f32 to vector<2x1024xf32>
    %16 = arith.maximumf %14, %15 : vector<2x1024xf32>
    %17 = arith.truncf %16 : vector<2x1024xf32> to vector<2x1024xbf16>
    %c0_12 = arith.constant 0 : index
    %c0_13 = arith.constant 0 : index
    %18 = vector.load %arg6[%c0_12, %c0_13] : memref<1024x512xbf16, #tpu.memory_space<vmem>>, vector<1024x512xbf16>
    %cst_14 = arith.constant dense<0.000000e+00> : vector<2x512xf32>
    %19 = tpu.matmul %17, %18, %cst_14 {dimension_numbers = #tpu.dot_dimension_numbers<[1], [0], [0], [1], [0, 0, 1, 1], [], []>} : vector<2x1024xbf16>, vector<1024x512xbf16>, vector<2x512xf32> -> vector<2x512xf32>
    %c0_15 = arith.constant 0 : index
    %c0_16 = arith.constant 0 : index
    %20 = vector.load %arg7[%c0_15, %c0_16] : memref<1x512xf32, #tpu.memory_space<vmem>>, vector<1x512xf32>
    %21 = vector.broadcast %20 : vector<1x512xf32> to vector<2x512xf32>
    %22 = arith.addf %19, %21 : vector<2x512xf32>
    %cst_17 = arith.constant 0.000000e+00 : f32
    %23 = vector.broadcast %cst_17 : f32 to vector<2x512xf32>
    %24 = arith.maximumf %22, %23 : vector<2x512xf32>
    %c0_18 = arith.constant 0 : index
    %c0_19 = arith.constant 0 : index
    %25 = vector.load %arg8[%c0_18, %c0_19] : memref<1x512xbf16, #tpu.memory_space<vmem>>, vector<1x512xbf16>
    %26 = arith.extf %25 : vector<1x512xbf16> to vector<1x512xf32>
    %27 = vector.broadcast %26 : vector<1x512xf32> to vector<2x512xf32>
    %28 = arith.mulf %24, %27 : vector<2x512xf32>
    %cst_20 = arith.constant dense<0.000000e+00> : vector<2xf32>
    %29 = vector.multi_reduction <add>, %28, %cst_20 [1] : vector<2x512xf32> to vector<2xf32>
    %30 = vector.shape_cast %29 : vector<2xf32> to vector<2x1xf32>
    %c0_21 = arith.constant 0 : index
    %c0_22 = arith.constant 0 : index
    %31 = memref.load %arg9[%c0_21, %c0_22] : memref<1x1xf32, #tpu.memory_space<smem>>
    %32 = vector.broadcast %31 : f32 to vector<2x1xf32>
    %33 = arith.addf %30, %32 : vector<2x1xf32>
    %c0_23 = arith.constant 0 : index
    %c0_24 = arith.constant 0 : index
    %34 = vector.load %arg10[%c0_23, %c0_24] : memref<2x1xf32, #tpu.memory_space<vmem>>, vector<2x1xf32>
    tpu.vector_store %arg10[%c0_23, %c0_24], %33 {strides = array<i32>} : memref<2x1xf32, #tpu.memory_space<vmem>>, vector<2x1xf32>,
    return
  }
  func.func @transform_0(%arg0: i32) -> (i32, i32) {
    %c0_i32 = arith.constant 0 : i32
    %c0_i32_0 = arith.constant 0 : i32
    return %arg0, %c0_i32 : i32, i32
  }
  func.func @transform_1(%arg0: i32) -> (i32, i32) {
    %c0_i32 = arith.constant 0 : i32
    %c0_i32_0 = arith.constant 0 : i32
    %c0_i32_1 = arith.constant 0 : i32
    return %c0_i32, %c0_i32_0 : i32, i32
  }
  func.func @transform_2(%arg0: i32) -> (i32, i32) {
    %c0_i32 = arith.constant 0 : i32
    %c0_i32_0 = arith.constant 0 : i32
    %c0_i32_1 = arith.constant 0 : i32
    return %c0_i32, %c0_i32_0 : i32, i32
  }
  func.func @transform_3(%arg0: i32) -> (i32, i32) {
    %c0_i32 = arith.constant 0 : i32
    %c0_i32_0 = arith.constant 0 : i32
    %c0_i32_1 = arith.constant 0 : i32
    return %c0_i32, %c0_i32_0 : i32, i32
  }
  func.func @transform_4(%arg0: i32) -> (i32, i32) {
    %c0_i32 = arith.constant 0 : i32
    %c0_i32_0 = arith.constant 0 : i32
    %c0_i32_1 = arith.constant 0 : i32
    return %c0_i32, %c0_i32_0 : i32, i32
  }
  func.func @transform_5(%arg0: i32) -> (i32, i32) {
    %c0_i32 = arith.constant 0 : i32
    %c0_i32_0 = arith.constant 0 : i32
    %c0_i32_1 = arith.constant 0 : i32
    return %c0_i32, %c0_i32_0 : i32, i32
  }
  func.func @transform_6(%arg0: i32) -> (i32, i32) {
    %c0_i32 = arith.constant 0 : i32
    %c0_i32_0 = arith.constant 0 : i32
    %c0_i32_1 = arith.constant 0 : i32
    return %c0_i32, %c0_i32_0 : i32, i32
  }
  func.func @transform_7(%arg0: i32) -> (i32, i32) {
    %c0_i32 = arith.constant 0 : i32
    %c0_i32_0 = arith.constant 0 : i32
    %c0_i32_1 = arith.constant 0 : i32
    return %c0_i32, %c0_i32_0 : i32, i32
  }
  func.func @transform_8(%arg0: i32) -> (i32, i32) {
    %c0_i32 = arith.constant 0 : i32
    %c0_i32_0 = arith.constant 0 : i32
    %c0_i32_1 = arith.constant 0 : i32
    return %c0_i32, %c0_i32_0 : i32, i32
  }
  func.func @transform_9(%arg0: i32) -> (i32, i32) {
    %c0_i32 = arith.constant 0 : i32
    %c0_i32_0 = arith.constant 0 : i32
    return %arg0, %c0_i32 : i32, i32
  }
}

</mosaic_0001>

<llo_original>
// kernel: attnmodel1_forward.1
$region0: #{attnmodel1_forward.1}
  #allocation0 [shape = 'u32[]', space=smem, size = 0x4, offset = 0x4, fixed_abs, tag = 'smem constant byte address 0x4 - core index']
  #allocation1 [shape = 'u32[144,128]{1,0:T(1,128)}', space=vmem, size = 0x12000, scoped, tag = 'internal scratch']
  #allocation2 [shape = 'f32[1,1]{1,0:T(1,128)S(6)}', space=smem, size = 0x200, scoped, tag = 'scoped memory for attnmodel1_forward.1']
  %s0 = inlined_call_operand.vmem [shape: f32[2,2048], index: 0, kind: input, shape index: {}]
  %s1 = inlined_call_operand.hbm [shape: bf16[2048,1024], index: 1, kind: input, shape index: {}]
  %s2 = inlined_call_operand.hbm [shape: f32[1,1024], index: 2, kind: input, shape index: {}]
  %s3 = inlined_call_operand.hbm [shape: bf16[1024,1024], index: 3, kind: input, shape index: {}]
  %s4 = inlined_call_operand.hbm [shape: f32[1,1024], index: 4, kind: input, shape index: {}]
  %s5 = inlined_call_operand.hbm [shape: bf16[1024,512], index: 5, kind: input, shape index: {}]
  %s6 = inlined_call_operand.hbm [shape: f32[1,512], index: 6, kind: input, shape index: {}]
  %s7 = inlined_call_operand.hbm [shape: bf16[1,512], index: 7, kind: input, shape index: {}]
  %s8 = inlined_call_operand.<no memory space> [shape: f32[1,1], index: 8, kind: input, shape index: {}]
  %s9 = inlined_call_operand.vmem [shape: f32[2,1], index: 9, kind: output, shape index: {}]
  %s10 = sld [smem:[#allocation0]]
  $region74: #{attnmodel1_forward.1} parent=0
    _
  %s12 = ssub.s32 1, %s10
  %s13 = scalar_select 0, %s12, %s10
  %14 = sst [smem:[#allocation2]] %s8
  $region1: #{attnmodel1_forward.1} parent=0
    #allocation3 [shape = 'u8[4194304]{0}', space=vmem, size = 0x400000, scoped, tag = 'input window, operand 1, single buffered']
    #allocation4 [shape = 's32[1]{0}', space=sflag, size = 0x4, scoped, tag = 'scoped memory for attnmodel1_forward.1']
    #allocation5 [shape = 'u8[4096]{0}', space=vmem, size = 0x1000, scoped, tag = 'input window, operand 2, single buffered']
    #allocation6 [shape = 's32[1]{0}', space=sflag, size = 0x4, scoped, tag = 'scoped memory for attnmodel1_forward.1']
    #allocation7 [shape = 'u8[2097152]{0}', space=vmem, size = 0x200000, scoped, tag = 'input window, operand 3, single buffered']
    #allocation8 [shape = 'u8[4096]{0}', space=vmem, size = 0x1000, scoped, tag = 'input window, operand 4, single buffered']
    #allocation9 [shape = 's32[1]{0}', space=sflag, size = 0x4, scoped, tag = 'scoped memory for attnmodel1_forward.1']
    #allocation10 [shape = 'u8[1048576]{0}', space=vmem, size = 0x100000, scoped, tag = 'input window, operand 5, single buffered']
    #allocation11 [shape = 'u8[2048]{0}', space=vmem, size = 0x800, scoped, tag = 'input window, operand 6, single buffered']
    #allocation12 [shape = 's32[1]{0}', space=sflag, size = 0x4, scoped, tag = 'scoped memory for attnmodel1_forward.1']
    #allocation13 [shape = 'u8[2048]{0}', space=vmem, size = 0x800, scoped, tag = 'input window, operand 7, single buffered']
    %15 = vsyncpa [#allocation4], 0
    %16 = vsyncpa [#allocation6], 0
    %17 = vsyncpa [#allocation9], 0
    %18 = vsyncpa [#allocation12], 0
    // Predicated region
    $region2: #{attnmodel1_forward.1} parent=1 // pred_check
      _
    $region3: #{attnmodel1_forward.1} parent=1 // pred_check_branch
      %20 = sbr.rel (0) target = $region5
    $region4: #{attnmodel1_forward.1} parent=1 // pred_region
      _
    $region5: #{attnmodel1_forward.1} parent=1 // pred_fallthru
      _
    // Predicated region
    $region6: #{attnmodel1_forward.1} parent=1 // pred_check
      _
    $region7: #{attnmodel1_forward.1} parent=1 // pred_check_branch
      %22 = sbr.rel (0) target = $region9
    $region8: #{attnmodel1_forward.1} parent=1 // pred_region
      %s24 = ssub.s32 131072, 131072
      %25 = vsyncadd [#allocation4], %s24
      %s26 = sshll.u32 [#allocation3], 4
      %s27 = int_to_ptr.vmem [resolvable:$true] %s26
      %32 = dma.hbm_to_vmem [thread:$0]  %s1, 131072, %s27, [#allocation4], 512, 512, 32
    $region9: #{attnmodel1_forward.1} parent=1 // pred_fallthru
      _
    // Predicated region
    $region10: #{attnmodel1_forward.1} parent=1 // pred_check
      _
    $region11: #{attnmodel1_forward.1} parent=1 // pred_check_branch
      %34 = sbr.rel (0) target = $region13
    $region12: #{attnmodel1_forward.1} parent=1 // pred_region
      %s36 = ssub.s32 128, 128
      %37 = vsyncadd [#allocation6], %s36
      %s39 = sshll.u32 [#allocation5], 4
      %s40 = int_to_ptr.vmem [resolvable:$true] %s39
      %42 = dma.hbm_to_vmem [thread:$0]  %s2, 128, %s40, [#allocation6]
    $region13: #{attnmodel1_forward.1} parent=1 // pred_fallthru
      _
    // Predicated region
    $region14: #{attnmodel1_forward.1} parent=1 // pred_check
      _
    $region15: #{attnmodel1_forward.1} parent=1 // pred_check_branch
      %44 = sbr.rel (0) target = $region17
    $region16: #{attnmodel1_forward.1} parent=1 // pred_region
      %s46 = ssub.s32 65536, 65536
      %47 = vsyncadd [#allocation6], %s46
      %s48 = sshll.u32 [#allocation7], 4
      %s49 = int_to_ptr.vmem [resolvable:$true] %s48
      %54 = dma.hbm_to_vmem [thread:$0]  %s3, 65536, %s49, [#allocation6], 512, 512, 32
    $region17: #{attnmodel1_forward.1} parent=1 // pred_fallthru
      _
    // Predicated region
    $region18: #{attnmodel1_forward.1} parent=1 // pred_check
      _
    $region19: #{attnmodel1_forward.1} parent=1 // pred_check_branch
      %56 = sbr.rel (0) target = $region21
    $region20: #{attnmodel1_forward.1} parent=1 // pred_region
      %s58 = ssub.s32 128, 128
      %59 = vsyncadd [#allocation9], %s58
      %s61 = sshll.u32 [#allocation8], 4
      %s62 = int_to_ptr.vmem [resolvable:$true] %s61
      %64 = dma.hbm_to_vmem [thread:$0]  %s4, 128, %s62, [#allocation9]
    $region21: #{attnmodel1_forward.1} parent=1 // pred_fallthru
      _
    // Predicated region
    $region22: #{attnmodel1_forward.1} parent=1 // pred_check
      _
    $region23: #{attnmodel1_forward.1} parent=1 // pred_check_branch
      %66 = sbr.rel (0) target = $region25
    $region24: #{attnmodel1_forward.1} parent=1 // pred_region
      %s68 = ssub.s32 32768, 32768
      %69 = vsyncadd [#allocation9], %s68
      %s70 = sshll.u32 [#allocation10], 4
      %s71 = int_to_ptr.vmem [resolvable:$true] %s70
      %76 = dma.hbm_to_vmem [thread:$0]  %s5, 32768, %s71, [#allocation9], 256, 256, 16
    $region25: #{attnmodel1_forward.1} parent=1 // pred_fallthru
      _
    // Predicated region
    $region26: #{attnmodel1_forward.1} parent=1 // pred_check
      _
    $region27: #{attnmodel1_forward.1} parent=1 // pred_check_branch
      %78 = sbr.rel (0) target = $region29
    $region28: #{attnmodel1_forward.1} parent=1 // pred_region
      %s80 = ssub.s32 64, 64
      %81 = vsyncadd [#allocation12], %s80
      %s83 = sshll.u32 [#allocation11], 4
      %s84 = int_to_ptr.vmem [resolvable:$true] %s83
      %86 = dma.hbm_to_vmem [thread:$0]  %s6, 64, %s84, [#allocation12]
    $region29: #{attnmodel1_forward.1} parent=1 // pred_fallthru
      _
    // Predicated region
    $region30: #{attnmodel1_forward.1} parent=1 // pred_check
      _
    $region31: #{attnmodel1_forward.1} parent=1 // pred_check_branch
      %88 = sbr.rel (0) target = $region33
    $region32: #{attnmodel1_forward.1} parent=1 // pred_region
      %s90 = ssub.s32 64, 64
      %91 = vsyncadd [#allocation12], %s90
      %s93 = sshll.u32 [#allocation13], 4
      %s94 = int_to_ptr.vmem [resolvable:$true] %s93
      %96 = dma.hbm_to_vmem [thread:$0]  %s7, 64, %s94, [#allocation12]
    $region33: #{attnmodel1_forward.1} parent=1 // pred_fallthru
      _
    // Predicated region
    $region34: #{attnmodel1_forward.1} parent=1 // pred_check
      _
    $region35: #{attnmodel1_forward.1} parent=1 // pred_check_branch
      %98 = sbr.rel (0) target = $region37
    $region36: #{attnmodel1_forward.1} parent=1 // pred_region
      _
    $region37: #{attnmodel1_forward.1} parent=1 // pred_fallthru
      _
    // Predicated region
    $region38: #{attnmodel1_forward.1} parent=1 // pred_check
      _
    $region39: #{attnmodel1_forward.1} parent=1 // pred_check_branch
      %100 = sbr.rel (0) target = $region41
    $region40: #{attnmodel1_forward.1} parent=1 // pred_region
      %101 = dma.done [#allocation4], 131072
    $region41: #{attnmodel1_forward.1} parent=1 // pred_fallthru
      _
    // Predicated region
    $region42: #{attnmodel1_forward.1} parent=1 // pred_check
      _
    $region43: #{attnmodel1_forward.1} parent=1 // pred_check_branch
      %103 = sbr.rel (0) target = $region45
    $region44: #{attnmodel1_forward.1} parent=1 // pred_region
      %104 = dma.done [#allocation6], 128
    $region45: #{attnmodel1_forward.1} parent=1 // pred_fallthru
      _
    // Predicated region
    $region46: #{attnmodel1_forward.1} parent=1 // pred_check
      _
    $region47: #{attnmodel1_forward.1} parent=1 // pred_check_branch
      %106 = sbr.rel (0) target = $region49
    $region48: #{attnmodel1_forward.1} parent=1 // pred_region
      %107 = dma.done [#allocation6], 65536
    $region49: #{attnmodel1_forward.1} parent=1 // pred_fallthru
      _
    // Predicated region
    $region50: #{attnmodel1_forward.1} parent=1 // pred_check
      _
    $region51: #{attnmodel1_forward.1} parent=1 // pred_check_branch
      %109 = sbr.rel (0) target = $region53
    $region52: #{attnmodel1_forward.1} parent=1 // pred_region
      %110 = dma.done [#allocation9], 128
    $region53: #{attnmodel1_forward.1} parent=1 // pred_fallthru
      _
    // Predicated region
    $region54: #{attnmodel1_forward.1} parent=1 // pred_check
      _
    $region55: #{attnmodel1_forward.1} parent=1 // pred_check_branch
      %112 = sbr.rel (0) target = $region57
    $region56: #{attnmodel1_forward.1} parent=1 // pred_region
      %113 = dma.done [#allocation9], 32768
    $region57: #{attnmodel1_forward.1} parent=1 // pred_fallthru
      _
    // Predicated region
    $region58: #{attnmodel1_forward.1} parent=1 // pred_check
      _
    $region59: #{attnmodel1_forward.1} parent=1 // pred_check_branch
      %115 = sbr.rel (0) target = $region61
    $region60: #{attnmodel1_forward.1} parent=1 // pred_region
      %116 = dma.done [#allocation12], 64
    $region61: #{attnmodel1_forward.1} parent=1 // pred_fallthru
      _
    // Predicated region
    $region62: #{attnmodel1_forward.1} parent=1 // pred_check
      _
    $region63: #{attnmodel1_forward.1} parent=1 // pred_check_branch
      %118 = sbr.rel (0) target = $region65
    $region64: #{attnmodel1_forward.1} parent=1 // pred_region
      %119 = dma.done [#allocation12], 64
    $region65: #{attnmodel1_forward.1} parent=1 // pred_fallthru
      _
    %v120 = vld [vmem:[%s0] sm:$0xff]
    %v121 = vld [vmem:[%s0 + $0x8] sm:$0xff]
    %v122 = vld [vmem:[%s0 + $0x10] sm:$0xff]
    %v123 = vld [vmem:[%s0 + $0x18] sm:$0xff]
    %v128 = vcombine.high %v120, %v120
    %v130 = vunpack.c.l.s4 1983009808
    %v131 = vunpack.c.0.s8 %v130
    %v132 = vlaneseq
    %v133 = vshrl.u32 %v132, 7
    %v134 = vsub.s32 %v131, %v133
    %v135 = vrot.slane %v120, %v134
    %v137 = vunpack.c.l.s4 1983009808
    %v138 = vunpack.c.0.s8 %v137
    %v139 = vlaneseq
    %v140 = vshrl.u32 %v139, 7
    %v141 = vsub.s32 %v138, %v140
    %v142 = vrot.slane %v128, %v141
    %v143 = vcombine.high %v135, %v135
    %v144 = vcombine.high %v142, %v142
    %v145 = vcombine.high %v121, %v121
    %v147 = vunpack.c.l.s4 1983009808
    %v148 = vunpack.c.0.s8 %v147
    %v149 = vlaneseq
    %v150 = vshrl.u32 %v149, 7
    %v151 = vsub.s32 %v148, %v150
    %v152 = vrot.slane %v121, %v151
    %v154 = vunpack.c.l.s4 1983009808
    %v155 = vunpack.c.0.s8 %v154
    %v156 = vlaneseq
    %v157 = vshrl.u32 %v156, 7
    %v158 = vsub.s32 %v155, %v157
    %v159 = vrot.slane %v145, %v158
    %v160 = vcombine.high %v152, %v152
    %v161 = vcombine.high %v159, %v159
    %v162 = vcombine.high %v122, %v122
    %v164 = vunpack.c.l.s4 1983009808
    %v165 = vunpack.c.0.s8 %v164
    %v166 = vlaneseq
    %v167 = vshrl.u32 %v166, 7
    %v168 = vsub.s32 %v165, %v167
    %v169 = vrot.slane %v122, %v168
    %v171 = vunpack.c.l.s4 1983009808
    %v172 = vunpack.c.0.s8 %v171
    %v173 = vlaneseq
    %v174 = vshrl.u32 %v173, 7
    %v175 = vsub.s32 %v172, %v174
    %v176 = vrot.slane %v162, %v175
    %v177 = vcombine.high %v169, %v169
    %v178 = vcombine.high %v176, %v176
    %v179 = vcombine.high %v123, %v123
    %v181 = vunpack.c.l.s4 1983009808
    %v182 = vunpack.c.0.s8 %v181
    %v183 = vlaneseq
    %v184 = vshrl.u32 %v183, 7
    %v185 = vsub.s32 %v182, %v184
    %v186 = vrot.slane %v123, %v185
    %v188 = vunpack.c.l.s4 1983009808
    %v189 = vunpack.c.0.s8 %v188
    %v190 = vlaneseq
    %v191 = vshrl.u32 %v190, 7
    %v192 = vsub.s32 %v189, %v191
    %v193 = vrot.slane %v179, %v192
    %v194 = vcombine.high %v186, %v186
    %v195 = vcombine.high %v193, %v193
    %v212 = vpack.c.bf16 %v135, %v135
    %v213 = vpack.c.bf16 %v143, %v143
    %v214 = vpack.c.bf16 %v142, %v142
    %v215 = vpack.c.bf16 %v144, %v144
    %v216 = vpack.c.bf16 %v152, %v152
    %v217 = vpack.c.bf16 %v160, %v160
    %v218 = vpack.c.bf16 %v159, %v159
    %v219 = vpack.c.bf16 %v161, %v161
    %v220 = vpack.c.bf16 %v169, %v169
    %v221 = vpack.c.bf16 %v177, %v177
    %v222 = vpack.c.bf16 %v176, %v176
    %v223 = vpack.c.bf16 %v178, %v178
    %v224 = vpack.c.bf16 %v186, %v186
    %v225 = vpack.c.bf16 %v194, %v194
    %v226 = vpack.c.bf16 %v193, %v193
    %v227 = vpack.c.bf16 %v195, %v195
    %v228 = vld [vmem:[#allocation3] sm:$0xff]
    %v229 = vld [vmem:[#allocation3 + $0x8] sm:$0xff]
    %v230 = vld [vmem:[#allocation3 + $0x10] sm:$0xff]
    %v231 = vld [vmem:[#allocation3 + $0x18] sm:$0xff]
    %v232 = vld [vmem:[#allocation3 + $0x20] sm:$0xff]
    %v233 = vld [vmem:[#allocation3 + $0x28] sm:$0xff]
    %v234 = vld [vmem:[#allocation3 + $0x30] sm:$0xff]
    %v235 = vld [vmem:[#allocation3 + $0x38] sm:$0xff]
    %v236 = vld [vmem:[#allocation3 + $0x40] sm:$0xff]
    %v237 = vld [vmem:[#allocation3 + $0x48] sm:$0xff]
    %v238 = vld [vmem:[#allocation3 + $0x50] sm:$0xff]
    %v239 = vld [vmem:[#allocation3 + $0x58] sm:$0xff]
    %v240 = vld [vmem:[#allocation3 + $0x60] sm:$0xff]
    %v241 = vld [vmem:[#allocation3 + $0x68] sm:$0xff]
    %v242 = vld [vmem:[#allocation3 + $0x70] sm:$0xff]
    %v243 = vld [vmem:[#allocation3 + $0x78] sm:$0xff]
    %v244 = vld [vmem:[#allocation3 + $0x80] sm:$0xff]
    %v245 = vld [vmem:[#allocation3 + $0x88] sm:$0xff]
    %v246 = vld [vmem:[#allocation3 + $0x90] sm:$0xff]
    %v247 = vld [vmem:[#allocation3 + $0x98] sm:$0xff]
    %v248 = vld [vmem:[#allocation3 + $0xa0] sm:$0xff]
    %v249 = vld [vmem:[#allocation3 + $0xa8] sm:$0xff]
    %v250 = vld [vmem:[#allocation3 + $0xb0] sm:$0xff]
    %v251 = vld [vmem:[#allocation3 + $0xb8] sm:$0xff]
    %v252 = vld [vmem:[#allocation3 + $0xc0] sm:$0xff]
    %v253 = vld [vmem:[#allocation3 + $0xc8] sm:$0xff]
    %v254 = vld [vmem:[#allocation3 + $0xd0] sm:$0xff]
    %v255 = vld [vmem:[#allocation3 + $0xd8] sm:$0xff]
    %v256 = vld [vmem:[#allocation3 + $0xe0] sm:$0xff]
    %v257 = vld [vmem:[#allocation3 + $0xe8] sm:$0xff]
    %v258 = vld [vmem:[#allocation3 + $0xf0] sm:$0xff]
    %v259 = vld [vmem:[#allocation3 + $0xf8] sm:$0xff]
    %v260 = vld [vmem:[#allocation3 + $0x100] sm:$0xff]
    %v261 = vld [vmem:[#allocation3 + $0x108] sm:$0xff]
    %v262 = vld [vmem:[#allocation3 + $0x110] sm:$0xff]
    %v263 = vld [vmem:[#allocation3 + $0x118] sm:$0xff]
    %v264 = vld [vmem:[#allocation3 + $0x120] sm:$0xff]
    %v265 = vld [vmem:[#allocation3 + $0x128] sm:$0xff]
    %v266 = vld [vmem:[#allocation3 + $0x130] sm:$0xff]
    %v267 = vld [vmem:[#allocation3 + $0x138] sm:$0xff]
    %v268 = vld [vmem:[#allocation3 + $0x140] sm:$0xff]
    %v269 = vld [vmem:[#allocation3 + $0x148] sm:$0xff]
    %v270 = vld [vmem:[#allocation3 + $0x150] sm:$0xff]
    %v271 = vld [vmem:[#allocation3 + $0x158] sm:$0xff]
    %v272 = vld [vmem:[#allocation3 + $0x160] sm:$0xff]
    %v273 = vld [vmem:[#allocation3 + $0x168] sm:$0xff]
    %v274 = vld [vmem:[#allocation3 + $0x170] sm:$0xff]
    %v275 = vld [vmem:[#allocation3 + $0x178] sm:$0xff]
    %v276 = vld [vmem:[#allocation3 + $0x180] sm:$0xff]
    %v277 = vld [vmem:[#allocation3 + $0x188] sm:$0xff]
    %v278 = vld [vmem:[#allocation3 + $0x190] sm:$0xff]
    %v279 = vld [vmem:[#allocation3 + $0x198] sm:$0xff]
    %v280 = vld [vmem:[#allocation3 + $0x1a0] sm:$0xff]
    %v281 = vld [vmem:[#allocation3 + $0x1a8] sm:$0xff]
    %v282 = vld [vmem:[#allocation3 + $0x1b0] sm:$0xff]
    %v283 = vld [vmem:[#allocation3 + $0x1b8] sm:$0xff]
    %v284 = vld [vmem:[#allocation3 + $0x1c0] sm:$0xff]
    %v285 = vld [vmem:[#allocation3 + $0x1c8] sm:$0xff]
    %v286 = vld [vmem:[#allocation3 + $0x1d0] sm:$0xff]
    %v287 = vld [vmem:[#allocation3 + $0x1d8] sm:$0xff]
    %v288 = vld [vmem:[#allocation3 + $0x1e0] sm:$0xff]
    %v289 = vld [vmem:[#allocation3 + $0x1e8] sm:$0xff]
    %v290 = vld [vmem:[#allocation3 + $0x1f0] sm:$0xff]
    %v291 = vld [vmem:[#allocation3 + $0x1f8] sm:$0xff]
    %v292 = vld [vmem:[#allocation3 + $0x200] sm:$0xff]
    %v293 = vld [vmem:[#allocation3 + $0x208] sm:$0xff]
    %v294 = vld [vmem:[#allocation3 + $0x210] sm:$0xff]
    %v295 = vld [vmem:[#allocation3 + $0x218] sm:$0xff]
    %v296 = vld [vmem:[#allocation3 + $0x220] sm:$0xff]
    %v297 = vld [vmem:[#allocation3 + $0x228] sm:$0xff]
    %v298 = vld [vmem:[#allocation3 + $0x230] sm:$0xff]
    %v299 = vld [vmem:[#allocation3 + $0x238] sm:$0xff]
    %v300 = vld [vmem:[#allocation3 + $0x240] sm:$0xff]
    %v301 = vld [vmem:[#allocation3 + $0x248] sm:$0xff]
    %v302 = vld [vmem:[#allocation3 + $0x250] sm:$0xff]
    %v303 = vld [vmem:[#allocation3 + $0x258] sm:$0xff]
    %v304 = vld [vmem:[#allocation3 + $0x260] sm:$0xff]
    %v305 = vld [vmem:[#allocation3 + $0x268] sm:$0xff]
    %v306 = vld [vmem:[#allocation3 + $0x270] sm:$0xff]
    %v307 = vld [vmem:[#allocation3 + $0x278] sm:$0xff]
    %v308 = vld [vmem:[#allocation3 + $0x280] sm:$0xff]
    %v309 = vld [vmem:[#allocation3 + $0x288] sm:$0xff]
    %v310 = vld [vmem:[#allocation3 + $0x290] sm:$0xff]
    %v311 = vld [vmem:[#allocation3 + $0x298] sm:$0xff]
    %v312 = vld [vmem:[#allocation3 + $0x2a0] sm:$0xff]
    %v313 = vld [vmem:[#allocation3 + $0x2a8] sm:$0xff]
    %v314 = vld [vmem:[#allocation3 + $0x2b0] sm:$0xff]
    %v315 = vld [vmem:[#allocation3 + $0x2b8] sm:$0xff]
    %v316 = vld [vmem:[#allocation3 + $0x2c0] sm:$0xff]
    %v317 = vld [vmem:[#allocation3 + $0x2c8] sm:$0xff]
    %v318 = vld [vmem:[#allocation3 + $0x2d0] sm:$0xff]
    %v319 = vld [vmem:[#allocation3 + $0x2d8] sm:$0xff]
    %v320 = vld [vmem:[#allocation3 + $0x2e0] sm:$0xff]
    %v321 = vld [vmem:[#allocation3 + $0x2e8] sm:$0xff]
    %v322 = vld [vmem:[#allocation3 + $0x2f0] sm:$0xff]
    %v323 = vld [vmem:[#allocation3 + $0x2f8] sm:$0xff]
    %v324 = vld [vmem:[#allocation3 + $0x300] sm:$0xff]
    %v325 = vld [vmem:[#allocation3 + $0x308] sm:$0xff]
    %v326 = vld [vmem:[#allocation3 + $0x310] sm:$0xff]
    %v327 = vld [vmem:[#allocation3 + $0x318] sm:$0xff]
    %v328 = vld [vmem:[#allocation3 + $0x320] sm:$0xff]
    %v329 = vld [vmem:[#allocation3 + $0x328] sm:$0xff]
    %v330 = vld [vmem:[#allocation3 + $0x330] sm:$0xff]
    %v331 = vld [vmem:[#allocation3 + $0x338] sm:$0xff]
    %v332 = vld [vmem:[#allocation3 + $0x340] sm:$0xff]
    %v333 = vld [vmem:[#allocation3 + $0x348] sm:$0xff]
    %v334 = vld [vmem:[#allocation3 + $0x350] sm:$0xff]
    %v335 = vld [vmem:[#allocation3 + $0x358] sm:$0xff]
    %v336 = vld [vmem:[#allocation3 + $0x360] sm:$0xff]
    %v337 = vld [vmem:[#allocation3 + $0x368] sm:$0xff]
    %v338 = vld [vmem:[#allocation3 + $0x370] sm:$0xff]
    %v339 = vld [vmem:[#allocation3 + $0x378] sm:$0xff]
    %v340 = vld [vmem:[#allocation3 + $0x380] sm:$0xff]
    %v341 = vld [vmem:[#allocation3 + $0x388] sm:$0xff]
    %v342 = vld [vmem:[#allocation3 + $0x390] sm:$0xff]
    %v343 = vld [vmem:[#allocation3 + $0x398] sm:$0xff]
    %v344 = vld [vmem:[#allocation3 + $0x3a0] sm:$0xff]
    %v345 = vld [vmem:[#allocation3 + $0x3a8] sm:$0xff]
    %v346 = vld [vmem:[#allocation3 + $0x3b0] sm:$0xff]
    %v347 = vld [vmem:[#allocation3 + $0x3b8] sm:$0xff]
    %v348 = vld [vmem:[#allocation3 + $0x3c0] sm:$0xff]
    %v349 = vld [vmem:[#allocation3 + $0x3c8] sm:$0xff]
    %v350 = vld [vmem:[#allocation3 + $0x3d0] sm:$0xff]
    %v351 = vld [vmem:[#allocation3 + $0x3d8] sm:$0xff]
    %v352 = vld [vmem:[#allocation3 + $0x3e0] sm:$0xff]
    %v353 = vld [vmem:[#allocation3 + $0x3e8] sm:$0xff]
    %v354 = vld [vmem:[#allocation3 + $0x3f0] sm:$0xff]
    %v355 = vld [vmem:[#allocation3 + $0x3f8] sm:$0xff]
    %v356 = vld [vmem:[#allocation3 + $0x400] sm:$0xff]
    %v357 = vld [vmem:[#allocation3 + $0x408] sm:$0xff]
    %v358 = vld [vmem:[#allocation3 + $0x410] sm:$0xff]
    %v359 = vld [vmem:[#allocation3 + $0x418] sm:$0xff]
    %v360 = vld [vmem:[#allocation3 + $0x420] sm:$0xff]
    %v361 = vld [vmem:[#allocation3 + $0x428] sm:$0xff]
    %v362 = vld [vmem:[#allocation3 + $0x430] sm:$0xff]
    %v363 = vld [vmem:[#allocation3 + $0x438] sm:$0xff]
    %v364 = vld [vmem:[#allocation3 + $0x440] sm:$0xff]
    %v365 = vld [vmem:[#allocation3 + $0x448] sm:$0xff]
    %v366 = vld [vmem:[#allocation3 + $0x450] sm:$0xff]
    %v367 = vld [vmem:[#allocation3 + $0x458] sm:$0xff]
    %v368 = vld [vmem:[#allocation3 + $0x460] sm:$0xff]
    %v369 = vld [vmem:[#allocation3 + $0x468] sm:$0xff]
    %v370 = vld [vmem:[#allocation3 + $0x470] sm:$0xff]
    %v371 = vld [vmem:[#allocation3 + $0x478] sm:$0xff]
    %v372 = vld [vmem:[#allocation3 + $0x480] sm:$0xff]
    %v373 = vld [vmem:[#allocation3 + $0x488] sm:$0xff]
    %v374 = vld [vmem:[#allocation3 + $0x490] sm:$0xff]
    %v375 = vld [vmem:[#allocation3 + $0x498] sm:$0xff]
    %v376 = vld [vmem:[#allocation3 + $0x4a0] sm:$0xff]
    %v377 = vld [vmem:[#allocation3 + $0x4a8] sm:$0xff]
    %v378 = vld [vmem:[#allocation3 + $0x4b0] sm:$0xff]
    %v379 = vld [vmem:[#allocation3 + $0x4b8] sm:$0xff]
    %v380 = vld [vmem:[#allocation3 + $0x4c0] sm:$0xff]
    %v381 = vld [vmem:[#allocation3 + $0x4c8] sm:$0xff]
    %v382 = vld [vmem:[#allocation3 + $0x4d0] sm:$0xff]
    %v383 = vld [vmem:[#allocation3 + $0x4d8] sm:$0xff]
    %v384 = vld [vmem:[#allocation3 + $0x4e0] sm:$0xff]
    %v385 = vld [vmem:[#allocation3 + $0x4e8] sm:$0xff]
    %v386 = vld [vmem:[#allocation3 + $0x4f0] sm:$0xff]
    %v387 = vld [vmem:[#allocation3 + $0x4f8] sm:$0xff]
    %v388 = vld [vmem:[#allocation3 + $0x500] sm:$0xff]
    %v389 = vld [vmem:[#allocation3 + $0x508] sm:$0xff]
    %v390 = vld [vmem:[#allocation3 + $0x510] sm:$0xff]
    %v391 = vld [vmem:[#allocation3 + $0x518] sm:$0xff]
    %v392 = vld [vmem:[#allocation3 + $0x520] sm:$0xff]
    %v393 = vld [vmem:[#allocation3 + $0x528] sm:$0xff]
    %v394 = vld [vmem:[#allocation3 + $0x530] sm:$0xff]
    %v395 = vld [vmem:[#allocation3 + $0x538] sm:$0xff]
    %v396 = vld [vmem:[#allocation3 + $0x540] sm:$0xff]
    %v397 = vld [vmem:[#allocation3 + $0x548] sm:$0xff]
    %v398 = vld [vmem:[#allocation3 + $0x550] sm:$0xff]
    %v399 = vld [vmem:[#allocation3 + $0x558] sm:$0xff]
    %v400 = vld [vmem:[#allocation3 + $0x560] sm:$0xff]
    %v401 = vld [vmem:[#allocation3 + $0x568] sm:$0xff]
    %v402 = vld [vmem:[#allocation3 + $0x570] sm:$0xff]
    %v403 = vld [vmem:[#allocation3 + $0x578] sm:$0xff]
    %v404 = vld [vmem:[#allocation3 + $0x580] sm:$0xff]
    %v405 = vld [vmem:[#allocation3 + $0x588] sm:$0xff]
    %v406 = vld [vmem:[#allocation3 + $0x590] sm:$0xff]
    %v407 = vld [vmem:[#allocation3 + $0x598] sm:$0xff]
    %v408 = vld [vmem:[#allocation3 + $0x5a0] sm:$0xff]
    %v409 = vld [vmem:[#allocation3 + $0x5a8] sm:$0xff]
    %v410 = vld [vmem:[#allocation3 + $0x5b0] sm:$0xff]
    %v411 = vld [vmem:[#allocation3 + $0x5b8] sm:$0xff]
    %v412 = vld [vmem:[#allocation3 + $0x5c0] sm:$0xff]
    %v413 = vld [vmem:[#allocation3 + $0x5c8] sm:$0xff]
    %v414 = vld [vmem:[#allocation3 + $0x5d0] sm:$0xff]
    %v415 = vld [vmem:[#allocation3 + $0x5d8] sm:$0xff]
    %v416 = vld [vmem:[#allocation3 + $0x5e0] sm:$0xff]
    %v417 = vld [vmem:[#allocation3 + $0x5e8] sm:$0xff]
    %v418 = vld [vmem:[#allocation3 + $0x5f0] sm:$0xff]
    %v419 = vld [vmem:[#allocation3 + $0x5f8] sm:$0xff]
    %v420 = vld [vmem:[#allocation3 + $0x600] sm:$0xff]
    %v421 = vld [vmem:[#allocation3 + $0x608] sm:$0xff]
    %v422 = vld [vmem:[#allocation3 + $0x610] sm:$0xff]
    %v423 = vld [vmem:[#allocation3 + $0x618] sm:$0xff]
    %v424 = vld [vmem:[#allocation3 + $0x620] sm:$0xff]
    %v425 = vld [vmem:[#allocation3 + $0x628] sm:$0xff]
    %v426 = vld [vmem:[#allocation3 + $0x630] sm:$0xff]
    %v427 = vld [vmem:[#allocation3 + $0x638] sm:$0xff]
    %v428 = vld [vmem:[#allocation3 + $0x640] sm:$0xff]
    %v429 = vld [vmem:[#allocation3 + $0x648] sm:$0xff]
    %v430 = vld [vmem:[#allocation3 + $0x650] sm:$0xff]
    %v431 = vld [vmem:[#allocation3 + $0x658] sm:$0xff]
    %v432 = vld [vmem:[#allocation3 + $0x660] sm:$0xff]
    %v433 = vld [vmem:[#allocation3 + $0x668] sm:$0xff]
    %v434 = vld [vmem:[#allocation3 + $0x670] sm:$0xff]
    %v435 = vld [vmem:[#allocation3 + $0x678] sm:$0xff]
    %v436 = vld [vmem:[#allocation3 + $0x680] sm:$0xff]
    %v437 = vld [vmem:[#allocation3 + $0x688] sm:$0xff]
    %v438 = vld [vmem:[#allocation3 + $0x690] sm:$0xff]
    %v439 = vld [vmem:[#allocation3 + $0x698] sm:$0xff]
    %v440 = vld [vmem:[#allocation3 + $0x6a0] sm:$0xff]
    %v441 = vld [vmem:[#allocation3 + $0x6a8] sm:$0xff]
    %v442 = vld [vmem:[#allocation3 + $0x6b0] sm:$0xff]
    %v443 = vld [vmem:[#allocation3 + $0x6b8] sm:$0xff]
    %v444 = vld [vmem:[#allocation3 + $0x6c0] sm:$0xff]
    %v445 = vld [vmem:[#allocation3 + $0x6c8] sm:$0xff]
    %v446 = vld [vmem:[#allocation3 + $0x6d0] sm:$0xff]
    %v447 = vld [vmem:[#allocation3 + $0x6d8] sm:$0xff]
    %v448 = vld [vmem:[#allocation3 + $0x6e0] sm:$0xff]
    %v449 = vld [vmem:[#allocation3 + $0x6e8] sm:$0xff]
    %v450 = vld [vmem:[#allocation3 + $0x6f0] sm:$0xff]
    %v451 = vld [vmem:[#allocation3 + $0x6f8] sm:$0xff]
    %v452 = vld [vmem:[#allocation3 + $0x700] sm:$0xff]
    %v453 = vld [vmem:[#allocation3 + $0x708] sm:$0xff]
    %v454 = vld [vmem:[#allocation3 + $0x710] sm:$0xff]
    %v455 = vld [vmem:[#allocation3 + $0x718] sm:$0xff]
    %v456 = vld [vmem:[#allocation3 + $0x720] sm:$0xff]
    %v457 = vld [vmem:[#allocation3 + $0x728] sm:$0xff]
    %v458 = vld [vmem:[#allocation3 + $0x730] sm:$0xff]
    %v459 = vld [vmem:[#allocation3 + $0x738] sm:$0xff]
    %v460 = vld [vmem:[#allocation3 + $0x740] sm:$0xff]
    %v461 = vld [vmem:[#allocation3 + $0x748] sm:$0xff]
    %v462 = vld [vmem:[#allocation3 + $0x750] sm:$0xff]
    %v463 = vld [vmem:[#allocation3 + $0x758] sm:$0xff]
    %v464 = vld [vmem:[#allocation3 + $0x760] sm:$0xff]
    %v465 = vld [vmem:[#allocation3 + $0x768] sm:$0xff]
    %v466 = vld [vmem:[#allocation3 + $0x770] sm:$0xff]
    %v467 = vld [vmem:[#allocation3 + $0x778] sm:$0xff]
    %v468 = vld [vmem:[#allocation3 + $0x780] sm:$0xff]
    %v469 = vld [vmem:[#allocation3 + $0x788] sm:$0xff]
    %v470 = vld [vmem:[#allocation3 + $0x790] sm:$0xff]
    %v471 = vld [vmem:[#allocation3 + $0x798] sm:$0xff]
    %v472 = vld [vmem:[#allocation3 + $0x7a0] sm:$0xff]
    %v473 = vld [vmem:[#allocation3 + $0x7a8] sm:$0xff]
    %v474 = vld [vmem:[#allocation3 + $0x7b0] sm:$0xff]
    %v475 = vld [vmem:[#allocation3 + $0x7b8] sm:$0xff]
    %v476 = vld [vmem:[#allocation3 + $0x7c0] sm:$0xff]
    %v477 = vld [vmem:[#allocation3 + $0x7c8] sm:$0xff]
    %v478 = vld [vmem:[#allocation3 + $0x7d0] sm:$0xff]
    %v479 = vld [vmem:[#allocation3 + $0x7d8] sm:$0xff]
    %v480 = vld [vmem:[#allocation3 + $0x7e0] sm:$0xff]
    %v481 = vld [vmem:[#allocation3 + $0x7e8] sm:$0xff]
    %v482 = vld [vmem:[#allocation3 + $0x7f0] sm:$0xff]
    %v483 = vld [vmem:[#allocation3 + $0x7f8] sm:$0xff]
    %v484 = vld [vmem:[#allocation3 + $0x800] sm:$0xff]
    %v485 = vld [vmem:[#allocation3 + $0x808] sm:$0xff]
    %v486 = vld [vmem:[#allocation3 + $0x810] sm:$0xff]
    %v487 = vld [vmem:[#allocation3 + $0x818] sm:$0xff]
    %v488 = vld [vmem:[#allocation3 + $0x820] sm:$0xff]
    %v489 = vld [vmem:[#allocation3 + $0x828] sm:$0xff]
    %v490 = vld [vmem:[#allocation3 + $0x830] sm:$0xff]
    %v491 = vld [vmem:[#allocation3 + $0x838] sm:$0xff]
    %v492 = vld [vmem:[#allocation3 + $0x840] sm:$0xff]
    %v493 = vld [vmem:[#allocation3 + $0x848] sm:$0xff]
    %v494 = vld [vmem:[#allocation3 + $0x850] sm:$0xff]
    %v495 = vld [vmem:[#allocation3 + $0x858] sm:$0xff]
    %v496 = vld [vmem:[#allocation3 + $0x860] sm:$0xff]
    %v497 = vld [vmem:[#allocation3 + $0x868] sm:$0xff]
    %v498 = vld [vmem:[#allocation3 + $0x870] sm:$0xff]
    %v499 = vld [vmem:[#allocation3 + $0x878] sm:$0xff]
    %v500 = vld [vmem:[#allocation3 + $0x880] sm:$0xff]
    %v501 = vld [vmem:[#allocation3 + $0x888] sm:$0xff]
    %v502 = vld [vmem:[#allocation3 + $0x890] sm:$0xff]
    %v503 = vld [vmem:[#allocation3 + $0x898] sm:$0xff]
    %v504 = vld [vmem:[#allocation3 + $0x8a0] sm:$0xff]
    %v505 = vld [vmem:[#allocation3 + $0x8a8] sm:$0xff]
    %v506 = vld [vmem:[#allocation3 + $0x8b0] sm:$0xff]
    %v507 = vld [vmem:[#allocation3 + $0x8b8] sm:$0xff]
    %v508 = vld [vmem:[#allocation3 + $0x8c0] sm:$0xff]
    %v509 = vld [vmem:[#allocation3 + $0x8c8] sm:$0xff]
    %v510 = vld [vmem:[#allocation3 + $0x8d0] sm:$0xff]
    %v511 = vld [vmem:[#allocation3 + $0x8d8] sm:$0xff]
    %v512 = vld [vmem:[#allocation3 + $0x8e0] sm:$0xff]
    %v513 = vld [vmem:[#allocation3 + $0x8e8] sm:$0xff]
    %v514 = vld [vmem:[#allocation3 + $0x8f0] sm:$0xff]
    %v515 = vld [vmem:[#allocation3 + $0x8f8] sm:$0xff]
    %v516 = vld [vmem:[#allocation3 + $0x900] sm:$0xff]
    %v517 = vld [vmem:[#allocation3 + $0x908] sm:$0xff]
    %v518 = vld [vmem:[#allocation3 + $0x910] sm:$0xff]
    %v519 = vld [vmem:[#allocation3 + $0x918] sm:$0xff]
    %v520 = vld [vmem:[#allocation3 + $0x920] sm:$0xff]
    %v521 = vld [vmem:[#allocation3 + $0x928] sm:$0xff]
    %v522 = vld [vmem:[#allocation3 + $0x930] sm:$0xff]
    %v523 = vld [vmem:[#allocation3 + $0x938] sm:$0xff]
    %v524 = vld [vmem:[#allocation3 + $0x940] sm:$0xff]
    %v525 = vld [vmem:[#allocation3 + $0x948] sm:$0xff]
    %v526 = vld [vmem:[#allocation3 + $0x950] sm:$0xff]
    %v527 = vld [vmem:[#allocation3 + $0x958] sm:$0xff]
    %v528 = vld [vmem:[#allocation3 + $0x960] sm:$0xff]
    %v529 = vld [vmem:[#allocation3 + $0x968] sm:$0xff]
    %v530 = vld [vmem:[#allocation3 + $0x970] sm:$0xff]
    %v531 = vld [vmem:[#allocation3 + $0x978] sm:$0xff]
    %v532 = vld [vmem:[#allocation3 + $0x980] sm:$0xff]
    %v533 = vld [vmem:[#allocation3 + $0x988] sm:$0xff]
    %v534 = vld [vmem:[#allocation3 + $0x990] sm:$0xff]
    %v535 = vld [vmem:[#allocation3 + $0x998] sm:$0xff]
    %v536 = vld [vmem:[#allocation3 + $0x9a0] sm:$0xff]
    %v537 = vld [vmem:[#allocation3 + $0x9a8] sm:$0xff]
    %v538 = vld [vmem:[#allocation3 + $0x9b0] sm:$0xff]
    %v539 = vld [vmem:[#allocation3 + $0x9b8] sm:$0xff]
    %v540 = vld [vmem:[#allocation3 + $0x9c0] sm:$0xff]
    %v541 = vld [vmem:[#allocation3 + $0x9c8] sm:$0xff]
    %v542 = vld [vmem:[#allocation3 + $0x9d0] sm:$0xff]
    %v543 = vld [vmem:[#allocation3 + $0x9d8] sm:$0xff]
    %v544 = vld [vmem:[#allocation3 + $0x9e0] sm:$0xff]
    %v545 = vld [vmem:[#allocation3 + $0x9e8] sm:$0xff]
    %v546 = vld [vmem:[#allocation3 + $0x9f0] sm:$0xff]
    %v547 = vld [vmem:[#allocation3 + $0x9f8] sm:$0xff]
    %v548 = vld [vmem:[#allocation3 + $0xa00] sm:$0xff]
    %v549 = vld [vmem:[#allocation3 + $0xa08] sm:$0xff]
    %v550 = vld [vmem:[#allocation3 + $0xa10] sm:$0xff]
    %v551 = vld [vmem:[#allocation3 + $0xa18] sm:$0xff]
    %v552 = vld [vmem:[#allocation3 + $0xa20] sm:$0xff]
    %v553 = vld [vmem:[#allocation3 + $0xa28] sm:$0xff]
    %v554 = vld [vmem:[#allocation3 + $0xa30] sm:$0xff]
    %v555 = vld [vmem:[#allocation3 + $0xa38] sm:$0xff]
    %v556 = vld [vmem:[#allocation3 + $0xa40] sm:$0xff]
    %v557 = vld [vmem:[#allocation3 + $0xa48] sm:$0xff]
    %v558 = vld [vmem:[#allocation3 + $0xa50] sm:$0xff]
    %v559 = vld [vmem:[#allocation3 + $0xa58] sm:$0xff]
    %v560 = vld [vmem:[#allocation3 + $0xa60] sm:$0xff]
    %v561 = vld [vmem:[#allocation3 + $0xa68] sm:$0xff]
    %v562 = vld [vmem:[#allocation3 + $0xa70] sm:$0xff]
    %v563 = vld [vmem:[#allocation3 + $0xa78] sm:$0xff]
    %v564 = vld [vmem:[#allocation3 + $0xa80] sm:$0xff]
    %v565 = vld [vmem:[#allocation3 + $0xa88] sm:$0xff]
    %v566 = vld [vmem:[#allocation3 + $0xa90] sm:$0xff]
    %v567 = vld [vmem:[#allocation3 + $0xa98] sm:$0xff]
    %v568 = vld [vmem:[#allocation3 + $0xaa0] sm:$0xff]
    %v569 = vld [vmem:[#allocation3 + $0xaa8] sm:$0xff]
    %v570 = vld [vmem:[#allocation3 + $0xab0] sm:$0xff]
    %v571 = vld [vmem:[#allocation3 + $0xab8] sm:$0xff]
    %v572 = vld [vmem:[#allocation3 + $0xac0] sm:$0xff]
    %v573 = vld [vmem:[#allocation3 + $0xac8] sm:$0xff]
    %v574 = vld [vmem:[#allocation3 + $0xad0] sm:$0xff]
    %v575 = vld [vmem:[#allocation3 + $0xad8] sm:$0xff]
    %v576 = vld [vmem:[#allocation3 + $0xae0] sm:$0xff]
    %v577 = vld [vmem:[#allocation3 + $0xae8] sm:$0xff]
    %v578 = vld [vmem:[#allocation3 + $0xaf0] sm:$0xff]
    %v579 = vld [vmem:[#allocation3 + $0xaf8] sm:$0xff]
    %v580 = vld [vmem:[#allocation3 + $0xb00] sm:$0xff]
    %v581 = vld [vmem:[#allocation3 + $0xb08] sm:$0xff]
    %v582 = vld [vmem:[#allocation3 + $0xb10] sm:$0xff]
    %v583 = vld [vmem:[#allocation3 + $0xb18] sm:$0xff]
    %v584 = vld [vmem:[#allocation3 + $0xb20] sm:$0xff]
    %v585 = vld [vmem:[#allocation3 + $0xb28] sm:$0xff]
    %v586 = vld [vmem:[#allocation3 + $0xb30] sm:$0xff]
    %v587 = vld [vmem:[#allocation3 + $0xb38] sm:$0xff]
    %v588 = vld [vmem:[#allocation3 + $0xb40] sm:$0xff]
    %v589 = vld [vmem:[#allocation3 + $0xb48] sm:$0xff]
    %v590 = vld [vmem:[#allocation3 + $0xb50] sm:$0xff]
    %v591 = vld [vmem:[#allocation3 + $0xb58] sm:$0xff]
    %v592 = vld [vmem:[#allocation3 + $0xb60] sm:$0xff]
    %v593 = vld [vmem:[#allocation3 + $0xb68] sm:$0xff]
    %v594 = vld [vmem:[#allocation3 + $0xb70] sm:$0xff]
    %v595 = vld [vmem:[#allocation3 + $0xb78] sm:$0xff]
    %v596 = vld [vmem:[#allocation3 + $0xb80] sm:$0xff]
    %v597 = vld [vmem:[#allocation3 + $0xb88] sm:$0xff]
    %v598 = vld [vmem:[#allocation3 + $0xb90] sm:$0xff]
    %v599 = vld [vmem:[#allocation3 + $0xb98] sm:$0xff]
    %v600 = vld [vmem:[#allocation3 + $0xba0] sm:$0xff]
    %v601 = vld [vmem:[#allocation3 + $0xba8] sm:$0xff]
    %v602 = vld [vmem:[#allocation3 + $0xbb0] sm:$0xff]
    %v603 = vld [vmem:[#allocation3 + $0xbb8] sm:$0xff]
    %v604 = vld [vmem:[#allocation3 + $0xbc0] sm:$0xff]
    %v605 = vld [vmem:[#allocation3 + $0xbc8] sm:$0xff]
    %v606 = vld [vmem:[#allocation3 + $0xbd0] sm:$0xff]
    %v607 = vld [vmem:[#allocation3 + $0xbd8] sm:$0xff]
    %v608 = vld [vmem:[#allocation3 + $0xbe0] sm:$0xff]
    %v609 = vld [vmem:[#allocation3 + $0xbe8] sm:$0xff]
    %v610 = vld [vmem:[#allocation3 + $0xbf0] sm:$0xff]
    %v611 = vld [vmem:[#allocation3 + $0xbf8] sm:$0xff]
    %v612 = vld [vmem:[#allocation3 + $0xc00] sm:$0xff]
    %v613 = vld [vmem:[#allocation3 + $0xc08] sm:$0xff]
    %v614 = vld [vmem:[#allocation3 + $0xc10] sm:$0xff]
    %v615 = vld [vmem:[#allocation3 + $0xc18] sm:$0xff]
    %v616 = vld [vmem:[#allocation3 + $0xc20] sm:$0xff]
    %v617 = vld [vmem:[#allocation3 + $0xc28] sm:$0xff]
    %v618 = vld [vmem:[#allocation3 + $0xc30] sm:$0xff]
    %v619 = vld [vmem:[#allocation3 + $0xc38] sm:$0xff]
    %v620 = vld [vmem:[#allocation3 + $0xc40] sm:$0xff]
    %v621 = vld [vmem:[#allocation3 + $0xc48] sm:$0xff]
    %v622 = vld [vmem:[#allocation3 + $0xc50] sm:$0xff]
    %v623 = vld [vmem:[#allocation3 + $0xc58] sm:$0xff]
    %v624 = vld [vmem:[#allocation3 + $0xc60] sm:$0xff]
    %v625 = vld [vmem:[#allocation3 + $0xc68] sm:$0xff]
    %v626 = vld [vmem:[#allocation3 + $0xc70] sm:$0xff]
    %v627 = vld [vmem:[#allocation3 + $0xc78] sm:$0xff]
    %v628 = vld [vmem:[#allocation3 + $0xc80] sm:$0xff]
    %v629 = vld [vmem:[#allocation3 + $0xc88] sm:$0xff]
    %v630 = vld [vmem:[#allocation3 + $0xc90] sm:$0xff]
    %v631 = vld [vmem:[#allocation3 + $0xc98] sm:$0xff]
    %v632 = vld [vmem:[#allocation3 + $0xca0] sm:$0xff]
    %v633 = vld [vmem:[#allocation3 + $0xca8] sm:$0xff]
    %v634 = vld [vmem:[#allocation3 + $0xcb0] sm:$0xff]
    %v635 = vld [vmem:[#allocation3 + $0xcb8] sm:$0xff]
    %v636 = vld [vmem:[#allocation3 + $0xcc0] sm:$0xff]
    %v637 = vld [vmem:[#allocation3 + $0xcc8] sm:$0xff]
    %v638 = vld [vmem:[#allocation3 + $0xcd0] sm:$0xff]
    %v639 = vld [vmem:[#allocation3 + $0xcd8] sm:$0xff]
    %v640 = vld [vmem:[#allocation3 + $0xce0] sm:$0xff]
    %v641 = vld [vmem:[#allocation3 + $0xce8] sm:$0xff]
    %v642 = vld [vmem:[#allocation3 + $0xcf0] sm:$0xff]
    %v643 = vld [vmem:[#allocation3 + $0xcf8] sm:$0xff]
    %v644 = vld [vmem:[#allocation3 + $0xd00] sm:$0xff]
    %v645 = vld [vmem:[#allocation3 + $0xd08] sm:$0xff]
    %v646 = vld [vmem:[#allocation3 + $0xd10] sm:$0xff]
    %v647 = vld [vmem:[#allocation3 + $0xd18] sm:$0xff]
    %v648 = vld [vmem:[#allocation3 + $0xd20] sm:$0xff]
    %v649 = vld [vmem:[#allocation3 + $0xd28] sm:$0xff]
    %v650 = vld [vmem:[#allocation3 + $0xd30] sm:$0xff]
    %v651 = vld [vmem:[#allocation3 + $0xd38] sm:$0xff]
    %v652 = vld [vmem:[#allocation3 + $0xd40] sm:$0xff]
    %v653 = vld [vmem:[#allocation3 + $0xd48] sm:$0xff]
    %v654 = vld [vmem:[#allocation3 + $0xd50] sm:$0xff]
    %v655 = vld [vmem:[#allocation3 + $0xd58] sm:$0xff]
    %v656 = vld [vmem:[#allocation3 + $0xd60] sm:$0xff]
    %v657 = vld [vmem:[#allocation3 + $0xd68] sm:$0xff]
    %v658 = vld [vmem:[#allocation3 + $0xd70] sm:$0xff]
    %v659 = vld [vmem:[#allocation3 + $0xd78] sm:$0xff]
    %v660 = vld [vmem:[#allocation3 + $0xd80] sm:$0xff]
    %v661 = vld [vmem:[#allocation3 + $0xd88] sm:$0xff]
    %v662 = vld [vmem:[#allocation3 + $0xd90] sm:$0xff]
    %v663 = vld [vmem:[#allocation3 + $0xd98] sm:$0xff]
    %v664 = vld [vmem:[#allocation3 + $0xda0] sm:$0xff]
    %v665 = vld [vmem:[#allocation3 + $0xda8] sm:$0xff]
    %v666 = vld [vmem:[#allocation3 + $0xdb0] sm:$0xff]
    %v667 = vld [vmem:[#allocation3 + $0xdb8] sm:$0xff]
    %v668 = vld [vmem:[#allocation3 + $0xdc0] sm:$0xff]
    %v669 = vld [vmem:[#allocation3 + $0xdc8] sm:$0xff]
    %v670 = vld [vmem:[#allocation3 + $0xdd0] sm:$0xff]
    %v671 = vld [vmem:[#allocation3 + $0xdd8] sm:$0xff]
    %v672 = vld [vmem:[#allocation3 + $0xde0] sm:$0xff]
    %v673 = vld [vmem:[#allocation3 + $0xde8] sm:$0xff]
    %v674 = vld [vmem:[#allocation3 + $0xdf0] sm:$0xff]
    %v675 = vld [vmem:[#allocation3 + $0xdf8] sm:$0xff]
    %v676 = vld [vmem:[#allocation3 + $0xe00] sm:$0xff]
    %v677 = vld [vmem:[#allocation3 + $0xe08] sm:$0xff]
    %v678 = vld [vmem:[#allocation3 + $0xe10] sm:$0xff]
    %v679 = vld [vmem:[#allocation3 + $0xe18] sm:$0xff]
    %v680 = vld [vmem:[#allocation3 + $0xe20] sm:$0xff]
    %v681 = vld [vmem:[#allocation3 + $0xe28] sm:$0xff]
    %v682 = vld [vmem:[#allocation3 + $0xe30] sm:$0xff]
    %v683 = vld [vmem:[#allocation3 + $0xe38] sm:$0xff]
    %v684 = vld [vmem:[#allocation3 + $0xe40] sm:$0xff]
    %v685 = vld [vmem:[#allocation3 + $0xe48] sm:$0xff]
    %v686 = vld [vmem:[#allocation3 + $0xe50] sm:$0xff]
    %v687 = vld [vmem:[#allocation3 + $0xe58] sm:$0xff]
    %v688 = vld [vmem:[#allocation3 + $0xe60] sm:$0xff]
    %v689 = vld [vmem:[#allocation3 + $0xe68] sm:$0xff]
    %v690 = vld [vmem:[#allocation3 + $0xe70] sm:$0xff]
    %v691 = vld [vmem:[#allocation3 + $0xe78] sm:$0xff]
    %v692 = vld [vmem:[#allocation3 + $0xe80] sm:$0xff]
    %v693 = vld [vmem:[#allocation3 + $0xe88] sm:$0xff]
    %v694 = vld [vmem:[#allocation3 + $0xe90] sm:$0xff]
    %v695 = vld [vmem:[#allocation3 + $0xe98] sm:$0xff]
    %v696 = vld [vmem:[#allocation3 + $0xea0] sm:$0xff]
    %v697 = vld [vmem:[#allocation3 + $0xea8] sm:$0xff]
    %v698 = vld [vmem:[#allocation3 + $0xeb0] sm:$0xff]
    %v699 = vld [vmem:[#allocation3 + $0xeb8] sm:$0xff]
    %v700 = vld [vmem:[#allocation3 + $0xec0] sm:$0xff]
    %v701 = vld [vmem:[#allocation3 + $0xec8] sm:$0xff]
    %v702 = vld [vmem:[#allocation3 + $0xed0] sm:$0xff]
    %v703 = vld [vmem:[#allocation3 + $0xed8] sm:$0xff]
    %v704 = vld [vmem:[#allocation3 + $0xee0] sm:$0xff]
    %v705 = vld [vmem:[#allocation3 + $0xee8] sm:$0xff]
    %v706 = vld [vmem:[#allocation3 + $0xef0] sm:$0xff]
    %v707 = vld [vmem:[#allocation3 + $0xef8] sm:$0xff]
    %v708 = vld [vmem:[#allocation3 + $0xf00] sm:$0xff]
    %v709 = vld [vmem:[#allocation3 + $0xf08] sm:$0xff]
    %v710 = vld [vmem:[#allocation3 + $0xf10] sm:$0xff]
    %v711 = vld [vmem:[#allocation3 + $0xf18] sm:$0xff]
    %v712 = vld [vmem:[#allocation3 + $0xf20] sm:$0xff]
    %v713 = vld [vmem:[#allocation3 + $0xf28] sm:$0xff]
    %v714 = vld [vmem:[#allocation3 + $0xf30] sm:$0xff]
    %v715 = vld [vmem:[#allocation3 + $0xf38] sm:$0xff]
    %v716 = vld [vmem:[#allocation3 + $0xf40] sm:$0xff]
    %v717 = vld [vmem:[#allocation3 + $0xf48] sm:$0xff]
    %v718 = vld [vmem:[#allocation3 + $0xf50] sm:$0xff]
    %v719 = vld [vmem:[#allocation3 + $0xf58] sm:$0xff]
    %v720 = vld [vmem:[#allocation3 + $0xf60] sm:$0xff]
    %v721 = vld [vmem:[#allocation3 + $0xf68] sm:$0xff]
    %v722 = vld [vmem:[#allocation3 + $0xf70] sm:$0xff]
    %v723 = vld [vmem:[#allocation3 + $0xf78] sm:$0xff]
    %v724 = vld [vmem:[#allocation3 + $0xf80] sm:$0xff]
    %v725 = vld [vmem:[#allocation3 + $0xf88] sm:$0xff]
    %v726 = vld [vmem:[#allocation3 + $0xf90] sm:$0xff]
    %v727 = vld [vmem:[#allocation3 + $0xf98] sm:$0xff]
    %v728 = vld [vmem:[#allocation3 + $0xfa0] sm:$0xff]
    %v729 = vld [vmem:[#allocation3 + $0xfa8] sm:$0xff]
    %v730 = vld [vmem:[#allocation3 + $0xfb0] sm:$0xff]
    %v731 = vld [vmem:[#allocation3 + $0xfb8] sm:$0xff]
    %v732 = vld [vmem:[#allocation3 + $0xfc0] sm:$0xff]
    %v733 = vld [vmem:[#allocation3 + $0xfc8] sm:$0xff]
    %v734 = vld [vmem:[#allocation3 + $0xfd0] sm:$0xff]
    %v735 = vld [vmem:[#allocation3 + $0xfd8] sm:$0xff]
    %v736 = vld [vmem:[#allocation3 + $0xfe0] sm:$0xff]
    %v737 = vld [vmem:[#allocation3 + $0xfe8] sm:$0xff]
    %v738 = vld [vmem:[#allocation3 + $0xff0] sm:$0xff]
    %v739 = vld [vmem:[#allocation3 + $0xff8] sm:$0xff]
    %v740 = vld [vmem:[#allocation3 + $0x1000] sm:$0xff]
    %v741 = vld [vmem:[#allocation3 + $0x1008] sm:$0xff]
    %v742 = vld [vmem:[#allocation3 + $0x1010] sm:$0xff]
    %v743 = vld [vmem:[#allocation3 + $0x1018] sm:$0xff]
    %v744 = vld [vmem:[#allocation3 + $0x1020] sm:$0xff]
    %v745 = vld [vmem:[#allocation3 + $0x1028] sm:$0xff]
    %v746 = vld [vmem:[#allocation3 + $0x1030] sm:$0xff]
    %v747 = vld [vmem:[#allocation3 + $0x1038] sm:$0xff]
    %v748 = vld [vmem:[#allocation3 + $0x1040] sm:$0xff]
    %v749 = vld [vmem:[#allocation3 + $0x1048] sm:$0xff]
    %v750 = vld [vmem:[#allocation3 + $0x1050] sm:$0xff]
    %v751 = vld [vmem:[#allocation3 + $0x1058] sm:$0xff]
    %v752 = vld [vmem:[#allocation3 + $0x1060] sm:$0xff]
    %v753 = vld [vmem:[#allocation3 + $0x1068] sm:$0xff]
    %v754 = vld [vmem:[#allocation3 + $0x1070] sm:$0xff]
    %v755 = vld [vmem:[#allocation3 + $0x1078] sm:$0xff]
    %v756 = vld [vmem:[#allocation3 + $0x1080] sm:$0xff]
    %v757 = vld [vmem:[#allocation3 + $0x1088] sm:$0xff]
    %v758 = vld [vmem:[#allocation3 + $0x1090] sm:$0xff]
    %v759 = vld [vmem:[#allocation3 + $0x1098] sm:$0xff]
    %v760 = vld [vmem:[#allocation3 + $0x10a0] sm:$0xff]
    %v761 = vld [vmem:[#allocation3 + $0x10a8] sm:$0xff]
    %v762 = vld [vmem:[#allocation3 + $0x10b0] sm:$0xff]
    %v763 = vld [vmem:[#allocation3 + $0x10b8] sm:$0xff]
    %v764 = vld [vmem:[#allocation3 + $0x10c0] sm:$0xff]
    %v765 = vld [vmem:[#allocation3 + $0x10c8] sm:$0xff]
    %v766 = vld [vmem:[#allocation3 + $0x10d0] sm:$0xff]
    %v767 = vld [vmem:[#allocation3 + $0x10d8] sm:$0xff]
    %v768 = vld [vmem:[#allocation3 + $0x10e0] sm:$0xff]
    %v769 = vld [vmem:[#allocation3 + $0x10e8] sm:$0xff]
    %v770 = vld [vmem:[#allocation3 + $0x10f0] sm:$0xff]
    %v771 = vld [vmem:[#allocation3 + $0x10f8] sm:$0xff]
    %v772 = vld [vmem:[#allocation3 + $0x1100] sm:$0xff]
    %v773 = vld [vmem:[#allocation3 + $0x1108] sm:$0xff]
    %v774 = vld [vmem:[#allocation3 + $0x1110] sm:$0xff]
    %v775 = vld [vmem:[#allocation3 + $0x1118] sm:$0xff]
    %v776 = vld [vmem:[#allocation3 + $0x1120] sm:$0xff]
    %v777 = vld [vmem:[#allocation3 + $0x1128] sm:$0xff]
    %v778 = vld [vmem:[#allocation3 + $0x1130] sm:$0xff]
    %v779 = vld [vmem:[#allocation3 + $0x1138] sm:$0xff]
    %v780 = vld [vmem:[#allocation3 + $0x1140] sm:$0xff]
    %v781 = vld [vmem:[#allocation3 + $0x1148] sm:$0xff]
    %v782 = vld [vmem:[#allocation3 + $0x1150] sm:$0xff]
    %v783 = vld [vmem:[#allocation3 + $0x1158] sm:$0xff]
    %v784 = vld [vmem:[#allocation3 + $0x1160] sm:$0xff]
    %v785 = vld [vmem:[#allocation3 + $0x1168] sm:$0xff]
    %v786 = vld [vmem:[#allocation3 + $0x1170] sm:$0xff]
    %v787 = vld [vmem:[#allocation3 + $0x1178] sm:$0xff]
    %v788 = vld [vmem:[#allocation3 + $0x1180] sm:$0xff]
    %v789 = vld [vmem:[#allocation3 + $0x1188] sm:$0xff]
    %v790 = vld [vmem:[#allocation3 + $0x1190] sm:$0xff]
    %v791 = vld [vmem:[#allocation3 + $0x1198] sm:$0xff]
    %v792 = vld [vmem:[#allocation3 + $0x11a0] sm:$0xff]
    %v793 = vld [vmem:[#allocation3 + $0x11a8] sm:$0xff]
    %v794 = vld [vmem:[#allocation3 + $0x11b0] sm:$0xff]
    %v795 = vld [vmem:[#allocation3 + $0x11b8] sm:$0xff]
    %v796 = vld [vmem:[#allocation3 + $0x11c0] sm:$0xff]
    %v797 = vld [vmem:[#allocation3 + $0x11c8] sm:$0xff]
    %v798 = vld [vmem:[#allocation3 + $0x11d0] sm:$0xff]
    %v799 = vld [vmem:[#allocation3 + $0x11d8] sm:$0xff]
    %v800 = vld [vmem:[#allocation3 + $0x11e0] sm:$0xff]
    %v801 = vld [vmem:[#allocation3 + $0x11e8] sm:$0xff]
    %v802 = vld [vmem:[#allocation3 + $0x11f0] sm:$0xff]
    %v803 = vld [vmem:[#allocation3 + $0x11f8] sm:$0xff]
    %v804 = vld [vmem:[#allocation3 + $0x1200] sm:$0xff]
    %v805 = vld [vmem:[#allocation3 + $0x1208] sm:$0xff]
    %v806 = vld [vmem:[#allocation3 + $0x1210] sm:$0xff]
    %v807 = vld [vmem:[#allocation3 + $0x1218] sm:$0xff]
    %v808 = vld [vmem:[#allocation3 + $0x1220] sm:$0xff]
    %v809 = vld [vmem:[#allocation3 + $0x1228] sm:$0xff]
    %v810 = vld [vmem:[#allocation3 + $0x1230] sm:$0xff]
    %v811 = vld [vmem:[#allocation3 + $0x1238] sm:$0xff]
    %v812 = vld [vmem:[#allocation3 + $0x1240] sm:$0xff]
    %v813 = vld [vmem:[#allocation3 + $0x1248] sm:$0xff]
    %v814 = vld [vmem:[#allocation3 + $0x1250] sm:$0xff]
    %v815 = vld [vmem:[#allocation3 + $0x1258] sm:$0xff]
    %v816 = vld [vmem:[#allocation3 + $0x1260] sm:$0xff]
    %v817 = vld [vmem:[#allocation3 + $0x1268] sm:$0xff]
    %v818 = vld [vmem:[#allocation3 + $0x1270] sm:$0xff]
    %v819 = vld [vmem:[#allocation3 + $0x1278] sm:$0xff]
    %v820 = vld [vmem:[#allocation3 + $0x1280] sm:$0xff]
    %v821 = vld [vmem:[#allocation3 + $0x1288] sm:$0xff]
    %v822 = vld [vmem:[#allocation3 + $0x1290] sm:$0xff]
    %v823 = vld [vmem:[#allocation3 + $0x1298] sm:$0xff]
    %v824 = vld [vmem:[#allocation3 + $0x12a0] sm:$0xff]
    %v825 = vld [vmem:[#allocation3 + $0x12a8] sm:$0xff]
    %v826 = vld [vmem:[#allocation3 + $0x12b0] sm:$0xff]
    %v827 = vld [vmem:[#allocation3 + $0x12b8] sm:$0xff]
    %v828 = vld [vmem:[#allocation3 + $0x12c0] sm:$0xff]
    %v829 = vld [vmem:[#allocation3 + $0x12c8] sm:$0xff]
    %v830 = vld [vmem:[#allocation3 + $0x12d0] sm:$0xff]
    %v831 = vld [vmem:[#allocation3 + $0x12d8] sm:$0xff]
    %v832 = vld [vmem:[#allocation3 + $0x12e0] sm:$0xff]
    %v833 = vld [vmem:[#allocation3 + $0x12e8] sm:$0xff]
    %v834 = vld [vmem:[#allocation3 + $0x12f0] sm:$0xff]
    %v835 = vld [vmem:[#allocation3 + $0x12f8] sm:$0xff]
    %v836 = vld [vmem:[#allocation3 + $0x1300] sm:$0xff]
    %v837 = vld [vmem:[#allocation3 + $0x1308] sm:$0xff]
    %v838 = vld [vmem:[#allocation3 + $0x1310] sm:$0xff]
    %v839 = vld [vmem:[#allocation3 + $0x1318] sm:$0xff]
    %v840 = vld [vmem:[#allocation3 + $0x1320] sm:$0xff]
    %v841 = vld [vmem:[#allocation3 + $0x1328] sm:$0xff]
    %v842 = vld [vmem:[#allocation3 + $0x1330] sm:$0xff]
    %v843 = vld [vmem:[#allocation3 + $0x1338] sm:$0xff]
    %v844 = vld [vmem:[#allocation3 + $0x1340] sm:$0xff]
    %v845 = vld [vmem:[#allocation3 + $0x1348] sm:$0xff]
    %v846 = vld [vmem:[#allocation3 + $0x1350] sm:$0xff]
    %v847 = vld [vmem:[#allocation3 + $0x1358] sm:$0xff]
    %v848 = vld [vmem:[#allocation3 + $0x1360] sm:$0xff]
    %v849 = vld [vmem:[#allocation3 + $0x1368] sm:$0xff]
    %v850 = vld [vmem:[#allocation3 + $0x1370] sm:$0xff]
    %v851 = vld [vmem:[#allocation3 + $0x1378] sm:$0xff]
    %v852 = vld [vmem:[#allocation3 + $0x1380] sm:$0xff]
    %v853 = vld [vmem:[#allocation3 + $0x1388] sm:$0xff]
    %v854 = vld [vmem:[#allocation3 + $0x1390] sm:$0xff]
    %v855 = vld [vmem:[#allocation3 + $0x1398] sm:$0xff]
    %v856 = vld [vmem:[#allocation3 + $0x13a0] sm:$0xff]
    %v857 = vld [vmem:[#allocation3 + $0x13a8] sm:$0xff]
    %v858 = vld [vmem:[#allocation3 + $0x13b0] sm:$0xff]
    %v859 = vld [vmem:[#allocation3 + $0x13b8] sm:$0xff]
    %v860 = vld [vmem:[#allocation3 + $0x13c0] sm:$0xff]
    %v861 = vld [vmem:[#allocation3 + $0x13c8] sm:$0xff]
    %v862 = vld [vmem:[#allocation3 + $0x13d0] sm:$0xff]
    %v863 = vld [vmem:[#allocation3 + $0x13d8] sm:$0xff]
    %v864 = vld [vmem:[#allocation3 + $0x13e0] sm:$0xff]
    %v865 = vld [vmem:[#allocation3 + $0x13e8] sm:$0xff]
    %v866 = vld [vmem:[#allocation3 + $0x13f0] sm:$0xff]
    %v867 = vld [vmem:[#allocation3 + $0x13f8] sm:$0xff]
    %v868 = vld [vmem:[#allocation3 + $0x1400] sm:$0xff]
    %v869 = vld [vmem:[#allocation3 + $0x1408] sm:$0xff]
    %v870 = vld [vmem:[#allocation3 + $0x1410] sm:$0xff]
    %v871 = vld [vmem:[#allocation3 + $0x1418] sm:$0xff]
    %v872 = vld [vmem:[#allocation3 + $0x1420] sm:$0xff]
    %v873 = vld [vmem:[#allocation3 + $0x1428] sm:$0xff]
    %v874 = vld [vmem:[#allocation3 + $0x1430] sm:$0xff]
    %v875 = vld [vmem:[#allocation3 + $0x1438] sm:$0xff]
    %v876 = vld [vmem:[#allocation3 + $0x1440] sm:$0xff]
    %v877 = vld [vmem:[#allocation3 + $0x1448] sm:$0xff]
    %v878 = vld [vmem:[#allocation3 + $0x1450] sm:$0xff]
    %v879 = vld [vmem:[#allocation3 + $0x1458] sm:$0xff]
    %v880 = vld [vmem:[#allocation3 + $0x1460] sm:$0xff]
    %v881 = vld [vmem:[#allocation3 + $0x1468] sm:$0xff]
    %v882 = vld [vmem:[#allocation3 + $0x1470] sm:$0xff]
    %v883 = vld [vmem:[#allocation3 + $0x1478] sm:$0xff]
    %v884 = vld [vmem:[#allocation3 + $0x1480] sm:$0xff]
    %v885 = vld [vmem:[#allocation3 + $0x1488] sm:$0xff]
    %v886 = vld [vmem:[#allocation3 + $0x1490] sm:$0xff]
    %v887 = vld [vmem:[#allocation3 + $0x1498] sm:$0xff]
    %v888 = vld [vmem:[#allocation3 + $0x14a0] sm:$0xff]
    %v889 = vld [vmem:[#allocation3 + $0x14a8] sm:$0xff]
    %v890 = vld [vmem:[#allocation3 + $0x14b0] sm:$0xff]
    %v891 = vld [vmem:[#allocation3 + $0x14b8] sm:$0xff]
    %v892 = vld [vmem:[#allocation3 + $0x14c0] sm:$0xff]
    %v893 = vld [vmem:[#allocation3 + $0x14c8] sm:$0xff]
    %v894 = vld [vmem:[#allocation3 + $0x14d0] sm:$0xff]
    %v895 = vld [vmem:[#allocation3 + $0x14d8] sm:$0xff]
    %v896 = vld [vmem:[#allocation3 + $0x14e0] sm:$0xff]
    %v897 = vld [vmem:[#allocation3 + $0x14e8] sm:$0xff]
    %v898 = vld [vmem:[#allocation3 + $0x14f0] sm:$0xff]
    %v899 = vld [vmem:[#allocation3 + $0x14f8] sm:$0xff]
    %v900 = vld [vmem:[#allocation3 + $0x1500] sm:$0xff]
    %v901 = vld [vmem:[#allocation3 + $0x1508] sm:$0xff]
    %v902 = vld [vmem:[#allocation3 + $0x1510] sm:$0xff]
    %v903 = vld [vmem:[#allocation3 + $0x1518] sm:$0xff]
    %v904 = vld [vmem:[#allocation3 + $0x1520] sm:$0xff]
    %v905 = vld [vmem:[#allocation3 + $0x1528] sm:$0xff]
    %v906 = vld [vmem:[#allocation3 + $0x1530] sm:$0xff]
    %v907 = vld [vmem:[#allocation3 + $0x1538] sm:$0xff]
    %v908 = vld [vmem:[#allocation3 + $0x1540] sm:$0xff]
    %v909 = vld [vmem:[#allocation3 + $0x1548] sm:$0xff]
    %v910 = vld [vmem:[#allocation3 + $0x1550] sm:$0xff]
    %v911 = vld [vmem:[#allocation3 + $0x1558] sm:$0xff]
    %v912 = vld [vmem:[#allocation3 + $0x1560] sm:$0xff]
    %v913 = vld [vmem:[#allocation3 + $0x1568] sm:$0xff]
    %v914 = vld [vmem:[#allocation3 + $0x1570] sm:$0xff]
    %v915 = vld [vmem:[#allocation3 + $0x1578] sm:$0xff]
    %v916 = vld [vmem:[#allocation3 + $0x1580] sm:$0xff]
    %v917 = vld [vmem:[#allocation3 + $0x1588] sm:$0xff]
    %v918 = vld [vmem:[#allocation3 + $0x1590] sm:$0xff]
    %v919 = vld [vmem:[#allocation3 + $0x1598] sm:$0xff]
    %v920 = vld [vmem:[#allocation3 + $0x15a0] sm:$0xff]
    %v921 = vld [vmem:[#allocation3 + $0x15a8] sm:$0xff]
    %v922 = vld [vmem:[#allocation3 + $0x15b0] sm:$0xff]
    %v923 = vld [vmem:[#allocation3 + $0x15b8] sm:$0xff]
    %v924 = vld [vmem:[#allocation3 + $0x15c0] sm:$0xff]
    %v925 = vld [vmem:[#allocation3 + $0x15c8] sm:$0xff]
    %v926 = vld [vmem:[#allocation3 + $0x15d0] sm:$0xff]
    %v927 = vld [vmem:[#allocation3 + $0x15d8] sm:$0xff]
    %v928 = vld [vmem:[#allocation3 + $0x15e0] sm:$0xff]
    %v929 = vld [vmem:[#allocation3 + $0x15e8] sm:$0xff]
    %v930 = vld [vmem:[#allocation3 + $0x15f0] sm:$0xff]
    %v931 = vld [vmem:[#allocation3 + $0x15f8] sm:$0xff]
    %v932 = vld [vmem:[#allocation3 + $0x1600] sm:$0xff]
    %v933 = vld [vmem:[#allocation3 + $0x1608] sm:$0xff]
    %v934 = vld [vmem:[#allocation3 + $0x1610] sm:$0xff]
    %v935 = vld [vmem:[#allocation3 + $0x1618] sm:$0xff]
    %v936 = vld [vmem:[#allocation3 + $0x1620] sm:$0xff]
    %v937 = vld [vmem:[#allocation3 + $0x1628] sm:$0xff]
    %v938 = vld [vmem:[#allocation3 + $0x1630] sm:$0xff]
    %v939 = vld [vmem:[#allocation3 + $0x1638] sm:$0xff]
    %v940 = vld [vmem:[#allocation3 + $0x1640] sm:$0xff]
    %v941 = vld [vmem:[#allocation3 + $0x1648] sm:$0xff]
    %v942 = vld [vmem:[#allocation3 + $0x1650] sm:$0xff]
    %v943 = vld [vmem:[#allocation3 + $0x1658] sm:$0xff]
    %v944 = vld [vmem:[#allocation3 + $0x1660] sm:$0xff]
    %v945 = vld [vmem:[#allocation3 + $0x1668] sm:$0xff]
    %v946 = vld [vmem:[#allocation3 + $0x1670] sm:$0xff]
    %v947 = vld [vmem:[#allocation3 + $0x1678] sm:$0xff]
    %v948 = vld [vmem:[#allocation3 + $0x1680] sm:$0xff]
    %v949 = vld [vmem:[#allocation3 + $0x1688] sm:$0xff]
    %v950 = vld [vmem:[#allocation3 + $0x1690] sm:$0xff]
    %v951 = vld [vmem:[#allocation3 + $0x1698] sm:$0xff]
    %v952 = vld [vmem:[#allocation3 + $0x16a0] sm:$0xff]
    %v953 = vld [vmem:[#allocation3 + $0x16a8] sm:$0xff]
    %v954 = vld [vmem:[#allocation3 + $0x16b0] sm:$0xff]
    %v955 = vld [vmem:[#allocation3 + $0x16b8] sm:$0xff]
    %v956 = vld [vmem:[#allocation3 + $0x16c0] sm:$0xff]
    %v957 = vld [vmem:[#allocation3 + $0x16c8] sm:$0xff]
    %v958 = vld [vmem:[#allocation3 + $0x16d0] sm:$0xff]
    %v959 = vld [vmem:[#allocation3 + $0x16d8] sm:$0xff]
    %v960 = vld [vmem:[#allocation3 + $0x16e0] sm:$0xff]
    %v961 = vld [vmem:[#allocation3 + $0x16e8] sm:$0xff]
    %v962 = vld [vmem:[#allocation3 + $0x16f0] sm:$0xff]
    %v963 = vld [vmem:[#allocation3 + $0x16f8] sm:$0xff]
    %v964 = vld [vmem:[#allocation3 + $0x1700] sm:$0xff]
    %v965 = vld [vmem:[#allocation3 + $0x1708] sm:$0xff]
    %v966 = vld [vmem:[#allocation3 + $0x1710] sm:$0xff]
    %v967 = vld [vmem:[#allocation3 + $0x1718] sm:$0xff]
    %v968 = vld [vmem:[#allocation3 + $0x1720] sm:$0xff]
    %v969 = vld [vmem:[#allocation3 + $0x1728] sm:$0xff]
    %v970 = vld [vmem:[#allocation3 + $0x1730] sm:$0xff]
    %v971 = vld [vmem:[#allocation3 + $0x1738] sm:$0xff]
    %v972 = vld [vmem:[#allocation3 + $0x1740] sm:$0xff]
    %v973 = vld [vmem:[#allocation3 + $0x1748] sm:$0xff]
    %v974 = vld [vmem:[#allocation3 + $0x1750] sm:$0xff]
    %v975 = vld [vmem:[#allocation3 + $0x1758] sm:$0xff]
    %v976 = vld [vmem:[#allocation3 + $0x1760] sm:$0xff]
    %v977 = vld [vmem:[#allocation3 + $0x1768] sm:$0xff]
    %v978 = vld [vmem:[#allocation3 + $0x1770] sm:$0xff]
    %v979 = vld [vmem:[#allocation3 + $0x1778] sm:$0xff]
    %v980 = vld [vmem:[#allocation3 + $0x1780] sm:$0xff]
    %v981 = vld [vmem:[#allocation3 + $0x1788] sm:$0xff]
    %v982 = vld [vmem:[#allocation3 + $0x1790] sm:$0xff]
    %v983 = vld [vmem:[#allocation3 + $0x1798] sm:$0xff]
    %v984 = vld [vmem:[#allocation3 + $0x17a0] sm:$0xff]
    %v985 = vld [vmem:[#allocation3 + $0x17a8] sm:$0xff]
    %v986 = vld [vmem:[#allocation3 + $0x17b0] sm:$0xff]
    %v987 = vld [vmem:[#allocation3 + $0x17b8] sm:$0xff]
    %v988 = vld [vmem:[#allocation3 + $0x17c0] sm:$0xff]
    %v989 = vld [vmem:[#allocation3 + $0x17c8] sm:$0xff]
    %v990 = vld [vmem:[#allocation3 + $0x17d0] sm:$0xff]
    %v991 = vld [vmem:[#allocation3 + $0x17d8] sm:$0xff]
    %v992 = vld [vmem:[#allocation3 + $0x17e0] sm:$0xff]
    %v993 = vld [vmem:[#allocation3 + $0x17e8] sm:$0xff]
    %v994 = vld [vmem:[#allocation3 + $0x17f0] sm:$0xff]
    %v995 = vld [vmem:[#allocation3 + $0x17f8] sm:$0xff]
    %v996 = vld [vmem:[#allocation3 + $0x1800] sm:$0xff]
    %v997 = vld [vmem:[#allocation3 + $0x1808] sm:$0xff]
    %v998 = vld [vmem:[#allocation3 + $0x1810] sm:$0xff]
    %v999 = vld [vmem:[#allocation3 + $0x1818] sm:$0xff]
    %v1000 = vld [vmem:[#allocation3 + $0x1820] sm:$0xff]
    %v1001 = vld [vmem:[#allocation3 + $0x1828] sm:$0xff]
    %v1002 = vld [vmem:[#allocation3 + $0x1830] sm:$0xff]
    %v1003 = vld [vmem:[#allocation3 + $0x1838] sm:$0xff]
    %v1004 = vld [vmem:[#allocation3 + $0x1840] sm:$0xff]
    %v1005 = vld [vmem:[#allocation3 + $0x1848] sm:$0xff]
    %v1006 = vld [vmem:[#allocation3 + $0x1850] sm:$0xff]
    %v1007 = vld [vmem:[#allocation3 + $0x1858] sm:$0xff]
    %v1008 = vld [vmem:[#allocation3 + $0x1860] sm:$0xff]
    %v1009 = vld [vmem:[#allocation3 + $0x1868] sm:$0xff]
    %v1010 = vld [vmem:[#allocation3 + $0x1870] sm:$0xff]
    %v1011 = vld [vmem:[#allocation3 + $0x1878] sm:$0xff]
    %v1012 = vld [vmem:[#allocation3 + $0x1880] sm:$0xff]
    %v1013 = vld [vmem:[#allocation3 + $0x1888] sm:$0xff]
    %v1014 = vld [vmem:[#allocation3 + $0x1890] sm:$0xff]
    %v1015 = vld [vmem:[#allocation3 + $0x1898] sm:$0xff]
    %v1016 = vld [vmem:[#allocation3 + $0x18a0] sm:$0xff]
    %v1017 = vld [vmem:[#allocation3 + $0x18a8] sm:$0xff]
    %v1018 = vld [vmem:[#allocation3 + $0x18b0] sm:$0xff]
    %v1019 = vld [vmem:[#allocation3 + $0x18b8] sm:$0xff]
    %v1020 = vld [vmem:[#allocation3 + $0x18c0] sm:$0xff]
    %v1021 = vld [vmem:[#allocation3 + $0x18c8] sm:$0xff]
    %v1022 = vld [vmem:[#allocation3 + $0x18d0] sm:$0xff]
    %v1023 = vld [vmem:[#allocation3 + $0x18d8] sm:$0xff]
    %v1024 = vld [vmem:[#allocation3 + $0x18e0] sm:$0xff]
    %v1025 = vld [vmem:[#allocation3 + $0x18e8] sm:$0xff]
    %v1026 = vld [vmem:[#allocation3 + $0x18f0] sm:$0xff]
    %v1027 = vld [vmem:[#allocation3 + $0x18f8] sm:$0xff]
    %v1028 = vld [vmem:[#allocation3 + $0x1900] sm:$0xff]
    %v1029 = vld [vmem:[#allocation3 + $0x1908] sm:$0xff]
    %v1030 = vld [vmem:[#allocation3 + $0x1910] sm:$0xff]
    %v1031 = vld [vmem:[#allocation3 + $0x1918] sm:$0xff]
    %v1032 = vld [vmem:[#allocation3 + $0x1920] sm:$0xff]
    %v1033 = vld [vmem:[#allocation3 + $0x1928] sm:$0xff]
    %v1034 = vld [vmem:[#allocation3 + $0x1930] sm:$0xff]
    %v1035 = vld [vmem:[#allocation3 + $0x1938] sm:$0xff]
    %v1036 = vld [vmem:[#allocation3 + $0x1940] sm:$0xff]
    %v1037 = vld [vmem:[#allocation3 + $0x1948] sm:$0xff]
    %v1038 = vld [vmem:[#allocation3 + $0x1950] sm:$0xff]
    %v1039 = vld [vmem:[#allocation3 + $0x1958] sm:$0xff]
    %v1040 = vld [vmem:[#allocation3 + $0x1960] sm:$0xff]
    %v1041 = vld [vmem:[#allocation3 + $0x1968] sm:$0xff]
    %v1042 = vld [vmem:[#allocation3 + $0x1970] sm:$0xff]
    %v1043 = vld [vmem:[#allocation3 + $0x1978] sm:$0xff]
    %v1044 = vld [vmem:[#allocation3 + $0x1980] sm:$0xff]
    %v1045 = vld [vmem:[#allocation3 + $0x1988] sm:$0xff]
    %v1046 = vld [vmem:[#allocation3 + $0x1990] sm:$0xff]
    %v1047 = vld [vmem:[#allocation3 + $0x1998] sm:$0xff]
    %v1048 = vld [vmem:[#allocation3 + $0x19a0] sm:$0xff]
    %v1049 = vld [vmem:[#allocation3 + $0x19a8] sm:$0xff]
    %v1050 = vld [vmem:[#allocation3 + $0x19b0] sm:$0xff]
    %v1051 = vld [vmem:[#allocation3 + $0x19b8] sm:$0xff]
    %v1052 = vld [vmem:[#allocation3 + $0x19c0] sm:$0xff]
    %v1053 = vld [vmem:[#allocation3 + $0x19c8] sm:$0xff]
    %v1054 = vld [vmem:[#allocation3 + $0x19d0] sm:$0xff]
    %v1055 = vld [vmem:[#allocation3 + $0x19d8] sm:$0xff]
    %v1056 = vld [vmem:[#allocation3 + $0x19e0] sm:$0xff]
    %v1057 = vld [vmem:[#allocation3 + $0x19e8] sm:$0xff]
    %v1058 = vld [vmem:[#allocation3 + $0x19f0] sm:$0xff]
    %v1059 = vld [vmem:[#allocation3 + $0x19f8] sm:$0xff]
    %v1060 = vld [vmem:[#allocation3 + $0x1a00] sm:$0xff]
    %v1061 = vld [vmem:[#allocation3 + $0x1a08] sm:$0xff]
    %v1062 = vld [vmem:[#allocation3 + $0x1a10] sm:$0xff]
    %v1063 = vld [vmem:[#allocation3 + $0x1a18] sm:$0xff]
    %v1064 = vld [vmem:[#allocation3 + $0x1a20] sm:$0xff]
    %v1065 = vld [vmem:[#allocation3 + $0x1a28] sm:$0xff]
    %v1066 = vld [vmem:[#allocation3 + $0x1a30] sm:$0xff]
    %v1067 = vld [vmem:[#allocation3 + $0x1a38] sm:$0xff]
    %v1068 = vld [vmem:[#allocation3 + $0x1a40] sm:$0xff]
    %v1069 = vld [vmem:[#allocation3 + $0x1a48] sm:$0xff]
    %v1070 = vld [vmem:[#allocation3 + $0x1a50] sm:$0xff]
    %v1071 = vld [vmem:[#allocation3 + $0x1a58] sm:$0xff]
    %v1072 = vld [vmem:[#allocation3 + $0x1a60] sm:$0xff]
    %v1073 = vld [vmem:[#allocation3 + $0x1a68] sm:$0xff]
    %v1074 = vld [vmem:[#allocation3 + $0x1a70] sm:$0xff]
    %v1075 = vld [vmem:[#allocation3 + $0x1a78] sm:$0xff]
    %v1076 = vld [vmem:[#allocation3 + $0x1a80] sm:$0xff]
    %v1077 = vld [vmem:[#allocation3 + $0x1a88] sm:$0xff]
    %v1078 = vld [vmem:[#allocation3 + $0x1a90] sm:$0xff]
    %v1079 = vld [vmem:[#allocation3 + $0x1a98] sm:$0xff]
    %v1080 = vld [vmem:[#allocation3 + $0x1aa0] sm:$0xff]
    %v1081 = vld [vmem:[#allocation3 + $0x1aa8] sm:$0xff]
    %v1082 = vld [vmem:[#allocation3 + $0x1ab0] sm:$0xff]
    %v1083 = vld [vmem:[#allocation3 + $0x1ab8] sm:$0xff]
    %v1084 = vld [vmem:[#allocation3 + $0x1ac0] sm:$0xff]
    %v1085 = vld [vmem:[#allocation3 + $0x1ac8] sm:$0xff]
    %v1086 = vld [vmem:[#allocation3 + $0x1ad0] sm:$0xff]
    %v1087 = vld [vmem:[#allocation3 + $0x1ad8] sm:$0xff]
    %v1088 = vld [vmem:[#allocation3 + $0x1ae0] sm:$0xff]
    %v1089 = vld [vmem:[#allocation3 + $0x1ae8] sm:$0xff]
    %v1090 = vld [vmem:[#allocation3 + $0x1af0] sm:$0xff]
    %v1091 = vld [vmem:[#allocation3 + $0x1af8] sm:$0xff]
    %v1092 = vld [vmem:[#allocation3 + $0x1b00] sm:$0xff]
    %v1093 = vld [vmem:[#allocation3 + $0x1b08] sm:$0xff]
    %v1094 = vld [vmem:[#allocation3 + $0x1b10] sm:$0xff]
    %v1095 = vld [vmem:[#allocation3 + $0x1b18] sm:$0xff]
    %v1096 = vld [vmem:[#allocation3 + $0x1b20] sm:$0xff]
    %v1097 = vld [vmem:[#allocation3 + $0x1b28] sm:$0xff]
    %v1098 = vld [vmem:[#allocation3 + $0x1b30] sm:$0xff]
    %v1099 = vld [vmem:[#allocation3 + $0x1b38] sm:$0xff]
    %v1100 = vld [vmem:[#allocation3 + $0x1b40] sm:$0xff]
    %v1101 = vld [vmem:[#allocation3 + $0x1b48] sm:$0xff]
    %v1102 = vld [vmem:[#allocation3 + $0x1b50] sm:$0xff]
    %v1103 = vld [vmem:[#allocation3 + $0x1b58] sm:$0xff]
    %v1104 = vld [vmem:[#allocation3 + $0x1b60] sm:$0xff]
    %v1105 = vld [vmem:[#allocation3 + $0x1b68] sm:$0xff]
    %v1106 = vld [vmem:[#allocation3 + $0x1b70] sm:$0xff]
    %v1107 = vld [vmem:[#allocation3 + $0x1b78] sm:$0xff]
    %v1108 = vld [vmem:[#allocation3 + $0x1b80] sm:$0xff]
    %v1109 = vld [vmem:[#allocation3 + $0x1b88] sm:$0xff]
    %v1110 = vld [vmem:[#allocation3 + $0x1b90] sm:$0xff]
    %v1111 = vld [vmem:[#allocation3 + $0x1b98] sm:$0xff]
    %v1112 = vld [vmem:[#allocation3 + $0x1ba0] sm:$0xff]
    %v1113 = vld [vmem:[#allocation3 + $0x1ba8] sm:$0xff]
    %v1114 = vld [vmem:[#allocation3 + $0x1bb0] sm:$0xff]
    %v1115 = vld [vmem:[#allocation3 + $0x1bb8] sm:$0xff]
    %v1116 = vld [vmem:[#allocation3 + $0x1bc0] sm:$0xff]
    %v1117 = vld [vmem:[#allocation3 + $0x1bc8] sm:$0xff]
    %v1118 = vld [vmem:[#allocation3 + $0x1bd0] sm:$0xff]
    %v1119 = vld [vmem:[#allocation3 + $0x1bd8] sm:$0xff]
    %v1120 = vld [vmem:[#allocation3 + $0x1be0] sm:$0xff]
    %v1121 = vld [vmem:[#allocation3 + $0x1be8] sm:$0xff]
    %v1122 = vld [vmem:[#allocation3 + $0x1bf0] sm:$0xff]
    %v1123 = vld [vmem:[#allocation3 + $0x1bf8] sm:$0xff]
    %v1124 = vld [vmem:[#allocation3 + $0x1c00] sm:$0xff]
    %v1125 = vld [vmem:[#allocation3 + $0x1c08] sm:$0xff]
    %v1126 = vld [vmem:[#allocation3 + $0x1c10] sm:$0xff]
    %v1127 = vld [vmem:[#allocation3 + $0x1c18] sm:$0xff]
    %v1128 = vld [vmem:[#allocation3 + $0x1c20] sm:$0xff]
    %v1129 = vld [vmem:[#allocation3 + $0x1c28] sm:$0xff]
    %v1130 = vld [vmem:[#allocation3 + $0x1c30] sm:$0xff]
    %v1131 = vld [vmem:[#allocation3 + $0x1c38] sm:$0xff]
    %v1132 = vld [vmem:[#allocation3 + $0x1c40] sm:$0xff]
    %v1133 = vld [vmem:[#allocation3 + $0x1c48] sm:$0xff]
    %v1134 = vld [vmem:[#allocation3 + $0x1c50] sm:$0xff]
    %v1135 = vld [vmem:[#allocation3 + $0x1c58] sm:$0xff]
    %v1136 = vld [vmem:[#allocation3 + $0x1c60] sm:$0xff]
    %v1137 = vld [vmem:[#allocation3 + $0x1c68] sm:$0xff]
    %v1138 = vld [vmem:[#allocation3 + $0x1c70] sm:$0xff]
    %v1139 = vld [vmem:[#allocation3 + $0x1c78] sm:$0xff]
    %v1140 = vld [vmem:[#allocation3 + $0x1c80] sm:$0xff]
    %v1141 = vld [vmem:[#allocation3 + $0x1c88] sm:$0xff]
    %v1142 = vld [vmem:[#allocation3 + $0x1c90] sm:$0xff]
    %v1143 = vld [vmem:[#allocation3 + $0x1c98] sm:$0xff]
    %v1144 = vld [vmem:[#allocation3 + $0x1ca0] sm:$0xff]
    %v1145 = vld [vmem:[#allocation3 + $0x1ca8] sm:$0xff]
    %v1146 = vld [vmem:[#allocation3 + $0x1cb0] sm:$0xff]
    %v1147 = vld [vmem:[#allocation3 + $0x1cb8] sm:$0xff]
    %v1148 = vld [vmem:[#allocation3 + $0x1cc0] sm:$0xff]
    %v1149 = vld [vmem:[#allocation3 + $0x1cc8] sm:$0xff]
    %v1150 = vld [vmem:[#allocation3 + $0x1cd0] sm:$0xff]
    %v1151 = vld [vmem:[#allocation3 + $0x1cd8] sm:$0xff]
    %v1152 = vld [vmem:[#allocation3 + $0x1ce0] sm:$0xff]
    %v1153 = vld [vmem:[#allocation3 + $0x1ce8] sm:$0xff]
    %v1154 = vld [vmem:[#allocation3 + $0x1cf0] sm:$0xff]
    %v1155 = vld [vmem:[#allocation3 + $0x1cf8] sm:$0xff]
    %v1156 = vld [vmem:[#allocation3 + $0x1d00] sm:$0xff]
    %v1157 = vld [vmem:[#allocation3 + $0x1d08] sm:$0xff]
    %v1158 = vld [vmem:[#allocation3 + $0x1d10] sm:$0xff]
    %v1159 = vld [vmem:[#allocation3 + $0x1d18] sm:$0xff]
    %v1160 = vld [vmem:[#allocation3 + $0x1d20] sm:$0xff]
    %v1161 = vld [vmem:[#allocation3 + $0x1d28] sm:$0xff]
    %v1162 = vld [vmem:[#allocation3 + $0x1d30] sm:$0xff]
    %v1163 = vld [vmem:[#allocation3 + $0x1d38] sm:$0xff]
    %v1164 = vld [vmem:[#allocation3 + $0x1d40] sm:$0xff]
    %v1165 = vld [vmem:[#allocation3 + $0x1d48] sm:$0xff]
    %v1166 = vld [vmem:[#allocation3 + $0x1d50] sm:$0xff]
    %v1167 = vld [vmem:[#allocation3 + $0x1d58] sm:$0xff]
    %v1168 = vld [vmem:[#allocation3 + $0x1d60] sm:$0xff]
    %v1169 = vld [vmem:[#allocation3 + $0x1d68] sm:$0xff]
    %v1170 = vld [vmem:[#allocation3 + $0x1d70] sm:$0xff]
    %v1171 = vld [vmem:[#allocation3 + $0x1d78] sm:$0xff]
    %v1172 = vld [vmem:[#allocation3 + $0x1d80] sm:$0xff]
    %v1173 = vld [vmem:[#allocation3 + $0x1d88] sm:$0xff]
    %v1174 = vld [vmem:[#allocation3 + $0x1d90] sm:$0xff]
    %v1175 = vld [vmem:[#allocation3 + $0x1d98] sm:$0xff]
    %v1176 = vld [vmem:[#allocation3 + $0x1da0] sm:$0xff]
    %v1177 = vld [vmem:[#allocation3 + $0x1da8] sm:$0xff]
    %v1178 = vld [vmem:[#allocation3 + $0x1db0] sm:$0xff]
    %v1179 = vld [vmem:[#allocation3 + $0x1db8] sm:$0xff]
    %v1180 = vld [vmem:[#allocation3 + $0x1dc0] sm:$0xff]
    %v1181 = vld [vmem:[#allocation3 + $0x1dc8] sm:$0xff]
    %v1182 = vld [vmem:[#allocation3 + $0x1dd0] sm:$0xff]
    %v1183 = vld [vmem:[#allocation3 + $0x1dd8] sm:$0xff]
    %v1184 = vld [vmem:[#allocation3 + $0x1de0] sm:$0xff]
    %v1185 = vld [vmem:[#allocation3 + $0x1de8] sm:$0xff]
    %v1186 = vld [vmem:[#allocation3 + $0x1df0] sm:$0xff]
    %v1187 = vld [vmem:[#allocation3 + $0x1df8] sm:$0xff]
    %v1188 = vld [vmem:[#allocation3 + $0x1e00] sm:$0xff]
    %v1189 = vld [vmem:[#allocation3 + $0x1e08] sm:$0xff]
    %v1190 = vld [vmem:[#allocation3 + $0x1e10] sm:$0xff]
    %v1191 = vld [vmem:[#allocation3 + $0x1e18] sm:$0xff]
    %v1192 = vld [vmem:[#allocation3 + $0x1e20] sm:$0xff]
    %v1193 = vld [vmem:[#allocation3 + $0x1e28] sm:$0xff]
    %v1194 = vld [vmem:[#allocation3 + $0x1e30] sm:$0xff]
    %v1195 = vld [vmem:[#allocation3 + $0x1e38] sm:$0xff]
    %v1196 = vld [vmem:[#allocation3 + $0x1e40] sm:$0xff]
    %v1197 = vld [vmem:[#allocation3 + $0x1e48] sm:$0xff]
    %v1198 = vld [vmem:[#allocation3 + $0x1e50] sm:$0xff]
    %v1199 = vld [vmem:[#allocation3 + $0x1e58] sm:$0xff]
    %v1200 = vld [vmem:[#allocation3 + $0x1e60] sm:$0xff]
    %v1201 = vld [vmem:[#allocation3 + $0x1e68] sm:$0xff]
    %v1202 = vld [vmem:[#allocation3 + $0x1e70] sm:$0xff]
    %v1203 = vld [vmem:[#allocation3 + $0x1e78] sm:$0xff]
    %v1204 = vld [vmem:[#allocation3 + $0x1e80] sm:$0xff]
    %v1205 = vld [vmem:[#allocation3 + $0x1e88] sm:$0xff]
    %v1206 = vld [vmem:[#allocation3 + $0x1e90] sm:$0xff]
    %v1207 = vld [vmem:[#allocation3 + $0x1e98] sm:$0xff]
    %v1208 = vld [vmem:[#allocation3 + $0x1ea0] sm:$0xff]
    %v1209 = vld [vmem:[#allocation3 + $0x1ea8] sm:$0xff]
    %v1210 = vld [vmem:[#allocation3 + $0x1eb0] sm:$0xff]
    %v1211 = vld [vmem:[#allocation3 + $0x1eb8] sm:$0xff]
    %v1212 = vld [vmem:[#allocation3 + $0x1ec0] sm:$0xff]
    %v1213 = vld [vmem:[#allocation3 + $0x1ec8] sm:$0xff]
    %v1214 = vld [vmem:[#allocation3 + $0x1ed0] sm:$0xff]
    %v1215 = vld [vmem:[#allocation3 + $0x1ed8] sm:$0xff]
    %v1216 = vld [vmem:[#allocation3 + $0x1ee0] sm:$0xff]
    %v1217 = vld [vmem:[#allocation3 + $0x1ee8] sm:$0xff]
    %v1218 = vld [vmem:[#allocation3 + $0x1ef0] sm:$0xff]
    %v1219 = vld [vmem:[#allocation3 + $0x1ef8] sm:$0xff]
    %v1220 = vld [vmem:[#allocation3 + $0x1f00] sm:$0xff]
    %v1221 = vld [vmem:[#allocation3 + $0x1f08] sm:$0xff]
    %v1222 = vld [vmem:[#allocation3 + $0x1f10] sm:$0xff]
    %v1223 = vld [vmem:[#allocation3 + $0x1f18] sm:$0xff]
    %v1224 = vld [vmem:[#allocation3 + $0x1f20] sm:$0xff]
    %v1225 = vld [vmem:[#allocation3 + $0x1f28] sm:$0xff]
    %v1226 = vld [vmem:[#allocation3 + $0x1f30] sm:$0xff]
    %v1227 = vld [vmem:[#allocation3 + $0x1f38] sm:$0xff]
    %v1228 = vld [vmem:[#allocation3 + $0x1f40] sm:$0xff]
    %v1229 = vld [vmem:[#allocation3 + $0x1f48] sm:$0xff]
    %v1230 = vld [vmem:[#allocation3 + $0x1f50] sm:$0xff]
    %v1231 = vld [vmem:[#allocation3 + $0x1f58] sm:$0xff]
    %v1232 = vld [vmem:[#allocation3 + $0x1f60] sm:$0xff]
    %v1233 = vld [vmem:[#allocation3 + $0x1f68] sm:$0xff]
    %v1234 = vld [vmem:[#allocation3 + $0x1f70] sm:$0xff]
    %v1235 = vld [vmem:[#allocation3 + $0x1f78] sm:$0xff]
    %v1236 = vld [vmem:[#allocation3 + $0x1f80] sm:$0xff]
    %v1237 = vld [vmem:[#allocation3 + $0x1f88] sm:$0xff]
    %v1238 = vld [vmem:[#allocation3 + $0x1f90] sm:$0xff]
    %v1239 = vld [vmem:[#allocation3 + $0x1f98] sm:$0xff]
    %v1240 = vld [vmem:[#allocation3 + $0x1fa0] sm:$0xff]
    %v1241 = vld [vmem:[#allocation3 + $0x1fa8] sm:$0xff]
    %v1242 = vld [vmem:[#allocation3 + $0x1fb0] sm:$0xff]
    %v1243 = vld [vmem:[#allocation3 + $0x1fb8] sm:$0xff]
    %v1244 = vld [vmem:[#allocation3 + $0x1fc0] sm:$0xff]
    %v1245 = vld [vmem:[#allocation3 + $0x1fc8] sm:$0xff]
    %v1246 = vld [vmem:[#allocation3 + $0x1fd0] sm:$0xff]
    %v1247 = vld [vmem:[#allocation3 + $0x1fd8] sm:$0xff]
    %v1248 = vld [vmem:[#allocation3 + $0x1fe0] sm:$0xff]
    %v1249 = vld [vmem:[#allocation3 + $0x1fe8] sm:$0xff]
    %v1250 = vld [vmem:[#allocation3 + $0x1ff0] sm:$0xff]
    %v1251 = vld [vmem:[#allocation3 + $0x1ff8] sm:$0xff]
    %v1252 = vld [vmem:[#allocation5] sm:$0xff]
    %v1254 = vlaneseq
    %v1255 = vshrl.u32 %v1254, 7
    %v1256 = vsub.s32 0, %v1255
    %v1257 = vrot.slane %v1252, %v1256
    %v1258 = vlaneseq
    %v1259 = vshrl.u32 %v1258, 7
    %v1260 = vsub.s32 1, %v1259
    %v1261 = vrot.slane %v1252, %v1260
    %v1262 = vlaneseq
    %v1263 = vshrl.u32 %v1262, 7
    %v1264 = vsub.s32 2, %v1263
    %v1265 = vrot.slane %v1252, %v1264
    %v1266 = vlaneseq
    %v1267 = vshrl.u32 %v1266, 7
    %v1268 = vsub.s32 3, %v1267
    %v1269 = vrot.slane %v1252, %v1268
    %v1270 = vlaneseq
    %v1271 = vshrl.u32 %v1270, 7
    %v1272 = vsub.s32 4, %v1271
    %v1273 = vrot.slane %v1252, %v1272
    %v1274 = vlaneseq
    %v1275 = vshrl.u32 %v1274, 7
    %v1276 = vsub.s32 5, %v1275
    %v1277 = vrot.slane %v1252, %v1276
    %v1278 = vlaneseq
    %v1279 = vshrl.u32 %v1278, 7
    %v1280 = vsub.s32 6, %v1279
    %v1281 = vrot.slane %v1252, %v1280
    %v1282 = vlaneseq
    %v1283 = vshrl.u32 %v1282, 7
    %v1284 = vsub.s32 7, %v1283
    %v1285 = vrot.slane %v1252, %v1284
    %v2318 = vunpack.c.l.b16 %v228
    %v2319 = vunpack.c.h.b16 %v228
    %v2320 = vunpack.c.l.b16 %v229
    %v2321 = vunpack.c.h.b16 %v229
    %v2322 = vunpack.c.l.b16 %v230
    %v2323 = vunpack.c.h.b16 %v230
    %v2324 = vunpack.c.l.b16 %v231
    %v2325 = vunpack.c.h.b16 %v231
    %v2326 = vunpack.c.l.b16 %v232
    %v2327 = vunpack.c.h.b16 %v232
    %v2328 = vunpack.c.l.b16 %v233
    %v2329 = vunpack.c.h.b16 %v233
    %v2330 = vunpack.c.l.b16 %v234
    %v2331 = vunpack.c.h.b16 %v234
    %v2332 = vunpack.c.l.b16 %v235
    %v2333 = vunpack.c.h.b16 %v235
    %v2334 = vunpack.c.l.b16 %v236
    %v2335 = vunpack.c.h.b16 %v236
    %v2336 = vunpack.c.l.b16 %v237
    %v2337 = vunpack.c.h.b16 %v237
    %v2338 = vunpack.c.l.b16 %v238
    %v2339 = vunpack.c.h.b16 %v238
    %v2340 = vunpack.c.l.b16 %v239
    %v2341 = vunpack.c.h.b16 %v239
    %v2342 = vunpack.c.l.b16 %v240
    %v2343 = vunpack.c.h.b16 %v240
    %v2344 = vunpack.c.l.b16 %v241
    %v2345 = vunpack.c.h.b16 %v241
    %v2346 = vunpack.c.l.b16 %v242
    %v2347 = vunpack.c.h.b16 %v242
    %v2348 = vunpack.c.l.b16 %v243
    %v2349 = vunpack.c.h.b16 %v243
    %v2350 = vunpack.c.l.b16 %v244
    %v2351 = vunpack.c.h.b16 %v244
    %v2352 = vunpack.c.l.b16 %v245
    %v2353 = vunpack.c.h.b16 %v245
    %v2354 = vunpack.c.l.b16 %v246
    %v2355 = vunpack.c.h.b16 %v246
    %v2356 = vunpack.c.l.b16 %v247
    %v2357 = vunpack.c.h.b16 %v247
    %v2358 = vunpack.c.l.b16 %v248
    %v2359 = vunpack.c.h.b16 %v248
    %v2360 = vunpack.c.l.b16 %v249
    %v2361 = vunpack.c.h.b16 %v249
    %v2362 = vunpack.c.l.b16 %v250
    %v2363 = vunpack.c.h.b16 %v250
    %v2364 = vunpack.c.l.b16 %v251
    %v2365 = vunpack.c.h.b16 %v251
    %v2366 = vunpack.c.l.b16 %v252
    %v2367 = vunpack.c.h.b16 %v252
    %v2368 = vunpack.c.l.b16 %v253
    %v2369 = vunpack.c.h.b16 %v253
    %v2370 = vunpack.c.l.b16 %v254
    %v2371 = vunpack.c.h.b16 %v254
    %v2372 = vunpack.c.l.b16 %v255
    %v2373 = vunpack.c.h.b16 %v255
    %v2374 = vunpack.c.l.b16 %v256
    %v2375 = vunpack.c.h.b16 %v256
    %v2376 = vunpack.c.l.b16 %v257
    %v2377 = vunpack.c.h.b16 %v257
    %v2378 = vunpack.c.l.b16 %v258
    %v2379 = vunpack.c.h.b16 %v258
    %v2380 = vunpack.c.l.b16 %v259
    %v2381 = vunpack.c.h.b16 %v259
    %v2382 = vunpack.c.l.b16 %v260
    %v2383 = vunpack.c.h.b16 %v260
    %v2384 = vunpack.c.l.b16 %v261
    %v2385 = vunpack.c.h.b16 %v261
    %v2386 = vunpack.c.l.b16 %v262
    %v2387 = vunpack.c.h.b16 %v262
    %v2388 = vunpack.c.l.b16 %v263
    %v2389 = vunpack.c.h.b16 %v263
    %v2390 = vunpack.c.l.b16 %v264
    %v2391 = vunpack.c.h.b16 %v264
    %v2392 = vunpack.c.l.b16 %v265
    %v2393 = vunpack.c.h.b16 %v265
    %v2394 = vunpack.c.l.b16 %v266
    %v2395 = vunpack.c.h.b16 %v266
    %v2396 = vunpack.c.l.b16 %v267
    %v2397 = vunpack.c.h.b16 %v267
    %v2398 = vunpack.c.l.b16 %v268
    %v2399 = vunpack.c.h.b16 %v268
    %v2400 = vunpack.c.l.b16 %v269
    %v2401 = vunpack.c.h.b16 %v269
    %v2402 = vunpack.c.l.b16 %v270
    %v2403 = vunpack.c.h.b16 %v270
    %v2404 = vunpack.c.l.b16 %v271
    %v2405 = vunpack.c.h.b16 %v271
    %v2406 = vunpack.c.l.b16 %v272
    %v2407 = vunpack.c.h.b16 %v272
    %v2408 = vunpack.c.l.b16 %v273
    %v2409 = vunpack.c.h.b16 %v273
    %v2410 = vunpack.c.l.b16 %v274
    %v2411 = vunpack.c.h.b16 %v274
    %v2412 = vunpack.c.l.b16 %v275
    %v2413 = vunpack.c.h.b16 %v275
    %v2414 = vunpack.c.l.b16 %v276
    %v2415 = vunpack.c.h.b16 %v276
    %v2416 = vunpack.c.l.b16 %v277
    %v2417 = vunpack.c.h.b16 %v277
    %v2418 = vunpack.c.l.b16 %v278
    %v2419 = vunpack.c.h.b16 %v278
    %v2420 = vunpack.c.l.b16 %v279
    %v2421 = vunpack.c.h.b16 %v279
    %v2422 = vunpack.c.l.b16 %v280
    %v2423 = vunpack.c.h.b16 %v280
    %v2424 = vunpack.c.l.b16 %v281
    %v2425 = vunpack.c.h.b16 %v281
    %v2426 = vunpack.c.l.b16 %v282
    %v2427 = vunpack.c.h.b16 %v282
    %v2428 = vunpack.c.l.b16 %v283
    %v2429 = vunpack.c.h.b16 %v283
    %v2430 = vunpack.c.l.b16 %v284
    %v2431 = vunpack.c.h.b16 %v284
    %v2432 = vunpack.c.l.b16 %v285
    %v2433 = vunpack.c.h.b16 %v285
    %v2434 = vunpack.c.l.b16 %v286
    %v2435 = vunpack.c.h.b16 %v286
    %v2436 = vunpack.c.l.b16 %v287
    %v2437 = vunpack.c.h.b16 %v287
    %v2438 = vunpack.c.l.b16 %v288
    %v2439 = vunpack.c.h.b16 %v288
    %v2440 = vunpack.c.l.b16 %v289
    %v2441 = vunpack.c.h.b16 %v289
    %v2442 = vunpack.c.l.b16 %v290
    %v2443 = vunpack.c.h.b16 %v290
    %v2444 = vunpack.c.l.b16 %v291
    %v2445 = vunpack.c.h.b16 %v291
    %v2446 = vunpack.c.l.b16 %v292
    %v2447 = vunpack.c.h.b16 %v292
    %v2448 = vunpack.c.l.b16 %v293
    %v2449 = vunpack.c.h.b16 %v293
    %v2450 = vunpack.c.l.b16 %v294
    %v2451 = vunpack.c.h.b16 %v294
    %v2452 = vunpack.c.l.b16 %v295
    %v2453 = vunpack.c.h.b16 %v295
    %v2454 = vunpack.c.l.b16 %v296
    %v2455 = vunpack.c.h.b16 %v296
    %v2456 = vunpack.c.l.b16 %v297
    %v2457 = vunpack.c.h.b16 %v297
    %v2458 = vunpack.c.l.b16 %v298
    %v2459 = vunpack.c.h.b16 %v298
    %v2460 = vunpack.c.l.b16 %v299
    %v2461 = vunpack.c.h.b16 %v299
    %v2462 = vunpack.c.l.b16 %v300
    %v2463 = vunpack.c.h.b16 %v300
    %v2464 = vunpack.c.l.b16 %v301
    %v2465 = vunpack.c.h.b16 %v301
    %v2466 = vunpack.c.l.b16 %v302
    %v2467 = vunpack.c.h.b16 %v302
    %v2468 = vunpack.c.l.b16 %v303
    %v2469 = vunpack.c.h.b16 %v303
    %v2470 = vunpack.c.l.b16 %v304
    %v2471 = vunpack.c.h.b16 %v304
    %v2472 = vunpack.c.l.b16 %v305
    %v2473 = vunpack.c.h.b16 %v305
    %v2474 = vunpack.c.l.b16 %v306
    %v2475 = vunpack.c.h.b16 %v306
    %v2476 = vunpack.c.l.b16 %v307
    %v2477 = vunpack.c.h.b16 %v307
    %v2478 = vunpack.c.l.b16 %v308
    %v2479 = vunpack.c.h.b16 %v308
    %v2480 = vunpack.c.l.b16 %v309
    %v2481 = vunpack.c.h.b16 %v309
    %v2482 = vunpack.c.l.b16 %v310
    %v2483 = vunpack.c.h.b16 %v310
    %v2484 = vunpack.c.l.b16 %v311
    %v2485 = vunpack.c.h.b16 %v311
    %v2486 = vunpack.c.l.b16 %v312
    %v2487 = vunpack.c.h.b16 %v312
    %v2488 = vunpack.c.l.b16 %v313
    %v2489 = vunpack.c.h.b16 %v313
    %v2490 = vunpack.c.l.b16 %v314
    %v2491 = vunpack.c.h.b16 %v314
    %v2492 = vunpack.c.l.b16 %v315
    %v2493 = vunpack.c.h.b16 %v315
    %v2494 = vunpack.c.l.b16 %v316
    %v2495 = vunpack.c.h.b16 %v316
    %v2496 = vunpack.c.l.b16 %v317
    %v2497 = vunpack.c.h.b16 %v317
    %v2498 = vunpack.c.l.b16 %v318
    %v2499 = vunpack.c.h.b16 %v318
    %v2500 = vunpack.c.l.b16 %v319
    %v2501 = vunpack.c.h.b16 %v319
    %v2502 = vunpack.c.l.b16 %v320
    %v2503 = vunpack.c.h.b16 %v320
    %v2504 = vunpack.c.l.b16 %v321
    %v2505 = vunpack.c.h.b16 %v321
    %v2506 = vunpack.c.l.b16 %v322
    %v2507 = vunpack.c.h.b16 %v322
    %v2508 = vunpack.c.l.b16 %v323
    %v2509 = vunpack.c.h.b16 %v323
    %v2510 = vunpack.c.l.b16 %v324
    %v2511 = vunpack.c.h.b16 %v324
    %v2512 = vunpack.c.l.b16 %v325
    %v2513 = vunpack.c.h.b16 %v325
    %v2514 = vunpack.c.l.b16 %v326
    %v2515 = vunpack.c.h.b16 %v326
    %v2516 = vunpack.c.l.b16 %v327
    %v2517 = vunpack.c.h.b16 %v327
    %v2518 = vunpack.c.l.b16 %v328
    %v2519 = vunpack.c.h.b16 %v328
    %v2520 = vunpack.c.l.b16 %v329
    %v2521 = vunpack.c.h.b16 %v329
    %v2522 = vunpack.c.l.b16 %v330
    %v2523 = vunpack.c.h.b16 %v330
    %v2524 = vunpack.c.l.b16 %v331
    %v2525 = vunpack.c.h.b16 %v331
    %v2526 = vunpack.c.l.b16 %v332
    %v2527 = vunpack.c.h.b16 %v332
    %v2528 = vunpack.c.l.b16 %v333
    %v2529 = vunpack.c.h.b16 %v333
    %v2530 = vunpack.c.l.b16 %v334
    %v2531 = vunpack.c.h.b16 %v334
    %v2532 = vunpack.c.l.b16 %v335
    %v2533 = vunpack.c.h.b16 %v335
    %v2534 = vunpack.c.l.b16 %v336
    %v2535 = vunpack.c.h.b16 %v336
    %v2536 = vunpack.c.l.b16 %v337
    %v2537 = vunpack.c.h.b16 %v337
    %v2538 = vunpack.c.l.b16 %v338
    %v2539 = vunpack.c.h.b16 %v338
    %v2540 = vunpack.c.l.b16 %v339
    %v2541 = vunpack.c.h.b16 %v339
    %v2542 = vunpack.c.l.b16 %v340
    %v2543 = vunpack.c.h.b16 %v340
    %v2544 = vunpack.c.l.b16 %v341
    %v2545 = vunpack.c.h.b16 %v341
    %v2546 = vunpack.c.l.b16 %v342
    %v2547 = vunpack.c.h.b16 %v342
    %v2548 = vunpack.c.l.b16 %v343
    %v2549 = vunpack.c.h.b16 %v343
    %v2550 = vunpack.c.l.b16 %v344
    %v2551 = vunpack.c.h.b16 %v344
    %v2552 = vunpack.c.l.b16 %v345
    %v2553 = vunpack.c.h.b16 %v345
    %v2554 = vunpack.c.l.b16 %v346
    %v2555 = vunpack.c.h.b16 %v346
    %v2556 = vunpack.c.l.b16 %v347
    %v2557 = vunpack.c.h.b16 %v347
    %v2558 = vunpack.c.l.b16 %v348
    %v2559 = vunpack.c.h.b16 %v348
    %v2560 = vunpack.c.l.b16 %v349
    %v2561 = vunpack.c.h.b16 %v349
    %v2562 = vunpack.c.l.b16 %v350
    %v2563 = vunpack.c.h.b16 %v350
    %v2564 = vunpack.c.l.b16 %v351
    %v2565 = vunpack.c.h.b16 %v351
    %v2566 = vunpack.c.l.b16 %v352
    %v2567 = vunpack.c.h.b16 %v352
    %v2568 = vunpack.c.l.b16 %v353
    %v2569 = vunpack.c.h.b16 %v353
    %v2570 = vunpack.c.l.b16 %v354
    %v2571 = vunpack.c.h.b16 %v354
    %v2572 = vunpack.c.l.b16 %v355
    %v2573 = vunpack.c.h.b16 %v355
    %v2574 = vunpack.c.l.b16 %v356
    %v2575 = vunpack.c.h.b16 %v356
    %v2576 = vunpack.c.l.b16 %v357
    %v2577 = vunpack.c.h.b16 %v357
    %v2578 = vunpack.c.l.b16 %v358
    %v2579 = vunpack.c.h.b16 %v358
    %v2580 = vunpack.c.l.b16 %v359
    %v2581 = vunpack.c.h.b16 %v359
    %v2582 = vunpack.c.l.b16 %v360
    %v2583 = vunpack.c.h.b16 %v360
    %v2584 = vunpack.c.l.b16 %v361
    %v2585 = vunpack.c.h.b16 %v361
    %v2586 = vunpack.c.l.b16 %v362
    %v2587 = vunpack.c.h.b16 %v362
    %v2588 = vunpack.c.l.b16 %v363
    %v2589 = vunpack.c.h.b16 %v363
    %v2590 = vunpack.c.l.b16 %v364
    %v2591 = vunpack.c.h.b16 %v364
    %v2592 = vunpack.c.l.b16 %v365
    %v2593 = vunpack.c.h.b16 %v365
    %v2594 = vunpack.c.l.b16 %v366
    %v2595 = vunpack.c.h.b16 %v366
    %v2596 = vunpack.c.l.b16 %v367
    %v2597 = vunpack.c.h.b16 %v367
    %v2598 = vunpack.c.l.b16 %v368
    %v2599 = vunpack.c.h.b16 %v368
    %v2600 = vunpack.c.l.b16 %v369
    %v2601 = vunpack.c.h.b16 %v369
    %v2602 = vunpack.c.l.b16 %v370
    %v2603 = vunpack.c.h.b16 %v370
    %v2604 = vunpack.c.l.b16 %v371
    %v2605 = vunpack.c.h.b16 %v371
    %v2606 = vunpack.c.l.b16 %v372
    %v2607 = vunpack.c.h.b16 %v372
    %v2608 = vunpack.c.l.b16 %v373
    %v2609 = vunpack.c.h.b16 %v373
    %v2610 = vunpack.c.l.b16 %v374
    %v2611 = vunpack.c.h.b16 %v374
    %v2612 = vunpack.c.l.b16 %v375
    %v2613 = vunpack.c.h.b16 %v375
    %v2614 = vunpack.c.l.b16 %v376
    %v2615 = vunpack.c.h.b16 %v376
    %v2616 = vunpack.c.l.b16 %v377
    %v2617 = vunpack.c.h.b16 %v377
    %v2618 = vunpack.c.l.b16 %v378
    %v2619 = vunpack.c.h.b16 %v378
    %v2620 = vunpack.c.l.b16 %v379
    %v2621 = vunpack.c.h.b16 %v379
    %v2622 = vunpack.c.l.b16 %v380
    %v2623 = vunpack.c.h.b16 %v380
    %v2624 = vunpack.c.l.b16 %v381
    %v2625 = vunpack.c.h.b16 %v381
    %v2626 = vunpack.c.l.b16 %v382
    %v2627 = vunpack.c.h.b16 %v382
    %v2628 = vunpack.c.l.b16 %v383
    %v2629 = vunpack.c.h.b16 %v383
    %v2630 = vunpack.c.l.b16 %v384
    %v2631 = vunpack.c.h.b16 %v384
    %v2632 = vunpack.c.l.b16 %v385
    %v2633 = vunpack.c.h.b16 %v385
    %v2634 = vunpack.c.l.b16 %v386
    %v2635 = vunpack.c.h.b16 %v386
    %v2636 = vunpack.c.l.b16 %v387
    %v2637 = vunpack.c.h.b16 %v387
    %v2638 = vunpack.c.l.b16 %v388
    %v2639 = vunpack.c.h.b16 %v388
    %v2640 = vunpack.c.l.b16 %v389
    %v2641 = vunpack.c.h.b16 %v389
    %v2642 = vunpack.c.l.b16 %v390
    %v2643 = vunpack.c.h.b16 %v390
    %v2644 = vunpack.c.l.b16 %v391
    %v2645 = vunpack.c.h.b16 %v391
    %v2646 = vunpack.c.l.b16 %v392
    %v2647 = vunpack.c.h.b16 %v392
    %v2648 = vunpack.c.l.b16 %v393
    %v2649 = vunpack.c.h.b16 %v393
    %v2650 = vunpack.c.l.b16 %v394
    %v2651 = vunpack.c.h.b16 %v394
    %v2652 = vunpack.c.l.b16 %v395
    %v2653 = vunpack.c.h.b16 %v395
    %v2654 = vunpack.c.l.b16 %v396
    %v2655 = vunpack.c.h.b16 %v396
    %v2656 = vunpack.c.l.b16 %v397
    %v2657 = vunpack.c.h.b16 %v397
    %v2658 = vunpack.c.l.b16 %v398
    %v2659 = vunpack.c.h.b16 %v398
    %v2660 = vunpack.c.l.b16 %v399
    %v2661 = vunpack.c.h.b16 %v399
    %v2662 = vunpack.c.l.b16 %v400
    %v2663 = vunpack.c.h.b16 %v400
    %v2664 = vunpack.c.l.b16 %v401
    %v2665 = vunpack.c.h.b16 %v401
    %v2666 = vunpack.c.l.b16 %v402
    %v2667 = vunpack.c.h.b16 %v402
    %v2668 = vunpack.c.l.b16 %v403
    %v2669 = vunpack.c.h.b16 %v403
    %v2670 = vunpack.c.l.b16 %v404
    %v2671 = vunpack.c.h.b16 %v404
    %v2672 = vunpack.c.l.b16 %v405
    %v2673 = vunpack.c.h.b16 %v405
    %v2674 = vunpack.c.l.b16 %v406
    %v2675 = vunpack.c.h.b16 %v406
    %v2676 = vunpack.c.l.b16 %v407
    %v2677 = vunpack.c.h.b16 %v407
    %v2678 = vunpack.c.l.b16 %v408
    %v2679 = vunpack.c.h.b16 %v408
    %v2680 = vunpack.c.l.b16 %v409
    %v2681 = vunpack.c.h.b16 %v409
    %v2682 = vunpack.c.l.b16 %v410
    %v2683 = vunpack.c.h.b16 %v410
    %v2684 = vunpack.c.l.b16 %v411
    %v2685 = vunpack.c.h.b16 %v411
    %v2686 = vunpack.c.l.b16 %v412
    %v2687 = vunpack.c.h.b16 %v412
    %v2688 = vunpack.c.l.b16 %v413
    %v2689 = vunpack.c.h.b16 %v413
    %v2690 = vunpack.c.l.b16 %v414
    %v2691 = vunpack.c.h.b16 %v414
    %v2692 = vunpack.c.l.b16 %v415
    %v2693 = vunpack.c.h.b16 %v415
    %v2694 = vunpack.c.l.b16 %v416
    %v2695 = vunpack.c.h.b16 %v416
    %v2696 = vunpack.c.l.b16 %v417
    %v2697 = vunpack.c.h.b16 %v417
    %v2698 = vunpack.c.l.b16 %v418
    %v2699 = vunpack.c.h.b16 %v418
    %v2700 = vunpack.c.l.b16 %v419
    %v2701 = vunpack.c.h.b16 %v419
    %v2702 = vunpack.c.l.b16 %v420
    %v2703 = vunpack.c.h.b16 %v420
    %v2704 = vunpack.c.l.b16 %v421
    %v2705 = vunpack.c.h.b16 %v421
    %v2706 = vunpack.c.l.b16 %v422
    %v2707 = vunpack.c.h.b16 %v422
    %v2708 = vunpack.c.l.b16 %v423
    %v2709 = vunpack.c.h.b16 %v423
    %v2710 = vunpack.c.l.b16 %v424
    %v2711 = vunpack.c.h.b16 %v424
    %v2712 = vunpack.c.l.b16 %v425
    %v2713 = vunpack.c.h.b16 %v425
    %v2714 = vunpack.c.l.b16 %v426
    %v2715 = vunpack.c.h.b16 %v426
    %v2716 = vunpack.c.l.b16 %v427
    %v2717 = vunpack.c.h.b16 %v427
    %v2718 = vunpack.c.l.b16 %v428
    %v2719 = vunpack.c.h.b16 %v428
    %v2720 = vunpack.c.l.b16 %v429
    %v2721 = vunpack.c.h.b16 %v429
    %v2722 = vunpack.c.l.b16 %v430
    %v2723 = vunpack.c.h.b16 %v430
    %v2724 = vunpack.c.l.b16 %v431
    %v2725 = vunpack.c.h.b16 %v431
    %v2726 = vunpack.c.l.b16 %v432
    %v2727 = vunpack.c.h.b16 %v432
    %v2728 = vunpack.c.l.b16 %v433
    %v2729 = vunpack.c.h.b16 %v433
    %v2730 = vunpack.c.l.b16 %v434
    %v2731 = vunpack.c.h.b16 %v434
    %v2732 = vunpack.c.l.b16 %v435
    %v2733 = vunpack.c.h.b16 %v435
    %v2734 = vunpack.c.l.b16 %v436
    %v2735 = vunpack.c.h.b16 %v436
    %v2736 = vunpack.c.l.b16 %v437
    %v2737 = vunpack.c.h.b16 %v437
    %v2738 = vunpack.c.l.b16 %v438
    %v2739 = vunpack.c.h.b16 %v438
    %v2740 = vunpack.c.l.b16 %v439
    %v2741 = vunpack.c.h.b16 %v439
    %v2742 = vunpack.c.l.b16 %v440
    %v2743 = vunpack.c.h.b16 %v440
    %v2744 = vunpack.c.l.b16 %v441
    %v2745 = vunpack.c.h.b16 %v441
    %v2746 = vunpack.c.l.b16 %v442
    %v2747 = vunpack.c.h.b16 %v442
    %v2748 = vunpack.c.l.b16 %v443
    %v2749 = vunpack.c.h.b16 %v443
    %v2750 = vunpack.c.l.b16 %v444
    %v2751 = vunpack.c.h.b16 %v444
    %v2752 = vunpack.c.l.b16 %v445
    %v2753 = vunpack.c.h.b16 %v445
    %v2754 = vunpack.c.l.b16 %v446
    %v2755 = vunpack.c.h.b16 %v446
    %v2756 = vunpack.c.l.b16 %v447
    %v2757 = vunpack.c.h.b16 %v447
    %v2758 = vunpack.c.l.b16 %v448
    %v2759 = vunpack.c.h.b16 %v448
    %v2760 = vunpack.c.l.b16 %v449
    %v2761 = vunpack.c.h.b16 %v449
    %v2762 = vunpack.c.l.b16 %v450
    %v2763 = vunpack.c.h.b16 %v450
    %v2764 = vunpack.c.l.b16 %v451
    %v2765 = vunpack.c.h.b16 %v451
    %v2766 = vunpack.c.l.b16 %v452
    %v2767 = vunpack.c.h.b16 %v452
    %v2768 = vunpack.c.l.b16 %v453
    %v2769 = vunpack.c.h.b16 %v453
    %v2770 = vunpack.c.l.b16 %v454
    %v2771 = vunpack.c.h.b16 %v454
    %v2772 = vunpack.c.l.b16 %v455
    %v2773 = vunpack.c.h.b16 %v455
    %v2774 = vunpack.c.l.b16 %v456
    %v2775 = vunpack.c.h.b16 %v456
    %v2776 = vunpack.c.l.b16 %v457
    %v2777 = vunpack.c.h.b16 %v457
    %v2778 = vunpack.c.l.b16 %v458
    %v2779 = vunpack.c.h.b16 %v458
    %v2780 = vunpack.c.l.b16 %v459
    %v2781 = vunpack.c.h.b16 %v459
    %v2782 = vunpack.c.l.b16 %v460
    %v2783 = vunpack.c.h.b16 %v460
    %v2784 = vunpack.c.l.b16 %v461
    %v2785 = vunpack.c.h.b16 %v461
    %v2786 = vunpack.c.l.b16 %v462
    %v2787 = vunpack.c.h.b16 %v462
    %v2788 = vunpack.c.l.b16 %v463
    %v2789 = vunpack.c.h.b16 %v463
    %v2790 = vunpack.c.l.b16 %v464
    %v2791 = vunpack.c.h.b16 %v464
    %v2792 = vunpack.c.l.b16 %v465
    %v2793 = vunpack.c.h.b16 %v465
    %v2794 = vunpack.c.l.b16 %v466
    %v2795 = vunpack.c.h.b16 %v466
    %v2796 = vunpack.c.l.b16 %v467
    %v2797 = vunpack.c.h.b16 %v467
    %v2798 = vunpack.c.l.b16 %v468
    %v2799 = vunpack.c.h.b16 %v468
    %v2800 = vunpack.c.l.b16 %v469
    %v2801 = vunpack.c.h.b16 %v469
    %v2802 = vunpack.c.l.b16 %v470
    %v2803 = vunpack.c.h.b16 %v470
    %v2804 = vunpack.c.l.b16 %v471
    %v2805 = vunpack.c.h.b16 %v471
    %v2806 = vunpack.c.l.b16 %v472
    %v2807 = vunpack.c.h.b16 %v472
    %v2808 = vunpack.c.l.b16 %v473
    %v2809 = vunpack.c.h.b16 %v473
    %v2810 = vunpack.c.l.b16 %v474
    %v2811 = vunpack.c.h.b16 %v474
    %v2812 = vunpack.c.l.b16 %v475
    %v2813 = vunpack.c.h.b16 %v475
    %v2814 = vunpack.c.l.b16 %v476
    %v2815 = vunpack.c.h.b16 %v476
    %v2816 = vunpack.c.l.b16 %v477
    %v2817 = vunpack.c.h.b16 %v477
    %v2818 = vunpack.c.l.b16 %v478
    %v2819 = vunpack.c.h.b16 %v478
    %v2820 = vunpack.c.l.b16 %v479
    %v2821 = vunpack.c.h.b16 %v479
    %v2822 = vunpack.c.l.b16 %v480
    %v2823 = vunpack.c.h.b16 %v480
    %v2824 = vunpack.c.l.b16 %v481
    %v2825 = vunpack.c.h.b16 %v481
    %v2826 = vunpack.c.l.b16 %v482
    %v2827 = vunpack.c.h.b16 %v482
    %v2828 = vunpack.c.l.b16 %v483
    %v2829 = vunpack.c.h.b16 %v483
    %v2830 = vunpack.c.l.b16 %v484
    %v2831 = vunpack.c.h.b16 %v484
    %v2832 = vunpack.c.l.b16 %v485
    %v2833 = vunpack.c.h.b16 %v485
    %v2834 = vunpack.c.l.b16 %v486
    %v2835 = vunpack.c.h.b16 %v486
    %v2836 = vunpack.c.l.b16 %v487
    %v2837 = vunpack.c.h.b16 %v487
    %v2838 = vunpack.c.l.b16 %v488
    %v2839 = vunpack.c.h.b16 %v488
    %v2840 = vunpack.c.l.b16 %v489
    %v2841 = vunpack.c.h.b16 %v489
    %v2842 = vunpack.c.l.b16 %v490
    %v2843 = vunpack.c.h.b16 %v490
    %v2844 = vunpack.c.l.b16 %v491
    %v2845 = vunpack.c.h.b16 %v491
    %v2846 = vunpack.c.l.b16 %v492
    %v2847 = vunpack.c.h.b16 %v492
    %v2848 = vunpack.c.l.b16 %v493
    %v2849 = vunpack.c.h.b16 %v493
    %v2850 = vunpack.c.l.b16 %v494
    %v2851 = vunpack.c.h.b16 %v494
    %v2852 = vunpack.c.l.b16 %v495
    %v2853 = vunpack.c.h.b16 %v495
    %v2854 = vunpack.c.l.b16 %v496
    %v2855 = vunpack.c.h.b16 %v496
    %v2856 = vunpack.c.l.b16 %v497
    %v2857 = vunpack.c.h.b16 %v497
    %v2858 = vunpack.c.l.b16 %v498
    %v2859 = vunpack.c.h.b16 %v498
    %v2860 = vunpack.c.l.b16 %v499
    %v2861 = vunpack.c.h.b16 %v499
    %v2862 = vunpack.c.l.b16 %v500
    %v2863 = vunpack.c.h.b16 %v500
    %v2864 = vunpack.c.l.b16 %v501
    %v2865 = vunpack.c.h.b16 %v501
    %v2866 = vunpack.c.l.b16 %v502
    %v2867 = vunpack.c.h.b16 %v502
    %v2868 = vunpack.c.l.b16 %v503
    %v2869 = vunpack.c.h.b16 %v503
    %v2870 = vunpack.c.l.b16 %v504
    %v2871 = vunpack.c.h.b16 %v504
    %v2872 = vunpack.c.l.b16 %v505
    %v2873 = vunpack.c.h.b16 %v505
    %v2874 = vunpack.c.l.b16 %v506
    %v2875 = vunpack.c.h.b16 %v506
    %v2876 = vunpack.c.l.b16 %v507
    %v2877 = vunpack.c.h.b16 %v507
    %v2878 = vunpack.c.l.b16 %v508
    %v2879 = vunpack.c.h.b16 %v508
    %v2880 = vunpack.c.l.b16 %v509
    %v2881 = vunpack.c.h.b16 %v509
    %v2882 = vunpack.c.l.b16 %v510
    %v2883 = vunpack.c.h.b16 %v510
    %v2884 = vunpack.c.l.b16 %v511
    %v2885 = vunpack.c.h.b16 %v511
    %v2886 = vunpack.c.l.b16 %v512
    %v2887 = vunpack.c.h.b16 %v512
    %v2888 = vunpack.c.l.b16 %v513
    %v2889 = vunpack.c.h.b16 %v513
    %v2890 = vunpack.c.l.b16 %v514
    %v2891 = vunpack.c.h.b16 %v514
    %v2892 = vunpack.c.l.b16 %v515
    %v2893 = vunpack.c.h.b16 %v515
    %v2894 = vunpack.c.l.b16 %v516
    %v2895 = vunpack.c.h.b16 %v516
    %v2896 = vunpack.c.l.b16 %v517
    %v2897 = vunpack.c.h.b16 %v517
    %v2898 = vunpack.c.l.b16 %v518
    %v2899 = vunpack.c.h.b16 %v518
    %v2900 = vunpack.c.l.b16 %v519
    %v2901 = vunpack.c.h.b16 %v519
    %v2902 = vunpack.c.l.b16 %v520
    %v2903 = vunpack.c.h.b16 %v520
    %v2904 = vunpack.c.l.b16 %v521
    %v2905 = vunpack.c.h.b16 %v521
    %v2906 = vunpack.c.l.b16 %v522
    %v2907 = vunpack.c.h.b16 %v522
    %v2908 = vunpack.c.l.b16 %v523
    %v2909 = vunpack.c.h.b16 %v523
    %v2910 = vunpack.c.l.b16 %v524
    %v2911 = vunpack.c.h.b16 %v524
    %v2912 = vunpack.c.l.b16 %v525
    %v2913 = vunpack.c.h.b16 %v525
    %v2914 = vunpack.c.l.b16 %v526
    %v2915 = vunpack.c.h.b16 %v526
    %v2916 = vunpack.c.l.b16 %v527
    %v2917 = vunpack.c.h.b16 %v527
    %v2918 = vunpack.c.l.b16 %v528
    %v2919 = vunpack.c.h.b16 %v528
    %v2920 = vunpack.c.l.b16 %v529
    %v2921 = vunpack.c.h.b16 %v529
    %v2922 = vunpack.c.l.b16 %v530
    %v2923 = vunpack.c.h.b16 %v530
    %v2924 = vunpack.c.l.b16 %v531
    %v2925 = vunpack.c.h.b16 %v531
    %v2926 = vunpack.c.l.b16 %v532
    %v2927 = vunpack.c.h.b16 %v532
    %v2928 = vunpack.c.l.b16 %v533
    %v2929 = vunpack.c.h.b16 %v533
    %v2930 = vunpack.c.l.b16 %v534
    %v2931 = vunpack.c.h.b16 %v534
    %v2932 = vunpack.c.l.b16 %v535
    %v2933 = vunpack.c.h.b16 %v535
    %v2934 = vunpack.c.l.b16 %v536
    %v2935 = vunpack.c.h.b16 %v536
    %v2936 = vunpack.c.l.b16 %v537
    %v2937 = vunpack.c.h.b16 %v537
    %v2938 = vunpack.c.l.b16 %v538
    %v2939 = vunpack.c.h.b16 %v538
    %v2940 = vunpack.c.l.b16 %v539
    %v2941 = vunpack.c.h.b16 %v539
    %v2942 = vunpack.c.l.b16 %v540
    %v2943 = vunpack.c.h.b16 %v540
    %v2944 = vunpack.c.l.b16 %v541
    %v2945 = vunpack.c.h.b16 %v541
    %v2946 = vunpack.c.l.b16 %v542
    %v2947 = vunpack.c.h.b16 %v542
    %v2948 = vunpack.c.l.b16 %v543
    %v2949 = vunpack.c.h.b16 %v543
    %v2950 = vunpack.c.l.b16 %v544
    %v2951 = vunpack.c.h.b16 %v544
    %v2952 = vunpack.c.l.b16 %v545
    %v2953 = vunpack.c.h.b16 %v545
    %v2954 = vunpack.c.l.b16 %v546
    %v2955 = vunpack.c.h.b16 %v546
    %v2956 = vunpack.c.l.b16 %v547
    %v2957 = vunpack.c.h.b16 %v547
    %v2958 = vunpack.c.l.b16 %v548
    %v2959 = vunpack.c.h.b16 %v548
    %v2960 = vunpack.c.l.b16 %v549
    %v2961 = vunpack.c.h.b16 %v549
    %v2962 = vunpack.c.l.b16 %v550
    %v2963 = vunpack.c.h.b16 %v550
    %v2964 = vunpack.c.l.b16 %v551
    %v2965 = vunpack.c.h.b16 %v551
    %v2966 = vunpack.c.l.b16 %v552
    %v2967 = vunpack.c.h.b16 %v552
    %v2968 = vunpack.c.l.b16 %v553
    %v2969 = vunpack.c.h.b16 %v553
    %v2970 = vunpack.c.l.b16 %v554
    %v2971 = vunpack.c.h.b16 %v554
    %v2972 = vunpack.c.l.b16 %v555
    %v2973 = vunpack.c.h.b16 %v555
    %v2974 = vunpack.c.l.b16 %v556
    %v2975 = vunpack.c.h.b16 %v556
    %v2976 = vunpack.c.l.b16 %v557
    %v2977 = vunpack.c.h.b16 %v557
    %v2978 = vunpack.c.l.b16 %v558
    %v2979 = vunpack.c.h.b16 %v558
    %v2980 = vunpack.c.l.b16 %v559
    %v2981 = vunpack.c.h.b16 %v559
    %v2982 = vunpack.c.l.b16 %v560
    %v2983 = vunpack.c.h.b16 %v560
    %v2984 = vunpack.c.l.b16 %v561
    %v2985 = vunpack.c.h.b16 %v561
    %v2986 = vunpack.c.l.b16 %v562
    %v2987 = vunpack.c.h.b16 %v562
    %v2988 = vunpack.c.l.b16 %v563
    %v2989 = vunpack.c.h.b16 %v563
    %v2990 = vunpack.c.l.b16 %v564
    %v2991 = vunpack.c.h.b16 %v564
    %v2992 = vunpack.c.l.b16 %v565
    %v2993 = vunpack.c.h.b16 %v565
    %v2994 = vunpack.c.l.b16 %v566
    %v2995 = vunpack.c.h.b16 %v566
    %v2996 = vunpack.c.l.b16 %v567
    %v2997 = vunpack.c.h.b16 %v567
    %v2998 = vunpack.c.l.b16 %v568
    %v2999 = vunpack.c.h.b16 %v568
    %v3000 = vunpack.c.l.b16 %v569
    %v3001 = vunpack.c.h.b16 %v569
    %v3002 = vunpack.c.l.b16 %v570
    %v3003 = vunpack.c.h.b16 %v570
    %v3004 = vunpack.c.l.b16 %v571
    %v3005 = vunpack.c.h.b16 %v571
    %v3006 = vunpack.c.l.b16 %v572
    %v3007 = vunpack.c.h.b16 %v572
    %v3008 = vunpack.c.l.b16 %v573
    %v3009 = vunpack.c.h.b16 %v573
    %v3010 = vunpack.c.l.b16 %v574
    %v3011 = vunpack.c.h.b16 %v574
    %v3012 = vunpack.c.l.b16 %v575
    %v3013 = vunpack.c.h.b16 %v575
    %v3014 = vunpack.c.l.b16 %v576
    %v3015 = vunpack.c.h.b16 %v576
    %v3016 = vunpack.c.l.b16 %v577
    %v3017 = vunpack.c.h.b16 %v577
    %v3018 = vunpack.c.l.b16 %v578
    %v3019 = vunpack.c.h.b16 %v578
    %v3020 = vunpack.c.l.b16 %v579
    %v3021 = vunpack.c.h.b16 %v579
    %v3022 = vunpack.c.l.b16 %v580
    %v3023 = vunpack.c.h.b16 %v580
    %v3024 = vunpack.c.l.b16 %v581
    %v3025 = vunpack.c.h.b16 %v581
    %v3026 = vunpack.c.l.b16 %v582
    %v3027 = vunpack.c.h.b16 %v582
    %v3028 = vunpack.c.l.b16 %v583
    %v3029 = vunpack.c.h.b16 %v583
    %v3030 = vunpack.c.l.b16 %v584
    %v3031 = vunpack.c.h.b16 %v584
    %v3032 = vunpack.c.l.b16 %v585
    %v3033 = vunpack.c.h.b16 %v585
    %v3034 = vunpack.c.l.b16 %v586
    %v3035 = vunpack.c.h.b16 %v586
    %v3036 = vunpack.c.l.b16 %v587
    %v3037 = vunpack.c.h.b16 %v587
    %v3038 = vunpack.c.l.b16 %v588
    %v3039 = vunpack.c.h.b16 %v588
    %v3040 = vunpack.c.l.b16 %v589
    %v3041 = vunpack.c.h.b16 %v589
    %v3042 = vunpack.c.l.b16 %v590
    %v3043 = vunpack.c.h.b16 %v590
    %v3044 = vunpack.c.l.b16 %v591
    %v3045 = vunpack.c.h.b16 %v591
    %v3046 = vunpack.c.l.b16 %v592
    %v3047 = vunpack.c.h.b16 %v592
    %v3048 = vunpack.c.l.b16 %v593
    %v3049 = vunpack.c.h.b16 %v593
    %v3050 = vunpack.c.l.b16 %v594
    %v3051 = vunpack.c.h.b16 %v594
    %v3052 = vunpack.c.l.b16 %v595
    %v3053 = vunpack.c.h.b16 %v595
    %v3054 = vunpack.c.l.b16 %v596
    %v3055 = vunpack.c.h.b16 %v596
    %v3056 = vunpack.c.l.b16 %v597
    %v3057 = vunpack.c.h.b16 %v597
    %v3058 = vunpack.c.l.b16 %v598
    %v3059 = vunpack.c.h.b16 %v598
    %v3060 = vunpack.c.l.b16 %v599
    %v3061 = vunpack.c.h.b16 %v599
    %v3062 = vunpack.c.l.b16 %v600
    %v3063 = vunpack.c.h.b16 %v600
    %v3064 = vunpack.c.l.b16 %v601
    %v3065 = vunpack.c.h.b16 %v601
    %v3066 = vunpack.c.l.b16 %v602
    %v3067 = vunpack.c.h.b16 %v602
    %v3068 = vunpack.c.l.b16 %v603
    %v3069 = vunpack.c.h.b16 %v603
    %v3070 = vunpack.c.l.b16 %v604
    %v3071 = vunpack.c.h.b16 %v604
    %v3072 = vunpack.c.l.b16 %v605
    %v3073 = vunpack.c.h.b16 %v605
    %v3074 = vunpack.c.l.b16 %v606
    %v3075 = vunpack.c.h.b16 %v606
    %v3076 = vunpack.c.l.b16 %v607
    %v3077 = vunpack.c.h.b16 %v607
    %v3078 = vunpack.c.l.b16 %v608
    %v3079 = vunpack.c.h.b16 %v608
    %v3080 = vunpack.c.l.b16 %v609
    %v3081 = vunpack.c.h.b16 %v609
    %v3082 = vunpack.c.l.b16 %v610
    %v3083 = vunpack.c.h.b16 %v610
    %v3084 = vunpack.c.l.b16 %v611
    %v3085 = vunpack.c.h.b16 %v611
    %v3086 = vunpack.c.l.b16 %v612
    %v3087 = vunpack.c.h.b16 %v612
    %v3088 = vunpack.c.l.b16 %v613
    %v3089 = vunpack.c.h.b16 %v613
    %v3090 = vunpack.c.l.b16 %v614
    %v3091 = vunpack.c.h.b16 %v614
    %v3092 = vunpack.c.l.b16 %v615
    %v3093 = vunpack.c.h.b16 %v615
    %v3094 = vunpack.c.l.b16 %v616
    %v3095 = vunpack.c.h.b16 %v616
    %v3096 = vunpack.c.l.b16 %v617
    %v3097 = vunpack.c.h.b16 %v617
    %v3098 = vunpack.c.l.b16 %v618
    %v3099 = vunpack.c.h.b16 %v618
    %v3100 = vunpack.c.l.b16 %v619
    %v3101 = vunpack.c.h.b16 %v619
    %v3102 = vunpack.c.l.b16 %v620
    %v3103 = vunpack.c.h.b16 %v620
    %v3104 = vunpack.c.l.b16 %v621
    %v3105 = vunpack.c.h.b16 %v621
    %v3106 = vunpack.c.l.b16 %v622
    %v3107 = vunpack.c.h.b16 %v622
    %v3108 = vunpack.c.l.b16 %v623
    %v3109 = vunpack.c.h.b16 %v623
    %v3110 = vunpack.c.l.b16 %v624
    %v3111 = vunpack.c.h.b16 %v624
    %v3112 = vunpack.c.l.b16 %v625
    %v3113 = vunpack.c.h.b16 %v625
    %v3114 = vunpack.c.l.b16 %v626
    %v3115 = vunpack.c.h.b16 %v626
    %v3116 = vunpack.c.l.b16 %v627
    %v3117 = vunpack.c.h.b16 %v627
    %v3118 = vunpack.c.l.b16 %v628
    %v3119 = vunpack.c.h.b16 %v628
    %v3120 = vunpack.c.l.b16 %v629
    %v3121 = vunpack.c.h.b16 %v629
    %v3122 = vunpack.c.l.b16 %v630
    %v3123 = vunpack.c.h.b16 %v630
    %v3124 = vunpack.c.l.b16 %v631
    %v3125 = vunpack.c.h.b16 %v631
    %v3126 = vunpack.c.l.b16 %v632
    %v3127 = vunpack.c.h.b16 %v632
    %v3128 = vunpack.c.l.b16 %v633
    %v3129 = vunpack.c.h.b16 %v633
    %v3130 = vunpack.c.l.b16 %v634
    %v3131 = vunpack.c.h.b16 %v634
    %v3132 = vunpack.c.l.b16 %v635
    %v3133 = vunpack.c.h.b16 %v635
    %v3134 = vunpack.c.l.b16 %v636
    %v3135 = vunpack.c.h.b16 %v636
    %v3136 = vunpack.c.l.b16 %v637
    %v3137 = vunpack.c.h.b16 %v637
    %v3138 = vunpack.c.l.b16 %v638
    %v3139 = vunpack.c.h.b16 %v638
    %v3140 = vunpack.c.l.b16 %v639
    %v3141 = vunpack.c.h.b16 %v639
    %v3142 = vunpack.c.l.b16 %v640
    %v3143 = vunpack.c.h.b16 %v640
    %v3144 = vunpack.c.l.b16 %v641
    %v3145 = vunpack.c.h.b16 %v641
    %v3146 = vunpack.c.l.b16 %v642
    %v3147 = vunpack.c.h.b16 %v642
    %v3148 = vunpack.c.l.b16 %v643
    %v3149 = vunpack.c.h.b16 %v643
    %v3150 = vunpack.c.l.b16 %v644
    %v3151 = vunpack.c.h.b16 %v644
    %v3152 = vunpack.c.l.b16 %v645
    %v3153 = vunpack.c.h.b16 %v645
    %v3154 = vunpack.c.l.b16 %v646
    %v3155 = vunpack.c.h.b16 %v646
    %v3156 = vunpack.c.l.b16 %v647
    %v3157 = vunpack.c.h.b16 %v647
    %v3158 = vunpack.c.l.b16 %v648
    %v3159 = vunpack.c.h.b16 %v648
    %v3160 = vunpack.c.l.b16 %v649
    %v3161 = vunpack.c.h.b16 %v649
    %v3162 = vunpack.c.l.b16 %v650
    %v3163 = vunpack.c.h.b16 %v650
    %v3164 = vunpack.c.l.b16 %v651
    %v3165 = vunpack.c.h.b16 %v651
    %v3166 = vunpack.c.l.b16 %v652
    %v3167 = vunpack.c.h.b16 %v652
    %v3168 = vunpack.c.l.b16 %v653
    %v3169 = vunpack.c.h.b16 %v653
    %v3170 = vunpack.c.l.b16 %v654
    %v3171 = vunpack.c.h.b16 %v654
    %v3172 = vunpack.c.l.b16 %v655
    %v3173 = vunpack.c.h.b16 %v655
    %v3174 = vunpack.c.l.b16 %v656
    %v3175 = vunpack.c.h.b16 %v656
    %v3176 = vunpack.c.l.b16 %v657
    %v3177 = vunpack.c.h.b16 %v657
    %v3178 = vunpack.c.l.b16 %v658
    %v3179 = vunpack.c.h.b16 %v658
    %v3180 = vunpack.c.l.b16 %v659
    %v3181 = vunpack.c.h.b16 %v659
    %v3182 = vunpack.c.l.b16 %v660
    %v3183 = vunpack.c.h.b16 %v660
    %v3184 = vunpack.c.l.b16 %v661
    %v3185 = vunpack.c.h.b16 %v661
    %v3186 = vunpack.c.l.b16 %v662
    %v3187 = vunpack.c.h.b16 %v662
    %v3188 = vunpack.c.l.b16 %v663
    %v3189 = vunpack.c.h.b16 %v663
    %v3190 = vunpack.c.l.b16 %v664
    %v3191 = vunpack.c.h.b16 %v664
    %v3192 = vunpack.c.l.b16 %v665
    %v3193 = vunpack.c.h.b16 %v665
    %v3194 = vunpack.c.l.b16 %v666
    %v3195 = vunpack.c.h.b16 %v666
    %v3196 = vunpack.c.l.b16 %v667
    %v3197 = vunpack.c.h.b16 %v667
    %v3198 = vunpack.c.l.b16 %v668
    %v3199 = vunpack.c.h.b16 %v668
    %v3200 = vunpack.c.l.b16 %v669
    %v3201 = vunpack.c.h.b16 %v669
    %v3202 = vunpack.c.l.b16 %v670
    %v3203 = vunpack.c.h.b16 %v670
    %v3204 = vunpack.c.l.b16 %v671
    %v3205 = vunpack.c.h.b16 %v671
    %v3206 = vunpack.c.l.b16 %v672
    %v3207 = vunpack.c.h.b16 %v672
    %v3208 = vunpack.c.l.b16 %v673
    %v3209 = vunpack.c.h.b16 %v673
    %v3210 = vunpack.c.l.b16 %v674
    %v3211 = vunpack.c.h.b16 %v674
    %v3212 = vunpack.c.l.b16 %v675
    %v3213 = vunpack.c.h.b16 %v675
    %v3214 = vunpack.c.l.b16 %v676
    %v3215 = vunpack.c.h.b16 %v676
    %v3216 = vunpack.c.l.b16 %v677
    %v3217 = vunpack.c.h.b16 %v677
    %v3218 = vunpack.c.l.b16 %v678
    %v3219 = vunpack.c.h.b16 %v678
    %v3220 = vunpack.c.l.b16 %v679
    %v3221 = vunpack.c.h.b16 %v679
    %v3222 = vunpack.c.l.b16 %v680
    %v3223 = vunpack.c.h.b16 %v680
    %v3224 = vunpack.c.l.b16 %v681
    %v3225 = vunpack.c.h.b16 %v681
    %v3226 = vunpack.c.l.b16 %v682
    %v3227 = vunpack.c.h.b16 %v682
    %v3228 = vunpack.c.l.b16 %v683
    %v3229 = vunpack.c.h.b16 %v683
    %v3230 = vunpack.c.l.b16 %v684
    %v3231 = vunpack.c.h.b16 %v684
    %v3232 = vunpack.c.l.b16 %v685
    %v3233 = vunpack.c.h.b16 %v685
    %v3234 = vunpack.c.l.b16 %v686
    %v3235 = vunpack.c.h.b16 %v686
    %v3236 = vunpack.c.l.b16 %v687
    %v3237 = vunpack.c.h.b16 %v687
    %v3238 = vunpack.c.l.b16 %v688
    %v3239 = vunpack.c.h.b16 %v688
    %v3240 = vunpack.c.l.b16 %v689
    %v3241 = vunpack.c.h.b16 %v689
    %v3242 = vunpack.c.l.b16 %v690
    %v3243 = vunpack.c.h.b16 %v690
    %v3244 = vunpack.c.l.b16 %v691
    %v3245 = vunpack.c.h.b16 %v691
    %v3246 = vunpack.c.l.b16 %v692
    %v3247 = vunpack.c.h.b16 %v692
    %v3248 = vunpack.c.l.b16 %v693
    %v3249 = vunpack.c.h.b16 %v693
    %v3250 = vunpack.c.l.b16 %v694
    %v3251 = vunpack.c.h.b16 %v694
    %v3252 = vunpack.c.l.b16 %v695
    %v3253 = vunpack.c.h.b16 %v695
    %v3254 = vunpack.c.l.b16 %v696
    %v3255 = vunpack.c.h.b16 %v696
    %v3256 = vunpack.c.l.b16 %v697
    %v3257 = vunpack.c.h.b16 %v697
    %v3258 = vunpack.c.l.b16 %v698
    %v3259 = vunpack.c.h.b16 %v698
    %v3260 = vunpack.c.l.b16 %v699
    %v3261 = vunpack.c.h.b16 %v699
    %v3262 = vunpack.c.l.b16 %v700
    %v3263 = vunpack.c.h.b16 %v700
    %v3264 = vunpack.c.l.b16 %v701
    %v3265 = vunpack.c.h.b16 %v701
    %v3266 = vunpack.c.l.b16 %v702
    %v3267 = vunpack.c.h.b16 %v702
    %v3268 = vunpack.c.l.b16 %v703
    %v3269 = vunpack.c.h.b16 %v703
    %v3270 = vunpack.c.l.b16 %v704
    %v3271 = vunpack.c.h.b16 %v704
    %v3272 = vunpack.c.l.b16 %v705
    %v3273 = vunpack.c.h.b16 %v705
    %v3274 = vunpack.c.l.b16 %v706
    %v3275 = vunpack.c.h.b16 %v706
    %v3276 = vunpack.c.l.b16 %v707
    %v3277 = vunpack.c.h.b16 %v707
    %v3278 = vunpack.c.l.b16 %v708
    %v3279 = vunpack.c.h.b16 %v708
    %v3280 = vunpack.c.l.b16 %v709
    %v3281 = vunpack.c.h.b16 %v709
    %v3282 = vunpack.c.l.b16 %v710
    %v3283 = vunpack.c.h.b16 %v710
    %v3284 = vunpack.c.l.b16 %v711
    %v3285 = vunpack.c.h.b16 %v711
    %v3286 = vunpack.c.l.b16 %v712
    %v3287 = vunpack.c.h.b16 %v712
    %v3288 = vunpack.c.l.b16 %v713
    %v3289 = vunpack.c.h.b16 %v713
    %v3290 = vunpack.c.l.b16 %v714
    %v3291 = vunpack.c.h.b16 %v714
    %v3292 = vunpack.c.l.b16 %v715
    %v3293 = vunpack.c.h.b16 %v715
    %v3294 = vunpack.c.l.b16 %v716
    %v3295 = vunpack.c.h.b16 %v716
    %v3296 = vunpack.c.l.b16 %v717
    %v3297 = vunpack.c.h.b16 %v717
    %v3298 = vunpack.c.l.b16 %v718
    %v3299 = vunpack.c.h.b16 %v718
    %v3300 = vunpack.c.l.b16 %v719
    %v3301 = vunpack.c.h.b16 %v719
    %v3302 = vunpack.c.l.b16 %v720
    %v3303 = vunpack.c.h.b16 %v720
    %v3304 = vunpack.c.l.b16 %v721
    %v3305 = vunpack.c.h.b16 %v721
    %v3306 = vunpack.c.l.b16 %v722
    %v3307 = vunpack.c.h.b16 %v722
    %v3308 = vunpack.c.l.b16 %v723
    %v3309 = vunpack.c.h.b16 %v723
    %v3310 = vunpack.c.l.b16 %v724
    %v3311 = vunpack.c.h.b16 %v724
    %v3312 = vunpack.c.l.b16 %v725
    %v3313 = vunpack.c.h.b16 %v725
    %v3314 = vunpack.c.l.b16 %v726
    %v3315 = vunpack.c.h.b16 %v726
    %v3316 = vunpack.c.l.b16 %v727
    %v3317 = vunpack.c.h.b16 %v727
    %v3318 = vunpack.c.l.b16 %v728
    %v3319 = vunpack.c.h.b16 %v728
    %v3320 = vunpack.c.l.b16 %v729
    %v3321 = vunpack.c.h.b16 %v729
    %v3322 = vunpack.c.l.b16 %v730
    %v3323 = vunpack.c.h.b16 %v730
    %v3324 = vunpack.c.l.b16 %v731
    %v3325 = vunpack.c.h.b16 %v731
    %v3326 = vunpack.c.l.b16 %v732
    %v3327 = vunpack.c.h.b16 %v732
    %v3328 = vunpack.c.l.b16 %v733
    %v3329 = vunpack.c.h.b16 %v733
    %v3330 = vunpack.c.l.b16 %v734
    %v3331 = vunpack.c.h.b16 %v734
    %v3332 = vunpack.c.l.b16 %v735
    %v3333 = vunpack.c.h.b16 %v735
    %v3334 = vunpack.c.l.b16 %v736
    %v3335 = vunpack.c.h.b16 %v736
    %v3336 = vunpack.c.l.b16 %v737
    %v3337 = vunpack.c.h.b16 %v737
    %v3338 = vunpack.c.l.b16 %v738
    %v3339 = vunpack.c.h.b16 %v738
    %v3340 = vunpack.c.l.b16 %v739
    %v3341 = vunpack.c.h.b16 %v739
    %v3342 = vunpack.c.l.b16 %v740
    %v3343 = vunpack.c.h.b16 %v740
    %v3344 = vunpack.c.l.b16 %v741
    %v3345 = vunpack.c.h.b16 %v741
    %v3346 = vunpack.c.l.b16 %v742
    %v3347 = vunpack.c.h.b16 %v742
    %v3348 = vunpack.c.l.b16 %v743
    %v3349 = vunpack.c.h.b16 %v743
    %v3350 = vunpack.c.l.b16 %v744
    %v3351 = vunpack.c.h.b16 %v744
    %v3352 = vunpack.c.l.b16 %v745
    %v3353 = vunpack.c.h.b16 %v745
    %v3354 = vunpack.c.l.b16 %v746
    %v3355 = vunpack.c.h.b16 %v746
    %v3356 = vunpack.c.l.b16 %v747
    %v3357 = vunpack.c.h.b16 %v747
    %v3358 = vunpack.c.l.b16 %v748
    %v3359 = vunpack.c.h.b16 %v748
    %v3360 = vunpack.c.l.b16 %v749
    %v3361 = vunpack.c.h.b16 %v749
    %v3362 = vunpack.c.l.b16 %v750
    %v3363 = vunpack.c.h.b16 %v750
    %v3364 = vunpack.c.l.b16 %v751
    %v3365 = vunpack.c.h.b16 %v751
    %v3366 = vunpack.c.l.b16 %v752
    %v3367 = vunpack.c.h.b16 %v752
    %v3368 = vunpack.c.l.b16 %v753
    %v3369 = vunpack.c.h.b16 %v753
    %v3370 = vunpack.c.l.b16 %v754
    %v3371 = vunpack.c.h.b16 %v754
    %v3372 = vunpack.c.l.b16 %v755
    %v3373 = vunpack.c.h.b16 %v755
    %v3374 = vunpack.c.l.b16 %v756
    %v3375 = vunpack.c.h.b16 %v756
    %v3376 = vunpack.c.l.b16 %v757
    %v3377 = vunpack.c.h.b16 %v757
    %v3378 = vunpack.c.l.b16 %v758
    %v3379 = vunpack.c.h.b16 %v758
    %v3380 = vunpack.c.l.b16 %v759
    %v3381 = vunpack.c.h.b16 %v759
    %v3382 = vunpack.c.l.b16 %v760
    %v3383 = vunpack.c.h.b16 %v760
    %v3384 = vunpack.c.l.b16 %v761
    %v3385 = vunpack.c.h.b16 %v761
    %v3386 = vunpack.c.l.b16 %v762
    %v3387 = vunpack.c.h.b16 %v762
    %v3388 = vunpack.c.l.b16 %v763
    %v3389 = vunpack.c.h.b16 %v763
    %v3390 = vunpack.c.l.b16 %v764
    %v3391 = vunpack.c.h.b16 %v764
    %v3392 = vunpack.c.l.b16 %v765
    %v3393 = vunpack.c.h.b16 %v765
    %v3394 = vunpack.c.l.b16 %v766
    %v3395 = vunpack.c.h.b16 %v766
    %v3396 = vunpack.c.l.b16 %v767
    %v3397 = vunpack.c.h.b16 %v767
    %v3398 = vunpack.c.l.b16 %v768
    %v3399 = vunpack.c.h.b16 %v768
    %v3400 = vunpack.c.l.b16 %v769
    %v3401 = vunpack.c.h.b16 %v769
    %v3402 = vunpack.c.l.b16 %v770
    %v3403 = vunpack.c.h.b16 %v770
    %v3404 = vunpack.c.l.b16 %v771
    %v3405 = vunpack.c.h.b16 %v771
    %v3406 = vunpack.c.l.b16 %v772
    %v3407 = vunpack.c.h.b16 %v772
    %v3408 = vunpack.c.l.b16 %v773
    %v3409 = vunpack.c.h.b16 %v773
    %v3410 = vunpack.c.l.b16 %v774
    %v3411 = vunpack.c.h.b16 %v774
    %v3412 = vunpack.c.l.b16 %v775
    %v3413 = vunpack.c.h.b16 %v775
    %v3414 = vunpack.c.l.b16 %v776
    %v3415 = vunpack.c.h.b16 %v776
    %v3416 = vunpack.c.l.b16 %v777
    %v3417 = vunpack.c.h.b16 %v777
    %v3418 = vunpack.c.l.b16 %v778
    %v3419 = vunpack.c.h.b16 %v778
    %v3420 = vunpack.c.l.b16 %v779
    %v3421 = vunpack.c.h.b16 %v779
    %v3422 = vunpack.c.l.b16 %v780
    %v3423 = vunpack.c.h.b16 %v780
    %v3424 = vunpack.c.l.b16 %v781
    %v3425 = vunpack.c.h.b16 %v781
    %v3426 = vunpack.c.l.b16 %v782
    %v3427 = vunpack.c.h.b16 %v782
    %v3428 = vunpack.c.l.b16 %v783
    %v3429 = vunpack.c.h.b16 %v783
    %v3430 = vunpack.c.l.b16 %v784
    %v3431 = vunpack.c.h.b16 %v784
    %v3432 = vunpack.c.l.b16 %v785
    %v3433 = vunpack.c.h.b16 %v785
    %v3434 = vunpack.c.l.b16 %v786
    %v3435 = vunpack.c.h.b16 %v786
    %v3436 = vunpack.c.l.b16 %v787
    %v3437 = vunpack.c.h.b16 %v787
    %v3438 = vunpack.c.l.b16 %v788
    %v3439 = vunpack.c.h.b16 %v788
    %v3440 = vunpack.c.l.b16 %v789
    %v3441 = vunpack.c.h.b16 %v789
    %v3442 = vunpack.c.l.b16 %v790
    %v3443 = vunpack.c.h.b16 %v790
    %v3444 = vunpack.c.l.b16 %v791
    %v3445 = vunpack.c.h.b16 %v791
    %v3446 = vunpack.c.l.b16 %v792
    %v3447 = vunpack.c.h.b16 %v792
    %v3448 = vunpack.c.l.b16 %v793
    %v3449 = vunpack.c.h.b16 %v793
    %v3450 = vunpack.c.l.b16 %v794
    %v3451 = vunpack.c.h.b16 %v794
    %v3452 = vunpack.c.l.b16 %v795
    %v3453 = vunpack.c.h.b16 %v795
    %v3454 = vunpack.c.l.b16 %v796
    %v3455 = vunpack.c.h.b16 %v796
    %v3456 = vunpack.c.l.b16 %v797
    %v3457 = vunpack.c.h.b16 %v797
    %v3458 = vunpack.c.l.b16 %v798
    %v3459 = vunpack.c.h.b16 %v798
    %v3460 = vunpack.c.l.b16 %v799
    %v3461 = vunpack.c.h.b16 %v799
    %v3462 = vunpack.c.l.b16 %v800
    %v3463 = vunpack.c.h.b16 %v800
    %v3464 = vunpack.c.l.b16 %v801
    %v3465 = vunpack.c.h.b16 %v801
    %v3466 = vunpack.c.l.b16 %v802
    %v3467 = vunpack.c.h.b16 %v802
    %v3468 = vunpack.c.l.b16 %v803
    %v3469 = vunpack.c.h.b16 %v803
    %v3470 = vunpack.c.l.b16 %v804
    %v3471 = vunpack.c.h.b16 %v804
    %v3472 = vunpack.c.l.b16 %v805
    %v3473 = vunpack.c.h.b16 %v805
    %v3474 = vunpack.c.l.b16 %v806
    %v3475 = vunpack.c.h.b16 %v806
    %v3476 = vunpack.c.l.b16 %v807
    %v3477 = vunpack.c.h.b16 %v807
    %v3478 = vunpack.c.l.b16 %v808
    %v3479 = vunpack.c.h.b16 %v808
    %v3480 = vunpack.c.l.b16 %v809
    %v3481 = vunpack.c.h.b16 %v809
    %v3482 = vunpack.c.l.b16 %v810
    %v3483 = vunpack.c.h.b16 %v810
    %v3484 = vunpack.c.l.b16 %v811
    %v3485 = vunpack.c.h.b16 %v811
    %v3486 = vunpack.c.l.b16 %v812
    %v3487 = vunpack.c.h.b16 %v812
    %v3488 = vunpack.c.l.b16 %v813
    %v3489 = vunpack.c.h.b16 %v813
    %v3490 = vunpack.c.l.b16 %v814
    %v3491 = vunpack.c.h.b16 %v814
    %v3492 = vunpack.c.l.b16 %v815
    %v3493 = vunpack.c.h.b16 %v815
    %v3494 = vunpack.c.l.b16 %v816
    %v3495 = vunpack.c.h.b16 %v816
    %v3496 = vunpack.c.l.b16 %v817
    %v3497 = vunpack.c.h.b16 %v817
    %v3498 = vunpack.c.l.b16 %v818
    %v3499 = vunpack.c.h.b16 %v818
    %v3500 = vunpack.c.l.b16 %v819
    %v3501 = vunpack.c.h.b16 %v819
    %v3502 = vunpack.c.l.b16 %v820
    %v3503 = vunpack.c.h.b16 %v820
    %v3504 = vunpack.c.l.b16 %v821
    %v3505 = vunpack.c.h.b16 %v821
    %v3506 = vunpack.c.l.b16 %v822
    %v3507 = vunpack.c.h.b16 %v822
    %v3508 = vunpack.c.l.b16 %v823
    %v3509 = vunpack.c.h.b16 %v823
    %v3510 = vunpack.c.l.b16 %v824
    %v3511 = vunpack.c.h.b16 %v824
    %v3512 = vunpack.c.l.b16 %v825
    %v3513 = vunpack.c.h.b16 %v825
    %v3514 = vunpack.c.l.b16 %v826
    %v3515 = vunpack.c.h.b16 %v826
    %v3516 = vunpack.c.l.b16 %v827
    %v3517 = vunpack.c.h.b16 %v827
    %v3518 = vunpack.c.l.b16 %v828
    %v3519 = vunpack.c.h.b16 %v828
    %v3520 = vunpack.c.l.b16 %v829
    %v3521 = vunpack.c.h.b16 %v829
    %v3522 = vunpack.c.l.b16 %v830
    %v3523 = vunpack.c.h.b16 %v830
    %v3524 = vunpack.c.l.b16 %v831
    %v3525 = vunpack.c.h.b16 %v831
    %v3526 = vunpack.c.l.b16 %v832
    %v3527 = vunpack.c.h.b16 %v832
    %v3528 = vunpack.c.l.b16 %v833
    %v3529 = vunpack.c.h.b16 %v833
    %v3530 = vunpack.c.l.b16 %v834
    %v3531 = vunpack.c.h.b16 %v834
    %v3532 = vunpack.c.l.b16 %v835
    %v3533 = vunpack.c.h.b16 %v835
    %v3534 = vunpack.c.l.b16 %v836
    %v3535 = vunpack.c.h.b16 %v836
    %v3536 = vunpack.c.l.b16 %v837
    %v3537 = vunpack.c.h.b16 %v837
    %v3538 = vunpack.c.l.b16 %v838
    %v3539 = vunpack.c.h.b16 %v838
    %v3540 = vunpack.c.l.b16 %v839
    %v3541 = vunpack.c.h.b16 %v839
    %v3542 = vunpack.c.l.b16 %v840
    %v3543 = vunpack.c.h.b16 %v840
    %v3544 = vunpack.c.l.b16 %v841
    %v3545 = vunpack.c.h.b16 %v841
    %v3546 = vunpack.c.l.b16 %v842
    %v3547 = vunpack.c.h.b16 %v842
    %v3548 = vunpack.c.l.b16 %v843
    %v3549 = vunpack.c.h.b16 %v843
    %v3550 = vunpack.c.l.b16 %v844
    %v3551 = vunpack.c.h.b16 %v844
    %v3552 = vunpack.c.l.b16 %v845
    %v3553 = vunpack.c.h.b16 %v845
    %v3554 = vunpack.c.l.b16 %v846
    %v3555 = vunpack.c.h.b16 %v846
    %v3556 = vunpack.c.l.b16 %v847
    %v3557 = vunpack.c.h.b16 %v847
    %v3558 = vunpack.c.l.b16 %v848
    %v3559 = vunpack.c.h.b16 %v848
    %v3560 = vunpack.c.l.b16 %v849
    %v3561 = vunpack.c.h.b16 %v849
    %v3562 = vunpack.c.l.b16 %v850
    %v3563 = vunpack.c.h.b16 %v850
    %v3564 = vunpack.c.l.b16 %v851
    %v3565 = vunpack.c.h.b16 %v851
    %v3566 = vunpack.c.l.b16 %v852
    %v3567 = vunpack.c.h.b16 %v852
    %v3568 = vunpack.c.l.b16 %v853
    %v3569 = vunpack.c.h.b16 %v853
    %v3570 = vunpack.c.l.b16 %v854
    %v3571 = vunpack.c.h.b16 %v854
    %v3572 = vunpack.c.l.b16 %v855
    %v3573 = vunpack.c.h.b16 %v855
    %v3574 = vunpack.c.l.b16 %v856
    %v3575 = vunpack.c.h.b16 %v856
    %v3576 = vunpack.c.l.b16 %v857
    %v3577 = vunpack.c.h.b16 %v857
    %v3578 = vunpack.c.l.b16 %v858
    %v3579 = vunpack.c.h.b16 %v858
    %v3580 = vunpack.c.l.b16 %v859
    %v3581 = vunpack.c.h.b16 %v859
    %v3582 = vunpack.c.l.b16 %v860
    %v3583 = vunpack.c.h.b16 %v860
    %v3584 = vunpack.c.l.b16 %v861
    %v3585 = vunpack.c.h.b16 %v861
    %v3586 = vunpack.c.l.b16 %v862
    %v3587 = vunpack.c.h.b16 %v862
    %v3588 = vunpack.c.l.b16 %v863
    %v3589 = vunpack.c.h.b16 %v863
    %v3590 = vunpack.c.l.b16 %v864
    %v3591 = vunpack.c.h.b16 %v864
    %v3592 = vunpack.c.l.b16 %v865
    %v3593 = vunpack.c.h.b16 %v865
    %v3594 = vunpack.c.l.b16 %v866
    %v3595 = vunpack.c.h.b16 %v866
    %v3596 = vunpack.c.l.b16 %v867
    %v3597 = vunpack.c.h.b16 %v867
    %v3598 = vunpack.c.l.b16 %v868
    %v3599 = vunpack.c.h.b16 %v868
    %v3600 = vunpack.c.l.b16 %v869
    %v3601 = vunpack.c.h.b16 %v869
    %v3602 = vunpack.c.l.b16 %v870
    %v3603 = vunpack.c.h.b16 %v870
    %v3604 = vunpack.c.l.b16 %v871
    %v3605 = vunpack.c.h.b16 %v871
    %v3606 = vunpack.c.l.b16 %v872
    %v3607 = vunpack.c.h.b16 %v872
    %v3608 = vunpack.c.l.b16 %v873
    %v3609 = vunpack.c.h.b16 %v873
    %v3610 = vunpack.c.l.b16 %v874
    %v3611 = vunpack.c.h.b16 %v874
    %v3612 = vunpack.c.l.b16 %v875
    %v3613 = vunpack.c.h.b16 %v875
    %v3614 = vunpack.c.l.b16 %v876
    %v3615 = vunpack.c.h.b16 %v876
    %v3616 = vunpack.c.l.b16 %v877
    %v3617 = vunpack.c.h.b16 %v877
    %v3618 = vunpack.c.l.b16 %v878
    %v3619 = vunpack.c.h.b16 %v878
    %v3620 = vunpack.c.l.b16 %v879
    %v3621 = vunpack.c.h.b16 %v879
    %v3622 = vunpack.c.l.b16 %v880
    %v3623 = vunpack.c.h.b16 %v880
    %v3624 = vunpack.c.l.b16 %v881
    %v3625 = vunpack.c.h.b16 %v881
    %v3626 = vunpack.c.l.b16 %v882
    %v3627 = vunpack.c.h.b16 %v882
    %v3628 = vunpack.c.l.b16 %v883
    %v3629 = vunpack.c.h.b16 %v883
    %v3630 = vunpack.c.l.b16 %v884
    %v3631 = vunpack.c.h.b16 %v884
    %v3632 = vunpack.c.l.b16 %v885
    %v3633 = vunpack.c.h.b16 %v885
    %v3634 = vunpack.c.l.b16 %v886
    %v3635 = vunpack.c.h.b16 %v886
    %v3636 = vunpack.c.l.b16 %v887
    %v3637 = vunpack.c.h.b16 %v887
    %v3638 = vunpack.c.l.b16 %v888
    %v3639 = vunpack.c.h.b16 %v888
    %v3640 = vunpack.c.l.b16 %v889
    %v3641 = vunpack.c.h.b16 %v889
    %v3642 = vunpack.c.l.b16 %v890
    %v3643 = vunpack.c.h.b16 %v890
    %v3644 = vunpack.c.l.b16 %v891
    %v3645 = vunpack.c.h.b16 %v891
    %v3646 = vunpack.c.l.b16 %v892
    %v3647 = vunpack.c.h.b16 %v892
    %v3648 = vunpack.c.l.b16 %v893
    %v3649 = vunpack.c.h.b16 %v893
    %v3650 = vunpack.c.l.b16 %v894
    %v3651 = vunpack.c.h.b16 %v894
    %v3652 = vunpack.c.l.b16 %v895
    %v3653 = vunpack.c.h.b16 %v895
    %v3654 = vunpack.c.l.b16 %v896
    %v3655 = vunpack.c.h.b16 %v896
    %v3656 = vunpack.c.l.b16 %v897
    %v3657 = vunpack.c.h.b16 %v897
    %v3658 = vunpack.c.l.b16 %v898
    %v3659 = vunpack.c.h.b16 %v898
    %v3660 = vunpack.c.l.b16 %v899
    %v3661 = vunpack.c.h.b16 %v899
    %v3662 = vunpack.c.l.b16 %v900
    %v3663 = vunpack.c.h.b16 %v900
    %v3664 = vunpack.c.l.b16 %v901
    %v3665 = vunpack.c.h.b16 %v901
    %v3666 = vunpack.c.l.b16 %v902
    %v3667 = vunpack.c.h.b16 %v902
    %v3668 = vunpack.c.l.b16 %v903
    %v3669 = vunpack.c.h.b16 %v903
    %v3670 = vunpack.c.l.b16 %v904
    %v3671 = vunpack.c.h.b16 %v904
    %v3672 = vunpack.c.l.b16 %v905
    %v3673 = vunpack.c.h.b16 %v905
    %v3674 = vunpack.c.l.b16 %v906
    %v3675 = vunpack.c.h.b16 %v906
    %v3676 = vunpack.c.l.b16 %v907
    %v3677 = vunpack.c.h.b16 %v907
    %v3678 = vunpack.c.l.b16 %v908
    %v3679 = vunpack.c.h.b16 %v908
    %v3680 = vunpack.c.l.b16 %v909
    %v3681 = vunpack.c.h.b16 %v909
    %v3682 = vunpack.c.l.b16 %v910
    %v3683 = vunpack.c.h.b16 %v910
    %v3684 = vunpack.c.l.b16 %v911
    %v3685 = vunpack.c.h.b16 %v911
    %v3686 = vunpack.c.l.b16 %v912
    %v3687 = vunpack.c.h.b16 %v912
    %v3688 = vunpack.c.l.b16 %v913
    %v3689 = vunpack.c.h.b16 %v913
    %v3690 = vunpack.c.l.b16 %v914
    %v3691 = vunpack.c.h.b16 %v914
    %v3692 = vunpack.c.l.b16 %v915
    %v3693 = vunpack.c.h.b16 %v915
    %v3694 = vunpack.c.l.b16 %v916
    %v3695 = vunpack.c.h.b16 %v916
    %v3696 = vunpack.c.l.b16 %v917
    %v3697 = vunpack.c.h.b16 %v917
    %v3698 = vunpack.c.l.b16 %v918
    %v3699 = vunpack.c.h.b16 %v918
    %v3700 = vunpack.c.l.b16 %v919
    %v3701 = vunpack.c.h.b16 %v919
    %v3702 = vunpack.c.l.b16 %v920
    %v3703 = vunpack.c.h.b16 %v920
    %v3704 = vunpack.c.l.b16 %v921
    %v3705 = vunpack.c.h.b16 %v921
    %v3706 = vunpack.c.l.b16 %v922
    %v3707 = vunpack.c.h.b16 %v922
    %v3708 = vunpack.c.l.b16 %v923
    %v3709 = vunpack.c.h.b16 %v923
    %v3710 = vunpack.c.l.b16 %v924
    %v3711 = vunpack.c.h.b16 %v924
    %v3712 = vunpack.c.l.b16 %v925
    %v3713 = vunpack.c.h.b16 %v925
    %v3714 = vunpack.c.l.b16 %v926
    %v3715 = vunpack.c.h.b16 %v926
    %v3716 = vunpack.c.l.b16 %v927
    %v3717 = vunpack.c.h.b16 %v927
    %v3718 = vunpack.c.l.b16 %v928
    %v3719 = vunpack.c.h.b16 %v928
    %v3720 = vunpack.c.l.b16 %v929
    %v3721 = vunpack.c.h.b16 %v929
    %v3722 = vunpack.c.l.b16 %v930
    %v3723 = vunpack.c.h.b16 %v930
    %v3724 = vunpack.c.l.b16 %v931
    %v3725 = vunpack.c.h.b16 %v931
    %v3726 = vunpack.c.l.b16 %v932
    %v3727 = vunpack.c.h.b16 %v932
    %v3728 = vunpack.c.l.b16 %v933
    %v3729 = vunpack.c.h.b16 %v933
    %v3730 = vunpack.c.l.b16 %v934
    %v3731 = vunpack.c.h.b16 %v934
    %v3732 = vunpack.c.l.b16 %v935
    %v3733 = vunpack.c.h.b16 %v935
    %v3734 = vunpack.c.l.b16 %v936
    %v3735 = vunpack.c.h.b16 %v936
    %v3736 = vunpack.c.l.b16 %v937
    %v3737 = vunpack.c.h.b16 %v937
    %v3738 = vunpack.c.l.b16 %v938
    %v3739 = vunpack.c.h.b16 %v938
    %v3740 = vunpack.c.l.b16 %v939
    %v3741 = vunpack.c.h.b16 %v939
    %v3742 = vunpack.c.l.b16 %v940
    %v3743 = vunpack.c.h.b16 %v940
    %v3744 = vunpack.c.l.b16 %v941
    %v3745 = vunpack.c.h.b16 %v941
    %v3746 = vunpack.c.l.b16 %v942
    %v3747 = vunpack.c.h.b16 %v942
    %v3748 = vunpack.c.l.b16 %v943
    %v3749 = vunpack.c.h.b16 %v943
    %v3750 = vunpack.c.l.b16 %v944
    %v3751 = vunpack.c.h.b16 %v944
    %v3752 = vunpack.c.l.b16 %v945
    %v3753 = vunpack.c.h.b16 %v945
    %v3754 = vunpack.c.l.b16 %v946
    %v3755 = vunpack.c.h.b16 %v946
    %v3756 = vunpack.c.l.b16 %v947
    %v3757 = vunpack.c.h.b16 %v947
    %v3758 = vunpack.c.l.b16 %v948
    %v3759 = vunpack.c.h.b16 %v948
    %v3760 = vunpack.c.l.b16 %v949
    %v3761 = vunpack.c.h.b16 %v949
    %v3762 = vunpack.c.l.b16 %v950
    %v3763 = vunpack.c.h.b16 %v950
    %v3764 = vunpack.c.l.b16 %v951
    %v3765 = vunpack.c.h.b16 %v951
    %v3766 = vunpack.c.l.b16 %v952
    %v3767 = vunpack.c.h.b16 %v952
    %v3768 = vunpack.c.l.b16 %v953
    %v3769 = vunpack.c.h.b16 %v953
    %v3770 = vunpack.c.l.b16 %v954
    %v3771 = vunpack.c.h.b16 %v954
    %v3772 = vunpack.c.l.b16 %v955
    %v3773 = vunpack.c.h.b16 %v955
    %v3774 = vunpack.c.l.b16 %v956
    %v3775 = vunpack.c.h.b16 %v956
    %v3776 = vunpack.c.l.b16 %v957
    %v3777 = vunpack.c.h.b16 %v957
    %v3778 = vunpack.c.l.b16 %v958
    %v3779 = vunpack.c.h.b16 %v958
    %v3780 = vunpack.c.l.b16 %v959
    %v3781 = vunpack.c.h.b16 %v959
    %v3782 = vunpack.c.l.b16 %v960
    %v3783 = vunpack.c.h.b16 %v960
    %v3784 = vunpack.c.l.b16 %v961
    %v3785 = vunpack.c.h.b16 %v961
    %v3786 = vunpack.c.l.b16 %v962
    %v3787 = vunpack.c.h.b16 %v962
    %v3788 = vunpack.c.l.b16 %v963
    %v3789 = vunpack.c.h.b16 %v963
    %v3790 = vunpack.c.l.b16 %v964
    %v3791 = vunpack.c.h.b16 %v964
    %v3792 = vunpack.c.l.b16 %v965
    %v3793 = vunpack.c.h.b16 %v965
    %v3794 = vunpack.c.l.b16 %v966
    %v3795 = vunpack.c.h.b16 %v966
    %v3796 = vunpack.c.l.b16 %v967
    %v3797 = vunpack.c.h.b16 %v967
    %v3798 = vunpack.c.l.b16 %v968
    %v3799 = vunpack.c.h.b16 %v968
    %v3800 = vunpack.c.l.b16 %v969
    %v3801 = vunpack.c.h.b16 %v969
    %v3802 = vunpack.c.l.b16 %v970
    %v3803 = vunpack.c.h.b16 %v970
    %v3804 = vunpack.c.l.b16 %v971
    %v3805 = vunpack.c.h.b16 %v971
    %v3806 = vunpack.c.l.b16 %v972
    %v3807 = vunpack.c.h.b16 %v972
    %v3808 = vunpack.c.l.b16 %v973
    %v3809 = vunpack.c.h.b16 %v973
    %v3810 = vunpack.c.l.b16 %v974
    %v3811 = vunpack.c.h.b16 %v974
    %v3812 = vunpack.c.l.b16 %v975
    %v3813 = vunpack.c.h.b16 %v975
    %v3814 = vunpack.c.l.b16 %v976
    %v3815 = vunpack.c.h.b16 %v976
    %v3816 = vunpack.c.l.b16 %v977
    %v3817 = vunpack.c.h.b16 %v977
    %v3818 = vunpack.c.l.b16 %v978
    %v3819 = vunpack.c.h.b16 %v978
    %v3820 = vunpack.c.l.b16 %v979
    %v3821 = vunpack.c.h.b16 %v979
    %v3822 = vunpack.c.l.b16 %v980
    %v3823 = vunpack.c.h.b16 %v980
    %v3824 = vunpack.c.l.b16 %v981
    %v3825 = vunpack.c.h.b16 %v981
    %v3826 = vunpack.c.l.b16 %v982
    %v3827 = vunpack.c.h.b16 %v982
    %v3828 = vunpack.c.l.b16 %v983
    %v3829 = vunpack.c.h.b16 %v983
    %v3830 = vunpack.c.l.b16 %v984
    %v3831 = vunpack.c.h.b16 %v984
    %v3832 = vunpack.c.l.b16 %v985
    %v3833 = vunpack.c.h.b16 %v985
    %v3834 = vunpack.c.l.b16 %v986
    %v3835 = vunpack.c.h.b16 %v986
    %v3836 = vunpack.c.l.b16 %v987
    %v3837 = vunpack.c.h.b16 %v987
    %v3838 = vunpack.c.l.b16 %v988
    %v3839 = vunpack.c.h.b16 %v988
    %v3840 = vunpack.c.l.b16 %v989
    %v3841 = vunpack.c.h.b16 %v989
    %v3842 = vunpack.c.l.b16 %v990
    %v3843 = vunpack.c.h.b16 %v990
    %v3844 = vunpack.c.l.b16 %v991
    %v3845 = vunpack.c.h.b16 %v991
    %v3846 = vunpack.c.l.b16 %v992
    %v3847 = vunpack.c.h.b16 %v992
    %v3848 = vunpack.c.l.b16 %v993
    %v3849 = vunpack.c.h.b16 %v993
    %v3850 = vunpack.c.l.b16 %v994
    %v3851 = vunpack.c.h.b16 %v994
    %v3852 = vunpack.c.l.b16 %v995
    %v3853 = vunpack.c.h.b16 %v995
    %v3854 = vunpack.c.l.b16 %v996
    %v3855 = vunpack.c.h.b16 %v996
    %v3856 = vunpack.c.l.b16 %v997
    %v3857 = vunpack.c.h.b16 %v997
    %v3858 = vunpack.c.l.b16 %v998
    %v3859 = vunpack.c.h.b16 %v998
    %v3860 = vunpack.c.l.b16 %v999
    %v3861 = vunpack.c.h.b16 %v999
    %v3862 = vunpack.c.l.b16 %v1000
    %v3863 = vunpack.c.h.b16 %v1000
    %v3864 = vunpack.c.l.b16 %v1001
    %v3865 = vunpack.c.h.b16 %v1001
    %v3866 = vunpack.c.l.b16 %v1002
    %v3867 = vunpack.c.h.b16 %v1002
    %v3868 = vunpack.c.l.b16 %v1003
    %v3869 = vunpack.c.h.b16 %v1003
    %v3870 = vunpack.c.l.b16 %v1004
    %v3871 = vunpack.c.h.b16 %v1004
    %v3872 = vunpack.c.l.b16 %v1005
    %v3873 = vunpack.c.h.b16 %v1005
    %v3874 = vunpack.c.l.b16 %v1006
    %v3875 = vunpack.c.h.b16 %v1006
    %v3876 = vunpack.c.l.b16 %v1007
    %v3877 = vunpack.c.h.b16 %v1007
    %v3878 = vunpack.c.l.b16 %v1008
    %v3879 = vunpack.c.h.b16 %v1008
    %v3880 = vunpack.c.l.b16 %v1009
    %v3881 = vunpack.c.h.b16 %v1009
    %v3882 = vunpack.c.l.b16 %v1010
    %v3883 = vunpack.c.h.b16 %v1010
    %v3884 = vunpack.c.l.b16 %v1011
    %v3885 = vunpack.c.h.b16 %v1011
    %v3886 = vunpack.c.l.b16 %v1012
    %v3887 = vunpack.c.h.b16 %v1012
    %v3888 = vunpack.c.l.b16 %v1013
    %v3889 = vunpack.c.h.b16 %v1013
    %v3890 = vunpack.c.l.b16 %v1014
    %v3891 = vunpack.c.h.b16 %v1014
    %v3892 = vunpack.c.l.b16 %v1015
    %v3893 = vunpack.c.h.b16 %v1015
    %v3894 = vunpack.c.l.b16 %v1016
    %v3895 = vunpack.c.h.b16 %v1016
    %v3896 = vunpack.c.l.b16 %v1017
    %v3897 = vunpack.c.h.b16 %v1017
    %v3898 = vunpack.c.l.b16 %v1018
    %v3899 = vunpack.c.h.b16 %v1018
    %v3900 = vunpack.c.l.b16 %v1019
    %v3901 = vunpack.c.h.b16 %v1019
    %v3902 = vunpack.c.l.b16 %v1020
    %v3903 = vunpack.c.h.b16 %v1020
    %v3904 = vunpack.c.l.b16 %v1021
    %v3905 = vunpack.c.h.b16 %v1021
    %v3906 = vunpack.c.l.b16 %v1022
    %v3907 = vunpack.c.h.b16 %v1022
    %v3908 = vunpack.c.l.b16 %v1023
    %v3909 = vunpack.c.h.b16 %v1023
    %v3910 = vunpack.c.l.b16 %v1024
    %v3911 = vunpack.c.h.b16 %v1024
    %v3912 = vunpack.c.l.b16 %v1025
    %v3913 = vunpack.c.h.b16 %v1025
    %v3914 = vunpack.c.l.b16 %v1026
    %v3915 = vunpack.c.h.b16 %v1026
    %v3916 = vunpack.c.l.b16 %v1027
    %v3917 = vunpack.c.h.b16 %v1027
    %v3918 = vunpack.c.l.b16 %v1028
    %v3919 = vunpack.c.h.b16 %v1028
    %v3920 = vunpack.c.l.b16 %v1029
    %v3921 = vunpack.c.h.b16 %v1029
    %v3922 = vunpack.c.l.b16 %v1030
    %v3923 = vunpack.c.h.b16 %v1030
    %v3924 = vunpack.c.l.b16 %v1031
    %v3925 = vunpack.c.h.b16 %v1031
    %v3926 = vunpack.c.l.b16 %v1032
    %v3927 = vunpack.c.h.b16 %v1032
    %v3928 = vunpack.c.l.b16 %v1033
    %v3929 = vunpack.c.h.b16 %v1033
    %v3930 = vunpack.c.l.b16 %v1034
    %v3931 = vunpack.c.h.b16 %v1034
    %v3932 = vunpack.c.l.b16 %v1035
    %v3933 = vunpack.c.h.b16 %v1035
    %v3934 = vunpack.c.l.b16 %v1036
    %v3935 = vunpack.c.h.b16 %v1036
    %v3936 = vunpack.c.l.b16 %v1037
    %v3937 = vunpack.c.h.b16 %v1037
    %v3938 = vunpack.c.l.b16 %v1038
    %v3939 = vunpack.c.h.b16 %v1038
    %v3940 = vunpack.c.l.b16 %v1039
    %v3941 = vunpack.c.h.b16 %v1039
    %v3942 = vunpack.c.l.b16 %v1040
    %v3943 = vunpack.c.h.b16 %v1040
    %v3944 = vunpack.c.l.b16 %v1041
    %v3945 = vunpack.c.h.b16 %v1041
    %v3946 = vunpack.c.l.b16 %v1042
    %v3947 = vunpack.c.h.b16 %v1042
    %v3948 = vunpack.c.l.b16 %v1043
    %v3949 = vunpack.c.h.b16 %v1043
    %v3950 = vunpack.c.l.b16 %v1044
    %v3951 = vunpack.c.h.b16 %v1044
    %v3952 = vunpack.c.l.b16 %v1045
    %v3953 = vunpack.c.h.b16 %v1045
    %v3954 = vunpack.c.l.b16 %v1046
    %v3955 = vunpack.c.h.b16 %v1046
    %v3956 = vunpack.c.l.b16 %v1047
    %v3957 = vunpack.c.h.b16 %v1047
    %v3958 = vunpack.c.l.b16 %v1048
    %v3959 = vunpack.c.h.b16 %v1048
    %v3960 = vunpack.c.l.b16 %v1049
    %v3961 = vunpack.c.h.b16 %v1049
    %v3962 = vunpack.c.l.b16 %v1050
    %v3963 = vunpack.c.h.b16 %v1050
    %v3964 = vunpack.c.l.b16 %v1051
    %v3965 = vunpack.c.h.b16 %v1051
    %v3966 = vunpack.c.l.b16 %v1052
    %v3967 = vunpack.c.h.b16 %v1052
    %v3968 = vunpack.c.l.b16 %v1053
    %v3969 = vunpack.c.h.b16 %v1053
    %v3970 = vunpack.c.l.b16 %v1054
    %v3971 = vunpack.c.h.b16 %v1054
    %v3972 = vunpack.c.l.b16 %v1055
    %v3973 = vunpack.c.h.b16 %v1055
    %v3974 = vunpack.c.l.b16 %v1056
    %v3975 = vunpack.c.h.b16 %v1056
    %v3976 = vunpack.c.l.b16 %v1057
    %v3977 = vunpack.c.h.b16 %v1057
    %v3978 = vunpack.c.l.b16 %v1058
    %v3979 = vunpack.c.h.b16 %v1058
    %v3980 = vunpack.c.l.b16 %v1059
    %v3981 = vunpack.c.h.b16 %v1059
    %v3982 = vunpack.c.l.b16 %v1060
    %v3983 = vunpack.c.h.b16 %v1060
    %v3984 = vunpack.c.l.b16 %v1061
    %v3985 = vunpack.c.h.b16 %v1061
    %v3986 = vunpack.c.l.b16 %v1062
    %v3987 = vunpack.c.h.b16 %v1062
    %v3988 = vunpack.c.l.b16 %v1063
    %v3989 = vunpack.c.h.b16 %v1063
    %v3990 = vunpack.c.l.b16 %v1064
    %v3991 = vunpack.c.h.b16 %v1064
    %v3992 = vunpack.c.l.b16 %v1065
    %v3993 = vunpack.c.h.b16 %v1065
    %v3994 = vunpack.c.l.b16 %v1066
    %v3995 = vunpack.c.h.b16 %v1066
    %v3996 = vunpack.c.l.b16 %v1067
    %v3997 = vunpack.c.h.b16 %v1067
    %v3998 = vunpack.c.l.b16 %v1068
    %v3999 = vunpack.c.h.b16 %v1068
    %v4000 = vunpack.c.l.b16 %v1069
    %v4001 = vunpack.c.h.b16 %v1069
    %v4002 = vunpack.c.l.b16 %v1070
    %v4003 = vunpack.c.h.b16 %v1070
    %v4004 = vunpack.c.l.b16 %v1071
    %v4005 = vunpack.c.h.b16 %v1071
    %v4006 = vunpack.c.l.b16 %v1072
    %v4007 = vunpack.c.h.b16 %v1072
    %v4008 = vunpack.c.l.b16 %v1073
    %v4009 = vunpack.c.h.b16 %v1073
    %v4010 = vunpack.c.l.b16 %v1074
    %v4011 = vunpack.c.h.b16 %v1074
    %v4012 = vunpack.c.l.b16 %v1075
    %v4013 = vunpack.c.h.b16 %v1075
    %v4014 = vunpack.c.l.b16 %v1076
    %v4015 = vunpack.c.h.b16 %v1076
    %v4016 = vunpack.c.l.b16 %v1077
    %v4017 = vunpack.c.h.b16 %v1077
    %v4018 = vunpack.c.l.b16 %v1078
    %v4019 = vunpack.c.h.b16 %v1078
    %v4020 = vunpack.c.l.b16 %v1079
    %v4021 = vunpack.c.h.b16 %v1079
    %v4022 = vunpack.c.l.b16 %v1080
    %v4023 = vunpack.c.h.b16 %v1080
    %v4024 = vunpack.c.l.b16 %v1081
    %v4025 = vunpack.c.h.b16 %v1081
    %v4026 = vunpack.c.l.b16 %v1082
    %v4027 = vunpack.c.h.b16 %v1082
    %v4028 = vunpack.c.l.b16 %v1083
    %v4029 = vunpack.c.h.b16 %v1083
    %v4030 = vunpack.c.l.b16 %v1084
    %v4031 = vunpack.c.h.b16 %v1084
    %v4032 = vunpack.c.l.b16 %v1085
    %v4033 = vunpack.c.h.b16 %v1085
    %v4034 = vunpack.c.l.b16 %v1086
    %v4035 = vunpack.c.h.b16 %v1086
    %v4036 = vunpack.c.l.b16 %v1087
    %v4037 = vunpack.c.h.b16 %v1087
    %v4038 = vunpack.c.l.b16 %v1088
    %v4039 = vunpack.c.h.b16 %v1088
    %v4040 = vunpack.c.l.b16 %v1089
    %v4041 = vunpack.c.h.b16 %v1089
    %v4042 = vunpack.c.l.b16 %v1090
    %v4043 = vunpack.c.h.b16 %v1090
    %v4044 = vunpack.c.l.b16 %v1091
    %v4045 = vunpack.c.h.b16 %v1091
    %v4046 = vunpack.c.l.b16 %v1092
    %v4047 = vunpack.c.h.b16 %v1092
    %v4048 = vunpack.c.l.b16 %v1093
    %v4049 = vunpack.c.h.b16 %v1093
    %v4050 = vunpack.c.l.b16 %v1094
    %v4051 = vunpack.c.h.b16 %v1094
    %v4052 = vunpack.c.l.b16 %v1095
    %v4053 = vunpack.c.h.b16 %v1095
    %v4054 = vunpack.c.l.b16 %v1096
    %v4055 = vunpack.c.h.b16 %v1096
    %v4056 = vunpack.c.l.b16 %v1097
    %v4057 = vunpack.c.h.b16 %v1097
    %v4058 = vunpack.c.l.b16 %v1098
    %v4059 = vunpack.c.h.b16 %v1098
    %v4060 = vunpack.c.l.b16 %v1099
    %v4061 = vunpack.c.h.b16 %v1099
    %v4062 = vunpack.c.l.b16 %v1100
    %v4063 = vunpack.c.h.b16 %v1100
    %v4064 = vunpack.c.l.b16 %v1101
    %v4065 = vunpack.c.h.b16 %v1101
    %v4066 = vunpack.c.l.b16 %v1102
    %v4067 = vunpack.c.h.b16 %v1102
    %v4068 = vunpack.c.l.b16 %v1103
    %v4069 = vunpack.c.h.b16 %v1103
    %v4070 = vunpack.c.l.b16 %v1104
    %v4071 = vunpack.c.h.b16 %v1104
    %v4072 = vunpack.c.l.b16 %v1105
    %v4073 = vunpack.c.h.b16 %v1105
    %v4074 = vunpack.c.l.b16 %v1106
    %v4075 = vunpack.c.h.b16 %v1106
    %v4076 = vunpack.c.l.b16 %v1107
    %v4077 = vunpack.c.h.b16 %v1107
    %v4078 = vunpack.c.l.b16 %v1108
    %v4079 = vunpack.c.h.b16 %v1108
    %v4080 = vunpack.c.l.b16 %v1109
    %v4081 = vunpack.c.h.b16 %v1109
    %v4082 = vunpack.c.l.b16 %v1110
    %v4083 = vunpack.c.h.b16 %v1110
    %v4084 = vunpack.c.l.b16 %v1111
    %v4085 = vunpack.c.h.b16 %v1111
    %v4086 = vunpack.c.l.b16 %v1112
    %v4087 = vunpack.c.h.b16 %v1112
    %v4088 = vunpack.c.l.b16 %v1113
    %v4089 = vunpack.c.h.b16 %v1113
    %v4090 = vunpack.c.l.b16 %v1114
    %v4091 = vunpack.c.h.b16 %v1114
    %v4092 = vunpack.c.l.b16 %v1115
    %v4093 = vunpack.c.h.b16 %v1115
    %v4094 = vunpack.c.l.b16 %v1116
    %v4095 = vunpack.c.h.b16 %v1116
    %v4096 = vunpack.c.l.b16 %v1117
    %v4097 = vunpack.c.h.b16 %v1117
    %v4098 = vunpack.c.l.b16 %v1118
    %v4099 = vunpack.c.h.b16 %v1118
    %v4100 = vunpack.c.l.b16 %v1119
    %v4101 = vunpack.c.h.b16 %v1119
    %v4102 = vunpack.c.l.b16 %v1120
    %v4103 = vunpack.c.h.b16 %v1120
    %v4104 = vunpack.c.l.b16 %v1121
    %v4105 = vunpack.c.h.b16 %v1121
    %v4106 = vunpack.c.l.b16 %v1122
    %v4107 = vunpack.c.h.b16 %v1122
    %v4108 = vunpack.c.l.b16 %v1123
    %v4109 = vunpack.c.h.b16 %v1123
    %v4110 = vunpack.c.l.b16 %v1124
    %v4111 = vunpack.c.h.b16 %v1124
    %v4112 = vunpack.c.l.b16 %v1125
    %v4113 = vunpack.c.h.b16 %v1125
    %v4114 = vunpack.c.l.b16 %v1126
    %v4115 = vunpack.c.h.b16 %v1126
    %v4116 = vunpack.c.l.b16 %v1127
    %v4117 = vunpack.c.h.b16 %v1127
    %v4118 = vunpack.c.l.b16 %v1128
    %v4119 = vunpack.c.h.b16 %v1128
    %v4120 = vunpack.c.l.b16 %v1129
    %v4121 = vunpack.c.h.b16 %v1129
    %v4122 = vunpack.c.l.b16 %v1130
    %v4123 = vunpack.c.h.b16 %v1130
    %v4124 = vunpack.c.l.b16 %v1131
    %v4125 = vunpack.c.h.b16 %v1131
    %v4126 = vunpack.c.l.b16 %v1132
    %v4127 = vunpack.c.h.b16 %v1132
    %v4128 = vunpack.c.l.b16 %v1133
    %v4129 = vunpack.c.h.b16 %v1133
    %v4130 = vunpack.c.l.b16 %v1134
    %v4131 = vunpack.c.h.b16 %v1134
    %v4132 = vunpack.c.l.b16 %v1135
    %v4133 = vunpack.c.h.b16 %v1135
    %v4134 = vunpack.c.l.b16 %v1136
    %v4135 = vunpack.c.h.b16 %v1136
    %v4136 = vunpack.c.l.b16 %v1137
    %v4137 = vunpack.c.h.b16 %v1137
    %v4138 = vunpack.c.l.b16 %v1138
    %v4139 = vunpack.c.h.b16 %v1138
    %v4140 = vunpack.c.l.b16 %v1139
    %v4141 = vunpack.c.h.b16 %v1139
    %v4142 = vunpack.c.l.b16 %v1140
    %v4143 = vunpack.c.h.b16 %v1140
    %v4144 = vunpack.c.l.b16 %v1141
    %v4145 = vunpack.c.h.b16 %v1141
    %v4146 = vunpack.c.l.b16 %v1142
    %v4147 = vunpack.c.h.b16 %v1142
    %v4148 = vunpack.c.l.b16 %v1143
    %v4149 = vunpack.c.h.b16 %v1143
    %v4150 = vunpack.c.l.b16 %v1144
    %v4151 = vunpack.c.h.b16 %v1144
    %v4152 = vunpack.c.l.b16 %v1145
    %v4153 = vunpack.c.h.b16 %v1145
    %v4154 = vunpack.c.l.b16 %v1146
    %v4155 = vunpack.c.h.b16 %v1146
    %v4156 = vunpack.c.l.b16 %v1147
    %v4157 = vunpack.c.h.b16 %v1147
    %v4158 = vunpack.c.l.b16 %v1148
    %v4159 = vunpack.c.h.b16 %v1148
    %v4160 = vunpack.c.l.b16 %v1149
    %v4161 = vunpack.c.h.b16 %v1149
    %v4162 = vunpack.c.l.b16 %v1150
    %v4163 = vunpack.c.h.b16 %v1150
    %v4164 = vunpack.c.l.b16 %v1151
    %v4165 = vunpack.c.h.b16 %v1151
    %v4166 = vunpack.c.l.b16 %v1152
    %v4167 = vunpack.c.h.b16 %v1152
    %v4168 = vunpack.c.l.b16 %v1153
    %v4169 = vunpack.c.h.b16 %v1153
    %v4170 = vunpack.c.l.b16 %v1154
    %v4171 = vunpack.c.h.b16 %v1154
    %v4172 = vunpack.c.l.b16 %v1155
    %v4173 = vunpack.c.h.b16 %v1155
    %v4174 = vunpack.c.l.b16 %v1156
    %v4175 = vunpack.c.h.b16 %v1156
    %v4176 = vunpack.c.l.b16 %v1157
    %v4177 = vunpack.c.h.b16 %v1157
    %v4178 = vunpack.c.l.b16 %v1158
    %v4179 = vunpack.c.h.b16 %v1158
    %v4180 = vunpack.c.l.b16 %v1159
    %v4181 = vunpack.c.h.b16 %v1159
    %v4182 = vunpack.c.l.b16 %v1160
    %v4183 = vunpack.c.h.b16 %v1160
    %v4184 = vunpack.c.l.b16 %v1161
    %v4185 = vunpack.c.h.b16 %v1161
    %v4186 = vunpack.c.l.b16 %v1162
    %v4187 = vunpack.c.h.b16 %v1162
    %v4188 = vunpack.c.l.b16 %v1163
    %v4189 = vunpack.c.h.b16 %v1163
    %v4190 = vunpack.c.l.b16 %v1164
    %v4191 = vunpack.c.h.b16 %v1164
    %v4192 = vunpack.c.l.b16 %v1165
    %v4193 = vunpack.c.h.b16 %v1165
    %v4194 = vunpack.c.l.b16 %v1166
    %v4195 = vunpack.c.h.b16 %v1166
    %v4196 = vunpack.c.l.b16 %v1167
    %v4197 = vunpack.c.h.b16 %v1167
    %v4198 = vunpack.c.l.b16 %v1168
    %v4199 = vunpack.c.h.b16 %v1168
    %v4200 = vunpack.c.l.b16 %v1169
    %v4201 = vunpack.c.h.b16 %v1169
    %v4202 = vunpack.c.l.b16 %v1170
    %v4203 = vunpack.c.h.b16 %v1170
    %v4204 = vunpack.c.l.b16 %v1171
    %v4205 = vunpack.c.h.b16 %v1171
    %v4206 = vunpack.c.l.b16 %v1172
    %v4207 = vunpack.c.h.b16 %v1172
    %v4208 = vunpack.c.l.b16 %v1173
    %v4209 = vunpack.c.h.b16 %v1173
    %v4210 = vunpack.c.l.b16 %v1174
    %v4211 = vunpack.c.h.b16 %v1174
    %v4212 = vunpack.c.l.b16 %v1175
    %v4213 = vunpack.c.h.b16 %v1175
    %v4214 = vunpack.c.l.b16 %v1176
    %v4215 = vunpack.c.h.b16 %v1176
    %v4216 = vunpack.c.l.b16 %v1177
    %v4217 = vunpack.c.h.b16 %v1177
    %v4218 = vunpack.c.l.b16 %v1178
    %v4219 = vunpack.c.h.b16 %v1178
    %v4220 = vunpack.c.l.b16 %v1179
    %v4221 = vunpack.c.h.b16 %v1179
    %v4222 = vunpack.c.l.b16 %v1180
    %v4223 = vunpack.c.h.b16 %v1180
    %v4224 = vunpack.c.l.b16 %v1181
    %v4225 = vunpack.c.h.b16 %v1181
    %v4226 = vunpack.c.l.b16 %v1182
    %v4227 = vunpack.c.h.b16 %v1182
    %v4228 = vunpack.c.l.b16 %v1183
    %v4229 = vunpack.c.h.b16 %v1183
    %v4230 = vunpack.c.l.b16 %v1184
    %v4231 = vunpack.c.h.b16 %v1184
    %v4232 = vunpack.c.l.b16 %v1185
    %v4233 = vunpack.c.h.b16 %v1185
    %v4234 = vunpack.c.l.b16 %v1186
    %v4235 = vunpack.c.h.b16 %v1186
    %v4236 = vunpack.c.l.b16 %v1187
    %v4237 = vunpack.c.h.b16 %v1187
    %v4238 = vunpack.c.l.b16 %v1188
    %v4239 = vunpack.c.h.b16 %v1188
    %v4240 = vunpack.c.l.b16 %v1189
    %v4241 = vunpack.c.h.b16 %v1189
    %v4242 = vunpack.c.l.b16 %v1190
    %v4243 = vunpack.c.h.b16 %v1190
    %v4244 = vunpack.c.l.b16 %v1191
    %v4245 = vunpack.c.h.b16 %v1191
    %v4246 = vunpack.c.l.b16 %v1192
    %v4247 = vunpack.c.h.b16 %v1192
    %v4248 = vunpack.c.l.b16 %v1193
    %v4249 = vunpack.c.h.b16 %v1193
    %v4250 = vunpack.c.l.b16 %v1194
    %v4251 = vunpack.c.h.b16 %v1194
    %v4252 = vunpack.c.l.b16 %v1195
    %v4253 = vunpack.c.h.b16 %v1195
    %v4254 = vunpack.c.l.b16 %v1196
    %v4255 = vunpack.c.h.b16 %v1196
    %v4256 = vunpack.c.l.b16 %v1197
    %v4257 = vunpack.c.h.b16 %v1197
    %v4258 = vunpack.c.l.b16 %v1198
    %v4259 = vunpack.c.h.b16 %v1198
    %v4260 = vunpack.c.l.b16 %v1199
    %v4261 = vunpack.c.h.b16 %v1199
    %v4262 = vunpack.c.l.b16 %v1200
    %v4263 = vunpack.c.h.b16 %v1200
    %v4264 = vunpack.c.l.b16 %v1201
    %v4265 = vunpack.c.h.b16 %v1201
    %v4266 = vunpack.c.l.b16 %v1202
    %v4267 = vunpack.c.h.b16 %v1202
    %v4268 = vunpack.c.l.b16 %v1203
    %v4269 = vunpack.c.h.b16 %v1203
    %v4270 = vunpack.c.l.b16 %v1204
    %v4271 = vunpack.c.h.b16 %v1204
    %v4272 = vunpack.c.l.b16 %v1205
    %v4273 = vunpack.c.h.b16 %v1205
    %v4274 = vunpack.c.l.b16 %v1206
    %v4275 = vunpack.c.h.b16 %v1206
    %v4276 = vunpack.c.l.b16 %v1207
    %v4277 = vunpack.c.h.b16 %v1207
    %v4278 = vunpack.c.l.b16 %v1208
    %v4279 = vunpack.c.h.b16 %v1208
    %v4280 = vunpack.c.l.b16 %v1209
    %v4281 = vunpack.c.h.b16 %v1209
    %v4282 = vunpack.c.l.b16 %v1210
    %v4283 = vunpack.c.h.b16 %v1210
    %v4284 = vunpack.c.l.b16 %v1211
    %v4285 = vunpack.c.h.b16 %v1211
    %v4286 = vunpack.c.l.b16 %v1212
    %v4287 = vunpack.c.h.b16 %v1212
    %v4288 = vunpack.c.l.b16 %v1213
    %v4289 = vunpack.c.h.b16 %v1213
    %v4290 = vunpack.c.l.b16 %v1214
    %v4291 = vunpack.c.h.b16 %v1214
    %v4292 = vunpack.c.l.b16 %v1215
    %v4293 = vunpack.c.h.b16 %v1215
    %v4294 = vunpack.c.l.b16 %v1216
    %v4295 = vunpack.c.h.b16 %v1216
    %v4296 = vunpack.c.l.b16 %v1217
    %v4297 = vunpack.c.h.b16 %v1217
    %v4298 = vunpack.c.l.b16 %v1218
    %v4299 = vunpack.c.h.b16 %v1218
    %v4300 = vunpack.c.l.b16 %v1219
    %v4301 = vunpack.c.h.b16 %v1219
    %v4302 = vunpack.c.l.b16 %v1220
    %v4303 = vunpack.c.h.b16 %v1220
    %v4304 = vunpack.c.l.b16 %v1221
    %v4305 = vunpack.c.h.b16 %v1221
    %v4306 = vunpack.c.l.b16 %v1222
    %v4307 = vunpack.c.h.b16 %v1222
    %v4308 = vunpack.c.l.b16 %v1223
    %v4309 = vunpack.c.h.b16 %v1223
    %v4310 = vunpack.c.l.b16 %v1224
    %v4311 = vunpack.c.h.b16 %v1224
    %v4312 = vunpack.c.l.b16 %v1225
    %v4313 = vunpack.c.h.b16 %v1225
    %v4314 = vunpack.c.l.b16 %v1226
    %v4315 = vunpack.c.h.b16 %v1226
    %v4316 = vunpack.c.l.b16 %v1227
    %v4317 = vunpack.c.h.b16 %v1227
    %v4318 = vunpack.c.l.b16 %v1228
    %v4319 = vunpack.c.h.b16 %v1228
    %v4320 = vunpack.c.l.b16 %v1229
    %v4321 = vunpack.c.h.b16 %v1229
    %v4322 = vunpack.c.l.b16 %v1230
    %v4323 = vunpack.c.h.b16 %v1230
    %v4324 = vunpack.c.l.b16 %v1231
    %v4325 = vunpack.c.h.b16 %v1231
    %v4326 = vunpack.c.l.b16 %v1232
    %v4327 = vunpack.c.h.b16 %v1232
    %v4328 = vunpack.c.l.b16 %v1233
    %v4329 = vunpack.c.h.b16 %v1233
    %v4330 = vunpack.c.l.b16 %v1234
    %v4331 = vunpack.c.h.b16 %v1234
    %v4332 = vunpack.c.l.b16 %v1235
    %v4333 = vunpack.c.h.b16 %v1235
    %v4334 = vunpack.c.l.b16 %v1236
    %v4335 = vunpack.c.h.b16 %v1236
    %v4336 = vunpack.c.l.b16 %v1237
    %v4337 = vunpack.c.h.b16 %v1237
    %v4338 = vunpack.c.l.b16 %v1238
    %v4339 = vunpack.c.h.b16 %v1238
    %v4340 = vunpack.c.l.b16 %v1239
    %v4341 = vunpack.c.h.b16 %v1239
    %v4342 = vunpack.c.l.b16 %v1240
    %v4343 = vunpack.c.h.b16 %v1240
    %v4344 = vunpack.c.l.b16 %v1241
    %v4345 = vunpack.c.h.b16 %v1241
    %v4346 = vunpack.c.l.b16 %v1242
    %v4347 = vunpack.c.h.b16 %v1242
    %v4348 = vunpack.c.l.b16 %v1243
    %v4349 = vunpack.c.h.b16 %v1243
    %v4350 = vunpack.c.l.b16 %v1244
    %v4351 = vunpack.c.h.b16 %v1244
    %v4352 = vunpack.c.l.b16 %v1245
    %v4353 = vunpack.c.h.b16 %v1245
    %v4354 = vunpack.c.l.b16 %v1246
    %v4355 = vunpack.c.h.b16 %v1246
    %v4356 = vunpack.c.l.b16 %v1247
    %v4357 = vunpack.c.h.b16 %v1247
    %v4358 = vunpack.c.l.b16 %v1248
    %v4359 = vunpack.c.h.b16 %v1248
    %v4360 = vunpack.c.l.b16 %v1249
    %v4361 = vunpack.c.h.b16 %v1249
    %v4362 = vunpack.c.l.b16 %v1250
    %v4363 = vunpack.c.h.b16 %v1250
    %v4364 = vunpack.c.l.b16 %v1251
    %v4365 = vunpack.c.h.b16 %v1251
    %v4366 = vpack.c.b16 %v2326, %v2318
    %v4367 = vpack.c.b16 %v2327, %v2319
    %v4368 = vpack.c.b16 %v2328, %v2320
    %v4369 = vpack.c.b16 %v2329, %v2321
    %v4370 = vpack.c.b16 %v2330, %v2322
    %v4371 = vpack.c.b16 %v2331, %v2323
    %v4372 = vpack.c.b16 %v2332, %v2324
    %v4373 = vpack.c.b16 %v2333, %v2325
    %v4374 = vpack.c.b16 %v2342, %v2334
    %v4375 = vpack.c.b16 %v2343, %v2335
    %v4376 = vpack.c.b16 %v2344, %v2336
    %v4377 = vpack.c.b16 %v2345, %v2337
    %v4378 = vpack.c.b16 %v2346, %v2338
    %v4379 = vpack.c.b16 %v2347, %v2339
    %v4380 = vpack.c.b16 %v2348, %v2340
    %v4381 = vpack.c.b16 %v2349, %v2341
    %v4382 = vpack.c.b16 %v2358, %v2350
    %v4383 = vpack.c.b16 %v2359, %v2351
    %v4384 = vpack.c.b16 %v2360, %v2352
    %v4385 = vpack.c.b16 %v2361, %v2353
    %v4386 = vpack.c.b16 %v2362, %v2354
    %v4387 = vpack.c.b16 %v2363, %v2355
    %v4388 = vpack.c.b16 %v2364, %v2356
    %v4389 = vpack.c.b16 %v2365, %v2357
    %v4390 = vpack.c.b16 %v2374, %v2366
    %v4391 = vpack.c.b16 %v2375, %v2367
    %v4392 = vpack.c.b16 %v2376, %v2368
    %v4393 = vpack.c.b16 %v2377, %v2369
    %v4394 = vpack.c.b16 %v2378, %v2370
    %v4395 = vpack.c.b16 %v2379, %v2371
    %v4396 = vpack.c.b16 %v2380, %v2372
    %v4397 = vpack.c.b16 %v2381, %v2373
    %v4398 = vpack.c.b16 %v2390, %v2382
    %v4399 = vpack.c.b16 %v2391, %v2383
    %v4400 = vpack.c.b16 %v2392, %v2384
    %v4401 = vpack.c.b16 %v2393, %v2385
    %v4402 = vpack.c.b16 %v2394, %v2386
    %v4403 = vpack.c.b16 %v2395, %v2387
    %v4404 = vpack.c.b16 %v2396, %v2388
    %v4405 = vpack.c.b16 %v2397, %v2389
    %v4406 = vpack.c.b16 %v2406, %v2398
    %v4407 = vpack.c.b16 %v2407, %v2399
    %v4408 = vpack.c.b16 %v2408, %v2400
    %v4409 = vpack.c.b16 %v2409, %v2401
    %v4410 = vpack.c.b16 %v2410, %v2402
    %v4411 = vpack.c.b16 %v2411, %v2403
    %v4412 = vpack.c.b16 %v2412, %v2404
    %v4413 = vpack.c.b16 %v2413, %v2405
    %v4414 = vpack.c.b16 %v2422, %v2414
    %v4415 = vpack.c.b16 %v2423, %v2415
    %v4416 = vpack.c.b16 %v2424, %v2416
    %v4417 = vpack.c.b16 %v2425, %v2417
    %v4418 = vpack.c.b16 %v2426, %v2418
    %v4419 = vpack.c.b16 %v2427, %v2419
    %v4420 = vpack.c.b16 %v2428, %v2420
    %v4421 = vpack.c.b16 %v2429, %v2421
    %v4422 = vpack.c.b16 %v2438, %v2430
    %v4423 = vpack.c.b16 %v2439, %v2431
    %v4424 = vpack.c.b16 %v2440, %v2432
    %v4425 = vpack.c.b16 %v2441, %v2433
    %v4426 = vpack.c.b16 %v2442, %v2434
    %v4427 = vpack.c.b16 %v2443, %v2435
    %v4428 = vpack.c.b16 %v2444, %v2436
    %v4429 = vpack.c.b16 %v2445, %v2437
    %v4430 = vpack.c.b16 %v2454, %v2446
    %v4431 = vpack.c.b16 %v2455, %v2447
    %v4432 = vpack.c.b16 %v2456, %v2448
    %v4433 = vpack.c.b16 %v2457, %v2449
    %v4434 = vpack.c.b16 %v2458, %v2450
    %v4435 = vpack.c.b16 %v2459, %v2451
    %v4436 = vpack.c.b16 %v2460, %v2452
    %v4437 = vpack.c.b16 %v2461, %v2453
    %v4438 = vpack.c.b16 %v2470, %v2462
    %v4439 = vpack.c.b16 %v2471, %v2463
    %v4440 = vpack.c.b16 %v2472, %v2464
    %v4441 = vpack.c.b16 %v2473, %v2465
    %v4442 = vpack.c.b16 %v2474, %v2466
    %v4443 = vpack.c.b16 %v2475, %v2467
    %v4444 = vpack.c.b16 %v2476, %v2468
    %v4445 = vpack.c.b16 %v2477, %v2469
    %v4446 = vpack.c.b16 %v2486, %v2478
    %v4447 = vpack.c.b16 %v2487, %v2479
    %v4448 = vpack.c.b16 %v2488, %v2480
    %v4449 = vpack.c.b16 %v2489, %v2481
    %v4450 = vpack.c.b16 %v2490, %v2482
    %v4451 = vpack.c.b16 %v2491, %v2483
    %v4452 = vpack.c.b16 %v2492, %v2484
    %v4453 = vpack.c.b16 %v2493, %v2485
    %v4454 = vpack.c.b16 %v2502, %v2494
    %v4455 = vpack.c.b16 %v2503, %v2495
    %v4456 = vpack.c.b16 %v2504, %v2496
    %v4457 = vpack.c.b16 %v2505, %v2497
    %v4458 = vpack.c.b16 %v2506, %v2498
    %v4459 = vpack.c.b16 %v2507, %v2499
    %v4460 = vpack.c.b16 %v2508, %v2500
    %v4461 = vpack.c.b16 %v2509, %v2501
    %v4462 = vpack.c.b16 %v2518, %v2510
    %v4463 = vpack.c.b16 %v2519, %v2511
    %v4464 = vpack.c.b16 %v2520, %v2512
    %v4465 = vpack.c.b16 %v2521, %v2513
    %v4466 = vpack.c.b16 %v2522, %v2514
    %v4467 = vpack.c.b16 %v2523, %v2515
    %v4468 = vpack.c.b16 %v2524, %v2516
    %v4469 = vpack.c.b16 %v2525, %v2517
    %v4470 = vpack.c.b16 %v2534, %v2526
    %v4471 = vpack.c.b16 %v2535, %v2527
    %v4472 = vpack.c.b16 %v2536, %v2528
    %v4473 = vpack.c.b16 %v2537, %v2529
    %v4474 = vpack.c.b16 %v2538, %v2530
    %v4475 = vpack.c.b16 %v2539, %v2531
    %v4476 = vpack.c.b16 %v2540, %v2532
    %v4477 = vpack.c.b16 %v2541, %v2533
    %v4478 = vpack.c.b16 %v2550, %v2542
    %v4479 = vpack.c.b16 %v2551, %v2543
    %v4480 = vpack.c.b16 %v2552, %v2544
    %v4481 = vpack.c.b16 %v2553, %v2545
    %v4482 = vpack.c.b16 %v2554, %v2546
    %v4483 = vpack.c.b16 %v2555, %v2547
    %v4484 = vpack.c.b16 %v2556, %v2548
    %v4485 = vpack.c.b16 %v2557, %v2549
    %v4486 = vpack.c.b16 %v2566, %v2558
    %v4487 = vpack.c.b16 %v2567, %v2559
    %v4488 = vpack.c.b16 %v2568, %v2560
    %v4489 = vpack.c.b16 %v2569, %v2561
    %v4490 = vpack.c.b16 %v2570, %v2562
    %v4491 = vpack.c.b16 %v2571, %v2563
    %v4492 = vpack.c.b16 %v2572, %v2564
    %v4493 = vpack.c.b16 %v2573, %v2565
    %v4494 = vpack.c.b16 %v2582, %v2574
    %v4495 = vpack.c.b16 %v2583, %v2575
    %v4496 = vpack.c.b16 %v2584, %v2576
    %v4497 = vpack.c.b16 %v2585, %v2577
    %v4498 = vpack.c.b16 %v2586, %v2578
    %v4499 = vpack.c.b16 %v2587, %v2579
    %v4500 = vpack.c.b16 %v2588, %v2580
    %v4501 = vpack.c.b16 %v2589, %v2581
    %v4502 = vpack.c.b16 %v2598, %v2590
    %v4503 = vpack.c.b16 %v2599, %v2591
    %v4504 = vpack.c.b16 %v2600, %v2592
    %v4505 = vpack.c.b16 %v2601, %v2593
    %v4506 = vpack.c.b16 %v2602, %v2594
    %v4507 = vpack.c.b16 %v2603, %v2595
    %v4508 = vpack.c.b16 %v2604, %v2596
    %v4509 = vpack.c.b16 %v2605, %v2597
    %v4510 = vpack.c.b16 %v2614, %v2606
    %v4511 = vpack.c.b16 %v2615, %v2607
    %v4512 = vpack.c.b16 %v2616, %v2608
    %v4513 = vpack.c.b16 %v2617, %v2609
    %v4514 = vpack.c.b16 %v2618, %v2610
    %v4515 = vpack.c.b16 %v2619, %v2611
    %v4516 = vpack.c.b16 %v2620, %v2612
    %v4517 = vpack.c.b16 %v2621, %v2613
    %v4518 = vpack.c.b16 %v2630, %v2622
    %v4519 = vpack.c.b16 %v2631, %v2623
    %v4520 = vpack.c.b16 %v2632, %v2624
    %v4521 = vpack.c.b16 %v2633, %v2625
    %v4522 = vpack.c.b16 %v2634, %v2626
    %v4523 = vpack.c.b16 %v2635, %v2627
    %v4524 = vpack.c.b16 %v2636, %v2628
    %v4525 = vpack.c.b16 %v2637, %v2629
    %v4526 = vpack.c.b16 %v2646, %v2638
    %v4527 = vpack.c.b16 %v2647, %v2639
    %v4528 = vpack.c.b16 %v2648, %v2640
    %v4529 = vpack.c.b16 %v2649, %v2641
    %v4530 = vpack.c.b16 %v2650, %v2642
    %v4531 = vpack.c.b16 %v2651, %v2643
    %v4532 = vpack.c.b16 %v2652, %v2644
    %v4533 = vpack.c.b16 %v2653, %v2645
    %v4534 = vpack.c.b16 %v2662, %v2654
    %v4535 = vpack.c.b16 %v2663, %v2655
    %v4536 = vpack.c.b16 %v2664, %v2656
    %v4537 = vpack.c.b16 %v2665, %v2657
    %v4538 = vpack.c.b16 %v2666, %v2658
    %v4539 = vpack.c.b16 %v2667, %v2659
    %v4540 = vpack.c.b16 %v2668, %v2660
    %v4541 = vpack.c.b16 %v2669, %v2661
    %v4542 = vpack.c.b16 %v2678, %v2670
    %v4543 = vpack.c.b16 %v2679, %v2671
    %v4544 = vpack.c.b16 %v2680, %v2672
    %v4545 = vpack.c.b16 %v2681, %v2673
    %v4546 = vpack.c.b16 %v2682, %v2674
    %v4547 = vpack.c.b16 %v2683, %v2675
    %v4548 = vpack.c.b16 %v2684, %v2676
    %v4549 = vpack.c.b16 %v2685, %v2677
    %v4550 = vpack.c.b16 %v2694, %v2686
    %v4551 = vpack.c.b16 %v2695, %v2687
    %v4552 = vpack.c.b16 %v2696, %v2688
    %v4553 = vpack.c.b16 %v2697, %v2689
    %v4554 = vpack.c.b16 %v2698, %v2690
    %v4555 = vpack.c.b16 %v2699, %v2691
    %v4556 = vpack.c.b16 %v2700, %v2692
    %v4557 = vpack.c.b16 %v2701, %v2693
    %v4558 = vpack.c.b16 %v2710, %v2702
    %v4559 = vpack.c.b16 %v2711, %v2703
    %v4560 = vpack.c.b16 %v2712, %v2704
    %v4561 = vpack.c.b16 %v2713, %v2705
    %v4562 = vpack.c.b16 %v2714, %v2706
    %v4563 = vpack.c.b16 %v2715, %v2707
    %v4564 = vpack.c.b16 %v2716, %v2708
    %v4565 = vpack.c.b16 %v2717, %v2709
    %v4566 = vpack.c.b16 %v2726, %v2718
    %v4567 = vpack.c.b16 %v2727, %v2719
    %v4568 = vpack.c.b16 %v2728, %v2720
    %v4569 = vpack.c.b16 %v2729, %v2721
    %v4570 = vpack.c.b16 %v2730, %v2722
    %v4571 = vpack.c.b16 %v2731, %v2723
    %v4572 = vpack.c.b16 %v2732, %v2724
    %v4573 = vpack.c.b16 %v2733, %v2725
    %v4574 = vpack.c.b16 %v2742, %v2734
    %v4575 = vpack.c.b16 %v2743, %v2735
    %v4576 = vpack.c.b16 %v2744, %v2736
    %v4577 = vpack.c.b16 %v2745, %v2737
    %v4578 = vpack.c.b16 %v2746, %v2738
    %v4579 = vpack.c.b16 %v2747, %v2739
    %v4580 = vpack.c.b16 %v2748, %v2740
    %v4581 = vpack.c.b16 %v2749, %v2741
    %v4582 = vpack.c.b16 %v2758, %v2750
    %v4583 = vpack.c.b16 %v2759, %v2751
    %v4584 = vpack.c.b16 %v2760, %v2752
    %v4585 = vpack.c.b16 %v2761, %v2753
    %v4586 = vpack.c.b16 %v2762, %v2754
    %v4587 = vpack.c.b16 %v2763, %v2755
    %v4588 = vpack.c.b16 %v2764, %v2756
    %v4589 = vpack.c.b16 %v2765, %v2757
    %v4590 = vpack.c.b16 %v2774, %v2766
    %v4591 = vpack.c.b16 %v2775, %v2767
    %v4592 = vpack.c.b16 %v2776, %v2768
    %v4593 = vpack.c.b16 %v2777, %v2769
    %v4594 = vpack.c.b16 %v2778, %v2770
    %v4595 = vpack.c.b16 %v2779, %v2771
    %v4596 = vpack.c.b16 %v2780, %v2772
    %v4597 = vpack.c.b16 %v2781, %v2773
    %v4598 = vpack.c.b16 %v2790, %v2782
    %v4599 = vpack.c.b16 %v2791, %v2783
    %v4600 = vpack.c.b16 %v2792, %v2784
    %v4601 = vpack.c.b16 %v2793, %v2785
    %v4602 = vpack.c.b16 %v2794, %v2786
    %v4603 = vpack.c.b16 %v2795, %v2787
    %v4604 = vpack.c.b16 %v2796, %v2788
    %v4605 = vpack.c.b16 %v2797, %v2789
    %v4606 = vpack.c.b16 %v2806, %v2798
    %v4607 = vpack.c.b16 %v2807, %v2799
    %v4608 = vpack.c.b16 %v2808, %v2800
    %v4609 = vpack.c.b16 %v2809, %v2801
    %v4610 = vpack.c.b16 %v2810, %v2802
    %v4611 = vpack.c.b16 %v2811, %v2803
    %v4612 = vpack.c.b16 %v2812, %v2804
    %v4613 = vpack.c.b16 %v2813, %v2805
    %v4614 = vpack.c.b16 %v2822, %v2814
    %v4615 = vpack.c.b16 %v2823, %v2815
    %v4616 = vpack.c.b16 %v2824, %v2816
    %v4617 = vpack.c.b16 %v2825, %v2817
    %v4618 = vpack.c.b16 %v2826, %v2818
    %v4619 = vpack.c.b16 %v2827, %v2819
    %v4620 = vpack.c.b16 %v2828, %v2820
    %v4621 = vpack.c.b16 %v2829, %v2821
    %v4622 = vpack.c.b16 %v2838, %v2830
    %v4623 = vpack.c.b16 %v2839, %v2831
    %v4624 = vpack.c.b16 %v2840, %v2832
    %v4625 = vpack.c.b16 %v2841, %v2833
    %v4626 = vpack.c.b16 %v2842, %v2834
    %v4627 = vpack.c.b16 %v2843, %v2835
    %v4628 = vpack.c.b16 %v2844, %v2836
    %v4629 = vpack.c.b16 %v2845, %v2837
    %v4630 = vpack.c.b16 %v2854, %v2846
    %v4631 = vpack.c.b16 %v2855, %v2847
    %v4632 = vpack.c.b16 %v2856, %v2848
    %v4633 = vpack.c.b16 %v2857, %v2849
    %v4634 = vpack.c.b16 %v2858, %v2850
    %v4635 = vpack.c.b16 %v2859, %v2851
    %v4636 = vpack.c.b16 %v2860, %v2852
    %v4637 = vpack.c.b16 %v2861, %v2853
    %v4638 = vpack.c.b16 %v2870, %v2862
    %v4639 = vpack.c.b16 %v2871, %v2863
    %v4640 = vpack.c.b16 %v2872, %v2864
    %v4641 = vpack.c.b16 %v2873, %v2865
    %v4642 = vpack.c.b16 %v2874, %v2866
    %v4643 = vpack.c.b16 %v2875, %v2867
    %v4644 = vpack.c.b16 %v2876, %v2868
    %v4645 = vpack.c.b16 %v2877, %v2869
    %v4646 = vpack.c.b16 %v2886, %v2878
    %v4647 = vpack.c.b16 %v2887, %v2879
    %v4648 = vpack.c.b16 %v2888, %v2880
    %v4649 = vpack.c.b16 %v2889, %v2881
    %v4650 = vpack.c.b16 %v2890, %v2882
    %v4651 = vpack.c.b16 %v2891, %v2883
    %v4652 = vpack.c.b16 %v2892, %v2884
    %v4653 = vpack.c.b16 %v2893, %v2885
    %v4654 = vpack.c.b16 %v2902, %v2894
    %v4655 = vpack.c.b16 %v2903, %v2895
    %v4656 = vpack.c.b16 %v2904, %v2896
    %v4657 = vpack.c.b16 %v2905, %v2897
    %v4658 = vpack.c.b16 %v2906, %v2898
    %v4659 = vpack.c.b16 %v2907, %v2899
    %v4660 = vpack.c.b16 %v2908, %v2900
    %v4661 = vpack.c.b16 %v2909, %v2901
    %v4662 = vpack.c.b16 %v2918, %v2910
    %v4663 = vpack.c.b16 %v2919, %v2911
    %v4664 = vpack.c.b16 %v2920, %v2912
    %v4665 = vpack.c.b16 %v2921, %v2913
    %v4666 = vpack.c.b16 %v2922, %v2914
    %v4667 = vpack.c.b16 %v2923, %v2915
    %v4668 = vpack.c.b16 %v2924, %v2916
    %v4669 = vpack.c.b16 %v2925, %v2917
    %v4670 = vpack.c.b16 %v2934, %v2926
    %v4671 = vpack.c.b16 %v2935, %v2927
    %v4672 = vpack.c.b16 %v2936, %v2928
    %v4673 = vpack.c.b16 %v2937, %v2929
    %v4674 = vpack.c.b16 %v2938, %v2930
    %v4675 = vpack.c.b16 %v2939, %v2931
    %v4676 = vpack.c.b16 %v2940, %v2932
    %v4677 = vpack.c.b16 %v2941, %v2933
    %v4678 = vpack.c.b16 %v2950, %v2942
    %v4679 = vpack.c.b16 %v2951, %v2943
    %v4680 = vpack.c.b16 %v2952, %v2944
    %v4681 = vpack.c.b16 %v2953, %v2945
    %v4682 = vpack.c.b16 %v2954, %v2946
    %v4683 = vpack.c.b16 %v2955, %v2947
    %v4684 = vpack.c.b16 %v2956, %v2948
    %v4685 = vpack.c.b16 %v2957, %v2949
    %v4686 = vpack.c.b16 %v2966, %v2958
    %v4687 = vpack.c.b16 %v2967, %v2959
    %v4688 = vpack.c.b16 %v2968, %v2960
    %v4689 = vpack.c.b16 %v2969, %v2961
    %v4690 = vpack.c.b16 %v2970, %v2962
    %v4691 = vpack.c.b16 %v2971, %v2963
    %v4692 = vpack.c.b16 %v2972, %v2964
    %v4693 = vpack.c.b16 %v2973, %v2965
    %v4694 = vpack.c.b16 %v2982, %v2974
    %v4695 = vpack.c.b16 %v2983, %v2975
    %v4696 = vpack.c.b16 %v2984, %v2976
    %v4697 = vpack.c.b16 %v2985, %v2977
    %v4698 = vpack.c.b16 %v2986, %v2978
    %v4699 = vpack.c.b16 %v2987, %v2979
    %v4700 = vpack.c.b16 %v2988, %v2980
    %v4701 = vpack.c.b16 %v2989, %v2981
    %v4702 = vpack.c.b16 %v2998, %v2990
    %v4703 = vpack.c.b16 %v2999, %v2991
    %v4704 = vpack.c.b16 %v3000, %v2992
    %v4705 = vpack.c.b16 %v3001, %v2993
    %v4706 = vpack.c.b16 %v3002, %v2994
    %v4707 = vpack.c.b16 %v3003, %v2995
    %v4708 = vpack.c.b16 %v3004, %v2996
    %v4709 = vpack.c.b16 %v3005, %v2997
    %v4710 = vpack.c.b16 %v3014, %v3006
    %v4711 = vpack.c.b16 %v3015, %v3007
    %v4712 = vpack.c.b16 %v3016, %v3008
    %v4713 = vpack.c.b16 %v3017, %v3009
    %v4714 = vpack.c.b16 %v3018, %v3010
    %v4715 = vpack.c.b16 %v3019, %v3011
    %v4716 = vpack.c.b16 %v3020, %v3012
    %v4717 = vpack.c.b16 %v3021, %v3013
    %v4718 = vpack.c.b16 %v3030, %v3022
    %v4719 = vpack.c.b16 %v3031, %v3023
    %v4720 = vpack.c.b16 %v3032, %v3024
    %v4721 = vpack.c.b16 %v3033, %v3025
    %v4722 = vpack.c.b16 %v3034, %v3026
    %v4723 = vpack.c.b16 %v3035, %v3027
    %v4724 = vpack.c.b16 %v3036, %v3028
    %v4725 = vpack.c.b16 %v3037, %v3029
    %v4726 = vpack.c.b16 %v3046, %v3038
    %v4727 = vpack.c.b16 %v3047, %v3039
    %v4728 = vpack.c.b16 %v3048, %v3040
    %v4729 = vpack.c.b16 %v3049, %v3041
    %v4730 = vpack.c.b16 %v3050, %v3042
    %v4731 = vpack.c.b16 %v3051, %v3043
    %v4732 = vpack.c.b16 %v3052, %v3044
    %v4733 = vpack.c.b16 %v3053, %v3045
    %v4734 = vpack.c.b16 %v3062, %v3054
    %v4735 = vpack.c.b16 %v3063, %v3055
    %v4736 = vpack.c.b16 %v3064, %v3056
    %v4737 = vpack.c.b16 %v3065, %v3057
    %v4738 = vpack.c.b16 %v3066, %v3058
    %v4739 = vpack.c.b16 %v3067, %v3059
    %v4740 = vpack.c.b16 %v3068, %v3060
    %v4741 = vpack.c.b16 %v3069, %v3061
    %v4742 = vpack.c.b16 %v3078, %v3070
    %v4743 = vpack.c.b16 %v3079, %v3071
    %v4744 = vpack.c.b16 %v3080, %v3072
    %v4745 = vpack.c.b16 %v3081, %v3073
    %v4746 = vpack.c.b16 %v3082, %v3074
    %v4747 = vpack.c.b16 %v3083, %v3075
    %v4748 = vpack.c.b16 %v3084, %v3076
    %v4749 = vpack.c.b16 %v3085, %v3077
    %v4750 = vpack.c.b16 %v3094, %v3086
    %v4751 = vpack.c.b16 %v3095, %v3087
    %v4752 = vpack.c.b16 %v3096, %v3088
    %v4753 = vpack.c.b16 %v3097, %v3089
    %v4754 = vpack.c.b16 %v3098, %v3090
    %v4755 = vpack.c.b16 %v3099, %v3091
    %v4756 = vpack.c.b16 %v3100, %v3092
    %v4757 = vpack.c.b16 %v3101, %v3093
    %v4758 = vpack.c.b16 %v3110, %v3102
    %v4759 = vpack.c.b16 %v3111, %v3103
    %v4760 = vpack.c.b16 %v3112, %v3104
    %v4761 = vpack.c.b16 %v3113, %v3105
    %v4762 = vpack.c.b16 %v3114, %v3106
    %v4763 = vpack.c.b16 %v3115, %v3107
    %v4764 = vpack.c.b16 %v3116, %v3108
    %v4765 = vpack.c.b16 %v3117, %v3109
    %v4766 = vpack.c.b16 %v3126, %v3118
    %v4767 = vpack.c.b16 %v3127, %v3119
    %v4768 = vpack.c.b16 %v3128, %v3120
    %v4769 = vpack.c.b16 %v3129, %v3121
    %v4770 = vpack.c.b16 %v3130, %v3122
    %v4771 = vpack.c.b16 %v3131, %v3123
    %v4772 = vpack.c.b16 %v3132, %v3124
    %v4773 = vpack.c.b16 %v3133, %v3125
    %v4774 = vpack.c.b16 %v3142, %v3134
    %v4775 = vpack.c.b16 %v3143, %v3135
    %v4776 = vpack.c.b16 %v3144, %v3136
    %v4777 = vpack.c.b16 %v3145, %v3137
    %v4778 = vpack.c.b16 %v3146, %v3138
    %v4779 = vpack.c.b16 %v3147, %v3139
    %v4780 = vpack.c.b16 %v3148, %v3140
    %v4781 = vpack.c.b16 %v3149, %v3141
    %v4782 = vpack.c.b16 %v3158, %v3150
    %v4783 = vpack.c.b16 %v3159, %v3151
    %v4784 = vpack.c.b16 %v3160, %v3152
    %v4785 = vpack.c.b16 %v3161, %v3153
    %v4786 = vpack.c.b16 %v3162, %v3154
    %v4787 = vpack.c.b16 %v3163, %v3155
    %v4788 = vpack.c.b16 %v3164, %v3156
    %v4789 = vpack.c.b16 %v3165, %v3157
    %v4790 = vpack.c.b16 %v3174, %v3166
    %v4791 = vpack.c.b16 %v3175, %v3167
    %v4792 = vpack.c.b16 %v3176, %v3168
    %v4793 = vpack.c.b16 %v3177, %v3169
    %v4794 = vpack.c.b16 %v3178, %v3170
    %v4795 = vpack.c.b16 %v3179, %v3171
    %v4796 = vpack.c.b16 %v3180, %v3172
    %v4797 = vpack.c.b16 %v3181, %v3173
    %v4798 = vpack.c.b16 %v3190, %v3182
    %v4799 = vpack.c.b16 %v3191, %v3183
    %v4800 = vpack.c.b16 %v3192, %v3184
    %v4801 = vpack.c.b16 %v3193, %v3185
    %v4802 = vpack.c.b16 %v3194, %v3186
    %v4803 = vpack.c.b16 %v3195, %v3187
    %v4804 = vpack.c.b16 %v3196, %v3188
    %v4805 = vpack.c.b16 %v3197, %v3189
    %v4806 = vpack.c.b16 %v3206, %v3198
    %v4807 = vpack.c.b16 %v3207, %v3199
    %v4808 = vpack.c.b16 %v3208, %v3200
    %v4809 = vpack.c.b16 %v3209, %v3201
    %v4810 = vpack.c.b16 %v3210, %v3202
    %v4811 = vpack.c.b16 %v3211, %v3203
    %v4812 = vpack.c.b16 %v3212, %v3204
    %v4813 = vpack.c.b16 %v3213, %v3205
    %v4814 = vpack.c.b16 %v3222, %v3214
    %v4815 = vpack.c.b16 %v3223, %v3215
    %v4816 = vpack.c.b16 %v3224, %v3216
    %v4817 = vpack.c.b16 %v3225, %v3217
    %v4818 = vpack.c.b16 %v3226, %v3218
    %v4819 = vpack.c.b16 %v3227, %v3219
    %v4820 = vpack.c.b16 %v3228, %v3220
    %v4821 = vpack.c.b16 %v3229, %v3221
    %v4822 = vpack.c.b16 %v3238, %v3230
    %v4823 = vpack.c.b16 %v3239, %v3231
    %v4824 = vpack.c.b16 %v3240, %v3232
    %v4825 = vpack.c.b16 %v3241, %v3233
    %v4826 = vpack.c.b16 %v3242, %v3234
    %v4827 = vpack.c.b16 %v3243, %v3235
    %v4828 = vpack.c.b16 %v3244, %v3236
    %v4829 = vpack.c.b16 %v3245, %v3237
    %v4830 = vpack.c.b16 %v3254, %v3246
    %v4831 = vpack.c.b16 %v3255, %v3247
    %v4832 = vpack.c.b16 %v3256, %v3248
    %v4833 = vpack.c.b16 %v3257, %v3249
    %v4834 = vpack.c.b16 %v3258, %v3250
    %v4835 = vpack.c.b16 %v3259, %v3251
    %v4836 = vpack.c.b16 %v3260, %v3252
    %v4837 = vpack.c.b16 %v3261, %v3253
    %v4838 = vpack.c.b16 %v3270, %v3262
    %v4839 = vpack.c.b16 %v3271, %v3263
    %v4840 = vpack.c.b16 %v3272, %v3264
    %v4841 = vpack.c.b16 %v3273, %v3265
    %v4842 = vpack.c.b16 %v3274, %v3266
    %v4843 = vpack.c.b16 %v3275, %v3267
    %v4844 = vpack.c.b16 %v3276, %v3268
    %v4845 = vpack.c.b16 %v3277, %v3269
    %v4846 = vpack.c.b16 %v3286, %v3278
    %v4847 = vpack.c.b16 %v3287, %v3279
    %v4848 = vpack.c.b16 %v3288, %v3280
    %v4849 = vpack.c.b16 %v3289, %v3281
    %v4850 = vpack.c.b16 %v3290, %v3282
    %v4851 = vpack.c.b16 %v3291, %v3283
    %v4852 = vpack.c.b16 %v3292, %v3284
    %v4853 = vpack.c.b16 %v3293, %v3285
    %v4854 = vpack.c.b16 %v3302, %v3294
    %v4855 = vpack.c.b16 %v3303, %v3295
    %v4856 = vpack.c.b16 %v3304, %v3296
    %v4857 = vpack.c.b16 %v3305, %v3297
    %v4858 = vpack.c.b16 %v3306, %v3298
    %v4859 = vpack.c.b16 %v3307, %v3299
    %v4860 = vpack.c.b16 %v3308, %v3300
    %v4861 = vpack.c.b16 %v3309, %v3301
    %v4862 = vpack.c.b16 %v3318, %v3310
    %v4863 = vpack.c.b16 %v3319, %v3311
    %v4864 = vpack.c.b16 %v3320, %v3312
    %v4865 = vpack.c.b16 %v3321, %v3313
    %v4866 = vpack.c.b16 %v3322, %v3314
    %v4867 = vpack.c.b16 %v3323, %v3315
    %v4868 = vpack.c.b16 %v3324, %v3316
    %v4869 = vpack.c.b16 %v3325, %v3317
    %v4870 = vpack.c.b16 %v3334, %v3326
    %v4871 = vpack.c.b16 %v3335, %v3327
    %v4872 = vpack.c.b16 %v3336, %v3328
    %v4873 = vpack.c.b16 %v3337, %v3329
    %v4874 = vpack.c.b16 %v3338, %v3330
    %v4875 = vpack.c.b16 %v3339, %v3331
    %v4876 = vpack.c.b16 %v3340, %v3332
    %v4877 = vpack.c.b16 %v3341, %v3333
    %v4878 = vpack.c.b16 %v3350, %v3342
    %v4879 = vpack.c.b16 %v3351, %v3343
    %v4880 = vpack.c.b16 %v3352, %v3344
    %v4881 = vpack.c.b16 %v3353, %v3345
    %v4882 = vpack.c.b16 %v3354, %v3346
    %v4883 = vpack.c.b16 %v3355, %v3347
    %v4884 = vpack.c.b16 %v3356, %v3348
    %v4885 = vpack.c.b16 %v3357, %v3349
    %v4886 = vpack.c.b16 %v3366, %v3358
    %v4887 = vpack.c.b16 %v3367, %v3359
    %v4888 = vpack.c.b16 %v3368, %v3360
    %v4889 = vpack.c.b16 %v3369, %v3361
    %v4890 = vpack.c.b16 %v3370, %v3362
    %v4891 = vpack.c.b16 %v3371, %v3363
    %v4892 = vpack.c.b16 %v3372, %v3364
    %v4893 = vpack.c.b16 %v3373, %v3365
    %v4894 = vpack.c.b16 %v3382, %v3374
    %v4895 = vpack.c.b16 %v3383, %v3375
    %v4896 = vpack.c.b16 %v3384, %v3376
    %v4897 = vpack.c.b16 %v3385, %v3377
    %v4898 = vpack.c.b16 %v3386, %v3378
    %v4899 = vpack.c.b16 %v3387, %v3379
    %v4900 = vpack.c.b16 %v3388, %v3380
    %v4901 = vpack.c.b16 %v3389, %v3381
    %v4902 = vpack.c.b16 %v3398, %v3390
    %v4903 = vpack.c.b16 %v3399, %v3391
    %v4904 = vpack.c.b16 %v3400, %v3392
    %v4905 = vpack.c.b16 %v3401, %v3393
    %v4906 = vpack.c.b16 %v3402, %v3394
    %v4907 = vpack.c.b16 %v3403, %v3395
    %v4908 = vpack.c.b16 %v3404, %v3396
    %v4909 = vpack.c.b16 %v3405, %v3397
    %v4910 = vpack.c.b16 %v3414, %v3406
    %v4911 = vpack.c.b16 %v3415, %v3407
    %v4912 = vpack.c.b16 %v3416, %v3408
    %v4913 = vpack.c.b16 %v3417, %v3409
    %v4914 = vpack.c.b16 %v3418, %v3410
    %v4915 = vpack.c.b16 %v3419, %v3411
    %v4916 = vpack.c.b16 %v3420, %v3412
    %v4917 = vpack.c.b16 %v3421, %v3413
    %v4918 = vpack.c.b16 %v3430, %v3422
    %v4919 = vpack.c.b16 %v3431, %v3423
    %v4920 = vpack.c.b16 %v3432, %v3424
    %v4921 = vpack.c.b16 %v3433, %v3425
    %v4922 = vpack.c.b16 %v3434, %v3426
    %v4923 = vpack.c.b16 %v3435, %v3427
    %v4924 = vpack.c.b16 %v3436, %v3428
    %v4925 = vpack.c.b16 %v3437, %v3429
    %v4926 = vpack.c.b16 %v3446, %v3438
    %v4927 = vpack.c.b16 %v3447, %v3439
    %v4928 = vpack.c.b16 %v3448, %v3440
    %v4929 = vpack.c.b16 %v3449, %v3441
    %v4930 = vpack.c.b16 %v3450, %v3442
    %v4931 = vpack.c.b16 %v3451, %v3443
    %v4932 = vpack.c.b16 %v3452, %v3444
    %v4933 = vpack.c.b16 %v3453, %v3445
    %v4934 = vpack.c.b16 %v3462, %v3454
    %v4935 = vpack.c.b16 %v3463, %v3455
    %v4936 = vpack.c.b16 %v3464, %v3456
    %v4937 = vpack.c.b16 %v3465, %v3457
    %v4938 = vpack.c.b16 %v3466, %v3458
    %v4939 = vpack.c.b16 %v3467, %v3459
    %v4940 = vpack.c.b16 %v3468, %v3460
    %v4941 = vpack.c.b16 %v3469, %v3461
    %v4942 = vpack.c.b16 %v3478, %v3470
    %v4943 = vpack.c.b16 %v3479, %v3471
    %v4944 = vpack.c.b16 %v3480, %v3472
    %v4945 = vpack.c.b16 %v3481, %v3473
    %v4946 = vpack.c.b16 %v3482, %v3474
    %v4947 = vpack.c.b16 %v3483, %v3475
    %v4948 = vpack.c.b16 %v3484, %v3476
    %v4949 = vpack.c.b16 %v3485, %v3477
    %v4950 = vpack.c.b16 %v3494, %v3486
    %v4951 = vpack.c.b16 %v3495, %v3487
    %v4952 = vpack.c.b16 %v3496, %v3488
    %v4953 = vpack.c.b16 %v3497, %v3489
    %v4954 = vpack.c.b16 %v3498, %v3490
    %v4955 = vpack.c.b16 %v3499, %v3491
    %v4956 = vpack.c.b16 %v3500, %v3492
    %v4957 = vpack.c.b16 %v3501, %v3493
    %v4958 = vpack.c.b16 %v3510, %v3502
    %v4959 = vpack.c.b16 %v3511, %v3503
    %v4960 = vpack.c.b16 %v3512, %v3504
    %v4961 = vpack.c.b16 %v3513, %v3505
    %v4962 = vpack.c.b16 %v3514, %v3506
    %v4963 = vpack.c.b16 %v3515, %v3507
    %v4964 = vpack.c.b16 %v3516, %v3508
    %v4965 = vpack.c.b16 %v3517, %v3509
    %v4966 = vpack.c.b16 %v3526, %v3518
    %v4967 = vpack.c.b16 %v3527, %v3519
    %v4968 = vpack.c.b16 %v3528, %v3520
    %v4969 = vpack.c.b16 %v3529, %v3521
    %v4970 = vpack.c.b16 %v3530, %v3522
    %v4971 = vpack.c.b16 %v3531, %v3523
    %v4972 = vpack.c.b16 %v3532, %v3524
    %v4973 = vpack.c.b16 %v3533, %v3525
    %v4974 = vpack.c.b16 %v3542, %v3534
    %v4975 = vpack.c.b16 %v3543, %v3535
    %v4976 = vpack.c.b16 %v3544, %v3536
    %v4977 = vpack.c.b16 %v3545, %v3537
    %v4978 = vpack.c.b16 %v3546, %v3538
    %v4979 = vpack.c.b16 %v3547, %v3539
    %v4980 = vpack.c.b16 %v3548, %v3540
    %v4981 = vpack.c.b16 %v3549, %v3541
    %v4982 = vpack.c.b16 %v3558, %v3550
    %v4983 = vpack.c.b16 %v3559, %v3551
    %v4984 = vpack.c.b16 %v3560, %v3552
    %v4985 = vpack.c.b16 %v3561, %v3553
    %v4986 = vpack.c.b16 %v3562, %v3554
    %v4987 = vpack.c.b16 %v3563, %v3555
    %v4988 = vpack.c.b16 %v3564, %v3556
    %v4989 = vpack.c.b16 %v3565, %v3557
    %v4990 = vpack.c.b16 %v3574, %v3566
    %v4991 = vpack.c.b16 %v3575, %v3567
    %v4992 = vpack.c.b16 %v3576, %v3568
    %v4993 = vpack.c.b16 %v3577, %v3569
    %v4994 = vpack.c.b16 %v3578, %v3570
    %v4995 = vpack.c.b16 %v3579, %v3571
    %v4996 = vpack.c.b16 %v3580, %v3572
    %v4997 = vpack.c.b16 %v3581, %v3573
    %v4998 = vpack.c.b16 %v3590, %v3582
    %v4999 = vpack.c.b16 %v3591, %v3583
    %v5000 = vpack.c.b16 %v3592, %v3584
    %v5001 = vpack.c.b16 %v3593, %v3585
    %v5002 = vpack.c.b16 %v3594, %v3586
    %v5003 = vpack.c.b16 %v3595, %v3587
    %v5004 = vpack.c.b16 %v3596, %v3588
    %v5005 = vpack.c.b16 %v3597, %v3589
    %v5006 = vpack.c.b16 %v3606, %v3598
    %v5007 = vpack.c.b16 %v3607, %v3599
    %v5008 = vpack.c.b16 %v3608, %v3600
    %v5009 = vpack.c.b16 %v3609, %v3601
    %v5010 = vpack.c.b16 %v3610, %v3602
    %v5011 = vpack.c.b16 %v3611, %v3603
    %v5012 = vpack.c.b16 %v3612, %v3604
    %v5013 = vpack.c.b16 %v3613, %v3605
    %v5014 = vpack.c.b16 %v3622, %v3614
    %v5015 = vpack.c.b16 %v3623, %v3615
    %v5016 = vpack.c.b16 %v3624, %v3616
    %v5017 = vpack.c.b16 %v3625, %v3617
    %v5018 = vpack.c.b16 %v3626, %v3618
    %v5019 = vpack.c.b16 %v3627, %v3619
    %v5020 = vpack.c.b16 %v3628, %v3620
    %v5021 = vpack.c.b16 %v3629, %v3621
    %v5022 = vpack.c.b16 %v3638, %v3630
    %v5023 = vpack.c.b16 %v3639, %v3631
    %v5024 = vpack.c.b16 %v3640, %v3632
    %v5025 = vpack.c.b16 %v3641, %v3633
    %v5026 = vpack.c.b16 %v3642, %v3634
    %v5027 = vpack.c.b16 %v3643, %v3635
    %v5028 = vpack.c.b16 %v3644, %v3636
    %v5029 = vpack.c.b16 %v3645, %v3637
    %v5030 = vpack.c.b16 %v3654, %v3646
    %v5031 = vpack.c.b16 %v3655, %v3647
    %v5032 = vpack.c.b16 %v3656, %v3648
    %v5033 = vpack.c.b16 %v3657, %v3649
    %v5034 = vpack.c.b16 %v3658, %v3650
    %v5035 = vpack.c.b16 %v3659, %v3651
    %v5036 = vpack.c.b16 %v3660, %v3652
    %v5037 = vpack.c.b16 %v3661, %v3653
    %v5038 = vpack.c.b16 %v3670, %v3662
    %v5039 = vpack.c.b16 %v3671, %v3663
    %v5040 = vpack.c.b16 %v3672, %v3664
    %v5041 = vpack.c.b16 %v3673, %v3665
    %v5042 = vpack.c.b16 %v3674, %v3666
    %v5043 = vpack.c.b16 %v3675, %v3667
    %v5044 = vpack.c.b16 %v3676, %v3668
    %v5045 = vpack.c.b16 %v3677, %v3669
    %v5046 = vpack.c.b16 %v3686, %v3678
    %v5047 = vpack.c.b16 %v3687, %v3679
    %v5048 = vpack.c.b16 %v3688, %v3680
    %v5049 = vpack.c.b16 %v3689, %v3681
    %v5050 = vpack.c.b16 %v3690, %v3682
    %v5051 = vpack.c.b16 %v3691, %v3683
    %v5052 = vpack.c.b16 %v3692, %v3684
    %v5053 = vpack.c.b16 %v3693, %v3685
    %v5054 = vpack.c.b16 %v3702, %v3694
    %v5055 = vpack.c.b16 %v3703, %v3695
    %v5056 = vpack.c.b16 %v3704, %v3696
    %v5057 = vpack.c.b16 %v3705, %v3697
    %v5058 = vpack.c.b16 %v3706, %v3698
    %v5059 = vpack.c.b16 %v3707, %v3699
    %v5060 = vpack.c.b16 %v3708, %v3700
    %v5061 = vpack.c.b16 %v3709, %v3701
    %v5062 = vpack.c.b16 %v3718, %v3710
    %v5063 = vpack.c.b16 %v3719, %v3711
    %v5064 = vpack.c.b16 %v3720, %v3712
    %v5065 = vpack.c.b16 %v3721, %v3713
    %v5066 = vpack.c.b16 %v3722, %v3714
    %v5067 = vpack.c.b16 %v3723, %v3715
    %v5068 = vpack.c.b16 %v3724, %v3716
    %v5069 = vpack.c.b16 %v3725, %v3717
    %v5070 = vpack.c.b16 %v3734, %v3726
    %v5071 = vpack.c.b16 %v3735, %v3727
    %v5072 = vpack.c.b16 %v3736, %v3728
    %v5073 = vpack.c.b16 %v3737, %v3729
    %v5074 = vpack.c.b16 %v3738, %v3730
    %v5075 = vpack.c.b16 %v3739, %v3731
    %v5076 = vpack.c.b16 %v3740, %v3732
    %v5077 = vpack.c.b16 %v3741, %v3733
    %v5078 = vpack.c.b16 %v3750, %v3742
    %v5079 = vpack.c.b16 %v3751, %v3743
    %v5080 = vpack.c.b16 %v3752, %v3744
    %v5081 = vpack.c.b16 %v3753, %v3745
    %v5082 = vpack.c.b16 %v3754, %v3746
    %v5083 = vpack.c.b16 %v3755, %v3747
    %v5084 = vpack.c.b16 %v3756, %v3748
    %v5085 = vpack.c.b16 %v3757, %v3749
    %v5086 = vpack.c.b16 %v3766, %v3758
    %v5087 = vpack.c.b16 %v3767, %v3759
    %v5088 = vpack.c.b16 %v3768, %v3760
    %v5089 = vpack.c.b16 %v3769, %v3761
    %v5090 = vpack.c.b16 %v3770, %v3762
    %v5091 = vpack.c.b16 %v3771, %v3763
    %v5092 = vpack.c.b16 %v3772, %v3764
    %v5093 = vpack.c.b16 %v3773, %v3765
    %v5094 = vpack.c.b16 %v3782, %v3774
    %v5095 = vpack.c.b16 %v3783, %v3775
    %v5096 = vpack.c.b16 %v3784, %v3776
    %v5097 = vpack.c.b16 %v3785, %v3777
    %v5098 = vpack.c.b16 %v3786, %v3778
    %v5099 = vpack.c.b16 %v3787, %v3779
    %v5100 = vpack.c.b16 %v3788, %v3780
    %v5101 = vpack.c.b16 %v3789, %v3781
    %v5102 = vpack.c.b16 %v3798, %v3790
    %v5103 = vpack.c.b16 %v3799, %v3791
    %v5104 = vpack.c.b16 %v3800, %v3792
    %v5105 = vpack.c.b16 %v3801, %v3793
    %v5106 = vpack.c.b16 %v3802, %v3794
    %v5107 = vpack.c.b16 %v3803, %v3795
    %v5108 = vpack.c.b16 %v3804, %v3796
    %v5109 = vpack.c.b16 %v3805, %v3797
    %v5110 = vpack.c.b16 %v3814, %v3806
    %v5111 = vpack.c.b16 %v3815, %v3807
    %v5112 = vpack.c.b16 %v3816, %v3808
    %v5113 = vpack.c.b16 %v3817, %v3809
    %v5114 = vpack.c.b16 %v3818, %v3810
    %v5115 = vpack.c.b16 %v3819, %v3811
    %v5116 = vpack.c.b16 %v3820, %v3812
    %v5117 = vpack.c.b16 %v3821, %v3813
    %v5118 = vpack.c.b16 %v3830, %v3822
    %v5119 = vpack.c.b16 %v3831, %v3823
    %v5120 = vpack.c.b16 %v3832, %v3824
    %v5121 = vpack.c.b16 %v3833, %v3825
    %v5122 = vpack.c.b16 %v3834, %v3826
    %v5123 = vpack.c.b16 %v3835, %v3827
    %v5124 = vpack.c.b16 %v3836, %v3828
    %v5125 = vpack.c.b16 %v3837, %v3829
    %v5126 = vpack.c.b16 %v3846, %v3838
    %v5127 = vpack.c.b16 %v3847, %v3839
    %v5128 = vpack.c.b16 %v3848, %v3840
    %v5129 = vpack.c.b16 %v3849, %v3841
    %v5130 = vpack.c.b16 %v3850, %v3842
    %v5131 = vpack.c.b16 %v3851, %v3843
    %v5132 = vpack.c.b16 %v3852, %v3844
    %v5133 = vpack.c.b16 %v3853, %v3845
    %v5134 = vpack.c.b16 %v3862, %v3854
    %v5135 = vpack.c.b16 %v3863, %v3855
    %v5136 = vpack.c.b16 %v3864, %v3856
    %v5137 = vpack.c.b16 %v3865, %v3857
    %v5138 = vpack.c.b16 %v3866, %v3858
    %v5139 = vpack.c.b16 %v3867, %v3859
    %v5140 = vpack.c.b16 %v3868, %v3860
    %v5141 = vpack.c.b16 %v3869, %v3861
    %v5142 = vpack.c.b16 %v3878, %v3870
    %v5143 = vpack.c.b16 %v3879, %v3871
    %v5144 = vpack.c.b16 %v3880, %v3872
    %v5145 = vpack.c.b16 %v3881, %v3873
    %v5146 = vpack.c.b16 %v3882, %v3874
    %v5147 = vpack.c.b16 %v3883, %v3875
    %v5148 = vpack.c.b16 %v3884, %v3876
    %v5149 = vpack.c.b16 %v3885, %v3877
    %v5150 = vpack.c.b16 %v3894, %v3886
    %v5151 = vpack.c.b16 %v3895, %v3887
    %v5152 = vpack.c.b16 %v3896, %v3888
    %v5153 = vpack.c.b16 %v3897, %v3889
    %v5154 = vpack.c.b16 %v3898, %v3890
    %v5155 = vpack.c.b16 %v3899, %v3891
    %v5156 = vpack.c.b16 %v3900, %v3892
    %v5157 = vpack.c.b16 %v3901, %v3893
    %v5158 = vpack.c.b16 %v3910, %v3902
    %v5159 = vpack.c.b16 %v3911, %v3903
    %v5160 = vpack.c.b16 %v3912, %v3904
    %v5161 = vpack.c.b16 %v3913, %v3905
    %v5162 = vpack.c.b16 %v3914, %v3906
    %v5163 = vpack.c.b16 %v3915, %v3907
    %v5164 = vpack.c.b16 %v3916, %v3908
    %v5165 = vpack.c.b16 %v3917, %v3909
    %v5166 = vpack.c.b16 %v3926, %v3918
    %v5167 = vpack.c.b16 %v3927, %v3919
    %v5168 = vpack.c.b16 %v3928, %v3920
    %v5169 = vpack.c.b16 %v3929, %v3921
    %v5170 = vpack.c.b16 %v3930, %v3922
    %v5171 = vpack.c.b16 %v3931, %v3923
    %v5172 = vpack.c.b16 %v3932, %v3924
    %v5173 = vpack.c.b16 %v3933, %v3925
    %v5174 = vpack.c.b16 %v3942, %v3934
    %v5175 = vpack.c.b16 %v3943, %v3935
    %v5176 = vpack.c.b16 %v3944, %v3936
    %v5177 = vpack.c.b16 %v3945, %v3937
    %v5178 = vpack.c.b16 %v3946, %v3938
    %v5179 = vpack.c.b16 %v3947, %v3939
    %v5180 = vpack.c.b16 %v3948, %v3940
    %v5181 = vpack.c.b16 %v3949, %v3941
    %v5182 = vpack.c.b16 %v3958, %v3950
    %v5183 = vpack.c.b16 %v3959, %v3951
    %v5184 = vpack.c.b16 %v3960, %v3952
    %v5185 = vpack.c.b16 %v3961, %v3953
    %v5186 = vpack.c.b16 %v3962, %v3954
    %v5187 = vpack.c.b16 %v3963, %v3955
    %v5188 = vpack.c.b16 %v3964, %v3956
    %v5189 = vpack.c.b16 %v3965, %v3957
    %v5190 = vpack.c.b16 %v3974, %v3966
    %v5191 = vpack.c.b16 %v3975, %v3967
    %v5192 = vpack.c.b16 %v3976, %v3968
    %v5193 = vpack.c.b16 %v3977, %v3969
    %v5194 = vpack.c.b16 %v3978, %v3970
    %v5195 = vpack.c.b16 %v3979, %v3971
    %v5196 = vpack.c.b16 %v3980, %v3972
    %v5197 = vpack.c.b16 %v3981, %v3973
    %v5198 = vpack.c.b16 %v3990, %v3982
    %v5199 = vpack.c.b16 %v3991, %v3983
    %v5200 = vpack.c.b16 %v3992, %v3984
    %v5201 = vpack.c.b16 %v3993, %v3985
    %v5202 = vpack.c.b16 %v3994, %v3986
    %v5203 = vpack.c.b16 %v3995, %v3987
    %v5204 = vpack.c.b16 %v3996, %v3988
    %v5205 = vpack.c.b16 %v3997, %v3989
    %v5206 = vpack.c.b16 %v4006, %v3998
    %v5207 = vpack.c.b16 %v4007, %v3999
    %v5208 = vpack.c.b16 %v4008, %v4000
    %v5209 = vpack.c.b16 %v4009, %v4001
    %v5210 = vpack.c.b16 %v4010, %v4002
    %v5211 = vpack.c.b16 %v4011, %v4003
    %v5212 = vpack.c.b16 %v4012, %v4004
    %v5213 = vpack.c.b16 %v4013, %v4005
    %v5214 = vpack.c.b16 %v4022, %v4014
    %v5215 = vpack.c.b16 %v4023, %v4015
    %v5216 = vpack.c.b16 %v4024, %v4016
    %v5217 = vpack.c.b16 %v4025, %v4017
    %v5218 = vpack.c.b16 %v4026, %v4018
    %v5219 = vpack.c.b16 %v4027, %v4019
    %v5220 = vpack.c.b16 %v4028, %v4020
    %v5221 = vpack.c.b16 %v4029, %v4021
    %v5222 = vpack.c.b16 %v4038, %v4030
    %v5223 = vpack.c.b16 %v4039, %v4031
    %v5224 = vpack.c.b16 %v4040, %v4032
    %v5225 = vpack.c.b16 %v4041, %v4033
    %v5226 = vpack.c.b16 %v4042, %v4034
    %v5227 = vpack.c.b16 %v4043, %v4035
    %v5228 = vpack.c.b16 %v4044, %v4036
    %v5229 = vpack.c.b16 %v4045, %v4037
    %v5230 = vpack.c.b16 %v4054, %v4046
    %v5231 = vpack.c.b16 %v4055, %v4047
    %v5232 = vpack.c.b16 %v4056, %v4048
    %v5233 = vpack.c.b16 %v4057, %v4049
    %v5234 = vpack.c.b16 %v4058, %v4050
    %v5235 = vpack.c.b16 %v4059, %v4051
    %v5236 = vpack.c.b16 %v4060, %v4052
    %v5237 = vpack.c.b16 %v4061, %v4053
    %v5238 = vpack.c.b16 %v4070, %v4062
    %v5239 = vpack.c.b16 %v4071, %v4063
    %v5240 = vpack.c.b16 %v4072, %v4064
    %v5241 = vpack.c.b16 %v4073, %v4065
    %v5242 = vpack.c.b16 %v4074, %v4066
    %v5243 = vpack.c.b16 %v4075, %v4067
    %v5244 = vpack.c.b16 %v4076, %v4068
    %v5245 = vpack.c.b16 %v4077, %v4069
    %v5246 = vpack.c.b16 %v4086, %v4078
    %v5247 = vpack.c.b16 %v4087, %v4079
    %v5248 = vpack.c.b16 %v4088, %v4080
    %v5249 = vpack.c.b16 %v4089, %v4081
    %v5250 = vpack.c.b16 %v4090, %v4082
    %v5251 = vpack.c.b16 %v4091, %v4083
    %v5252 = vpack.c.b16 %v4092, %v4084
    %v5253 = vpack.c.b16 %v4093, %v4085
    %v5254 = vpack.c.b16 %v4102, %v4094
    %v5255 = vpack.c.b16 %v4103, %v4095
    %v5256 = vpack.c.b16 %v4104, %v4096
    %v5257 = vpack.c.b16 %v4105, %v4097
    %v5258 = vpack.c.b16 %v4106, %v4098
    %v5259 = vpack.c.b16 %v4107, %v4099
    %v5260 = vpack.c.b16 %v4108, %v4100
    %v5261 = vpack.c.b16 %v4109, %v4101
    %v5262 = vpack.c.b16 %v4118, %v4110
    %v5263 = vpack.c.b16 %v4119, %v4111
    %v5264 = vpack.c.b16 %v4120, %v4112
    %v5265 = vpack.c.b16 %v4121, %v4113
    %v5266 = vpack.c.b16 %v4122, %v4114
    %v5267 = vpack.c.b16 %v4123, %v4115
    %v5268 = vpack.c.b16 %v4124, %v4116
    %v5269 = vpack.c.b16 %v4125, %v4117
    %v5270 = vpack.c.b16 %v4134, %v4126
    %v5271 = vpack.c.b16 %v4135, %v4127
    %v5272 = vpack.c.b16 %v4136, %v4128
    %v5273 = vpack.c.b16 %v4137, %v4129
    %v5274 = vpack.c.b16 %v4138, %v4130
    %v5275 = vpack.c.b16 %v4139, %v4131
    %v5276 = vpack.c.b16 %v4140, %v4132
    %v5277 = vpack.c.b16 %v4141, %v4133
    %v5278 = vpack.c.b16 %v4150, %v4142
    %v5279 = vpack.c.b16 %v4151, %v4143
    %v5280 = vpack.c.b16 %v4152, %v4144
    %v5281 = vpack.c.b16 %v4153, %v4145
    %v5282 = vpack.c.b16 %v4154, %v4146
    %v5283 = vpack.c.b16 %v4155, %v4147
    %v5284 = vpack.c.b16 %v4156, %v4148
    %v5285 = vpack.c.b16 %v4157, %v4149
    %v5286 = vpack.c.b16 %v4166, %v4158
    %v5287 = vpack.c.b16 %v4167, %v4159
    %v5288 = vpack.c.b16 %v4168, %v4160
    %v5289 = vpack.c.b16 %v4169, %v4161
    %v5290 = vpack.c.b16 %v4170, %v4162
    %v5291 = vpack.c.b16 %v4171, %v4163
    %v5292 = vpack.c.b16 %v4172, %v4164
    %v5293 = vpack.c.b16 %v4173, %v4165
    %v5294 = vpack.c.b16 %v4182, %v4174
    %v5295 = vpack.c.b16 %v4183, %v4175
    %v5296 = vpack.c.b16 %v4184, %v4176
    %v5297 = vpack.c.b16 %v4185, %v4177
    %v5298 = vpack.c.b16 %v4186, %v4178
    %v5299 = vpack.c.b16 %v4187, %v4179
    %v5300 = vpack.c.b16 %v4188, %v4180
    %v5301 = vpack.c.b16 %v4189, %v4181
    %v5302 = vpack.c.b16 %v4198, %v4190
    %v5303 = vpack.c.b16 %v4199, %v4191
    %v5304 = vpack.c.b16 %v4200, %v4192
    %v5305 = vpack.c.b16 %v4201, %v4193
    %v5306 = vpack.c.b16 %v4202, %v4194
    %v5307 = vpack.c.b16 %v4203, %v4195
    %v5308 = vpack.c.b16 %v4204, %v4196
    %v5309 = vpack.c.b16 %v4205, %v4197
    %v5310 = vpack.c.b16 %v4214, %v4206
    %v5311 = vpack.c.b16 %v4215, %v4207
    %v5312 = vpack.c.b16 %v4216, %v4208
    %v5313 = vpack.c.b16 %v4217, %v4209
    %v5314 = vpack.c.b16 %v4218, %v4210
    %v5315 = vpack.c.b16 %v4219, %v4211
    %v5316 = vpack.c.b16 %v4220, %v4212
    %v5317 = vpack.c.b16 %v4221, %v4213
    %v5318 = vpack.c.b16 %v4230, %v4222
    %v5319 = vpack.c.b16 %v4231, %v4223
    %v5320 = vpack.c.b16 %v4232, %v4224
    %v5321 = vpack.c.b16 %v4233, %v4225
    %v5322 = vpack.c.b16 %v4234, %v4226
    %v5323 = vpack.c.b16 %v4235, %v4227
    %v5324 = vpack.c.b16 %v4236, %v4228
    %v5325 = vpack.c.b16 %v4237, %v4229
    %v5326 = vpack.c.b16 %v4246, %v4238
    %v5327 = vpack.c.b16 %v4247, %v4239
    %v5328 = vpack.c.b16 %v4248, %v4240
    %v5329 = vpack.c.b16 %v4249, %v4241
    %v5330 = vpack.c.b16 %v4250, %v4242
    %v5331 = vpack.c.b16 %v4251, %v4243
    %v5332 = vpack.c.b16 %v4252, %v4244
    %v5333 = vpack.c.b16 %v4253, %v4245
    %v5334 = vpack.c.b16 %v4262, %v4254
    %v5335 = vpack.c.b16 %v4263, %v4255
    %v5336 = vpack.c.b16 %v4264, %v4256
    %v5337 = vpack.c.b16 %v4265, %v4257
    %v5338 = vpack.c.b16 %v4266, %v4258
    %v5339 = vpack.c.b16 %v4267, %v4259
    %v5340 = vpack.c.b16 %v4268, %v4260
    %v5341 = vpack.c.b16 %v4269, %v4261
    %v5342 = vpack.c.b16 %v4278, %v4270
    %v5343 = vpack.c.b16 %v4279, %v4271
    %v5344 = vpack.c.b16 %v4280, %v4272
    %v5345 = vpack.c.b16 %v4281, %v4273
    %v5346 = vpack.c.b16 %v4282, %v4274
    %v5347 = vpack.c.b16 %v4283, %v4275
    %v5348 = vpack.c.b16 %v4284, %v4276
    %v5349 = vpack.c.b16 %v4285, %v4277
    %v5350 = vpack.c.b16 %v4294, %v4286
    %v5351 = vpack.c.b16 %v4295, %v4287
    %v5352 = vpack.c.b16 %v4296, %v4288
    %v5353 = vpack.c.b16 %v4297, %v4289
    %v5354 = vpack.c.b16 %v4298, %v4290
    %v5355 = vpack.c.b16 %v4299, %v4291
    %v5356 = vpack.c.b16 %v4300, %v4292
    %v5357 = vpack.c.b16 %v4301, %v4293
    %v5358 = vpack.c.b16 %v4310, %v4302
    %v5359 = vpack.c.b16 %v4311, %v4303
    %v5360 = vpack.c.b16 %v4312, %v4304
    %v5361 = vpack.c.b16 %v4313, %v4305
    %v5362 = vpack.c.b16 %v4314, %v4306
    %v5363 = vpack.c.b16 %v4315, %v4307
    %v5364 = vpack.c.b16 %v4316, %v4308
    %v5365 = vpack.c.b16 %v4317, %v4309
    %v5366 = vpack.c.b16 %v4326, %v4318
    %v5367 = vpack.c.b16 %v4327, %v4319
    %v5368 = vpack.c.b16 %v4328, %v4320
    %v5369 = vpack.c.b16 %v4329, %v4321
    %v5370 = vpack.c.b16 %v4330, %v4322
    %v5371 = vpack.c.b16 %v4331, %v4323
    %v5372 = vpack.c.b16 %v4332, %v4324
    %v5373 = vpack.c.b16 %v4333, %v4325
    %v5374 = vpack.c.b16 %v4342, %v4334
    %v5375 = vpack.c.b16 %v4343, %v4335
    %v5376 = vpack.c.b16 %v4344, %v4336
    %v5377 = vpack.c.b16 %v4345, %v4337
    %v5378 = vpack.c.b16 %v4346, %v4338
    %v5379 = vpack.c.b16 %v4347, %v4339
    %v5380 = vpack.c.b16 %v4348, %v4340
    %v5381 = vpack.c.b16 %v4349, %v4341
    %v5382 = vpack.c.b16 %v4358, %v4350
    %v5383 = vpack.c.b16 %v4359, %v4351
    %v5384 = vpack.c.b16 %v4360, %v4352
    %v5385 = vpack.c.b16 %v4361, %v4353
    %v5386 = vpack.c.b16 %v4362, %v4354
    %v5387 = vpack.c.b16 %v4363, %v4355
    %v5388 = vpack.c.b16 %v4364, %v4356
    %v5389 = vpack.c.b16 %v4365, %v4357
    %6414 = vmatprep.subr.bf16.mxu0 %v4367
    %6415 = vmatpush1.bf16.msra.mxu0 %v4366
    %6416 = vmatprep.subr.bf16.mxu0 %v4375
    %6417 = vmatpush1.bf16.msra.mxu0 %v4374
    %6418 = vmatprep.subr.bf16.mxu0 %v4383
    %6419 = vmatpush1.bf16.msra.mxu0 %v4382
    %6420 = vmatprep.subr.bf16.mxu0 %v4391
    %6421 = vmatpush1.bf16.msra.mxu0 %v4390
    %6422 = vmatprep.subr.bf16.mxu0 %v4399
    %6423 = vmatpush1.bf16.msra.mxu0 %v4398
    %6424 = vmatprep.subr.bf16.mxu0 %v4407
    %6425 = vmatpush1.bf16.msra.mxu0 %v4406
    %6426 = vmatprep.subr.bf16.mxu0 %v4415
    %6427 = vmatpush1.bf16.msra.mxu0 %v4414
    %6428 = vmatprep.subr.bf16.mxu0 %v4423
    %6429 = vmatpush1.bf16.msra.mxu0 %v4422
    %6430 = vmatprep.subr.bf16.mxu0 %v4431
    %6431 = vmatpush1.bf16.msra.mxu0 %v4430
    %6432 = vmatprep.subr.bf16.mxu0 %v4439
    %6433 = vmatpush1.bf16.msra.mxu0 %v4438
    %6434 = vmatprep.subr.bf16.mxu0 %v4447
    %6435 = vmatpush1.bf16.msra.mxu0 %v4446
    %6436 = vmatprep.subr.bf16.mxu0 %v4455
    %6437 = vmatpush1.bf16.msra.mxu0 %v4454
    %6438 = vmatprep.subr.bf16.mxu0 %v4463
    %6439 = vmatpush1.bf16.msra.mxu0 %v4462
    %6440 = vmatprep.subr.bf16.mxu0 %v4471
    %6441 = vmatpush1.bf16.msra.mxu0 %v4470
    %6442 = vmatprep.subr.bf16.mxu0 %v4479
    %6443 = vmatpush1.bf16.msra.mxu0 %v4478
    %6444 = vmatprep.subr.bf16.mxu0 %v4487
    %6445 = vmatpush1.bf16.msra.mxu0 %v4486
    %6446 = vmatprep.mubr.bf16.mxu0 %v213
    %6447 = vmatmul.mubr.bf16.gmra.mrb[0].mxu0 %v212
    %v6448 = vpop.f32.mrb[0].mxu0
    %v6449 = vadd.f32 %v1257, %v6448
    %v6450 = vpop.f32.mrb[0].mxu0
    %v6451 = vadd.f32 %v1261, %v6450
    %v6452 = vpop.f32.mrb[0].mxu0
    %v6453 = vpop.f32.mrb[0].mxu0
    %6454 = vdwg.mxu0
    %6455 = vmatprep.subr.bf16.mxu0 %v4495
    %6456 = vmatpush1.bf16.msra.mxu0 %v4494
    %6457 = vmatprep.subr.bf16.mxu0 %v4503
    %6458 = vmatpush1.bf16.msra.mxu0 %v4502
    %6459 = vmatprep.subr.bf16.mxu0 %v4511
    %6460 = vmatpush1.bf16.msra.mxu0 %v4510
    %6461 = vmatprep.subr.bf16.mxu0 %v4519
    %6462 = vmatpush1.bf16.msra.mxu0 %v4518
    %6463 = vmatprep.subr.bf16.mxu0 %v4527
    %6464 = vmatpush1.bf16.msra.mxu0 %v4526
    %6465 = vmatprep.subr.bf16.mxu0 %v4535
    %6466 = vmatpush1.bf16.msra.mxu0 %v4534
    %6467 = vmatprep.subr.bf16.mxu0 %v4543
    %6468 = vmatpush1.bf16.msra.mxu0 %v4542
    %6469 = vmatprep.subr.bf16.mxu0 %v4551
    %6470 = vmatpush1.bf16.msra.mxu0 %v4550
    %6471 = vmatprep.subr.bf16.mxu0 %v4559
    %6472 = vmatpush1.bf16.msra.mxu0 %v4558
    %6473 = vmatprep.subr.bf16.mxu0 %v4567
    %6474 = vmatpush1.bf16.msra.mxu0 %v4566
    %6475 = vmatprep.subr.bf16.mxu0 %v4575
    %6476 = vmatpush1.bf16.msra.mxu0 %v4574
    %6477 = vmatprep.subr.bf16.mxu0 %v4583
    %6478 = vmatpush1.bf16.msra.mxu0 %v4582
    %6479 = vmatprep.subr.bf16.mxu0 %v4591
    %6480 = vmatpush1.bf16.msra.mxu0 %v4590
    %6481 = vmatprep.subr.bf16.mxu0 %v4599
    %6482 = vmatpush1.bf16.msra.mxu0 %v4598
    %6483 = vmatprep.subr.bf16.mxu0 %v4607
    %6484 = vmatpush1.bf16.msra.mxu0 %v4606
    %6485 = vmatprep.subr.bf16.mxu0 %v4615
    %6486 = vmatpush1.bf16.msra.mxu0 %v4614
    %6487 = vmatprep.mubr.bf16.mxu0 %v215
    %6488 = vmatmul.mubr.bf16.gmra.mrb[0].mxu0 %v214
    %v6489 = vpop.f32.mrb[0].mxu0
    %v6490 = vadd.f32 %v6449, %v6489
    %v6491 = vpop.f32.mrb[0].mxu0
    %v6492 = vadd.f32 %v6451, %v6491
    %v6493 = vpop.f32.mrb[0].mxu0
    %v6494 = vpop.f32.mrb[0].mxu0
    %6495 = vdwg.mxu0
    %6496 = vmatprep.subr.bf16.mxu0 %v4623
    %6497 = vmatpush1.bf16.msra.mxu0 %v4622
    %6498 = vmatprep.subr.bf16.mxu0 %v4631
    %6499 = vmatpush1.bf16.msra.mxu0 %v4630
    %6500 = vmatprep.subr.bf16.mxu0 %v4639
    %6501 = vmatpush1.bf16.msra.mxu0 %v4638
    %6502 = vmatprep.subr.bf16.mxu0 %v4647
    %6503 = vmatpush1.bf16.msra.mxu0 %v4646
    %6504 = vmatprep.subr.bf16.mxu0 %v4655
    %6505 = vmatpush1.bf16.msra.mxu0 %v4654
    %6506 = vmatprep.subr.bf16.mxu0 %v4663
    %6507 = vmatpush1.bf16.msra.mxu0 %v4662
    %6508 = vmatprep.subr.bf16.mxu0 %v4671
    %6509 = vmatpush1.bf16.msra.mxu0 %v4670
    %6510 = vmatprep.subr.bf16.mxu0 %v4679
    %6511 = vmatpush1.bf16.msra.mxu0 %v4678
    %6512 = vmatprep.subr.bf16.mxu0 %v4687
    %6513 = vmatpush1.bf16.msra.mxu0 %v4686
    %6514 = vmatprep.subr.bf16.mxu0 %v4695
    %6515 = vmatpush1.bf16.msra.mxu0 %v4694
    %6516 = vmatprep.subr.bf16.mxu0 %v4703
    %6517 = vmatpush1.bf16.msra.mxu0 %v4702
    %6518 = vmatprep.subr.bf16.mxu0 %v4711
    %6519 = vmatpush1.bf16.msra.mxu0 %v4710
    %6520 = vmatprep.subr.bf16.mxu0 %v4719
    %6521 = vmatpush1.bf16.msra.mxu0 %v4718
    %6522 = vmatprep.subr.bf16.mxu0 %v4727
    %6523 = vmatpush1.bf16.msra.mxu0 %v4726
    %6524 = vmatprep.subr.bf16.mxu0 %v4735
    %6525 = vmatpush1.bf16.msra.mxu0 %v4734
    %6526 = vmatprep.subr.bf16.mxu0 %v4743
    %6527 = vmatpush1.bf16.msra.mxu0 %v4742
    %6528 = vmatprep.mubr.bf16.mxu0 %v217
    %6529 = vmatmul.mubr.bf16.gmra.mrb[0].mxu0 %v216
    %v6530 = vpop.f32.mrb[0].mxu0
    %v6531 = vadd.f32 %v6490, %v6530
    %v6532 = vpop.f32.mrb[0].mxu0
    %v6533 = vadd.f32 %v6492, %v6532
    %v6534 = vpop.f32.mrb[0].mxu0
    %v6535 = vpop.f32.mrb[0].mxu0
    %6536 = vdwg.mxu0
    %6537 = vmatprep.subr.bf16.mxu0 %v4751
    %6538 = vmatpush1.bf16.msra.mxu0 %v4750
    %6539 = vmatprep.subr.bf16.mxu0 %v4759
    %6540 = vmatpush1.bf16.msra.mxu0 %v4758
    %6541 = vmatprep.subr.bf16.mxu0 %v4767
    %6542 = vmatpush1.bf16.msra.mxu0 %v4766
    %6543 = vmatprep.subr.bf16.mxu0 %v4775
    %6544 = vmatpush1.bf16.msra.mxu0 %v4774
    %6545 = vmatprep.subr.bf16.mxu0 %v4783
    %6546 = vmatpush1.bf16.msra.mxu0 %v4782
    %6547 = vmatprep.subr.bf16.mxu0 %v4791
    %6548 = vmatpush1.bf16.msra.mxu0 %v4790
    %6549 = vmatprep.subr.bf16.mxu0 %v4799
    %6550 = vmatpush1.bf16.msra.mxu0 %v4798
    %6551 = vmatprep.subr.bf16.mxu0 %v4807
    %6552 = vmatpush1.bf16.msra.mxu0 %v4806
    %6553 = vmatprep.subr.bf16.mxu0 %v4815
    %6554 = vmatpush1.bf16.msra.mxu0 %v4814
    %6555 = vmatprep.subr.bf16.mxu0 %v4823
    %6556 = vmatpush1.bf16.msra.mxu0 %v4822
    %6557 = vmatprep.subr.bf16.mxu0 %v4831
    %6558 = vmatpush1.bf16.msra.mxu0 %v4830
    %6559 = vmatprep.subr.bf16.mxu0 %v4839
    %6560 = vmatpush1.bf16.msra.mxu0 %v4838
    %6561 = vmatprep.subr.bf16.mxu0 %v4847
    %6562 = vmatpush1.bf16.msra.mxu0 %v4846
    %6563 = vmatprep.subr.bf16.mxu0 %v4855
    %6564 = vmatpush1.bf16.msra.mxu0 %v4854
    %6565 = vmatprep.subr.bf16.mxu0 %v4863
    %6566 = vmatpush1.bf16.msra.mxu0 %v4862
    %6567 = vmatprep.subr.bf16.mxu0 %v4871
    %6568 = vmatpush1.bf16.msra.mxu0 %v4870
    %6569 = vmatprep.mubr.bf16.mxu0 %v219
    %6570 = vmatmul.mubr.bf16.gmra.mrb[0].mxu0 %v218
    %v6571 = vpop.f32.mrb[0].mxu0
    %v6572 = vadd.f32 %v6531, %v6571
    %v6573 = vpop.f32.mrb[0].mxu0
    %v6574 = vadd.f32 %v6533, %v6573
    %v6575 = vpop.f32.mrb[0].mxu0
    %v6576 = vpop.f32.mrb[0].mxu0
    %6577 = vdwg.mxu0
    %6578 = vmatprep.subr.bf16.mxu0 %v4879
    %6579 = vmatpush1.bf16.msra.mxu0 %v4878
    %6580 = vmatprep.subr.bf16.mxu0 %v4887
    %6581 = vmatpush1.bf16.msra.mxu0 %v4886
    %6582 = vmatprep.subr.bf16.mxu0 %v4895
    %6583 = vmatpush1.bf16.msra.mxu0 %v4894
    %6584 = vmatprep.subr.bf16.mxu0 %v4903
    %6585 = vmatpush1.bf16.msra.mxu0 %v4902
    %6586 = vmatprep.subr.bf16.mxu0 %v4911
    %6587 = vmatpush1.bf16.msra.mxu0 %v4910
    %6588 = vmatprep.subr.bf16.mxu0 %v4919
    %6589 = vmatpush1.bf16.msra.mxu0 %v4918
    %6590 = vmatprep.subr.bf16.mxu0 %v4927
    %6591 = vmatpush1.bf16.msra.mxu0 %v4926
    %6592 = vmatprep.subr.bf16.mxu0 %v4935
    %6593 = vmatpush1.bf16.msra.mxu0 %v4934
    %6594 = vmatprep.subr.bf16.mxu0 %v4943
    %6595 = vmatpush1.bf16.msra.mxu0 %v4942
    %6596 = vmatprep.subr.bf16.mxu0 %v4951
    %6597 = vmatpush1.bf16.msra.mxu0 %v4950
    %6598 = vmatprep.subr.bf16.mxu0 %v4959
    %6599 = vmatpush1.bf16.msra.mxu0 %v4958
    %6600 = vmatprep.subr.bf16.mxu0 %v4967
    %6601 = vmatpush1.bf16.msra.mxu0 %v4966
    %6602 = vmatprep.subr.bf16.mxu0 %v4975
    %6603 = vmatpush1.bf16.msra.mxu0 %v4974
    %6604 = vmatprep.subr.bf16.mxu0 %v4983
    %6605 = vmatpush1.bf16.msra.mxu0 %v4982
    %6606 = vmatprep.subr.bf16.mxu0 %v4991
    %6607 = vmatpush1.bf16.msra.mxu0 %v4990
    %6608 = vmatprep.subr.bf16.mxu0 %v4999
    %6609 = vmatpush1.bf16.msra.mxu0 %v4998
    %6610 = vmatprep.mubr.bf16.mxu0 %v221
    %6611 = vmatmul.mubr.bf16.gmra.mrb[0].mxu0 %v220
    %v6612 = vpop.f32.mrb[0].mxu0
    %v6613 = vadd.f32 %v6572, %v6612
    %v6614 = vpop.f32.mrb[0].mxu0
    %v6615 = vadd.f32 %v6574, %v6614
    %v6616 = vpop.f32.mrb[0].mxu0
    %v6617 = vpop.f32.mrb[0].mxu0
    %6618 = vdwg.mxu0
    %6619 = vmatprep.subr.bf16.mxu0 %v5007
    %6620 = vmatpush1.bf16.msra.mxu0 %v5006
    %6621 = vmatprep.subr.bf16.mxu0 %v5015
    %6622 = vmatpush1.bf16.msra.mxu0 %v5014
    %6623 = vmatprep.subr.bf16.mxu0 %v5023
    %6624 = vmatpush1.bf16.msra.mxu0 %v5022
    %6625 = vmatprep.subr.bf16.mxu0 %v5031
    %6626 = vmatpush1.bf16.msra.mxu0 %v5030
    %6627 = vmatprep.subr.bf16.mxu0 %v5039
    %6628 = vmatpush1.bf16.msra.mxu0 %v5038
    %6629 = vmatprep.subr.bf16.mxu0 %v5047
    %6630 = vmatpush1.bf16.msra.mxu0 %v5046
    %6631 = vmatprep.subr.bf16.mxu0 %v5055
    %6632 = vmatpush1.bf16.msra.mxu0 %v5054
    %6633 = vmatprep.subr.bf16.mxu0 %v5063
    %6634 = vmatpush1.bf16.msra.mxu0 %v5062
    %6635 = vmatprep.subr.bf16.mxu0 %v5071
    %6636 = vmatpush1.bf16.msra.mxu0 %v5070
    %6637 = vmatprep.subr.bf16.mxu0 %v5079
    %6638 = vmatpush1.bf16.msra.mxu0 %v5078
    %6639 = vmatprep.subr.bf16.mxu0 %v5087
    %6640 = vmatpush1.bf16.msra.mxu0 %v5086
    %6641 = vmatprep.subr.bf16.mxu0 %v5095
    %6642 = vmatpush1.bf16.msra.mxu0 %v5094
    %6643 = vmatprep.subr.bf16.mxu0 %v5103
    %6644 = vmatpush1.bf16.msra.mxu0 %v5102
    %6645 = vmatprep.subr.bf16.mxu0 %v5111
    %6646 = vmatpush1.bf16.msra.mxu0 %v5110
    %6647 = vmatprep.subr.bf16.mxu0 %v5119
    %6648 = vmatpush1.bf16.msra.mxu0 %v5118
    %6649 = vmatprep.subr.bf16.mxu0 %v5127
    %6650 = vmatpush1.bf16.msra.mxu0 %v5126
    %6651 = vmatprep.mubr.bf16.mxu0 %v223
    %6652 = vmatmul.mubr.bf16.gmra.mrb[0].mxu0 %v222
    %v6653 = vpop.f32.mrb[0].mxu0
    %v6654 = vadd.f32 %v6613, %v6653
    %v6655 = vpop.f32.mrb[0].mxu0
    %v6656 = vadd.f32 %v6615, %v6655
    %v6657 = vpop.f32.mrb[0].mxu0
    %v6658 = vpop.f32.mrb[0].mxu0
    %6659 = vdwg.mxu0
    %6660 = vmatprep.subr.bf16.mxu0 %v5135
    %6661 = vmatpush1.bf16.msra.mxu0 %v5134
    %6662 = vmatprep.subr.bf16.mxu0 %v5143
    %6663 = vmatpush1.bf16.msra.mxu0 %v5142
    %6664 = vmatprep.subr.bf16.mxu0 %v5151
    %6665 = vmatpush1.bf16.msra.mxu0 %v5150
    %6666 = vmatprep.subr.bf16.mxu0 %v5159
    %6667 = vmatpush1.bf16.msra.mxu0 %v5158
    %6668 = vmatprep.subr.bf16.mxu0 %v5167
    %6669 = vmatpush1.bf16.msra.mxu0 %v5166
    %6670 = vmatprep.subr.bf16.mxu0 %v5175
    %6671 = vmatpush1.bf16.msra.mxu0 %v5174
    %6672 = vmatprep.subr.bf16.mxu0 %v5183
    %6673 = vmatpush1.bf16.msra.mxu0 %v5182
    %6674 = vmatprep.subr.bf16.mxu0 %v5191
    %6675 = vmatpush1.bf16.msra.mxu0 %v5190
    %6676 = vmatprep.subr.bf16.mxu0 %v5199
    %6677 = vmatpush1.bf16.msra.mxu0 %v5198
    %6678 = vmatprep.subr.bf16.mxu0 %v5207
    %6679 = vmatpush1.bf16.msra.mxu0 %v5206
    %6680 = vmatprep.subr.bf16.mxu0 %v5215
    %6681 = vmatpush1.bf16.msra.mxu0 %v5214
    %6682 = vmatprep.subr.bf16.mxu0 %v5223
    %6683 = vmatpush1.bf16.msra.mxu0 %v5222
    %6684 = vmatprep.subr.bf16.mxu0 %v5231
    %6685 = vmatpush1.bf16.msra.mxu0 %v5230
    %6686 = vmatprep.subr.bf16.mxu0 %v5239
    %6687 = vmatpush1.bf16.msra.mxu0 %v5238
    %6688 = vmatprep.subr.bf16.mxu0 %v5247
    %6689 = vmatpush1.bf16.msra.mxu0 %v5246
    %6690 = vmatprep.subr.bf16.mxu0 %v5255
    %6691 = vmatpush1.bf16.msra.mxu0 %v5254
    %6692 = vmatprep.mubr.bf16.mxu0 %v225
    %6693 = vmatmul.mubr.bf16.gmra.mrb[0].mxu0 %v224
    %v6694 = vpop.f32.mrb[0].mxu0
    %v6695 = vadd.f32 %v6654, %v6694
    %v6696 = vpop.f32.mrb[0].mxu0
    %v6697 = vadd.f32 %v6656, %v6696
    %v6698 = vpop.f32.mrb[0].mxu0
    %v6699 = vpop.f32.mrb[0].mxu0
    %6700 = vdwg.mxu0
    %6701 = vmatprep.subr.bf16.mxu0 %v5263
    %6702 = vmatpush1.bf16.msra.mxu0 %v5262
    %6703 = vmatprep.subr.bf16.mxu0 %v5271
    %6704 = vmatpush1.bf16.msra.mxu0 %v5270
    %6705 = vmatprep.subr.bf16.mxu0 %v5279
    %6706 = vmatpush1.bf16.msra.mxu0 %v5278
    %6707 = vmatprep.subr.bf16.mxu0 %v5287
    %6708 = vmatpush1.bf16.msra.mxu0 %v5286
    %6709 = vmatprep.subr.bf16.mxu0 %v5295
    %6710 = vmatpush1.bf16.msra.mxu0 %v5294
    %6711 = vmatprep.subr.bf16.mxu0 %v5303
    %6712 = vmatpush1.bf16.msra.mxu0 %v5302
    %6713 = vmatprep.subr.bf16.mxu0 %v5311
    %6714 = vmatpush1.bf16.msra.mxu0 %v5310
    %6715 = vmatprep.subr.bf16.mxu0 %v5319
    %6716 = vmatpush1.bf16.msra.mxu0 %v5318
    %6717 = vmatprep.subr.bf16.mxu0 %v5327
    %6718 = vmatpush1.bf16.msra.mxu0 %v5326
    %6719 = vmatprep.subr.bf16.mxu0 %v5335
    %6720 = vmatpush1.bf16.msra.mxu0 %v5334
    %6721 = vmatprep.subr.bf16.mxu0 %v5343
    %6722 = vmatpush1.bf16.msra.mxu0 %v5342
    %6723 = vmatprep.subr.bf16.mxu0 %v5351
    %6724 = vmatpush1.bf16.msra.mxu0 %v5350
    %6725 = vmatprep.subr.bf16.mxu0 %v5359
    %6726 = vmatpush1.bf16.msra.mxu0 %v5358
    %6727 = vmatprep.subr.bf16.mxu0 %v5367
    %6728 = vmatpush1.bf16.msra.mxu0 %v5366
    %6729 = vmatprep.subr.bf16.mxu0 %v5375
    %6730 = vmatpush1.bf16.msra.mxu0 %v5374
    %6731 = vmatprep.subr.bf16.mxu0 %v5383
    %6732 = vmatpush1.bf16.msra.mxu0 %v5382
    %6733 = vmatprep.mubr.bf16.mxu0 %v227
    %6734 = vmatmul.mubr.bf16.gmra.mrb[0].mxu0 %v226
    %v6735 = vpop.f32.mrb[0].mxu0
    %v6736 = vadd.f32 %v6695, %v6735
    %v6737 = vpop.f32.mrb[0].mxu0
    %v6738 = vadd.f32 %v6697, %v6737
    %v6739 = vpop.f32.mrb[0].mxu0
    %v6740 = vpop.f32.mrb[0].mxu0
    %6741 = vdwg.mxu0
    %6742 = vmatprep.subr.bf16.mxu0 %v4369
    %6743 = vmatpush1.bf16.msra.mxu0 %v4368
    %6744 = vmatprep.subr.bf16.mxu0 %v4377
    %6745 = vmatpush1.bf16.msra.mxu0 %v4376
    %6746 = vmatprep.subr.bf16.mxu0 %v4385
    %6747 = vmatpush1.bf16.msra.mxu0 %v4384
    %6748 = vmatprep.subr.bf16.mxu0 %v4393
    %6749 = vmatpush1.bf16.msra.mxu0 %v4392
    %6750 = vmatprep.subr.bf16.mxu0 %v4401
    %6751 = vmatpush1.bf16.msra.mxu0 %v4400
    %6752 = vmatprep.subr.bf16.mxu0 %v4409
    %6753 = vmatpush1.bf16.msra.mxu0 %v4408
    %6754 = vmatprep.subr.bf16.mxu0 %v4417
    %6755 = vmatpush1.bf16.msra.mxu0 %v4416
    %6756 = vmatprep.subr.bf16.mxu0 %v4425
    %6757 = vmatpush1.bf16.msra.mxu0 %v4424
    %6758 = vmatprep.subr.bf16.mxu0 %v4433
    %6759 = vmatpush1.bf16.msra.mxu0 %v4432
    %6760 = vmatprep.subr.bf16.mxu0 %v4441
    %6761 = vmatpush1.bf16.msra.mxu0 %v4440
    %6762 = vmatprep.subr.bf16.mxu0 %v4449
    %6763 = vmatpush1.bf16.msra.mxu0 %v4448
    %6764 = vmatprep.subr.bf16.mxu0 %v4457
    %6765 = vmatpush1.bf16.msra.mxu0 %v4456
    %6766 = vmatprep.subr.bf16.mxu0 %v4465
    %6767 = vmatpush1.bf16.msra.mxu0 %v4464
    %6768 = vmatprep.subr.bf16.mxu0 %v4473
    %6769 = vmatpush1.bf16.msra.mxu0 %v4472
    %6770 = vmatprep.subr.bf16.mxu0 %v4481
    %6771 = vmatpush1.bf16.msra.mxu0 %v4480
    %6772 = vmatprep.subr.bf16.mxu0 %v4489
    %6773 = vmatpush1.bf16.msra.mxu0 %v4488
    %6774 = vmatprep.mubr.bf16.mxu0 %v213
    %6775 = vmatmul.mubr.bf16.gmra.mrb[0].mxu0 %v212
    %v6776 = vpop.f32.mrb[0].mxu0
    %v6777 = vadd.f32 %v1265, %v6776
    %v6778 = vpop.f32.mrb[0].mxu0
    %v6779 = vadd.f32 %v1269, %v6778
    %v6780 = vpop.f32.mrb[0].mxu0
    %v6781 = vpop.f32.mrb[0].mxu0
    %6782 = vdwg.mxu0
    %6783 = vmatprep.subr.bf16.mxu0 %v4497
    %6784 = vmatpush1.bf16.msra.mxu0 %v4496
    %6785 = vmatprep.subr.bf16.mxu0 %v4505
    %6786 = vmatpush1.bf16.msra.mxu0 %v4504
    %6787 = vmatprep.subr.bf16.mxu0 %v4513
    %6788 = vmatpush1.bf16.msra.mxu0 %v4512
    %6789 = vmatprep.subr.bf16.mxu0 %v4521
    %6790 = vmatpush1.bf16.msra.mxu0 %v4520
    %6791 = vmatprep.subr.bf16.mxu0 %v4529
    %6792 = vmatpush1.bf16.msra.mxu0 %v4528
    %6793 = vmatprep.subr.bf16.mxu0 %v4537
    %6794 = vmatpush1.bf16.msra.mxu0 %v4536
    %6795 = vmatprep.subr.bf16.mxu0 %v4545
    %6796 = vmatpush1.bf16.msra.mxu0 %v4544
    %6797 = vmatprep.subr.bf16.mxu0 %v4553
    %6798 = vmatpush1.bf16.msra.mxu0 %v4552
    %6799 = vmatprep.subr.bf16.mxu0 %v4561
    %6800 = vmatpush1.bf16.msra.mxu0 %v4560
    %6801 = vmatprep.subr.bf16.mxu0 %v4569
    %6802 = vmatpush1.bf16.msra.mxu0 %v4568
    %6803 = vmatprep.subr.bf16.mxu0 %v4577
    %6804 = vmatpush1.bf16.msra.mxu0 %v4576
    %6805 = vmatprep.subr.bf16.mxu0 %v4585
    %6806 = vmatpush1.bf16.msra.mxu0 %v4584
    %6807 = vmatprep.subr.bf16.mxu0 %v4593
    %6808 = vmatpush1.bf16.msra.mxu0 %v4592
    %6809 = vmatprep.subr.bf16.mxu0 %v4601
    %6810 = vmatpush1.bf16.msra.mxu0 %v4600
    %6811 = vmatprep.subr.bf16.mxu0 %v4609
    %6812 = vmatpush1.bf16.msra.mxu0 %v4608
    %6813 = vmatprep.subr.bf16.mxu0 %v4617
    %6814 = vmatpush1.bf16.msra.mxu0 %v4616
    %6815 = vmatprep.mubr.bf16.mxu0 %v215
    %6816 = vmatmul.mubr.bf16.gmra.mrb[0].mxu0 %v214
    %v6817 = vpop.f32.mrb[0].mxu0
    %v6818 = vadd.f32 %v6777, %v6817
    %v6819 = vpop.f32.mrb[0].mxu0
    %v6820 = vadd.f32 %v6779, %v6819
    %v6821 = vpop.f32.mrb[0].mxu0
    %v6822 = vpop.f32.mrb[0].mxu0
    %6823 = vdwg.mxu0
    %6824 = vmatprep.subr.bf16.mxu0 %v4625
    %6825 = vmatpush1.bf16.msra.mxu0 %v4624
    %6826 = vmatprep.subr.bf16.mxu0 %v4633
    %6827 = vmatpush1.bf16.msra.mxu0 %v4632
    %6828 = vmatprep.subr.bf16.mxu0 %v4641
    %6829 = vmatpush1.bf16.msra.mxu0 %v4640
    %6830 = vmatprep.subr.bf16.mxu0 %v4649
    %6831 = vmatpush1.bf16.msra.mxu0 %v4648
    %6832 = vmatprep.subr.bf16.mxu0 %v4657
    %6833 = vmatpush1.bf16.msra.mxu0 %v4656
    %6834 = vmatprep.subr.bf16.mxu0 %v4665
    %6835 = vmatpush1.bf16.msra.mxu0 %v4664
    %6836 = vmatprep.subr.bf16.mxu0 %v4673
    %6837 = vmatpush1.bf16.msra.mxu0 %v4672
    %6838 = vmatprep.subr.bf16.mxu0 %v4681
    %6839 = vmatpush1.bf16.msra.mxu0 %v4680
    %6840 = vmatprep.subr.bf16.mxu0 %v4689
    %6841 = vmatpush1.bf16.msra.mxu0 %v4688
    %6842 = vmatprep.subr.bf16.mxu0 %v4697
    %6843 = vmatpush1.bf16.msra.mxu0 %v4696
    %6844 = vmatprep.subr.bf16.mxu0 %v4705
    %6845 = vmatpush1.bf16.msra.mxu0 %v4704
    %6846 = vmatprep.subr.bf16.mxu0 %v4713
    %6847 = vmatpush1.bf16.msra.mxu0 %v4712
    %6848 = vmatprep.subr.bf16.mxu0 %v4721
    %6849 = vmatpush1.bf16.msra.mxu0 %v4720
    %6850 = vmatprep.subr.bf16.mxu0 %v4729
    %6851 = vmatpush1.bf16.msra.mxu0 %v4728
    %6852 = vmatprep.subr.bf16.mxu0 %v4737
    %6853 = vmatpush1.bf16.msra.mxu0 %v4736
    %6854 = vmatprep.subr.bf16.mxu0 %v4745
    %6855 = vmatpush1.bf16.msra.mxu0 %v4744
    %6856 = vmatprep.mubr.bf16.mxu0 %v217
    %6857 = vmatmul.mubr.bf16.gmra.mrb[0].mxu0 %v216
    %v6858 = vpop.f32.mrb[0].mxu0
    %v6859 = vadd.f32 %v6818, %v6858
    %v6860 = vpop.f32.mrb[0].mxu0
    %v6861 = vadd.f32 %v6820, %v6860
    %v6862 = vpop.f32.mrb[0].mxu0
    %v6863 = vpop.f32.mrb[0].mxu0
    %6864 = vdwg.mxu0
    %6865 = vmatprep.subr.bf16.mxu0 %v4753
    %6866 = vmatpush1.bf16.msra.mxu0 %v4752
    %6867 = vmatprep.subr.bf16.mxu0 %v4761
    %6868 = vmatpush1.bf16.msra.mxu0 %v4760
    %6869 = vmatprep.subr.bf16.mxu0 %v4769
    %6870 = vmatpush1.bf16.msra.mxu0 %v4768
    %6871 = vmatprep.subr.bf16.mxu0 %v4777
    %6872 = vmatpush1.bf16.msra.mxu0 %v4776
    %6873 = vmatprep.subr.bf16.mxu0 %v4785
    %6874 = vmatpush1.bf16.msra.mxu0 %v4784
    %6875 = vmatprep.subr.bf16.mxu0 %v4793
    %6876 = vmatpush1.bf16.msra.mxu0 %v4792
    %6877 = vmatprep.subr.bf16.mxu0 %v4801
    %6878 = vmatpush1.bf16.msra.mxu0 %v4800
    %6879 = vmatprep.subr.bf16.mxu0 %v4809
    %6880 = vmatpush1.bf16.msra.mxu0 %v4808
    %6881 = vmatprep.subr.bf16.mxu0 %v4817
    %6882 = vmatpush1.bf16.msra.mxu0 %v4816
    %6883 = vmatprep.subr.bf16.mxu0 %v4825
    %6884 = vmatpush1.bf16.msra.mxu0 %v4824
    %6885 = vmatprep.subr.bf16.mxu0 %v4833
    %6886 = vmatpush1.bf16.msra.mxu0 %v4832
    %6887 = vmatprep.subr.bf16.mxu0 %v4841
    %6888 = vmatpush1.bf16.msra.mxu0 %v4840
    %6889 = vmatprep.subr.bf16.mxu0 %v4849
    %6890 = vmatpush1.bf16.msra.mxu0 %v4848
    %6891 = vmatprep.subr.bf16.mxu0 %v4857
    %6892 = vmatpush1.bf16.msra.mxu0 %v4856
    %6893 = vmatprep.subr.bf16.mxu0 %v4865
    %6894 = vmatpush1.bf16.msra.mxu0 %v4864
    %6895 = vmatprep.subr.bf16.mxu0 %v4873
    %6896 = vmatpush1.bf16.msra.mxu0 %v4872
    %6897 = vmatprep.mubr.bf16.mxu0 %v219
    %6898 = vmatmul.mubr.bf16.gmra.mrb[0].mxu0 %v218
    %v6899 = vpop.f32.mrb[0].mxu0
    %v6900 = vadd.f32 %v6859, %v6899
    %v6901 = vpop.f32.mrb[0].mxu0
    %v6902 = vadd.f32 %v6861, %v6901
    %v6903 = vpop.f32.mrb[0].mxu0
    %v6904 = vpop.f32.mrb[0].mxu0
    %6905 = vdwg.mxu0
    %6906 = vmatprep.subr.bf16.mxu0 %v4881
    %6907 = vmatpush1.bf16.msra.mxu0 %v4880
    %6908 = vmatprep.subr.bf16.mxu0 %v4889
    %6909 = vmatpush1.bf16.msra.mxu0 %v4888
    %6910 = vmatprep.subr.bf16.mxu0 %v4897
    %6911 = vmatpush1.bf16.msra.mxu0 %v4896
    %6912 = vmatprep.subr.bf16.mxu0 %v4905
    %6913 = vmatpush1.bf16.msra.mxu0 %v4904
    %6914 = vmatprep.subr.bf16.mxu0 %v4913
    %6915 = vmatpush1.bf16.msra.mxu0 %v4912
    %6916 = vmatprep.subr.bf16.mxu0 %v4921
    %6917 = vmatpush1.bf16.msra.mxu0 %v4920
    %6918 = vmatprep.subr.bf16.mxu0 %v4929
    %6919 = vmatpush1.bf16.msra.mxu0 %v4928
    %6920 = vmatprep.subr.bf16.mxu0 %v4937
    %6921 = vmatpush1.bf16.msra.mxu0 %v4936
    %6922 = vmatprep.subr.bf16.mxu0 %v4945
    %6923 = vmatpush1.bf16.msra.mxu0 %v4944
    %6924 = vmatprep.subr.bf16.mxu0 %v4953
    %6925 = vmatpush1.bf16.msra.mxu0 %v4952
    %6926 = vmatprep.subr.bf16.mxu0 %v4961
    %6927 = vmatpush1.bf16.msra.mxu0 %v4960
    %6928 = vmatprep.subr.bf16.mxu0 %v4969
    %6929 = vmatpush1.bf16.msra.mxu0 %v4968
    %6930 = vmatprep.subr.bf16.mxu0 %v4977
    %6931 = vmatpush1.bf16.msra.mxu0 %v4976
    %6932 = vmatprep.subr.bf16.mxu0 %v4985
    %6933 = vmatpush1.bf16.msra.mxu0 %v4984
    %6934 = vmatprep.subr.bf16.mxu0 %v4993
    %6935 = vmatpush1.bf16.msra.mxu0 %v4992
    %6936 = vmatprep.subr.bf16.mxu0 %v5001
    %6937 = vmatpush1.bf16.msra.mxu0 %v5000
    %6938 = vmatprep.mubr.bf16.mxu0 %v221
    %6939 = vmatmul.mubr.bf16.gmra.mrb[0].mxu0 %v220
    %v6940 = vpop.f32.mrb[0].mxu0
    %v6941 = vadd.f32 %v6900, %v6940
    %v6942 = vpop.f32.mrb[0].mxu0
    %v6943 = vadd.f32 %v6902, %v6942
    %v6944 = vpop.f32.mrb[0].mxu0
    %v6945 = vpop.f32.mrb[0].mxu0
    %6946 = vdwg.mxu0
    %6947 = vmatprep.subr.bf16.mxu0 %v5009
    %6948 = vmatpush1.bf16.msra.mxu0 %v5008
    %6949 = vmatprep.subr.bf16.mxu0 %v5017
    %6950 = vmatpush1.bf16.msra.mxu0 %v5016
    %6951 = vmatprep.subr.bf16.mxu0 %v5025
    %6952 = vmatpush1.bf16.msra.mxu0 %v5024
    %6953 = vmatprep.subr.bf16.mxu0 %v5033
    %6954 = vmatpush1.bf16.msra.mxu0 %v5032
    %6955 = vmatprep.subr.bf16.mxu0 %v5041
    %6956 = vmatpush1.bf16.msra.mxu0 %v5040
    %6957 = vmatprep.subr.bf16.mxu0 %v5049
    %6958 = vmatpush1.bf16.msra.mxu0 %v5048
    %6959 = vmatprep.subr.bf16.mxu0 %v5057
    %6960 = vmatpush1.bf16.msra.mxu0 %v5056
    %6961 = vmatprep.subr.bf16.mxu0 %v5065
    %6962 = vmatpush1.bf16.msra.mxu0 %v5064
    %6963 = vmatprep.subr.bf16.mxu0 %v5073
    %6964 = vmatpush1.bf16.msra.mxu0 %v5072
    %6965 = vmatprep.subr.bf16.mxu0 %v5081
    %6966 = vmatpush1.bf16.msra.mxu0 %v5080
    %6967 = vmatprep.subr.bf16.mxu0 %v5089
    %6968 = vmatpush1.bf16.msra.mxu0 %v5088
    %6969 = vmatprep.subr.bf16.mxu0 %v5097
    %6970 = vmatpush1.bf16.msra.mxu0 %v5096
    %6971 = vmatprep.subr.bf16.mxu0 %v5105
    %6972 = vmatpush1.bf16.msra.mxu0 %v5104
    %6973 = vmatprep.subr.bf16.mxu0 %v5113
    %6974 = vmatpush1.bf16.msra.mxu0 %v5112
    %6975 = vmatprep.subr.bf16.mxu0 %v5121
    %6976 = vmatpush1.bf16.msra.mxu0 %v5120
    %6977 = vmatprep.subr.bf16.mxu0 %v5129
    %6978 = vmatpush1.bf16.msra.mxu0 %v5128
    %6979 = vmatprep.mubr.bf16.mxu0 %v223
    %6980 = vmatmul.mubr.bf16.gmra.mrb[0].mxu0 %v222
    %v6981 = vpop.f32.mrb[0].mxu0
    %v6982 = vadd.f32 %v6941, %v6981
    %v6983 = vpop.f32.mrb[0].mxu0
    %v6984 = vadd.f32 %v6943, %v6983
    %v6985 = vpop.f32.mrb[0].mxu0
    %v6986 = vpop.f32.mrb[0].mxu0
    %6987 = vdwg.mxu0
    %6988 = vmatprep.subr.bf16.mxu0 %v5137
    %6989 = vmatpush1.bf16.msra.mxu0 %v5136
    %6990 = vmatprep.subr.bf16.mxu0 %v5145
    %6991 = vmatpush1.bf16.msra.mxu0 %v5144
    %6992 = vmatprep.subr.bf16.mxu0 %v5153
    %6993 = vmatpush1.bf16.msra.mxu0 %v5152
    %6994 = vmatprep.subr.bf16.mxu0 %v5161
    %6995 = vmatpush1.bf16.msra.mxu0 %v5160
    %6996 = vmatprep.subr.bf16.mxu0 %v5169
    %6997 = vmatpush1.bf16.msra.mxu0 %v5168
    %6998 = vmatprep.subr.bf16.mxu0 %v5177
    %6999 = vmatpush1.bf16.msra.mxu0 %v5176
    %7000 = vmatprep.subr.bf16.mxu0 %v5185
    %7001 = vmatpush1.bf16.msra.mxu0 %v5184
    %7002 = vmatprep.subr.bf16.mxu0 %v5193
    %7003 = vmatpush1.bf16.msra.mxu0 %v5192
    %7004 = vmatprep.subr.bf16.mxu0 %v5201
    %7005 = vmatpush1.bf16.msra.mxu0 %v5200
    %7006 = vmatprep.subr.bf16.mxu0 %v5209
    %7007 = vmatpush1.bf16.msra.mxu0 %v5208
    %7008 = vmatprep.subr.bf16.mxu0 %v5217
    %7009 = vmatpush1.bf16.msra.mxu0 %v5216
    %7010 = vmatprep.subr.bf16.mxu0 %v5225
    %7011 = vmatpush1.bf16.msra.mxu0 %v5224
    %7012 = vmatprep.subr.bf16.mxu0 %v5233
    %7013 = vmatpush1.bf16.msra.mxu0 %v5232
    %7014 = vmatprep.subr.bf16.mxu0 %v5241
    %7015 = vmatpush1.bf16.msra.mxu0 %v5240
    %7016 = vmatprep.subr.bf16.mxu0 %v5249
    %7017 = vmatpush1.bf16.msra.mxu0 %v5248
    %7018 = vmatprep.subr.bf16.mxu0 %v5257
    %7019 = vmatpush1.bf16.msra.mxu0 %v5256
    %7020 = vmatprep.mubr.bf16.mxu0 %v225
    %7021 = vmatmul.mubr.bf16.gmra.mrb[0].mxu0 %v224
    %v7022 = vpop.f32.mrb[0].mxu0
    %v7023 = vadd.f32 %v6982, %v7022
    %v7024 = vpop.f32.mrb[0].mxu0
    %v7025 = vadd.f32 %v6984, %v7024
    %v7026 = vpop.f32.mrb[0].mxu0
    %v7027 = vpop.f32.mrb[0].mxu0
    %7028 = vdwg.mxu0
    %7029 = vmatprep.subr.bf16.mxu0 %v5265
    %7030 = vmatpush1.bf16.msra.mxu0 %v5264
    %7031 = vmatprep.subr.bf16.mxu0 %v5273
    %7032 = vmatpush1.bf16.msra.mxu0 %v5272
    %7033 = vmatprep.subr.bf16.mxu0 %v5281
    %7034 = vmatpush1.bf16.msra.mxu0 %v5280
    %7035 = vmatprep.subr.bf16.mxu0 %v5289
    %7036 = vmatpush1.bf16.msra.mxu0 %v5288
    %7037 = vmatprep.subr.bf16.mxu0 %v5297
    %7038 = vmatpush1.bf16.msra.mxu0 %v5296
    %7039 = vmatprep.subr.bf16.mxu0 %v5305
    %7040 = vmatpush1.bf16.msra.mxu0 %v5304
    %7041 = vmatprep.subr.bf16.mxu0 %v5313
    %7042 = vmatpush1.bf16.msra.mxu0 %v5312
    %7043 = vmatprep.subr.bf16.mxu0 %v5321
    %7044 = vmatpush1.bf16.msra.mxu0 %v5320
    %7045 = vmatprep.subr.bf16.mxu0 %v5329
    %7046 = vmatpush1.bf16.msra.mxu0 %v5328
    %7047 = vmatprep.subr.bf16.mxu0 %v5337
    %7048 = vmatpush1.bf16.msra.mxu0 %v5336
    %7049 = vmatprep.subr.bf16.mxu0 %v5345
    %7050 = vmatpush1.bf16.msra.mxu0 %v5344
    %7051 = vmatprep.subr.bf16.mxu0 %v5353
    %7052 = vmatpush1.bf16.msra.mxu0 %v5352
    %7053 = vmatprep.subr.bf16.mxu0 %v5361
    %7054 = vmatpush1.bf16.msra.mxu0 %v5360
    %7055 = vmatprep.subr.bf16.mxu0 %v5369
    %7056 = vmatpush1.bf16.msra.mxu0 %v5368
    %7057 = vmatprep.subr.bf16.mxu0 %v5377
    %7058 = vmatpush1.bf16.msra.mxu0 %v5376
    %7059 = vmatprep.subr.bf16.mxu0 %v5385
    %7060 = vmatpush1.bf16.msra.mxu0 %v5384
    %7061 = vmatprep.mubr.bf16.mxu0 %v227
    %7062 = vmatmul.mubr.bf16.gmra.mrb[0].mxu0 %v226
    %v7063 = vpop.f32.mrb[0].mxu0
    %v7064 = vadd.f32 %v7023, %v7063
    %v7065 = vpop.f32.mrb[0].mxu0
    %v7066 = vadd.f32 %v7025, %v7065
    %v7067 = vpop.f32.mrb[0].mxu0
    %v7068 = vpop.f32.mrb[0].mxu0
    %7069 = vdwg.mxu0
    %7070 = vmatprep.subr.bf16.mxu0 %v4371
    %7071 = vmatpush1.bf16.msra.mxu0 %v4370
    %7072 = vmatprep.subr.bf16.mxu0 %v4379
    %7073 = vmatpush1.bf16.msra.mxu0 %v4378
    %7074 = vmatprep.subr.bf16.mxu0 %v4387
    %7075 = vmatpush1.bf16.msra.mxu0 %v4386
    %7076 = vmatprep.subr.bf16.mxu0 %v4395
    %7077 = vmatpush1.bf16.msra.mxu0 %v4394
    %7078 = vmatprep.subr.bf16.mxu0 %v4403
    %7079 = vmatpush1.bf16.msra.mxu0 %v4402
    %7080 = vmatprep.subr.bf16.mxu0 %v4411
    %7081 = vmatpush1.bf16.msra.mxu0 %v4410
    %7082 = vmatprep.subr.bf16.mxu0 %v4419
    %7083 = vmatpush1.bf16.msra.mxu0 %v4418
    %7084 = vmatprep.subr.bf16.mxu0 %v4427
    %7085 = vmatpush1.bf16.msra.mxu0 %v4426
    %7086 = vmatprep.subr.bf16.mxu0 %v4435
    %7087 = vmatpush1.bf16.msra.mxu0 %v4434
    %7088 = vmatprep.subr.bf16.mxu0 %v4443
    %7089 = vmatpush1.bf16.msra.mxu0 %v4442
    %7090 = vmatprep.subr.bf16.mxu0 %v4451
    %7091 = vmatpush1.bf16.msra.mxu0 %v4450
    %7092 = vmatprep.subr.bf16.mxu0 %v4459
    %7093 = vmatpush1.bf16.msra.mxu0 %v4458
    %7094 = vmatprep.subr.bf16.mxu0 %v4467
    %7095 = vmatpush1.bf16.msra.mxu0 %v4466
    %7096 = vmatprep.subr.bf16.mxu0 %v4475
    %7097 = vmatpush1.bf16.msra.mxu0 %v4474
    %7098 = vmatprep.subr.bf16.mxu0 %v4483
    %7099 = vmatpush1.bf16.msra.mxu0 %v4482
    %7100 = vmatprep.subr.bf16.mxu0 %v4491
    %7101 = vmatpush1.bf16.msra.mxu0 %v4490
    %7102 = vmatprep.mubr.bf16.mxu0 %v213
    %7103 = vmatmul.mubr.bf16.gmra.mrb[0].mxu0 %v212
    %v7104 = vpop.f32.mrb[0].mxu0
    %v7105 = vadd.f32 %v1273, %v7104
    %v7106 = vpop.f32.mrb[0].mxu0
    %v7107 = vadd.f32 %v1277, %v7106
    %v7108 = vpop.f32.mrb[0].mxu0
    %v7109 = vpop.f32.mrb[0].mxu0
    %7110 = vdwg.mxu0
    %7111 = vmatprep.subr.bf16.mxu0 %v4499
    %7112 = vmatpush1.bf16.msra.mxu0 %v4498
    %7113 = vmatprep.subr.bf16.mxu0 %v4507
    %7114 = vmatpush1.bf16.msra.mxu0 %v4506
    %7115 = vmatprep.subr.bf16.mxu0 %v4515
    %7116 = vmatpush1.bf16.msra.mxu0 %v4514
    %7117 = vmatprep.subr.bf16.mxu0 %v4523
    %7118 = vmatpush1.bf16.msra.mxu0 %v4522
    %7119 = vmatprep.subr.bf16.mxu0 %v4531
    %7120 = vmatpush1.bf16.msra.mxu0 %v4530
    %7121 = vmatprep.subr.bf16.mxu0 %v4539
    %7122 = vmatpush1.bf16.msra.mxu0 %v4538
    %7123 = vmatprep.subr.bf16.mxu0 %v4547
    %7124 = vmatpush1.bf16.msra.mxu0 %v4546
    %7125 = vmatprep.subr.bf16.mxu0 %v4555
    %7126 = vmatpush1.bf16.msra.mxu0 %v4554
    %7127 = vmatprep.subr.bf16.mxu0 %v4563
    %7128 = vmatpush1.bf16.msra.mxu0 %v4562
    %7129 = vmatprep.subr.bf16.mxu0 %v4571
    %7130 = vmatpush1.bf16.msra.mxu0 %v4570
    %7131 = vmatprep.subr.bf16.mxu0 %v4579
    %7132 = vmatpush1.bf16.msra.mxu0 %v4578
    %7133 = vmatprep.subr.bf16.mxu0 %v4587
    %7134 = vmatpush1.bf16.msra.mxu0 %v4586
    %7135 = vmatprep.subr.bf16.mxu0 %v4595
    %7136 = vmatpush1.bf16.msra.mxu0 %v4594
    %7137 = vmatprep.subr.bf16.mxu0 %v4603
    %7138 = vmatpush1.bf16.msra.mxu0 %v4602
    %7139 = vmatprep.subr.bf16.mxu0 %v4611
    %7140 = vmatpush1.bf16.msra.mxu0 %v4610
    %7141 = vmatprep.subr.bf16.mxu0 %v4619
    %7142 = vmatpush1.bf16.msra.mxu0 %v4618
    %7143 = vmatprep.mubr.bf16.mxu0 %v215
    %7144 = vmatmul.mubr.bf16.gmra.mrb[0].mxu0 %v214
    %v7145 = vpop.f32.mrb[0].mxu0
    %v7146 = vadd.f32 %v7105, %v7145
    %v7147 = vpop.f32.mrb[0].mxu0
    %v7148 = vadd.f32 %v7107, %v7147
    %v7149 = vpop.f32.mrb[0].mxu0
    %v7150 = vpop.f32.mrb[0].mxu0
    %7151 = vdwg.mxu0
    %7152 = vmatprep.subr.bf16.mxu0 %v4627
    %7153 = vmatpush1.bf16.msra.mxu0 %v4626
    %7154 = vmatprep.subr.bf16.mxu0 %v4635
    %7155 = vmatpush1.bf16.msra.mxu0 %v4634
    %7156 = vmatprep.subr.bf16.mxu0 %v4643
    %7157 = vmatpush1.bf16.msra.mxu0 %v4642
    %7158 = vmatprep.subr.bf16.mxu0 %v4651
    %7159 = vmatpush1.bf16.msra.mxu0 %v4650
    %7160 = vmatprep.subr.bf16.mxu0 %v4659
    %7161 = vmatpush1.bf16.msra.mxu0 %v4658
    %7162 = vmatprep.subr.bf16.mxu0 %v4667
    %7163 = vmatpush1.bf16.msra.mxu0 %v4666
    %7164 = vmatprep.subr.bf16.mxu0 %v4675
    %7165 = vmatpush1.bf16.msra.mxu0 %v4674
    %7166 = vmatprep.subr.bf16.mxu0 %v4683
    %7167 = vmatpush1.bf16.msra.mxu0 %v4682
    %7168 = vmatprep.subr.bf16.mxu0 %v4691
    %7169 = vmatpush1.bf16.msra.mxu0 %v4690
    %7170 = vmatprep.subr.bf16.mxu0 %v4699
    %7171 = vmatpush1.bf16.msra.mxu0 %v4698
    %7172 = vmatprep.subr.bf16.mxu0 %v4707
    %7173 = vmatpush1.bf16.msra.mxu0 %v4706
    %7174 = vmatprep.subr.bf16.mxu0 %v4715
    %7175 = vmatpush1.bf16.msra.mxu0 %v4714
    %7176 = vmatprep.subr.bf16.mxu0 %v4723
    %7177 = vmatpush1.bf16.msra.mxu0 %v4722
    %7178 = vmatprep.subr.bf16.mxu0 %v4731
    %7179 = vmatpush1.bf16.msra.mxu0 %v4730
    %7180 = vmatprep.subr.bf16.mxu0 %v4739
    %7181 = vmatpush1.bf16.msra.mxu0 %v4738
    %7182 = vmatprep.subr.bf16.mxu0 %v4747
    %7183 = vmatpush1.bf16.msra.mxu0 %v4746
    %7184 = vmatprep.mubr.bf16.mxu0 %v217
    %7185 = vmatmul.mubr.bf16.gmra.mrb[0].mxu0 %v216
    %v7186 = vpop.f32.mrb[0].mxu0
    %v7187 = vadd.f32 %v7146, %v7186
    %v7188 = vpop.f32.mrb[0].mxu0
    %v7189 = vadd.f32 %v7148, %v7188
    %v7190 = vpop.f32.mrb[0].mxu0
    %v7191 = vpop.f32.mrb[0].mxu0
    %7192 = vdwg.mxu0
    %7193 = vmatprep.subr.bf16.mxu0 %v4755
    %7194 = vmatpush1.bf16.msra.mxu0 %v4754
    %7195 = vmatprep.subr.bf16.mxu0 %v4763
    %7196 = vmatpush1.bf16.msra.mxu0 %v4762
    %7197 = vmatprep.subr.bf16.mxu0 %v4771
    %7198 = vmatpush1.bf16.msra.mxu0 %v4770
    %7199 = vmatprep.subr.bf16.mxu0 %v4779
    %7200 = vmatpush1.bf16.msra.mxu0 %v4778
    %7201 = vmatprep.subr.bf16.mxu0 %v4787
    %7202 = vmatpush1.bf16.msra.mxu0 %v4786
    %7203 = vmatprep.subr.bf16.mxu0 %v4795
    %7204 = vmatpush1.bf16.msra.mxu0 %v4794
    %7205 = vmatprep.subr.bf16.mxu0 %v4803
    %7206 = vmatpush1.bf16.msra.mxu0 %v4802
    %7207 = vmatprep.subr.bf16.mxu0 %v4811
    %7208 = vmatpush1.bf16.msra.mxu0 %v4810
    %7209 = vmatprep.subr.bf16.mxu0 %v4819
    %7210 = vmatpush1.bf16.msra.mxu0 %v4818
    %7211 = vmatprep.subr.bf16.mxu0 %v4827
    %7212 = vmatpush1.bf16.msra.mxu0 %v4826
    %7213 = vmatprep.subr.bf16.mxu0 %v4835
    %7214 = vmatpush1.bf16.msra.mxu0 %v4834
    %7215 = vmatprep.subr.bf16.mxu0 %v4843
    %7216 = vmatpush1.bf16.msra.mxu0 %v4842
    %7217 = vmatprep.subr.bf16.mxu0 %v4851
    %7218 = vmatpush1.bf16.msra.mxu0 %v4850
    %7219 = vmatprep.subr.bf16.mxu0 %v4859
    %7220 = vmatpush1.bf16.msra.mxu0 %v4858
    %7221 = vmatprep.subr.bf16.mxu0 %v4867
    %7222 = vmatpush1.bf16.msra.mxu0 %v4866
    %7223 = vmatprep.subr.bf16.mxu0 %v4875
    %7224 = vmatpush1.bf16.msra.mxu0 %v4874
    %7225 = vmatprep.mubr.bf16.mxu0 %v219
    %7226 = vmatmul.mubr.bf16.gmra.mrb[0].mxu0 %v218
    %v7227 = vpop.f32.mrb[0].mxu0
    %v7228 = vadd.f32 %v7187, %v7227
    %v7229 = vpop.f32.mrb[0].mxu0
    %v7230 = vadd.f32 %v7189, %v7229
    %v7231 = vpop.f32.mrb[0].mxu0
    %v7232 = vpop.f32.mrb[0].mxu0
    %7233 = vdwg.mxu0
    %7234 = vmatprep.subr.bf16.mxu0 %v4883
    %7235 = vmatpush1.bf16.msra.mxu0 %v4882
    %7236 = vmatprep.subr.bf16.mxu0 %v4891
    %7237 = vmatpush1.bf16.msra.mxu0 %v4890
    %7238 = vmatprep.subr.bf16.mxu0 %v4899
    %7239 = vmatpush1.bf16.msra.mxu0 %v4898
    %7240 = vmatprep.subr.bf16.mxu0 %v4907
    %7241 = vmatpush1.bf16.msra.mxu0 %v4906
    %7242 = vmatprep.subr.bf16.mxu0 %v4915
    %7243 = vmatpush1.bf16.msra.mxu0 %v4914
    %7244 = vmatprep.subr.bf16.mxu0 %v4923
    %7245 = vmatpush1.bf16.msra.mxu0 %v4922
    %7246 = vmatprep.subr.bf16.mxu0 %v4931
    %7247 = vmatpush1.bf16.msra.mxu0 %v4930
    %7248 = vmatprep.subr.bf16.mxu0 %v4939
    %7249 = vmatpush1.bf16.msra.mxu0 %v4938
    %7250 = vmatprep.subr.bf16.mxu0 %v4947
    %7251 = vmatpush1.bf16.msra.mxu0 %v4946
    %7252 = vmatprep.subr.bf16.mxu0 %v4955
    %7253 = vmatpush1.bf16.msra.mxu0 %v4954
    %7254 = vmatprep.subr.bf16.mxu0 %v4963
    %7255 = vmatpush1.bf16.msra.mxu0 %v4962
    %7256 = vmatprep.subr.bf16.mxu0 %v4971
    %7257 = vmatpush1.bf16.msra.mxu0 %v4970
    %7258 = vmatprep.subr.bf16.mxu0 %v4979
    %7259 = vmatpush1.bf16.msra.mxu0 %v4978
    %7260 = vmatprep.subr.bf16.mxu0 %v4987
    %7261 = vmatpush1.bf16.msra.mxu0 %v4986
    %7262 = vmatprep.subr.bf16.mxu0 %v4995
    %7263 = vmatpush1.bf16.msra.mxu0 %v4994
    %7264 = vmatprep.subr.bf16.mxu0 %v5003
    %7265 = vmatpush1.bf16.msra.mxu0 %v5002
    %7266 = vmatprep.mubr.bf16.mxu0 %v221
    %7267 = vmatmul.mubr.bf16.gmra.mrb[0].mxu0 %v220
    %v7268 = vpop.f32.mrb[0].mxu0
    %v7269 = vadd.f32 %v7228, %v7268
    %v7270 = vpop.f32.mrb[0].mxu0
    %v7271 = vadd.f32 %v7230, %v7270
    %v7272 = vpop.f32.mrb[0].mxu0
    %v7273 = vpop.f32.mrb[0].mxu0
    %7274 = vdwg.mxu0
    %7275 = vmatprep.subr.bf16.mxu0 %v5011
    %7276 = vmatpush1.bf16.msra.mxu0 %v5010
    %7277 = vmatprep.subr.bf16.mxu0 %v5019
    %7278 = vmatpush1.bf16.msra.mxu0 %v5018
    %7279 = vmatprep.subr.bf16.mxu0 %v5027
    %7280 = vmatpush1.bf16.msra.mxu0 %v5026
    %7281 = vmatprep.subr.bf16.mxu0 %v5035
    %7282 = vmatpush1.bf16.msra.mxu0 %v5034
    %7283 = vmatprep.subr.bf16.mxu0 %v5043
    %7284 = vmatpush1.bf16.msra.mxu0 %v5042
    %7285 = vmatprep.subr.bf16.mxu0 %v5051
    %7286 = vmatpush1.bf16.msra.mxu0 %v5050
    %7287 = vmatprep.subr.bf16.mxu0 %v5059
    %7288 = vmatpush1.bf16.msra.mxu0 %v5058
    %7289 = vmatprep.subr.bf16.mxu0 %v5067
    %7290 = vmatpush1.bf16.msra.mxu0 %v5066
    %7291 = vmatprep.subr.bf16.mxu0 %v5075
    %7292 = vmatpush1.bf16.msra.mxu0 %v5074
    %7293 = vmatprep.subr.bf16.mxu0 %v5083
    %7294 = vmatpush1.bf16.msra.mxu0 %v5082
    %7295 = vmatprep.subr.bf16.mxu0 %v5091
    %7296 = vmatpush1.bf16.msra.mxu0 %v5090
    %7297 = vmatprep.subr.bf16.mxu0 %v5099
    %7298 = vmatpush1.bf16.msra.mxu0 %v5098
    %7299 = vmatprep.subr.bf16.mxu0 %v5107
    %7300 = vmatpush1.bf16.msra.mxu0 %v5106
    %7301 = vmatprep.subr.bf16.mxu0 %v5115
    %7302 = vmatpush1.bf16.msra.mxu0 %v5114
    %7303 = vmatprep.subr.bf16.mxu0 %v5123
    %7304 = vmatpush1.bf16.msra.mxu0 %v5122
    %7305 = vmatprep.subr.bf16.mxu0 %v5131
    %7306 = vmatpush1.bf16.msra.mxu0 %v5130
    %7307 = vmatprep.mubr.bf16.mxu0 %v223
    %7308 = vmatmul.mubr.bf16.gmra.mrb[0].mxu0 %v222
    %v7309 = vpop.f32.mrb[0].mxu0
    %v7310 = vadd.f32 %v7269, %v7309
    %v7311 = vpop.f32.mrb[0].mxu0
    %v7312 = vadd.f32 %v7271, %v7311
    %v7313 = vpop.f32.mrb[0].mxu0
    %v7314 = vpop.f32.mrb[0].mxu0
    %7315 = vdwg.mxu0
    %7316 = vmatprep.subr.bf16.mxu0 %v5139
    %7317 = vmatpush1.bf16.msra.mxu0 %v5138
    %7318 = vmatprep.subr.bf16.mxu0 %v5147
    %7319 = vmatpush1.bf16.msra.mxu0 %v5146
    %7320 = vmatprep.subr.bf16.mxu0 %v5155
    %7321 = vmatpush1.bf16.msra.mxu0 %v5154
    %7322 = vmatprep.subr.bf16.mxu0 %v5163
    %7323 = vmatpush1.bf16.msra.mxu0 %v5162
    %7324 = vmatprep.subr.bf16.mxu0 %v5171
    %7325 = vmatpush1.bf16.msra.mxu0 %v5170
    %7326 = vmatprep.subr.bf16.mxu0 %v5179
    %7327 = vmatpush1.bf16.msra.mxu0 %v5178
    %7328 = vmatprep.subr.bf16.mxu0 %v5187
    %7329 = vmatpush1.bf16.msra.mxu0 %v5186
    %7330 = vmatprep.subr.bf16.mxu0 %v5195
    %7331 = vmatpush1.bf16.msra.mxu0 %v5194
    %7332 = vmatprep.subr.bf16.mxu0 %v5203
    %7333 = vmatpush1.bf16.msra.mxu0 %v5202
    %7334 = vmatprep.subr.bf16.mxu0 %v5211
    %7335 = vmatpush1.bf16.msra.mxu0 %v5210
    %7336 = vmatprep.subr.bf16.mxu0 %v5219
    %7337 = vmatpush1.bf16.msra.mxu0 %v5218
    %7338 = vmatprep.subr.bf16.mxu0 %v5227
    %7339 = vmatpush1.bf16.msra.mxu0 %v5226
    %7340 = vmatprep.subr.bf16.mxu0 %v5235
    %7341 = vmatpush1.bf16.msra.mxu0 %v5234
    %7342 = vmatprep.subr.bf16.mxu0 %v5243
    %7343 = vmatpush1.bf16.msra.mxu0 %v5242
    %7344 = vmatprep.subr.bf16.mxu0 %v5251
    %7345 = vmatpush1.bf16.msra.mxu0 %v5250
    %7346 = vmatprep.subr.bf16.mxu0 %v5259
    %7347 = vmatpush1.bf16.msra.mxu0 %v5258
    %7348 = vmatprep.mubr.bf16.mxu0 %v225
    %7349 = vmatmul.mubr.bf16.gmra.mrb[0].mxu0 %v224
    %v7350 = vpop.f32.mrb[0].mxu0
    %v7351 = vadd.f32 %v7310, %v7350
    %v7352 = vpop.f32.mrb[0].mxu0
    %v7353 = vadd.f32 %v7312, %v7352
    %v7354 = vpop.f32.mrb[0].mxu0
    %v7355 = vpop.f32.mrb[0].mxu0
    %7356 = vdwg.mxu0
    %7357 = vmatprep.subr.bf16.mxu0 %v5267
    %7358 = vmatpush1.bf16.msra.mxu0 %v5266
    %7359 = vmatprep.subr.bf16.mxu0 %v5275
    %7360 = vmatpush1.bf16.msra.mxu0 %v5274
    %7361 = vmatprep.subr.bf16.mxu0 %v5283
    %7362 = vmatpush1.bf16.msra.mxu0 %v5282
    %7363 = vmatprep.subr.bf16.mxu0 %v5291
    %7364 = vmatpush1.bf16.msra.mxu0 %v5290
    %7365 = vmatprep.subr.bf16.mxu0 %v5299
    %7366 = vmatpush1.bf16.msra.mxu0 %v5298
    %7367 = vmatprep.subr.bf16.mxu0 %v5307
    %7368 = vmatpush1.bf16.msra.mxu0 %v5306
    %7369 = vmatprep.subr.bf16.mxu0 %v5315
    %7370 = vmatpush1.bf16.msra.mxu0 %v5314
    %7371 = vmatprep.subr.bf16.mxu0 %v5323
    %7372 = vmatpush1.bf16.msra.mxu0 %v5322
    %7373 = vmatprep.subr.bf16.mxu0 %v5331
    %7374 = vmatpush1.bf16.msra.mxu0 %v5330
    %7375 = vmatprep.subr.bf16.mxu0 %v5339
    %7376 = vmatpush1.bf16.msra.mxu0 %v5338
    %7377 = vmatprep.subr.bf16.mxu0 %v5347
    %7378 = vmatpush1.bf16.msra.mxu0 %v5346
    %7379 = vmatprep.subr.bf16.mxu0 %v5355
    %7380 = vmatpush1.bf16.msra.mxu0 %v5354
    %7381 = vmatprep.subr.bf16.mxu0 %v5363
    %7382 = vmatpush1.bf16.msra.mxu0 %v5362
    %7383 = vmatprep.subr.bf16.mxu0 %v5371
    %7384 = vmatpush1.bf16.msra.mxu0 %v5370
    %7385 = vmatprep.subr.bf16.mxu0 %v5379
    %7386 = vmatpush1.bf16.msra.mxu0 %v5378
    %7387 = vmatprep.subr.bf16.mxu0 %v5387
    %7388 = vmatpush1.bf16.msra.mxu0 %v5386
    %7389 = vmatprep.mubr.bf16.mxu0 %v227
    %7390 = vmatmul.mubr.bf16.gmra.mrb[0].mxu0 %v226
    %v7391 = vpop.f32.mrb[0].mxu0
    %v7392 = vadd.f32 %v7351, %v7391
    %v7393 = vpop.f32.mrb[0].mxu0
    %v7394 = vadd.f32 %v7353, %v7393
    %v7395 = vpop.f32.mrb[0].mxu0
    %v7396 = vpop.f32.mrb[0].mxu0
    %7397 = vdwg.mxu0
    %7398 = vmatprep.subr.bf16.mxu0 %v4373
    %7399 = vmatpush1.bf16.msra.mxu0 %v4372
    %7400 = vmatprep.subr.bf16.mxu0 %v4381
    %7401 = vmatpush1.bf16.msra.mxu0 %v4380
    %7402 = vmatprep.subr.bf16.mxu0 %v4389
    %7403 = vmatpush1.bf16.msra.mxu0 %v4388
    %7404 = vmatprep.subr.bf16.mxu0 %v4397
    %7405 = vmatpush1.bf16.msra.mxu0 %v4396
    %7406 = vmatprep.subr.bf16.mxu0 %v4405
    %7407 = vmatpush1.bf16.msra.mxu0 %v4404
    %7408 = vmatprep.subr.bf16.mxu0 %v4413
    %7409 = vmatpush1.bf16.msra.mxu0 %v4412
    %7410 = vmatprep.subr.bf16.mxu0 %v4421
    %7411 = vmatpush1.bf16.msra.mxu0 %v4420
    %7412 = vmatprep.subr.bf16.mxu0 %v4429
    %7413 = vmatpush1.bf16.msra.mxu0 %v4428
    %7414 = vmatprep.subr.bf16.mxu0 %v4437
    %7415 = vmatpush1.bf16.msra.mxu0 %v4436
    %7416 = vmatprep.subr.bf16.mxu0 %v4445
    %7417 = vmatpush1.bf16.msra.mxu0 %v4444
    %7418 = vmatprep.subr.bf16.mxu0 %v4453
    %7419 = vmatpush1.bf16.msra.mxu0 %v4452
    %7420 = vmatprep.subr.bf16.mxu0 %v4461
    %7421 = vmatpush1.bf16.msra.mxu0 %v4460
    %7422 = vmatprep.subr.bf16.mxu0 %v4469
    %7423 = vmatpush1.bf16.msra.mxu0 %v4468
    %7424 = vmatprep.subr.bf16.mxu0 %v4477
    %7425 = vmatpush1.bf16.msra.mxu0 %v4476
    %7426 = vmatprep.subr.bf16.mxu0 %v4485
    %7427 = vmatpush1.bf16.msra.mxu0 %v4484
    %7428 = vmatprep.subr.bf16.mxu0 %v4493
    %7429 = vmatpush1.bf16.msra.mxu0 %v4492
    %7430 = vmatprep.mubr.bf16.mxu0 %v213
    %7431 = vmatmul.mubr.bf16.gmra.mrb[0].mxu0 %v212
    %v7432 = vpop.f32.mrb[0].mxu0
    %v7433 = vadd.f32 %v1281, %v7432
    %v7434 = vpop.f32.mrb[0].mxu0
    %v7435 = vadd.f32 %v1285, %v7434
    %v7436 = vpop.f32.mrb[0].mxu0
    %v7437 = vpop.f32.mrb[0].mxu0
    %7438 = vdwg.mxu0
    %7439 = vmatprep.subr.bf16.mxu0 %v4501
    %7440 = vmatpush1.bf16.msra.mxu0 %v4500
    %7441 = vmatprep.subr.bf16.mxu0 %v4509
    %7442 = vmatpush1.bf16.msra.mxu0 %v4508
    %7443 = vmatprep.subr.bf16.mxu0 %v4517
    %7444 = vmatpush1.bf16.msra.mxu0 %v4516
    %7445 = vmatprep.subr.bf16.mxu0 %v4525
    %7446 = vmatpush1.bf16.msra.mxu0 %v4524
    %7447 = vmatprep.subr.bf16.mxu0 %v4533
    %7448 = vmatpush1.bf16.msra.mxu0 %v4532
    %7449 = vmatprep.subr.bf16.mxu0 %v4541
    %7450 = vmatpush1.bf16.msra.mxu0 %v4540
    %7451 = vmatprep.subr.bf16.mxu0 %v4549
    %7452 = vmatpush1.bf16.msra.mxu0 %v4548
    %7453 = vmatprep.subr.bf16.mxu0 %v4557
    %7454 = vmatpush1.bf16.msra.mxu0 %v4556
    %7455 = vmatprep.subr.bf16.mxu0 %v4565
    %7456 = vmatpush1.bf16.msra.mxu0 %v4564
    %7457 = vmatprep.subr.bf16.mxu0 %v4573
    %7458 = vmatpush1.bf16.msra.mxu0 %v4572
    %7459 = vmatprep.subr.bf16.mxu0 %v4581
    %7460 = vmatpush1.bf16.msra.mxu0 %v4580
    %7461 = vmatprep.subr.bf16.mxu0 %v4589
    %7462 = vmatpush1.bf16.msra.mxu0 %v4588
    %7463 = vmatprep.subr.bf16.mxu0 %v4597
    %7464 = vmatpush1.bf16.msra.mxu0 %v4596
    %7465 = vmatprep.subr.bf16.mxu0 %v4605
    %7466 = vmatpush1.bf16.msra.mxu0 %v4604
    %7467 = vmatprep.subr.bf16.mxu0 %v4613
    %7468 = vmatpush1.bf16.msra.mxu0 %v4612
    %7469 = vmatprep.subr.bf16.mxu0 %v4621
    %7470 = vmatpush1.bf16.msra.mxu0 %v4620
    %7471 = vmatprep.mubr.bf16.mxu0 %v215
    %7472 = vmatmul.mubr.bf16.gmra.mrb[0].mxu0 %v214
    %v7473 = vpop.f32.mrb[0].mxu0
    %v7474 = vadd.f32 %v7433, %v7473
    %v7475 = vpop.f32.mrb[0].mxu0
    %v7476 = vadd.f32 %v7435, %v7475
    %v7477 = vpop.f32.mrb[0].mxu0
    %v7478 = vpop.f32.mrb[0].mxu0
    %7479 = vdwg.mxu0
    %7480 = vmatprep.subr.bf16.mxu0 %v4629
    %7481 = vmatpush1.bf16.msra.mxu0 %v4628
    %7482 = vmatprep.subr.bf16.mxu0 %v4637
    %7483 = vmatpush1.bf16.msra.mxu0 %v4636
    %7484 = vmatprep.subr.bf16.mxu0 %v4645
    %7485 = vmatpush1.bf16.msra.mxu0 %v4644
    %7486 = vmatprep.subr.bf16.mxu0 %v4653
    %7487 = vmatpush1.bf16.msra.mxu0 %v4652
    %7488 = vmatprep.subr.bf16.mxu0 %v4661
    %7489 = vmatpush1.bf16.msra.mxu0 %v4660
    %7490 = vmatprep.subr.bf16.mxu0 %v4669
    %7491 = vmatpush1.bf16.msra.mxu0 %v4668
    %7492 = vmatprep.subr.bf16.mxu0 %v4677
    %7493 = vmatpush1.bf16.msra.mxu0 %v4676
    %7494 = vmatprep.subr.bf16.mxu0 %v4685
    %7495 = vmatpush1.bf16.msra.mxu0 %v4684
    %7496 = vmatprep.subr.bf16.mxu0 %v4693
    %7497 = vmatpush1.bf16.msra.mxu0 %v4692
    %7498 = vmatprep.subr.bf16.mxu0 %v4701
    %7499 = vmatpush1.bf16.msra.mxu0 %v4700
    %7500 = vmatprep.subr.bf16.mxu0 %v4709
    %7501 = vmatpush1.bf16.msra.mxu0 %v4708
    %7502 = vmatprep.subr.bf16.mxu0 %v4717
    %7503 = vmatpush1.bf16.msra.mxu0 %v4716
    %7504 = vmatprep.subr.bf16.mxu0 %v4725
    %7505 = vmatpush1.bf16.msra.mxu0 %v4724
    %7506 = vmatprep.subr.bf16.mxu0 %v4733
    %7507 = vmatpush1.bf16.msra.mxu0 %v4732
    %7508 = vmatprep.subr.bf16.mxu0 %v4741
    %7509 = vmatpush1.bf16.msra.mxu0 %v4740
    %7510 = vmatprep.subr.bf16.mxu0 %v4749
    %7511 = vmatpush1.bf16.msra.mxu0 %v4748
    %7512 = vmatprep.mubr.bf16.mxu0 %v217
    %7513 = vmatmul.mubr.bf16.gmra.mrb[0].mxu0 %v216
    %v7514 = vpop.f32.mrb[0].mxu0
    %v7515 = vadd.f32 %v7474, %v7514
    %v7516 = vpop.f32.mrb[0].mxu0
    %v7517 = vadd.f32 %v7476, %v7516
    %v7518 = vpop.f32.mrb[0].mxu0
    %v7519 = vpop.f32.mrb[0].mxu0
    %7520 = vdwg.mxu0
    %7521 = vmatprep.subr.bf16.mxu0 %v4757
    %7522 = vmatpush1.bf16.msra.mxu0 %v4756
    %7523 = vmatprep.subr.bf16.mxu0 %v4765
    %7524 = vmatpush1.bf16.msra.mxu0 %v4764
    %7525 = vmatprep.subr.bf16.mxu0 %v4773
    %7526 = vmatpush1.bf16.msra.mxu0 %v4772
    %7527 = vmatprep.subr.bf16.mxu0 %v4781
    %7528 = vmatpush1.bf16.msra.mxu0 %v4780
    %7529 = vmatprep.subr.bf16.mxu0 %v4789
    %7530 = vmatpush1.bf16.msra.mxu0 %v4788
    %7531 = vmatprep.subr.bf16.mxu0 %v4797
    %7532 = vmatpush1.bf16.msra.mxu0 %v4796
    %7533 = vmatprep.subr.bf16.mxu0 %v4805
    %7534 = vmatpush1.bf16.msra.mxu0 %v4804
    %7535 = vmatprep.subr.bf16.mxu0 %v4813
    %7536 = vmatpush1.bf16.msra.mxu0 %v4812
    %7537 = vmatprep.subr.bf16.mxu0 %v4821
    %7538 = vmatpush1.bf16.msra.mxu0 %v4820
    %7539 = vmatprep.subr.bf16.mxu0 %v4829
    %7540 = vmatpush1.bf16.msra.mxu0 %v4828
    %7541 = vmatprep.subr.bf16.mxu0 %v4837
    %7542 = vmatpush1.bf16.msra.mxu0 %v4836
    %7543 = vmatprep.subr.bf16.mxu0 %v4845
    %7544 = vmatpush1.bf16.msra.mxu0 %v4844
    %7545 = vmatprep.subr.bf16.mxu0 %v4853
    %7546 = vmatpush1.bf16.msra.mxu0 %v4852
    %7547 = vmatprep.subr.bf16.mxu0 %v4861
    %7548 = vmatpush1.bf16.msra.mxu0 %v4860
    %7549 = vmatprep.subr.bf16.mxu0 %v4869
    %7550 = vmatpush1.bf16.msra.mxu0 %v4868
    %7551 = vmatprep.subr.bf16.mxu0 %v4877
    %7552 = vmatpush1.bf16.msra.mxu0 %v4876
    %7553 = vmatprep.mubr.bf16.mxu0 %v219
    %7554 = vmatmul.mubr.bf16.gmra.mrb[0].mxu0 %v218
    %v7555 = vpop.f32.mrb[0].mxu0
    %v7556 = vadd.f32 %v7515, %v7555
    %v7557 = vpop.f32.mrb[0].mxu0
    %v7558 = vadd.f32 %v7517, %v7557
    %v7559 = vpop.f32.mrb[0].mxu0
    %v7560 = vpop.f32.mrb[0].mxu0
    %7561 = vdwg.mxu0
    %7562 = vmatprep.subr.bf16.mxu0 %v4885
    %7563 = vmatpush1.bf16.msra.mxu0 %v4884
    %7564 = vmatprep.subr.bf16.mxu0 %v4893
    %7565 = vmatpush1.bf16.msra.mxu0 %v4892
    %7566 = vmatprep.subr.bf16.mxu0 %v4901
    %7567 = vmatpush1.bf16.msra.mxu0 %v4900
    %7568 = vmatprep.subr.bf16.mxu0 %v4909
    %7569 = vmatpush1.bf16.msra.mxu0 %v4908
    %7570 = vmatprep.subr.bf16.mxu0 %v4917
    %7571 = vmatpush1.bf16.msra.mxu0 %v4916
    %7572 = vmatprep.subr.bf16.mxu0 %v4925
    %7573 = vmatpush1.bf16.msra.mxu0 %v4924
    %7574 = vmatprep.subr.bf16.mxu0 %v4933
    %7575 = vmatpush1.bf16.msra.mxu0 %v4932
    %7576 = vmatprep.subr.bf16.mxu0 %v4941
    %7577 = vmatpush1.bf16.msra.mxu0 %v4940
    %7578 = vmatprep.subr.bf16.mxu0 %v4949
    %7579 = vmatpush1.bf16.msra.mxu0 %v4948
    %7580 = vmatprep.subr.bf16.mxu0 %v4957
    %7581 = vmatpush1.bf16.msra.mxu0 %v4956
    %7582 = vmatprep.subr.bf16.mxu0 %v4965
    %7583 = vmatpush1.bf16.msra.mxu0 %v4964
    %7584 = vmatprep.subr.bf16.mxu0 %v4973
    %7585 = vmatpush1.bf16.msra.mxu0 %v4972
    %7586 = vmatprep.subr.bf16.mxu0 %v4981
    %7587 = vmatpush1.bf16.msra.mxu0 %v4980
    %7588 = vmatprep.subr.bf16.mxu0 %v4989
    %7589 = vmatpush1.bf16.msra.mxu0 %v4988
    %7590 = vmatprep.subr.bf16.mxu0 %v4997
    %7591 = vmatpush1.bf16.msra.mxu0 %v4996
    %7592 = vmatprep.subr.bf16.mxu0 %v5005
    %7593 = vmatpush1.bf16.msra.mxu0 %v5004
    %7594 = vmatprep.mubr.bf16.mxu0 %v221
    %7595 = vmatmul.mubr.bf16.gmra.mrb[0].mxu0 %v220
    %v7596 = vpop.f32.mrb[0].mxu0
    %v7597 = vadd.f32 %v7556, %v7596
    %v7598 = vpop.f32.mrb[0].mxu0
    %v7599 = vadd.f32 %v7558, %v7598
    %v7600 = vpop.f32.mrb[0].mxu0
    %v7601 = vpop.f32.mrb[0].mxu0
    %7602 = vdwg.mxu0
    %7603 = vmatprep.subr.bf16.mxu0 %v5013
    %7604 = vmatpush1.bf16.msra.mxu0 %v5012
    %7605 = vmatprep.subr.bf16.mxu0 %v5021
    %7606 = vmatpush1.bf16.msra.mxu0 %v5020
    %7607 = vmatprep.subr.bf16.mxu0 %v5029
    %7608 = vmatpush1.bf16.msra.mxu0 %v5028
    %7609 = vmatprep.subr.bf16.mxu0 %v5037
    %7610 = vmatpush1.bf16.msra.mxu0 %v5036
    %7611 = vmatprep.subr.bf16.mxu0 %v5045
    %7612 = vmatpush1.bf16.msra.mxu0 %v5044
    %7613 = vmatprep.subr.bf16.mxu0 %v5053
    %7614 = vmatpush1.bf16.msra.mxu0 %v5052
    %7615 = vmatprep.subr.bf16.mxu0 %v5061
    %7616 = vmatpush1.bf16.msra.mxu0 %v5060
    %7617 = vmatprep.subr.bf16.mxu0 %v5069
    %7618 = vmatpush1.bf16.msra.mxu0 %v5068
    %7619 = vmatprep.subr.bf16.mxu0 %v5077
    %7620 = vmatpush1.bf16.msra.mxu0 %v5076
    %7621 = vmatprep.subr.bf16.mxu0 %v5085
    %7622 = vmatpush1.bf16.msra.mxu0 %v5084
    %7623 = vmatprep.subr.bf16.mxu0 %v5093
    %7624 = vmatpush1.bf16.msra.mxu0 %v5092
    %7625 = vmatprep.subr.bf16.mxu0 %v5101
    %7626 = vmatpush1.bf16.msra.mxu0 %v5100
    %7627 = vmatprep.subr.bf16.mxu0 %v5109
    %7628 = vmatpush1.bf16.msra.mxu0 %v5108
    %7629 = vmatprep.subr.bf16.mxu0 %v5117
    %7630 = vmatpush1.bf16.msra.mxu0 %v5116
    %7631 = vmatprep.subr.bf16.mxu0 %v5125
    %7632 = vmatpush1.bf16.msra.mxu0 %v5124
    %7633 = vmatprep.subr.bf16.mxu0 %v5133
    %7634 = vmatpush1.bf16.msra.mxu0 %v5132
    %7635 = vmatprep.mubr.bf16.mxu0 %v223
    %7636 = vmatmul.mubr.bf16.gmra.mrb[0].mxu0 %v222
    %v7637 = vpop.f32.mrb[0].mxu0
    %v7638 = vadd.f32 %v7597, %v7637
    %v7639 = vpop.f32.mrb[0].mxu0
    %v7640 = vadd.f32 %v7599, %v7639
    %v7641 = vpop.f32.mrb[0].mxu0
    %v7642 = vpop.f32.mrb[0].mxu0
    %7643 = vdwg.mxu0
    %7644 = vmatprep.subr.bf16.mxu0 %v5141
    %7645 = vmatpush1.bf16.msra.mxu0 %v5140
    %7646 = vmatprep.subr.bf16.mxu0 %v5149
    %7647 = vmatpush1.bf16.msra.mxu0 %v5148
    %7648 = vmatprep.subr.bf16.mxu0 %v5157
    %7649 = vmatpush1.bf16.msra.mxu0 %v5156
    %7650 = vmatprep.subr.bf16.mxu0 %v5165
    %7651 = vmatpush1.bf16.msra.mxu0 %v5164
    %7652 = vmatprep.subr.bf16.mxu0 %v5173
    %7653 = vmatpush1.bf16.msra.mxu0 %v5172
    %7654 = vmatprep.subr.bf16.mxu0 %v5181
    %7655 = vmatpush1.bf16.msra.mxu0 %v5180
    %7656 = vmatprep.subr.bf16.mxu0 %v5189
    %7657 = vmatpush1.bf16.msra.mxu0 %v5188
    %7658 = vmatprep.subr.bf16.mxu0 %v5197
    %7659 = vmatpush1.bf16.msra.mxu0 %v5196
    %7660 = vmatprep.subr.bf16.mxu0 %v5205
    %7661 = vmatpush1.bf16.msra.mxu0 %v5204
    %7662 = vmatprep.subr.bf16.mxu0 %v5213
    %7663 = vmatpush1.bf16.msra.mxu0 %v5212
    %7664 = vmatprep.subr.bf16.mxu0 %v5221
    %7665 = vmatpush1.bf16.msra.mxu0 %v5220
    %7666 = vmatprep.subr.bf16.mxu0 %v5229
    %7667 = vmatpush1.bf16.msra.mxu0 %v5228
    %7668 = vmatprep.subr.bf16.mxu0 %v5237
    %7669 = vmatpush1.bf16.msra.mxu0 %v5236
    %7670 = vmatprep.subr.bf16.mxu0 %v5245
    %7671 = vmatpush1.bf16.msra.mxu0 %v5244
    %7672 = vmatprep.subr.bf16.mxu0 %v5253
    %7673 = vmatpush1.bf16.msra.mxu0 %v5252
    %7674 = vmatprep.subr.bf16.mxu0 %v5261
    %7675 = vmatpush1.bf16.msra.mxu0 %v5260
    %7676 = vmatprep.mubr.bf16.mxu0 %v225
    %7677 = vmatmul.mubr.bf16.gmra.mrb[0].mxu0 %v224
    %v7678 = vpop.f32.mrb[0].mxu0
    %v7679 = vadd.f32 %v7638, %v7678
    %v7680 = vpop.f32.mrb[0].mxu0
    %v7681 = vadd.f32 %v7640, %v7680
    %v7682 = vpop.f32.mrb[0].mxu0
    %v7683 = vpop.f32.mrb[0].mxu0
    %7684 = vdwg.mxu0
    %7685 = vmatprep.subr.bf16.mxu0 %v5269
    %7686 = vmatpush1.bf16.msra.mxu0 %v5268
    %7687 = vmatprep.subr.bf16.mxu0 %v5277
    %7688 = vmatpush1.bf16.msra.mxu0 %v5276
    %7689 = vmatprep.subr.bf16.mxu0 %v5285
    %7690 = vmatpush1.bf16.msra.mxu0 %v5284
    %7691 = vmatprep.subr.bf16.mxu0 %v5293
    %7692 = vmatpush1.bf16.msra.mxu0 %v5292
    %7693 = vmatprep.subr.bf16.mxu0 %v5301
    %7694 = vmatpush1.bf16.msra.mxu0 %v5300
    %7695 = vmatprep.subr.bf16.mxu0 %v5309
    %7696 = vmatpush1.bf16.msra.mxu0 %v5308
    %7697 = vmatprep.subr.bf16.mxu0 %v5317
    %7698 = vmatpush1.bf16.msra.mxu0 %v5316
    %7699 = vmatprep.subr.bf16.mxu0 %v5325
    %7700 = vmatpush1.bf16.msra.mxu0 %v5324
    %7701 = vmatprep.subr.bf16.mxu0 %v5333
    %7702 = vmatpush1.bf16.msra.mxu0 %v5332
    %7703 = vmatprep.subr.bf16.mxu0 %v5341
    %7704 = vmatpush1.bf16.msra.mxu0 %v5340
    %7705 = vmatprep.subr.bf16.mxu0 %v5349
    %7706 = vmatpush1.bf16.msra.mxu0 %v5348
    %7707 = vmatprep.subr.bf16.mxu0 %v5357
    %7708 = vmatpush1.bf16.msra.mxu0 %v5356
    %7709 = vmatprep.subr.bf16.mxu0 %v5365
    %7710 = vmatpush1.bf16.msra.mxu0 %v5364
    %7711 = vmatprep.subr.bf16.mxu0 %v5373
    %7712 = vmatpush1.bf16.msra.mxu0 %v5372
    %7713 = vmatprep.subr.bf16.mxu0 %v5381
    %7714 = vmatpush1.bf16.msra.mxu0 %v5380
    %7715 = vmatprep.subr.bf16.mxu0 %v5389
    %7716 = vmatpush1.bf16.msra.mxu0 %v5388
    %7717 = vmatprep.mubr.bf16.mxu0 %v227
    %7718 = vmatmul.mubr.bf16.gmra.mrb[0].mxu0 %v226
    %v7719 = vpop.f32.mrb[0].mxu0
    %v7720 = vadd.f32 %v7679, %v7719
    %v7721 = vpop.f32.mrb[0].mxu0
    %v7722 = vadd.f32 %v7681, %v7721
    %v7723 = vpop.f32.mrb[0].mxu0
    %v7724 = vpop.f32.mrb[0].mxu0
    %7725 = vdwg.mxu0
    %v7726 = vmax.f32 %v6736, 0.0
    %v7727 = vmax.f32 %v6738, 0.0
    %v7728 = vmax.f32 %v7064, 0.0
    %v7729 = vmax.f32 %v7066, 0.0
    %v7730 = vmax.f32 %v7392, 0.0
    %v7731 = vmax.f32 %v7394, 0.0
    %v7732 = vmax.f32 %v7720, 0.0
    %v7733 = vmax.f32 %v7722, 0.0
    %v7734 = vpack.c.bf16 %v7726, %v7726
    %v7735 = vpack.c.bf16 %v7727, %v7727
    %v7736 = vpack.c.bf16 %v7728, %v7728
    %v7737 = vpack.c.bf16 %v7729, %v7729
    %v7738 = vpack.c.bf16 %v7730, %v7730
    %v7739 = vpack.c.bf16 %v7731, %v7731
    %v7740 = vpack.c.bf16 %v7732, %v7732
    %v7741 = vpack.c.bf16 %v7733, %v7733
    %v7742 = vld [vmem:[#allocation7] sm:$0xff]
    %v7743 = vld [vmem:[#allocation7 + $0x8] sm:$0xff]
    %v7744 = vld [vmem:[#allocation7 + $0x10] sm:$0xff]
    %v7745 = vld [vmem:[#allocation7 + $0x18] sm:$0xff]
    %v7746 = vld [vmem:[#allocation7 + $0x20] sm:$0xff]
    %v7747 = vld [vmem:[#allocation7 + $0x28] sm:$0xff]
    %v7748 = vld [vmem:[#allocation7 + $0x30] sm:$0xff]
    %v7749 = vld [vmem:[#allocation7 + $0x38] sm:$0xff]
    %v7750 = vld [vmem:[#allocation7 + $0x40] sm:$0xff]
    %v7751 = vld [vmem:[#allocation7 + $0x48] sm:$0xff]
    %v7752 = vld [vmem:[#allocation7 + $0x50] sm:$0xff]
    %v7753 = vld [vmem:[#allocation7 + $0x58] sm:$0xff]
    %v7754 = vld [vmem:[#allocation7 + $0x60] sm:$0xff]
    %v7755 = vld [vmem:[#allocation7 + $0x68] sm:$0xff]
    %v7756 = vld [vmem:[#allocation7 + $0x70] sm:$0xff]
    %v7757 = vld [vmem:[#allocation7 + $0x78] sm:$0xff]
    %v7758 = vld [vmem:[#allocation7 + $0x80] sm:$0xff]
    %v7759 = vld [vmem:[#allocation7 + $0x88] sm:$0xff]
    %v7760 = vld [vmem:[#allocation7 + $0x90] sm:$0xff]
    %v7761 = vld [vmem:[#allocation7 + $0x98] sm:$0xff]
    %v7762 = vld [vmem:[#allocation7 + $0xa0] sm:$0xff]
    %v7763 = vld [vmem:[#allocation7 + $0xa8] sm:$0xff]
    %v7764 = vld [vmem:[#allocation7 + $0xb0] sm:$0xff]
    %v7765 = vld [vmem:[#allocation7 + $0xb8] sm:$0xff]
    %v7766 = vld [vmem:[#allocation7 + $0xc0] sm:$0xff]
    %v7767 = vld [vmem:[#allocation7 + $0xc8] sm:$0xff]
    %v7768 = vld [vmem:[#allocation7 + $0xd0] sm:$0xff]
    %v7769 = vld [vmem:[#allocation7 + $0xd8] sm:$0xff]
    %v7770 = vld [vmem:[#allocation7 + $0xe0] sm:$0xff]
    %v7771 = vld [vmem:[#allocation7 + $0xe8] sm:$0xff]
    %v7772 = vld [vmem:[#allocation7 + $0xf0] sm:$0xff]
    %v7773 = vld [vmem:[#allocation7 + $0xf8] sm:$0xff]
    %v7774 = vld [vmem:[#allocation7 + $0x100] sm:$0xff]
    %v7775 = vld [vmem:[#allocation7 + $0x108] sm:$0xff]
    %v7776 = vld [vmem:[#allocation7 + $0x110] sm:$0xff]
    %v7777 = vld [vmem:[#allocation7 + $0x118] sm:$0xff]
    %v7778 = vld [vmem:[#allocation7 + $0x120] sm:$0xff]
    %v7779 = vld [vmem:[#allocation7 + $0x128] sm:$0xff]
    %v7780 = vld [vmem:[#allocation7 + $0x130] sm:$0xff]
    %v7781 = vld [vmem:[#allocation7 + $0x138] sm:$0xff]
    %v7782 = vld [vmem:[#allocation7 + $0x140] sm:$0xff]
    %v7783 = vld [vmem:[#allocation7 + $0x148] sm:$0xff]
    %v7784 = vld [vmem:[#allocation7 + $0x150] sm:$0xff]
    %v7785 = vld [vmem:[#allocation7 + $0x158] sm:$0xff]
    %v7786 = vld [vmem:[#allocation7 + $0x160] sm:$0xff]
    %v7787 = vld [vmem:[#allocation7 + $0x168] sm:$0xff]
    %v7788 = vld [vmem:[#allocation7 + $0x170] sm:$0xff]
    %v7789 = vld [vmem:[#allocation7 + $0x178] sm:$0xff]
    %v7790 = vld [vmem:[#allocation7 + $0x180] sm:$0xff]
    %v7791 = vld [vmem:[#allocation7 + $0x188] sm:$0xff]
    %v7792 = vld [vmem:[#allocation7 + $0x190] sm:$0xff]
    %v7793 = vld [vmem:[#allocation7 + $0x198] sm:$0xff]
    %v7794 = vld [vmem:[#allocation7 + $0x1a0] sm:$0xff]
    %v7795 = vld [vmem:[#allocation7 + $0x1a8] sm:$0xff]
    %v7796 = vld [vmem:[#allocation7 + $0x1b0] sm:$0xff]
    %v7797 = vld [vmem:[#allocation7 + $0x1b8] sm:$0xff]
    %v7798 = vld [vmem:[#allocation7 + $0x1c0] sm:$0xff]
    %v7799 = vld [vmem:[#allocation7 + $0x1c8] sm:$0xff]
    %v7800 = vld [vmem:[#allocation7 + $0x1d0] sm:$0xff]
    %v7801 = vld [vmem:[#allocation7 + $0x1d8] sm:$0xff]
    %v7802 = vld [vmem:[#allocation7 + $0x1e0] sm:$0xff]
    %v7803 = vld [vmem:[#allocation7 + $0x1e8] sm:$0xff]
    %v7804 = vld [vmem:[#allocation7 + $0x1f0] sm:$0xff]
    %v7805 = vld [vmem:[#allocation7 + $0x1f8] sm:$0xff]
    %v7806 = vld [vmem:[#allocation7 + $0x200] sm:$0xff]
    %v7807 = vld [vmem:[#allocation7 + $0x208] sm:$0xff]
    %v7808 = vld [vmem:[#allocation7 + $0x210] sm:$0xff]
    %v7809 = vld [vmem:[#allocation7 + $0x218] sm:$0xff]
    %v7810 = vld [vmem:[#allocation7 + $0x220] sm:$0xff]
    %v7811 = vld [vmem:[#allocation7 + $0x228] sm:$0xff]
    %v7812 = vld [vmem:[#allocation7 + $0x230] sm:$0xff]
    %v7813 = vld [vmem:[#allocation7 + $0x238] sm:$0xff]
    %v7814 = vld [vmem:[#allocation7 + $0x240] sm:$0xff]
    %v7815 = vld [vmem:[#allocation7 + $0x248] sm:$0xff]
    %v7816 = vld [vmem:[#allocation7 + $0x250] sm:$0xff]
    %v7817 = vld [vmem:[#allocation7 + $0x258] sm:$0xff]
    %v7818 = vld [vmem:[#allocation7 + $0x260] sm:$0xff]
    %v7819 = vld [vmem:[#allocation7 + $0x268] sm:$0xff]
    %v7820 = vld [vmem:[#allocation7 + $0x270] sm:$0xff]
    %v7821 = vld [vmem:[#allocation7 + $0x278] sm:$0xff]
    %v7822 = vld [vmem:[#allocation7 + $0x280] sm:$0xff]
    %v7823 = vld [vmem:[#allocation7 + $0x288] sm:$0xff]
    %v7824 = vld [vmem:[#allocation7 + $0x290] sm:$0xff]
    %v7825 = vld [vmem:[#allocation7 + $0x298] sm:$0xff]
    %v7826 = vld [vmem:[#allocation7 + $0x2a0] sm:$0xff]
    %v7827 = vld [vmem:[#allocation7 + $0x2a8] sm:$0xff]
    %v7828 = vld [vmem:[#allocation7 + $0x2b0] sm:$0xff]
    %v7829 = vld [vmem:[#allocation7 + $0x2b8] sm:$0xff]
    %v7830 = vld [vmem:[#allocation7 + $0x2c0] sm:$0xff]
    %v7831 = vld [vmem:[#allocation7 + $0x2c8] sm:$0xff]
    %v7832 = vld [vmem:[#allocation7 + $0x2d0] sm:$0xff]
    %v7833 = vld [vmem:[#allocation7 + $0x2d8] sm:$0xff]
    %v7834 = vld [vmem:[#allocation7 + $0x2e0] sm:$0xff]
    %v7835 = vld [vmem:[#allocation7 + $0x2e8] sm:$0xff]
    %v7836 = vld [vmem:[#allocation7 + $0x2f0] sm:$0xff]
    %v7837 = vld [vmem:[#allocation7 + $0x2f8] sm:$0xff]
    %v7838 = vld [vmem:[#allocation7 + $0x300] sm:$0xff]
    %v7839 = vld [vmem:[#allocation7 + $0x308] sm:$0xff]
    %v7840 = vld [vmem:[#allocation7 + $0x310] sm:$0xff]
    %v7841 = vld [vmem:[#allocation7 + $0x318] sm:$0xff]
    %v7842 = vld [vmem:[#allocation7 + $0x320] sm:$0xff]
    %v7843 = vld [vmem:[#allocation7 + $0x328] sm:$0xff]
    %v7844 = vld [vmem:[#allocation7 + $0x330] sm:$0xff]
    %v7845 = vld [vmem:[#allocation7 + $0x338] sm:$0xff]
    %v7846 = vld [vmem:[#allocation7 + $0x340] sm:$0xff]
    %v7847 = vld [vmem:[#allocation7 + $0x348] sm:$0xff]
    %v7848 = vld [vmem:[#allocation7 + $0x350] sm:$0xff]
    %v7849 = vld [vmem:[#allocation7 + $0x358] sm:$0xff]
    %v7850 = vld [vmem:[#allocation7 + $0x360] sm:$0xff]
    %v7851 = vld [vmem:[#allocation7 + $0x368] sm:$0xff]
    %v7852 = vld [vmem:[#allocation7 + $0x370] sm:$0xff]
    %v7853 = vld [vmem:[#allocation7 + $0x378] sm:$0xff]
    %v7854 = vld [vmem:[#allocation7 + $0x380] sm:$0xff]
    %v7855 = vld [vmem:[#allocation7 + $0x388] sm:$0xff]
    %v7856 = vld [vmem:[#allocation7 + $0x390] sm:$0xff]
    %v7857 = vld [vmem:[#allocation7 + $0x398] sm:$0xff]
    %v7858 = vld [vmem:[#allocation7 + $0x3a0] sm:$0xff]
    %v7859 = vld [vmem:[#allocation7 + $0x3a8] sm:$0xff]
    %v7860 = vld [vmem:[#allocation7 + $0x3b0] sm:$0xff]
    %v7861 = vld [vmem:[#allocation7 + $0x3b8] sm:$0xff]
    %v7862 = vld [vmem:[#allocation7 + $0x3c0] sm:$0xff]
    %v7863 = vld [vmem:[#allocation7 + $0x3c8] sm:$0xff]
    %v7864 = vld [vmem:[#allocation7 + $0x3d0] sm:$0xff]
    %v7865 = vld [vmem:[#allocation7 + $0x3d8] sm:$0xff]
    %v7866 = vld [vmem:[#allocation7 + $0x3e0] sm:$0xff]
    %v7867 = vld [vmem:[#allocation7 + $0x3e8] sm:$0xff]
    %v7868 = vld [vmem:[#allocation7 + $0x3f0] sm:$0xff]
    %v7869 = vld [vmem:[#allocation7 + $0x3f8] sm:$0xff]
    %v7870 = vld [vmem:[#allocation7 + $0x400] sm:$0xff]
    %v7871 = vld [vmem:[#allocation7 + $0x408] sm:$0xff]
    %v7872 = vld [vmem:[#allocation7 + $0x410] sm:$0xff]
    %v7873 = vld [vmem:[#allocation7 + $0x418] sm:$0xff]
    %v7874 = vld [vmem:[#allocation7 + $0x420] sm:$0xff]
    %v7875 = vld [vmem:[#allocation7 + $0x428] sm:$0xff]
    %v7876 = vld [vmem:[#allocation7 + $0x430] sm:$0xff]
    %v7877 = vld [vmem:[#allocation7 + $0x438] sm:$0xff]
    %v7878 = vld [vmem:[#allocation7 + $0x440] sm:$0xff]
    %v7879 = vld [vmem:[#allocation7 + $0x448] sm:$0xff]
    %v7880 = vld [vmem:[#allocation7 + $0x450] sm:$0xff]
    %v7881 = vld [vmem:[#allocation7 + $0x458] sm:$0xff]
    %v7882 = vld [vmem:[#allocation7 + $0x460] sm:$0xff]
    %v7883 = vld [vmem:[#allocation7 + $0x468] sm:$0xff]
    %v7884 = vld [vmem:[#allocation7 + $0x470] sm:$0xff]
    %v7885 = vld [vmem:[#allocation7 + $0x478] sm:$0xff]
    %v7886 = vld [vmem:[#allocation7 + $0x480] sm:$0xff]
    %v7887 = vld [vmem:[#allocation7 + $0x488] sm:$0xff]
    %v7888 = vld [vmem:[#allocation7 + $0x490] sm:$0xff]
    %v7889 = vld [vmem:[#allocation7 + $0x498] sm:$0xff]
    %v7890 = vld [vmem:[#allocation7 + $0x4a0] sm:$0xff]
    %v7891 = vld [vmem:[#allocation7 + $0x4a8] sm:$0xff]
    %v7892 = vld [vmem:[#allocation7 + $0x4b0] sm:$0xff]
    %v7893 = vld [vmem:[#allocation7 + $0x4b8] sm:$0xff]
    %v7894 = vld [vmem:[#allocation7 + $0x4c0] sm:$0xff]
    %v7895 = vld [vmem:[#allocation7 + $0x4c8] sm:$0xff]
    %v7896 = vld [vmem:[#allocation7 + $0x4d0] sm:$0xff]
    %v7897 = vld [vmem:[#allocation7 + $0x4d8] sm:$0xff]
    %v7898 = vld [vmem:[#allocation7 + $0x4e0] sm:$0xff]
    %v7899 = vld [vmem:[#allocation7 + $0x4e8] sm:$0xff]
    %v7900 = vld [vmem:[#allocation7 + $0x4f0] sm:$0xff]
    %v7901 = vld [vmem:[#allocation7 + $0x4f8] sm:$0xff]
    %v7902 = vld [vmem:[#allocation7 + $0x500] sm:$0xff]
    %v7903 = vld [vmem:[#allocation7 + $0x508] sm:$0xff]
    %v7904 = vld [vmem:[#allocation7 + $0x510] sm:$0xff]
    %v7905 = vld [vmem:[#allocation7 + $0x518] sm:$0xff]
    %v7906 = vld [vmem:[#allocation7 + $0x520] sm:$0xff]
    %v7907 = vld [vmem:[#allocation7 + $0x528] sm:$0xff]
    %v7908 = vld [vmem:[#allocation7 + $0x530] sm:$0xff]
    %v7909 = vld [vmem:[#allocation7 + $0x538] sm:$0xff]
    %v7910 = vld [vmem:[#allocation7 + $0x540] sm:$0xff]
    %v7911 = vld [vmem:[#allocation7 + $0x548] sm:$0xff]
    %v7912 = vld [vmem:[#allocation7 + $0x550] sm:$0xff]
    %v7913 = vld [vmem:[#allocation7 + $0x558] sm:$0xff]
    %v7914 = vld [vmem:[#allocation7 + $0x560] sm:$0xff]
    %v7915 = vld [vmem:[#allocation7 + $0x568] sm:$0xff]
    %v7916 = vld [vmem:[#allocation7 + $0x570] sm:$0xff]
    %v7917 = vld [vmem:[#allocation7 + $0x578] sm:$0xff]
    %v7918 = vld [vmem:[#allocation7 + $0x580] sm:$0xff]
    %v7919 = vld [vmem:[#allocation7 + $0x588] sm:$0xff]
    %v7920 = vld [vmem:[#allocation7 + $0x590] sm:$0xff]
    %v7921 = vld [vmem:[#allocation7 + $0x598] sm:$0xff]
    %v7922 = vld [vmem:[#allocation7 + $0x5a0] sm:$0xff]
    %v7923 = vld [vmem:[#allocation7 + $0x5a8] sm:$0xff]
    %v7924 = vld [vmem:[#allocation7 + $0x5b0] sm:$0xff]
    %v7925 = vld [vmem:[#allocation7 + $0x5b8] sm:$0xff]
    %v7926 = vld [vmem:[#allocation7 + $0x5c0] sm:$0xff]
    %v7927 = vld [vmem:[#allocation7 + $0x5c8] sm:$0xff]
    %v7928 = vld [vmem:[#allocation7 + $0x5d0] sm:$0xff]
    %v7929 = vld [vmem:[#allocation7 + $0x5d8] sm:$0xff]
    %v7930 = vld [vmem:[#allocation7 + $0x5e0] sm:$0xff]
    %v7931 = vld [vmem:[#allocation7 + $0x5e8] sm:$0xff]
    %v7932 = vld [vmem:[#allocation7 + $0x5f0] sm:$0xff]
    %v7933 = vld [vmem:[#allocation7 + $0x5f8] sm:$0xff]
    %v7934 = vld [vmem:[#allocation7 + $0x600] sm:$0xff]
    %v7935 = vld [vmem:[#allocation7 + $0x608] sm:$0xff]
    %v7936 = vld [vmem:[#allocation7 + $0x610] sm:$0xff]
    %v7937 = vld [vmem:[#allocation7 + $0x618] sm:$0xff]
    %v7938 = vld [vmem:[#allocation7 + $0x620] sm:$0xff]
    %v7939 = vld [vmem:[#allocation7 + $0x628] sm:$0xff]
    %v7940 = vld [vmem:[#allocation7 + $0x630] sm:$0xff]
    %v7941 = vld [vmem:[#allocation7 + $0x638] sm:$0xff]
    %v7942 = vld [vmem:[#allocation7 + $0x640] sm:$0xff]
    %v7943 = vld [vmem:[#allocation7 + $0x648] sm:$0xff]
    %v7944 = vld [vmem:[#allocation7 + $0x650] sm:$0xff]
    %v7945 = vld [vmem:[#allocation7 + $0x658] sm:$0xff]
    %v7946 = vld [vmem:[#allocation7 + $0x660] sm:$0xff]
    %v7947 = vld [vmem:[#allocation7 + $0x668] sm:$0xff]
    %v7948 = vld [vmem:[#allocation7 + $0x670] sm:$0xff]
    %v7949 = vld [vmem:[#allocation7 + $0x678] sm:$0xff]
    %v7950 = vld [vmem:[#allocation7 + $0x680] sm:$0xff]
    %v7951 = vld [vmem:[#allocation7 + $0x688] sm:$0xff]
    %v7952 = vld [vmem:[#allocation7 + $0x690] sm:$0xff]
    %v7953 = vld [vmem:[#allocation7 + $0x698] sm:$0xff]
    %v7954 = vld [vmem:[#allocation7 + $0x6a0] sm:$0xff]
    %v7955 = vld [vmem:[#allocation7 + $0x6a8] sm:$0xff]
    %v7956 = vld [vmem:[#allocation7 + $0x6b0] sm:$0xff]
    %v7957 = vld [vmem:[#allocation7 + $0x6b8] sm:$0xff]
    %v7958 = vld [vmem:[#allocation7 + $0x6c0] sm:$0xff]
    %v7959 = vld [vmem:[#allocation7 + $0x6c8] sm:$0xff]
    %v7960 = vld [vmem:[#allocation7 + $0x6d0] sm:$0xff]
    %v7961 = vld [vmem:[#allocation7 + $0x6d8] sm:$0xff]
    %v7962 = vld [vmem:[#allocation7 + $0x6e0] sm:$0xff]
    %v7963 = vld [vmem:[#allocation7 + $0x6e8] sm:$0xff]
    %v7964 = vld [vmem:[#allocation7 + $0x6f0] sm:$0xff]
    %v7965 = vld [vmem:[#allocation7 + $0x6f8] sm:$0xff]
    %v7966 = vld [vmem:[#allocation7 + $0x700] sm:$0xff]
    %v7967 = vld [vmem:[#allocation7 + $0x708] sm:$0xff]
    %v7968 = vld [vmem:[#allocation7 + $0x710] sm:$0xff]
    %v7969 = vld [vmem:[#allocation7 + $0x718] sm:$0xff]
    %v7970 = vld [vmem:[#allocation7 + $0x720] sm:$0xff]
    %v7971 = vld [vmem:[#allocation7 + $0x728] sm:$0xff]
    %v7972 = vld [vmem:[#allocation7 + $0x730] sm:$0xff]
    %v7973 = vld [vmem:[#allocation7 + $0x738] sm:$0xff]
    %v7974 = vld [vmem:[#allocation7 + $0x740] sm:$0xff]
    %v7975 = vld [vmem:[#allocation7 + $0x748] sm:$0xff]
    %v7976 = vld [vmem:[#allocation7 + $0x750] sm:$0xff]
    %v7977 = vld [vmem:[#allocation7 + $0x758] sm:$0xff]
    %v7978 = vld [vmem:[#allocation7 + $0x760] sm:$0xff]
    %v7979 = vld [vmem:[#allocation7 + $0x768] sm:$0xff]
    %v7980 = vld [vmem:[#allocation7 + $0x770] sm:$0xff]
    %v7981 = vld [vmem:[#allocation7 + $0x778] sm:$0xff]
    %v7982 = vld [vmem:[#allocation7 + $0x780] sm:$0xff]
    %v7983 = vld [vmem:[#allocation7 + $0x788] sm:$0xff]
    %v7984 = vld [vmem:[#allocation7 + $0x790] sm:$0xff]
    %v7985 = vld [vmem:[#allocation7 + $0x798] sm:$0xff]
    %v7986 = vld [vmem:[#allocation7 + $0x7a0] sm:$0xff]
    %v7987 = vld [vmem:[#allocation7 + $0x7a8] sm:$0xff]
    %v7988 = vld [vmem:[#allocation7 + $0x7b0] sm:$0xff]
    %v7989 = vld [vmem:[#allocation7 + $0x7b8] sm:$0xff]
    %v7990 = vld [vmem:[#allocation7 + $0x7c0] sm:$0xff]
    %v7991 = vld [vmem:[#allocation7 + $0x7c8] sm:$0xff]
    %v7992 = vld [vmem:[#allocation7 + $0x7d0] sm:$0xff]
    %v7993 = vld [vmem:[#allocation7 + $0x7d8] sm:$0xff]
    %v7994 = vld [vmem:[#allocation7 + $0x7e0] sm:$0xff]
    %v7995 = vld [vmem:[#allocation7 + $0x7e8] sm:$0xff]
    %v7996 = vld [vmem:[#allocation7 + $0x7f0] sm:$0xff]
    %v7997 = vld [vmem:[#allocation7 + $0x7f8] sm:$0xff]
    %v7998 = vld [vmem:[#allocation7 + $0x800] sm:$0xff]
    %v7999 = vld [vmem:[#allocation7 + $0x808] sm:$0xff]
    %v8000 = vld [vmem:[#allocation7 + $0x810] sm:$0xff]
    %v8001 = vld [vmem:[#allocation7 + $0x818] sm:$0xff]
    %v8002 = vld [vmem:[#allocation7 + $0x820] sm:$0xff]
    %v8003 = vld [vmem:[#allocation7 + $0x828] sm:$0xff]
    %v8004 = vld [vmem:[#allocation7 + $0x830] sm:$0xff]
    %v8005 = vld [vmem:[#allocation7 + $0x838] sm:$0xff]
    %v8006 = vld [vmem:[#allocation7 + $0x840] sm:$0xff]
    %v8007 = vld [vmem:[#allocation7 + $0x848] sm:$0xff]
    %v8008 = vld [vmem:[#allocation7 + $0x850] sm:$0xff]
    %v8009 = vld [vmem:[#allocation7 + $0x858] sm:$0xff]
    %v8010 = vld [vmem:[#allocation7 + $0x860] sm:$0xff]
    %v8011 = vld [vmem:[#allocation7 + $0x868] sm:$0xff]
    %v8012 = vld [vmem:[#allocation7 + $0x870] sm:$0xff]
    %v8013 = vld [vmem:[#allocation7 + $0x878] sm:$0xff]
    %v8014 = vld [vmem:[#allocation7 + $0x880] sm:$0xff]
    %v8015 = vld [vmem:[#allocation7 + $0x888] sm:$0xff]
    %v8016 = vld [vmem:[#allocation7 + $0x890] sm:$0xff]
    %v8017 = vld [vmem:[#allocation7 + $0x898] sm:$0xff]
    %v8018 = vld [vmem:[#allocation7 + $0x8a0] sm:$0xff]
    %v8019 = vld [vmem:[#allocation7 + $0x8a8] sm:$0xff]
    %v8020 = vld [vmem:[#allocation7 + $0x8b0] sm:$0xff]
    %v8021 = vld [vmem:[#allocation7 + $0x8b8] sm:$0xff]
    %v8022 = vld [vmem:[#allocation7 + $0x8c0] sm:$0xff]
    %v8023 = vld [vmem:[#allocation7 + $0x8c8] sm:$0xff]
    %v8024 = vld [vmem:[#allocation7 + $0x8d0] sm:$0xff]
    %v8025 = vld [vmem:[#allocation7 + $0x8d8] sm:$0xff]
    %v8026 = vld [vmem:[#allocation7 + $0x8e0] sm:$0xff]
    %v8027 = vld [vmem:[#allocation7 + $0x8e8] sm:$0xff]
    %v8028 = vld [vmem:[#allocation7 + $0x8f0] sm:$0xff]
    %v8029 = vld [vmem:[#allocation7 + $0x8f8] sm:$0xff]
    %v8030 = vld [vmem:[#allocation7 + $0x900] sm:$0xff]
    %v8031 = vld [vmem:[#allocation7 + $0x908] sm:$0xff]
    %v8032 = vld [vmem:[#allocation7 + $0x910] sm:$0xff]
    %v8033 = vld [vmem:[#allocation7 + $0x918] sm:$0xff]
    %v8034 = vld [vmem:[#allocation7 + $0x920] sm:$0xff]
    %v8035 = vld [vmem:[#allocation7 + $0x928] sm:$0xff]
    %v8036 = vld [vmem:[#allocation7 + $0x930] sm:$0xff]
    %v8037 = vld [vmem:[#allocation7 + $0x938] sm:$0xff]
    %v8038 = vld [vmem:[#allocation7 + $0x940] sm:$0xff]
    %v8039 = vld [vmem:[#allocation7 + $0x948] sm:$0xff]
    %v8040 = vld [vmem:[#allocation7 + $0x950] sm:$0xff]
    %v8041 = vld [vmem:[#allocation7 + $0x958] sm:$0xff]
    %v8042 = vld [vmem:[#allocation7 + $0x960] sm:$0xff]
    %v8043 = vld [vmem:[#allocation7 + $0x968] sm:$0xff]
    %v8044 = vld [vmem:[#allocation7 + $0x970] sm:$0xff]
    %v8045 = vld [vmem:[#allocation7 + $0x978] sm:$0xff]
    %v8046 = vld [vmem:[#allocation7 + $0x980] sm:$0xff]
    %v8047 = vld [vmem:[#allocation7 + $0x988] sm:$0xff]
    %v8048 = vld [vmem:[#allocation7 + $0x990] sm:$0xff]
    %v8049 = vld [vmem:[#allocation7 + $0x998] sm:$0xff]
    %v8050 = vld [vmem:[#allocation7 + $0x9a0] sm:$0xff]
    %v8051 = vld [vmem:[#allocation7 + $0x9a8] sm:$0xff]
    %v8052 = vld [vmem:[#allocation7 + $0x9b0] sm:$0xff]
    %v8053 = vld [vmem:[#allocation7 + $0x9b8] sm:$0xff]
    %v8054 = vld [vmem:[#allocation7 + $0x9c0] sm:$0xff]
    %v8055 = vld [vmem:[#allocation7 + $0x9c8] sm:$0xff]
    %v8056 = vld [vmem:[#allocation7 + $0x9d0] sm:$0xff]
    %v8057 = vld [vmem:[#allocation7 + $0x9d8] sm:$0xff]
    %v8058 = vld [vmem:[#allocation7 + $0x9e0] sm:$0xff]
    %v8059 = vld [vmem:[#allocation7 + $0x9e8] sm:$0xff]
    %v8060 = vld [vmem:[#allocation7 + $0x9f0] sm:$0xff]
    %v8061 = vld [vmem:[#allocation7 + $0x9f8] sm:$0xff]
    %v8062 = vld [vmem:[#allocation7 + $0xa00] sm:$0xff]
    %v8063 = vld [vmem:[#allocation7 + $0xa08] sm:$0xff]
    %v8064 = vld [vmem:[#allocation7 + $0xa10] sm:$0xff]
    %v8065 = vld [vmem:[#allocation7 + $0xa18] sm:$0xff]
    %v8066 = vld [vmem:[#allocation7 + $0xa20] sm:$0xff]
    %v8067 = vld [vmem:[#allocation7 + $0xa28] sm:$0xff]
    %v8068 = vld [vmem:[#allocation7 + $0xa30] sm:$0xff]
    %v8069 = vld [vmem:[#allocation7 + $0xa38] sm:$0xff]
    %v8070 = vld [vmem:[#allocation7 + $0xa40] sm:$0xff]
    %v8071 = vld [vmem:[#allocation7 + $0xa48] sm:$0xff]
    %v8072 = vld [vmem:[#allocation7 + $0xa50] sm:$0xff]
    %v8073 = vld [vmem:[#allocation7 + $0xa58] sm:$0xff]
    %v8074 = vld [vmem:[#allocation7 + $0xa60] sm:$0xff]
    %v8075 = vld [vmem:[#allocation7 + $0xa68] sm:$0xff]
    %v8076 = vld [vmem:[#allocation7 + $0xa70] sm:$0xff]
    %v8077 = vld [vmem:[#allocation7 + $0xa78] sm:$0xff]
    %v8078 = vld [vmem:[#allocation7 + $0xa80] sm:$0xff]
    %v8079 = vld [vmem:[#allocation7 + $0xa88] sm:$0xff]
    %v8080 = vld [vmem:[#allocation7 + $0xa90] sm:$0xff]
    %v8081 = vld [vmem:[#allocation7 + $0xa98] sm:$0xff]
    %v8082 = vld [vmem:[#allocation7 + $0xaa0] sm:$0xff]
    %v8083 = vld [vmem:[#allocation7 + $0xaa8] sm:$0xff]
    %v8084 = vld [vmem:[#allocation7 + $0xab0] sm:$0xff]
    %v8085 = vld [vmem:[#allocation7 + $0xab8] sm:$0xff]
    %v8086 = vld [vmem:[#allocation7 + $0xac0] sm:$0xff]
    %v8087 = vld [vmem:[#allocation7 + $0xac8] sm:$0xff]
    %v8088 = vld [vmem:[#allocation7 + $0xad0] sm:$0xff]
    %v8089 = vld [vmem:[#allocation7 + $0xad8] sm:$0xff]
    %v8090 = vld [vmem:[#allocation7 + $0xae0] sm:$0xff]
    %v8091 = vld [vmem:[#allocation7 + $0xae8] sm:$0xff]
    %v8092 = vld [vmem:[#allocation7 + $0xaf0] sm:$0xff]
    %v8093 = vld [vmem:[#allocation7 + $0xaf8] sm:$0xff]
    %v8094 = vld [vmem:[#allocation7 + $0xb00] sm:$0xff]
    %v8095 = vld [vmem:[#allocation7 + $0xb08] sm:$0xff]
    %v8096 = vld [vmem:[#allocation7 + $0xb10] sm:$0xff]
    %v8097 = vld [vmem:[#allocation7 + $0xb18] sm:$0xff]
    %v8098 = vld [vmem:[#allocation7 + $0xb20] sm:$0xff]
    %v8099 = vld [vmem:[#allocation7 + $0xb28] sm:$0xff]
    %v8100 = vld [vmem:[#allocation7 + $0xb30] sm:$0xff]
    %v8101 = vld [vmem:[#allocation7 + $0xb38] sm:$0xff]
    %v8102 = vld [vmem:[#allocation7 + $0xb40] sm:$0xff]
    %v8103 = vld [vmem:[#allocation7 + $0xb48] sm:$0xff]
    %v8104 = vld [vmem:[#allocation7 + $0xb50] sm:$0xff]
    %v8105 = vld [vmem:[#allocation7 + $0xb58] sm:$0xff]
    %v8106 = vld [vmem:[#allocation7 + $0xb60] sm:$0xff]
    %v8107 = vld [vmem:[#allocation7 + $0xb68] sm:$0xff]
    %v8108 = vld [vmem:[#allocation7 + $0xb70] sm:$0xff]
    %v8109 = vld [vmem:[#allocation7 + $0xb78] sm:$0xff]
    %v8110 = vld [vmem:[#allocation7 + $0xb80] sm:$0xff]
    %v8111 = vld [vmem:[#allocation7 + $0xb88] sm:$0xff]
    %v8112 = vld [vmem:[#allocation7 + $0xb90] sm:$0xff]
    %v8113 = vld [vmem:[#allocation7 + $0xb98] sm:$0xff]
    %v8114 = vld [vmem:[#allocation7 + $0xba0] sm:$0xff]
    %v8115 = vld [vmem:[#allocation7 + $0xba8] sm:$0xff]
    %v8116 = vld [vmem:[#allocation7 + $0xbb0] sm:$0xff]
    %v8117 = vld [vmem:[#allocation7 + $0xbb8] sm:$0xff]
    %v8118 = vld [vmem:[#allocation7 + $0xbc0] sm:$0xff]
    %v8119 = vld [vmem:[#allocation7 + $0xbc8] sm:$0xff]
    %v8120 = vld [vmem:[#allocation7 + $0xbd0] sm:$0xff]
    %v8121 = vld [vmem:[#allocation7 + $0xbd8] sm:$0xff]
    %v8122 = vld [vmem:[#allocation7 + $0xbe0] sm:$0xff]
    %v8123 = vld [vmem:[#allocation7 + $0xbe8] sm:$0xff]
    %v8124 = vld [vmem:[#allocation7 + $0xbf0] sm:$0xff]
    %v8125 = vld [vmem:[#allocation7 + $0xbf8] sm:$0xff]
    %v8126 = vld [vmem:[#allocation7 + $0xc00] sm:$0xff]
    %v8127 = vld [vmem:[#allocation7 + $0xc08] sm:$0xff]
    %v8128 = vld [vmem:[#allocation7 + $0xc10] sm:$0xff]
    %v8129 = vld [vmem:[#allocation7 + $0xc18] sm:$0xff]
    %v8130 = vld [vmem:[#allocation7 + $0xc20] sm:$0xff]
    %v8131 = vld [vmem:[#allocation7 + $0xc28] sm:$0xff]
    %v8132 = vld [vmem:[#allocation7 + $0xc30] sm:$0xff]
    %v8133 = vld [vmem:[#allocation7 + $0xc38] sm:$0xff]
    %v8134 = vld [vmem:[#allocation7 + $0xc40] sm:$0xff]
    %v8135 = vld [vmem:[#allocation7 + $0xc48] sm:$0xff]
    %v8136 = vld [vmem:[#allocation7 + $0xc50] sm:$0xff]
    %v8137 = vld [vmem:[#allocation7 + $0xc58] sm:$0xff]
    %v8138 = vld [vmem:[#allocation7 + $0xc60] sm:$0xff]
    %v8139 = vld [vmem:[#allocation7 + $0xc68] sm:$0xff]
    %v8140 = vld [vmem:[#allocation7 + $0xc70] sm:$0xff]
    %v8141 = vld [vmem:[#allocation7 + $0xc78] sm:$0xff]
    %v8142 = vld [vmem:[#allocation7 + $0xc80] sm:$0xff]
    %v8143 = vld [vmem:[#allocation7 + $0xc88] sm:$0xff]
    %v8144 = vld [vmem:[#allocation7 + $0xc90] sm:$0xff]
    %v8145 = vld [vmem:[#allocation7 + $0xc98] sm:$0xff]
    %v8146 = vld [vmem:[#allocation7 + $0xca0] sm:$0xff]
    %v8147 = vld [vmem:[#allocation7 + $0xca8] sm:$0xff]
    %v8148 = vld [vmem:[#allocation7 + $0xcb0] sm:$0xff]
    %v8149 = vld [vmem:[#allocation7 + $0xcb8] sm:$0xff]
    %v8150 = vld [vmem:[#allocation7 + $0xcc0] sm:$0xff]
    %v8151 = vld [vmem:[#allocation7 + $0xcc8] sm:$0xff]
    %v8152 = vld [vmem:[#allocation7 + $0xcd0] sm:$0xff]
    %v8153 = vld [vmem:[#allocation7 + $0xcd8] sm:$0xff]
    %v8154 = vld [vmem:[#allocation7 + $0xce0] sm:$0xff]
    %v8155 = vld [vmem:[#allocation7 + $0xce8] sm:$0xff]
    %v8156 = vld [vmem:[#allocation7 + $0xcf0] sm:$0xff]
    %v8157 = vld [vmem:[#allocation7 + $0xcf8] sm:$0xff]
    %v8158 = vld [vmem:[#allocation7 + $0xd00] sm:$0xff]
    %v8159 = vld [vmem:[#allocation7 + $0xd08] sm:$0xff]
    %v8160 = vld [vmem:[#allocation7 + $0xd10] sm:$0xff]
    %v8161 = vld [vmem:[#allocation7 + $0xd18] sm:$0xff]
    %v8162 = vld [vmem:[#allocation7 + $0xd20] sm:$0xff]
    %v8163 = vld [vmem:[#allocation7 + $0xd28] sm:$0xff]
    %v8164 = vld [vmem:[#allocation7 + $0xd30] sm:$0xff]
    %v8165 = vld [vmem:[#allocation7 + $0xd38] sm:$0xff]
    %v8166 = vld [vmem:[#allocation7 + $0xd40] sm:$0xff]
    %v8167 = vld [vmem:[#allocation7 + $0xd48] sm:$0xff]
    %v8168 = vld [vmem:[#allocation7 + $0xd50] sm:$0xff]
    %v8169 = vld [vmem:[#allocation7 + $0xd58] sm:$0xff]
    %v8170 = vld [vmem:[#allocation7 + $0xd60] sm:$0xff]
    %v8171 = vld [vmem:[#allocation7 + $0xd68] sm:$0xff]
    %v8172 = vld [vmem:[#allocation7 + $0xd70] sm:$0xff]
    %v8173 = vld [vmem:[#allocation7 + $0xd78] sm:$0xff]
    %v8174 = vld [vmem:[#allocation7 + $0xd80] sm:$0xff]
    %v8175 = vld [vmem:[#allocation7 + $0xd88] sm:$0xff]
    %v8176 = vld [vmem:[#allocation7 + $0xd90] sm:$0xff]
    %v8177 = vld [vmem:[#allocation7 + $0xd98] sm:$0xff]
    %v8178 = vld [vmem:[#allocation7 + $0xda0] sm:$0xff]
    %v8179 = vld [vmem:[#allocation7 + $0xda8] sm:$0xff]
    %v8180 = vld [vmem:[#allocation7 + $0xdb0] sm:$0xff]
    %v8181 = vld [vmem:[#allocation7 + $0xdb8] sm:$0xff]
    %v8182 = vld [vmem:[#allocation7 + $0xdc0] sm:$0xff]
    %v8183 = vld [vmem:[#allocation7 + $0xdc8] sm:$0xff]
    %v8184 = vld [vmem:[#allocation7 + $0xdd0] sm:$0xff]
    %v8185 = vld [vmem:[#allocation7 + $0xdd8] sm:$0xff]
    %v8186 = vld [vmem:[#allocation7 + $0xde0] sm:$0xff]
    %v8187 = vld [vmem:[#allocation7 + $0xde8] sm:$0xff]
    %v8188 = vld [vmem:[#allocation7 + $0xdf0] sm:$0xff]
    %v8189 = vld [vmem:[#allocation7 + $0xdf8] sm:$0xff]
    %v8190 = vld [vmem:[#allocation7 + $0xe00] sm:$0xff]
    %v8191 = vld [vmem:[#allocation7 + $0xe08] sm:$0xff]
    %v8192 = vld [vmem:[#allocation7 + $0xe10] sm:$0xff]
    %v8193 = vld [vmem:[#allocation7 + $0xe18] sm:$0xff]
    %v8194 = vld [vmem:[#allocation7 + $0xe20] sm:$0xff]
    %v8195 = vld [vmem:[#allocation7 + $0xe28] sm:$0xff]
    %v8196 = vld [vmem:[#allocation7 + $0xe30] sm:$0xff]
    %v8197 = vld [vmem:[#allocation7 + $0xe38] sm:$0xff]
    %v8198 = vld [vmem:[#allocation7 + $0xe40] sm:$0xff]
    %v8199 = vld [vmem:[#allocation7 + $0xe48] sm:$0xff]
    %v8200 = vld [vmem:[#allocation7 + $0xe50] sm:$0xff]
    %v8201 = vld [vmem:[#allocation7 + $0xe58] sm:$0xff]
    %v8202 = vld [vmem:[#allocation7 + $0xe60] sm:$0xff]
    %v8203 = vld [vmem:[#allocation7 + $0xe68] sm:$0xff]
    %v8204 = vld [vmem:[#allocation7 + $0xe70] sm:$0xff]
    %v8205 = vld [vmem:[#allocation7 + $0xe78] sm:$0xff]
    %v8206 = vld [vmem:[#allocation7 + $0xe80] sm:$0xff]
    %v8207 = vld [vmem:[#allocation7 + $0xe88] sm:$0xff]
    %v8208 = vld [vmem:[#allocation7 + $0xe90] sm:$0xff]
    %v8209 = vld [vmem:[#allocation7 + $0xe98] sm:$0xff]
    %v8210 = vld [vmem:[#allocation7 + $0xea0] sm:$0xff]
    %v8211 = vld [vmem:[#allocation7 + $0xea8] sm:$0xff]
    %v8212 = vld [vmem:[#allocation7 + $0xeb0] sm:$0xff]
    %v8213 = vld [vmem:[#allocation7 + $0xeb8] sm:$0xff]
    %v8214 = vld [vmem:[#allocation7 + $0xec0] sm:$0xff]
    %v8215 = vld [vmem:[#allocation7 + $0xec8] sm:$0xff]
    %v8216 = vld [vmem:[#allocation7 + $0xed0] sm:$0xff]
    %v8217 = vld [vmem:[#allocation7 + $0xed8] sm:$0xff]
    %v8218 = vld [vmem:[#allocation7 + $0xee0] sm:$0xff]
    %v8219 = vld [vmem:[#allocation7 + $0xee8] sm:$0xff]
    %v8220 = vld [vmem:[#allocation7 + $0xef0] sm:$0xff]
    %v8221 = vld [vmem:[#allocation7 + $0xef8] sm:$0xff]
    %v8222 = vld [vmem:[#allocation7 + $0xf00] sm:$0xff]
    %v8223 = vld [vmem:[#allocation7 + $0xf08] sm:$0xff]
    %v8224 = vld [vmem:[#allocation7 + $0xf10] sm:$0xff]
    %v8225 = vld [vmem:[#allocation7 + $0xf18] sm:$0xff]
    %v8226 = vld [vmem:[#allocation7 + $0xf20] sm:$0xff]
    %v8227 = vld [vmem:[#allocation7 + $0xf28] sm:$0xff]
    %v8228 = vld [vmem:[#allocation7 + $0xf30] sm:$0xff]
    %v8229 = vld [vmem:[#allocation7 + $0xf38] sm:$0xff]
    %v8230 = vld [vmem:[#allocation7 + $0xf40] sm:$0xff]
    %v8231 = vld [vmem:[#allocation7 + $0xf48] sm:$0xff]
    %v8232 = vld [vmem:[#allocation7 + $0xf50] sm:$0xff]
    %v8233 = vld [vmem:[#allocation7 + $0xf58] sm:$0xff]
    %v8234 = vld [vmem:[#allocation7 + $0xf60] sm:$0xff]
    %v8235 = vld [vmem:[#allocation7 + $0xf68] sm:$0xff]
    %v8236 = vld [vmem:[#allocation7 + $0xf70] sm:$0xff]
    %v8237 = vld [vmem:[#allocation7 + $0xf78] sm:$0xff]
    %v8238 = vld [vmem:[#allocation7 + $0xf80] sm:$0xff]
    %v8239 = vld [vmem:[#allocation7 + $0xf88] sm:$0xff]
    %v8240 = vld [vmem:[#allocation7 + $0xf90] sm:$0xff]
    %v8241 = vld [vmem:[#allocation7 + $0xf98] sm:$0xff]
    %v8242 = vld [vmem:[#allocation7 + $0xfa0] sm:$0xff]
    %v8243 = vld [vmem:[#allocation7 + $0xfa8] sm:$0xff]
    %v8244 = vld [vmem:[#allocation7 + $0xfb0] sm:$0xff]
    %v8245 = vld [vmem:[#allocation7 + $0xfb8] sm:$0xff]
    %v8246 = vld [vmem:[#allocation7 + $0xfc0] sm:$0xff]
    %v8247 = vld [vmem:[#allocation7 + $0xfc8] sm:$0xff]
    %v8248 = vld [vmem:[#allocation7 + $0xfd0] sm:$0xff]
    %v8249 = vld [vmem:[#allocation7 + $0xfd8] sm:$0xff]
    %v8250 = vld [vmem:[#allocation7 + $0xfe0] sm:$0xff]
    %v8251 = vld [vmem:[#allocation7 + $0xfe8] sm:$0xff]
    %v8252 = vld [vmem:[#allocation7 + $0xff0] sm:$0xff]
    %v8253 = vld [vmem:[#allocation7 + $0xff8] sm:$0xff]
    %v8254 = vld [vmem:[#allocation8] sm:$0xff]
    %v8256 = vlaneseq
    %v8257 = vshrl.u32 %v8256, 7
    %v8258 = vsub.s32 0, %v8257
    %v8259 = vrot.slane %v8254, %v8258
    %v8260 = vlaneseq
    %v8261 = vshrl.u32 %v8260, 7
    %v8262 = vsub.s32 1, %v8261
    %v8263 = vrot.slane %v8254, %v8262
    %v8264 = vlaneseq
    %v8265 = vshrl.u32 %v8264, 7
    %v8266 = vsub.s32 2, %v8265
    %v8267 = vrot.slane %v8254, %v8266
    %v8268 = vlaneseq
    %v8269 = vshrl.u32 %v8268, 7
    %v8270 = vsub.s32 3, %v8269
    %v8271 = vrot.slane %v8254, %v8270
    %v8272 = vlaneseq
    %v8273 = vshrl.u32 %v8272, 7
    %v8274 = vsub.s32 4, %v8273
    %v8275 = vrot.slane %v8254, %v8274
    %v8276 = vlaneseq
    %v8277 = vshrl.u32 %v8276, 7
    %v8278 = vsub.s32 5, %v8277
    %v8279 = vrot.slane %v8254, %v8278
    %v8280 = vlaneseq
    %v8281 = vshrl.u32 %v8280, 7
    %v8282 = vsub.s32 6, %v8281
    %v8283 = vrot.slane %v8254, %v8282
    %v8284 = vlaneseq
    %v8285 = vshrl.u32 %v8284, 7
    %v8286 = vsub.s32 7, %v8285
    %v8287 = vrot.slane %v8254, %v8286
    %v8808 = vunpack.c.l.b16 %v7742
    %v8809 = vunpack.c.h.b16 %v7742
    %v8810 = vunpack.c.l.b16 %v7743
    %v8811 = vunpack.c.h.b16 %v7743
    %v8812 = vunpack.c.l.b16 %v7744
    %v8813 = vunpack.c.h.b16 %v7744
    %v8814 = vunpack.c.l.b16 %v7745
    %v8815 = vunpack.c.h.b16 %v7745
    %v8816 = vunpack.c.l.b16 %v7746
    %v8817 = vunpack.c.h.b16 %v7746
    %v8818 = vunpack.c.l.b16 %v7747
    %v8819 = vunpack.c.h.b16 %v7747
    %v8820 = vunpack.c.l.b16 %v7748
    %v8821 = vunpack.c.h.b16 %v7748
    %v8822 = vunpack.c.l.b16 %v7749
    %v8823 = vunpack.c.h.b16 %v7749
    %v8824 = vunpack.c.l.b16 %v7750
    %v8825 = vunpack.c.h.b16 %v7750
    %v8826 = vunpack.c.l.b16 %v7751
    %v8827 = vunpack.c.h.b16 %v7751
    %v8828 = vunpack.c.l.b16 %v7752
    %v8829 = vunpack.c.h.b16 %v7752
    %v8830 = vunpack.c.l.b16 %v7753
    %v8831 = vunpack.c.h.b16 %v7753
    %v8832 = vunpack.c.l.b16 %v7754
    %v8833 = vunpack.c.h.b16 %v7754
    %v8834 = vunpack.c.l.b16 %v7755
    %v8835 = vunpack.c.h.b16 %v7755
    %v8836 = vunpack.c.l.b16 %v7756
    %v8837 = vunpack.c.h.b16 %v7756
    %v8838 = vunpack.c.l.b16 %v7757
    %v8839 = vunpack.c.h.b16 %v7757
    %v8840 = vunpack.c.l.b16 %v7758
    %v8841 = vunpack.c.h.b16 %v7758
    %v8842 = vunpack.c.l.b16 %v7759
    %v8843 = vunpack.c.h.b16 %v7759
    %v8844 = vunpack.c.l.b16 %v7760
    %v8845 = vunpack.c.h.b16 %v7760
    %v8846 = vunpack.c.l.b16 %v7761
    %v8847 = vunpack.c.h.b16 %v7761
    %v8848 = vunpack.c.l.b16 %v7762
    %v8849 = vunpack.c.h.b16 %v7762
    %v8850 = vunpack.c.l.b16 %v7763
    %v8851 = vunpack.c.h.b16 %v7763
    %v8852 = vunpack.c.l.b16 %v7764
    %v8853 = vunpack.c.h.b16 %v7764
    %v8854 = vunpack.c.l.b16 %v7765
    %v8855 = vunpack.c.h.b16 %v7765
    %v8856 = vunpack.c.l.b16 %v7766
    %v8857 = vunpack.c.h.b16 %v7766
    %v8858 = vunpack.c.l.b16 %v7767
    %v8859 = vunpack.c.h.b16 %v7767
    %v8860 = vunpack.c.l.b16 %v7768
    %v8861 = vunpack.c.h.b16 %v7768
    %v8862 = vunpack.c.l.b16 %v7769
    %v8863 = vunpack.c.h.b16 %v7769
    %v8864 = vunpack.c.l.b16 %v7770
    %v8865 = vunpack.c.h.b16 %v7770
    %v8866 = vunpack.c.l.b16 %v7771
    %v8867 = vunpack.c.h.b16 %v7771
    %v8868 = vunpack.c.l.b16 %v7772
    %v8869 = vunpack.c.h.b16 %v7772
    %v8870 = vunpack.c.l.b16 %v7773
    %v8871 = vunpack.c.h.b16 %v7773
    %v8872 = vunpack.c.l.b16 %v7774
    %v8873 = vunpack.c.h.b16 %v7774
    %v8874 = vunpack.c.l.b16 %v7775
    %v8875 = vunpack.c.h.b16 %v7775
    %v8876 = vunpack.c.l.b16 %v7776
    %v8877 = vunpack.c.h.b16 %v7776
    %v8878 = vunpack.c.l.b16 %v7777
    %v8879 = vunpack.c.h.b16 %v7777
    %v8880 = vunpack.c.l.b16 %v7778
    %v8881 = vunpack.c.h.b16 %v7778
    %v8882 = vunpack.c.l.b16 %v7779
    %v8883 = vunpack.c.h.b16 %v7779
    %v8884 = vunpack.c.l.b16 %v7780
    %v8885 = vunpack.c.h.b16 %v7780
    %v8886 = vunpack.c.l.b16 %v7781
    %v8887 = vunpack.c.h.b16 %v7781
    %v8888 = vunpack.c.l.b16 %v7782
    %v8889 = vunpack.c.h.b16 %v7782
    %v8890 = vunpack.c.l.b16 %v7783
    %v8891 = vunpack.c.h.b16 %v7783
    %v8892 = vunpack.c.l.b16 %v7784
    %v8893 = vunpack.c.h.b16 %v7784
    %v8894 = vunpack.c.l.b16 %v7785
    %v8895 = vunpack.c.h.b16 %v7785
    %v8896 = vunpack.c.l.b16 %v7786
    %v8897 = vunpack.c.h.b16 %v7786
    %v8898 = vunpack.c.l.b16 %v7787
    %v8899 = vunpack.c.h.b16 %v7787
    %v8900 = vunpack.c.l.b16 %v7788
    %v8901 = vunpack.c.h.b16 %v7788
    %v8902 = vunpack.c.l.b16 %v7789
    %v8903 = vunpack.c.h.b16 %v7789
    %v8904 = vunpack.c.l.b16 %v7790
    %v8905 = vunpack.c.h.b16 %v7790
    %v8906 = vunpack.c.l.b16 %v7791
    %v8907 = vunpack.c.h.b16 %v7791
    %v8908 = vunpack.c.l.b16 %v7792
    %v8909 = vunpack.c.h.b16 %v7792
    %v8910 = vunpack.c.l.b16 %v7793
    %v8911 = vunpack.c.h.b16 %v7793
    %v8912 = vunpack.c.l.b16 %v7794
    %v8913 = vunpack.c.h.b16 %v7794
    %v8914 = vunpack.c.l.b16 %v7795
    %v8915 = vunpack.c.h.b16 %v7795
    %v8916 = vunpack.c.l.b16 %v7796
    %v8917 = vunpack.c.h.b16 %v7796
    %v8918 = vunpack.c.l.b16 %v7797
    %v8919 = vunpack.c.h.b16 %v7797
    %v8920 = vunpack.c.l.b16 %v7798
    %v8921 = vunpack.c.h.b16 %v7798
    %v8922 = vunpack.c.l.b16 %v7799
    %v8923 = vunpack.c.h.b16 %v7799
    %v8924 = vunpack.c.l.b16 %v7800
    %v8925 = vunpack.c.h.b16 %v7800
    %v8926 = vunpack.c.l.b16 %v7801
    %v8927 = vunpack.c.h.b16 %v7801
    %v8928 = vunpack.c.l.b16 %v7802
    %v8929 = vunpack.c.h.b16 %v7802
    %v8930 = vunpack.c.l.b16 %v7803
    %v8931 = vunpack.c.h.b16 %v7803
    %v8932 = vunpack.c.l.b16 %v7804
    %v8933 = vunpack.c.h.b16 %v7804
    %v8934 = vunpack.c.l.b16 %v7805
    %v8935 = vunpack.c.h.b16 %v7805
    %v8936 = vunpack.c.l.b16 %v7806
    %v8937 = vunpack.c.h.b16 %v7806
    %v8938 = vunpack.c.l.b16 %v7807
    %v8939 = vunpack.c.h.b16 %v7807
    %v8940 = vunpack.c.l.b16 %v7808
    %v8941 = vunpack.c.h.b16 %v7808
    %v8942 = vunpack.c.l.b16 %v7809
    %v8943 = vunpack.c.h.b16 %v7809
    %v8944 = vunpack.c.l.b16 %v7810
    %v8945 = vunpack.c.h.b16 %v7810
    %v8946 = vunpack.c.l.b16 %v7811
    %v8947 = vunpack.c.h.b16 %v7811
    %v8948 = vunpack.c.l.b16 %v7812
    %v8949 = vunpack.c.h.b16 %v7812
    %v8950 = vunpack.c.l.b16 %v7813
    %v8951 = vunpack.c.h.b16 %v7813
    %v8952 = vunpack.c.l.b16 %v7814
    %v8953 = vunpack.c.h.b16 %v7814
    %v8954 = vunpack.c.l.b16 %v7815
    %v8955 = vunpack.c.h.b16 %v7815
    %v8956 = vunpack.c.l.b16 %v7816
    %v8957 = vunpack.c.h.b16 %v7816
    %v8958 = vunpack.c.l.b16 %v7817
    %v8959 = vunpack.c.h.b16 %v7817
    %v8960 = vunpack.c.l.b16 %v7818
    %v8961 = vunpack.c.h.b16 %v7818
    %v8962 = vunpack.c.l.b16 %v7819
    %v8963 = vunpack.c.h.b16 %v7819
    %v8964 = vunpack.c.l.b16 %v7820
    %v8965 = vunpack.c.h.b16 %v7820
    %v8966 = vunpack.c.l.b16 %v7821
    %v8967 = vunpack.c.h.b16 %v7821
    %v8968 = vunpack.c.l.b16 %v7822
    %v8969 = vunpack.c.h.b16 %v7822
    %v8970 = vunpack.c.l.b16 %v7823
    %v8971 = vunpack.c.h.b16 %v7823
    %v8972 = vunpack.c.l.b16 %v7824
    %v8973 = vunpack.c.h.b16 %v7824
    %v8974 = vunpack.c.l.b16 %v7825
    %v8975 = vunpack.c.h.b16 %v7825
    %v8976 = vunpack.c.l.b16 %v7826
    %v8977 = vunpack.c.h.b16 %v7826
    %v8978 = vunpack.c.l.b16 %v7827
    %v8979 = vunpack.c.h.b16 %v7827
    %v8980 = vunpack.c.l.b16 %v7828
    %v8981 = vunpack.c.h.b16 %v7828
    %v8982 = vunpack.c.l.b16 %v7829
    %v8983 = vunpack.c.h.b16 %v7829
    %v8984 = vunpack.c.l.b16 %v7830
    %v8985 = vunpack.c.h.b16 %v7830
    %v8986 = vunpack.c.l.b16 %v7831
    %v8987 = vunpack.c.h.b16 %v7831
    %v8988 = vunpack.c.l.b16 %v7832
    %v8989 = vunpack.c.h.b16 %v7832
    %v8990 = vunpack.c.l.b16 %v7833
    %v8991 = vunpack.c.h.b16 %v7833
    %v8992 = vunpack.c.l.b16 %v7834
    %v8993 = vunpack.c.h.b16 %v7834
    %v8994 = vunpack.c.l.b16 %v7835
    %v8995 = vunpack.c.h.b16 %v7835
    %v8996 = vunpack.c.l.b16 %v7836
    %v8997 = vunpack.c.h.b16 %v7836
    %v8998 = vunpack.c.l.b16 %v7837
    %v8999 = vunpack.c.h.b16 %v7837
    %v9000 = vunpack.c.l.b16 %v7838
    %v9001 = vunpack.c.h.b16 %v7838
    %v9002 = vunpack.c.l.b16 %v7839
    %v9003 = vunpack.c.h.b16 %v7839
    %v9004 = vunpack.c.l.b16 %v7840
    %v9005 = vunpack.c.h.b16 %v7840
    %v9006 = vunpack.c.l.b16 %v7841
    %v9007 = vunpack.c.h.b16 %v7841
    %v9008 = vunpack.c.l.b16 %v7842
    %v9009 = vunpack.c.h.b16 %v7842
    %v9010 = vunpack.c.l.b16 %v7843
    %v9011 = vunpack.c.h.b16 %v7843
    %v9012 = vunpack.c.l.b16 %v7844
    %v9013 = vunpack.c.h.b16 %v7844
    %v9014 = vunpack.c.l.b16 %v7845
    %v9015 = vunpack.c.h.b16 %v7845
    %v9016 = vunpack.c.l.b16 %v7846
    %v9017 = vunpack.c.h.b16 %v7846
    %v9018 = vunpack.c.l.b16 %v7847
    %v9019 = vunpack.c.h.b16 %v7847
    %v9020 = vunpack.c.l.b16 %v7848
    %v9021 = vunpack.c.h.b16 %v7848
    %v9022 = vunpack.c.l.b16 %v7849
    %v9023 = vunpack.c.h.b16 %v7849
    %v9024 = vunpack.c.l.b16 %v7850
    %v9025 = vunpack.c.h.b16 %v7850
    %v9026 = vunpack.c.l.b16 %v7851
    %v9027 = vunpack.c.h.b16 %v7851
    %v9028 = vunpack.c.l.b16 %v7852
    %v9029 = vunpack.c.h.b16 %v7852
    %v9030 = vunpack.c.l.b16 %v7853
    %v9031 = vunpack.c.h.b16 %v7853
    %v9032 = vunpack.c.l.b16 %v7854
    %v9033 = vunpack.c.h.b16 %v7854
    %v9034 = vunpack.c.l.b16 %v7855
    %v9035 = vunpack.c.h.b16 %v7855
    %v9036 = vunpack.c.l.b16 %v7856
    %v9037 = vunpack.c.h.b16 %v7856
    %v9038 = vunpack.c.l.b16 %v7857
    %v9039 = vunpack.c.h.b16 %v7857
    %v9040 = vunpack.c.l.b16 %v7858
    %v9041 = vunpack.c.h.b16 %v7858
    %v9042 = vunpack.c.l.b16 %v7859
    %v9043 = vunpack.c.h.b16 %v7859
    %v9044 = vunpack.c.l.b16 %v7860
    %v9045 = vunpack.c.h.b16 %v7860
    %v9046 = vunpack.c.l.b16 %v7861
    %v9047 = vunpack.c.h.b16 %v7861
    %v9048 = vunpack.c.l.b16 %v7862
    %v9049 = vunpack.c.h.b16 %v7862
    %v9050 = vunpack.c.l.b16 %v7863
    %v9051 = vunpack.c.h.b16 %v7863
    %v9052 = vunpack.c.l.b16 %v7864
    %v9053 = vunpack.c.h.b16 %v7864
    %v9054 = vunpack.c.l.b16 %v7865
    %v9055 = vunpack.c.h.b16 %v7865
    %v9056 = vunpack.c.l.b16 %v7866
    %v9057 = vunpack.c.h.b16 %v7866
    %v9058 = vunpack.c.l.b16 %v7867
    %v9059 = vunpack.c.h.b16 %v7867
    %v9060 = vunpack.c.l.b16 %v7868
    %v9061 = vunpack.c.h.b16 %v7868
    %v9062 = vunpack.c.l.b16 %v7869
    %v9063 = vunpack.c.h.b16 %v7869
    %v9064 = vunpack.c.l.b16 %v7870
    %v9065 = vunpack.c.h.b16 %v7870
    %v9066 = vunpack.c.l.b16 %v7871
    %v9067 = vunpack.c.h.b16 %v7871
    %v9068 = vunpack.c.l.b16 %v7872
    %v9069 = vunpack.c.h.b16 %v7872
    %v9070 = vunpack.c.l.b16 %v7873
    %v9071 = vunpack.c.h.b16 %v7873
    %v9072 = vunpack.c.l.b16 %v7874
    %v9073 = vunpack.c.h.b16 %v7874
    %v9074 = vunpack.c.l.b16 %v7875
    %v9075 = vunpack.c.h.b16 %v7875
    %v9076 = vunpack.c.l.b16 %v7876
    %v9077 = vunpack.c.h.b16 %v7876
    %v9078 = vunpack.c.l.b16 %v7877
    %v9079 = vunpack.c.h.b16 %v7877
    %v9080 = vunpack.c.l.b16 %v7878
    %v9081 = vunpack.c.h.b16 %v7878
    %v9082 = vunpack.c.l.b16 %v7879
    %v9083 = vunpack.c.h.b16 %v7879
    %v9084 = vunpack.c.l.b16 %v7880
    %v9085 = vunpack.c.h.b16 %v7880
    %v9086 = vunpack.c.l.b16 %v7881
    %v9087 = vunpack.c.h.b16 %v7881
    %v9088 = vunpack.c.l.b16 %v7882
    %v9089 = vunpack.c.h.b16 %v7882
    %v9090 = vunpack.c.l.b16 %v7883
    %v9091 = vunpack.c.h.b16 %v7883
    %v9092 = vunpack.c.l.b16 %v7884
    %v9093 = vunpack.c.h.b16 %v7884
    %v9094 = vunpack.c.l.b16 %v7885
    %v9095 = vunpack.c.h.b16 %v7885
    %v9096 = vunpack.c.l.b16 %v7886
    %v9097 = vunpack.c.h.b16 %v7886
    %v9098 = vunpack.c.l.b16 %v7887
    %v9099 = vunpack.c.h.b16 %v7887
    %v9100 = vunpack.c.l.b16 %v7888
    %v9101 = vunpack.c.h.b16 %v7888
    %v9102 = vunpack.c.l.b16 %v7889
    %v9103 = vunpack.c.h.b16 %v7889
    %v9104 = vunpack.c.l.b16 %v7890
    %v9105 = vunpack.c.h.b16 %v7890
    %v9106 = vunpack.c.l.b16 %v7891
    %v9107 = vunpack.c.h.b16 %v7891
    %v9108 = vunpack.c.l.b16 %v7892
    %v9109 = vunpack.c.h.b16 %v7892
    %v9110 = vunpack.c.l.b16 %v7893
    %v9111 = vunpack.c.h.b16 %v7893
    %v9112 = vunpack.c.l.b16 %v7894
    %v9113 = vunpack.c.h.b16 %v7894
    %v9114 = vunpack.c.l.b16 %v7895
    %v9115 = vunpack.c.h.b16 %v7895
    %v9116 = vunpack.c.l.b16 %v7896
    %v9117 = vunpack.c.h.b16 %v7896
    %v9118 = vunpack.c.l.b16 %v7897
    %v9119 = vunpack.c.h.b16 %v7897
    %v9120 = vunpack.c.l.b16 %v7898
    %v9121 = vunpack.c.h.b16 %v7898
    %v9122 = vunpack.c.l.b16 %v7899
    %v9123 = vunpack.c.h.b16 %v7899
    %v9124 = vunpack.c.l.b16 %v7900
    %v9125 = vunpack.c.h.b16 %v7900
    %v9126 = vunpack.c.l.b16 %v7901
    %v9127 = vunpack.c.h.b16 %v7901
    %v9128 = vunpack.c.l.b16 %v7902
    %v9129 = vunpack.c.h.b16 %v7902
    %v9130 = vunpack.c.l.b16 %v7903
    %v9131 = vunpack.c.h.b16 %v7903
    %v9132 = vunpack.c.l.b16 %v7904
    %v9133 = vunpack.c.h.b16 %v7904
    %v9134 = vunpack.c.l.b16 %v7905
    %v9135 = vunpack.c.h.b16 %v7905
    %v9136 = vunpack.c.l.b16 %v7906
    %v9137 = vunpack.c.h.b16 %v7906
    %v9138 = vunpack.c.l.b16 %v7907
    %v9139 = vunpack.c.h.b16 %v7907
    %v9140 = vunpack.c.l.b16 %v7908
    %v9141 = vunpack.c.h.b16 %v7908
    %v9142 = vunpack.c.l.b16 %v7909
    %v9143 = vunpack.c.h.b16 %v7909
    %v9144 = vunpack.c.l.b16 %v7910
    %v9145 = vunpack.c.h.b16 %v7910
    %v9146 = vunpack.c.l.b16 %v7911
    %v9147 = vunpack.c.h.b16 %v7911
    %v9148 = vunpack.c.l.b16 %v7912
    %v9149 = vunpack.c.h.b16 %v7912
    %v9150 = vunpack.c.l.b16 %v7913
    %v9151 = vunpack.c.h.b16 %v7913
    %v9152 = vunpack.c.l.b16 %v7914
    %v9153 = vunpack.c.h.b16 %v7914
    %v9154 = vunpack.c.l.b16 %v7915
    %v9155 = vunpack.c.h.b16 %v7915
    %v9156 = vunpack.c.l.b16 %v7916
    %v9157 = vunpack.c.h.b16 %v7916
    %v9158 = vunpack.c.l.b16 %v7917
    %v9159 = vunpack.c.h.b16 %v7917
    %v9160 = vunpack.c.l.b16 %v7918
    %v9161 = vunpack.c.h.b16 %v7918
    %v9162 = vunpack.c.l.b16 %v7919
    %v9163 = vunpack.c.h.b16 %v7919
    %v9164 = vunpack.c.l.b16 %v7920
    %v9165 = vunpack.c.h.b16 %v7920
    %v9166 = vunpack.c.l.b16 %v7921
    %v9167 = vunpack.c.h.b16 %v7921
    %v9168 = vunpack.c.l.b16 %v7922
    %v9169 = vunpack.c.h.b16 %v7922
    %v9170 = vunpack.c.l.b16 %v7923
    %v9171 = vunpack.c.h.b16 %v7923
    %v9172 = vunpack.c.l.b16 %v7924
    %v9173 = vunpack.c.h.b16 %v7924
    %v9174 = vunpack.c.l.b16 %v7925
    %v9175 = vunpack.c.h.b16 %v7925
    %v9176 = vunpack.c.l.b16 %v7926
    %v9177 = vunpack.c.h.b16 %v7926
    %v9178 = vunpack.c.l.b16 %v7927
    %v9179 = vunpack.c.h.b16 %v7927
    %v9180 = vunpack.c.l.b16 %v7928
    %v9181 = vunpack.c.h.b16 %v7928
    %v9182 = vunpack.c.l.b16 %v7929
    %v9183 = vunpack.c.h.b16 %v7929
    %v9184 = vunpack.c.l.b16 %v7930
    %v9185 = vunpack.c.h.b16 %v7930
    %v9186 = vunpack.c.l.b16 %v7931
    %v9187 = vunpack.c.h.b16 %v7931
    %v9188 = vunpack.c.l.b16 %v7932
    %v9189 = vunpack.c.h.b16 %v7932
    %v9190 = vunpack.c.l.b16 %v7933
    %v9191 = vunpack.c.h.b16 %v7933
    %v9192 = vunpack.c.l.b16 %v7934
    %v9193 = vunpack.c.h.b16 %v7934
    %v9194 = vunpack.c.l.b16 %v7935
    %v9195 = vunpack.c.h.b16 %v7935
    %v9196 = vunpack.c.l.b16 %v7936
    %v9197 = vunpack.c.h.b16 %v7936
    %v9198 = vunpack.c.l.b16 %v7937
    %v9199 = vunpack.c.h.b16 %v7937
    %v9200 = vunpack.c.l.b16 %v7938
    %v9201 = vunpack.c.h.b16 %v7938
    %v9202 = vunpack.c.l.b16 %v7939
    %v9203 = vunpack.c.h.b16 %v7939
    %v9204 = vunpack.c.l.b16 %v7940
    %v9205 = vunpack.c.h.b16 %v7940
    %v9206 = vunpack.c.l.b16 %v7941
    %v9207 = vunpack.c.h.b16 %v7941
    %v9208 = vunpack.c.l.b16 %v7942
    %v9209 = vunpack.c.h.b16 %v7942
    %v9210 = vunpack.c.l.b16 %v7943
    %v9211 = vunpack.c.h.b16 %v7943
    %v9212 = vunpack.c.l.b16 %v7944
    %v9213 = vunpack.c.h.b16 %v7944
    %v9214 = vunpack.c.l.b16 %v7945
    %v9215 = vunpack.c.h.b16 %v7945
    %v9216 = vunpack.c.l.b16 %v7946
    %v9217 = vunpack.c.h.b16 %v7946
    %v9218 = vunpack.c.l.b16 %v7947
    %v9219 = vunpack.c.h.b16 %v7947
    %v9220 = vunpack.c.l.b16 %v7948
    %v9221 = vunpack.c.h.b16 %v7948
    %v9222 = vunpack.c.l.b16 %v7949
    %v9223 = vunpack.c.h.b16 %v7949
    %v9224 = vunpack.c.l.b16 %v7950
    %v9225 = vunpack.c.h.b16 %v7950
    %v9226 = vunpack.c.l.b16 %v7951
    %v9227 = vunpack.c.h.b16 %v7951
    %v9228 = vunpack.c.l.b16 %v7952
    %v9229 = vunpack.c.h.b16 %v7952
    %v9230 = vunpack.c.l.b16 %v7953
    %v9231 = vunpack.c.h.b16 %v7953
    %v9232 = vunpack.c.l.b16 %v7954
    %v9233 = vunpack.c.h.b16 %v7954
    %v9234 = vunpack.c.l.b16 %v7955
    %v9235 = vunpack.c.h.b16 %v7955
    %v9236 = vunpack.c.l.b16 %v7956
    %v9237 = vunpack.c.h.b16 %v7956
    %v9238 = vunpack.c.l.b16 %v7957
    %v9239 = vunpack.c.h.b16 %v7957
    %v9240 = vunpack.c.l.b16 %v7958
    %v9241 = vunpack.c.h.b16 %v7958
    %v9242 = vunpack.c.l.b16 %v7959
    %v9243 = vunpack.c.h.b16 %v7959
    %v9244 = vunpack.c.l.b16 %v7960
    %v9245 = vunpack.c.h.b16 %v7960
    %v9246 = vunpack.c.l.b16 %v7961
    %v9247 = vunpack.c.h.b16 %v7961
    %v9248 = vunpack.c.l.b16 %v7962
    %v9249 = vunpack.c.h.b16 %v7962
    %v9250 = vunpack.c.l.b16 %v7963
    %v9251 = vunpack.c.h.b16 %v7963
    %v9252 = vunpack.c.l.b16 %v7964
    %v9253 = vunpack.c.h.b16 %v7964
    %v9254 = vunpack.c.l.b16 %v7965
    %v9255 = vunpack.c.h.b16 %v7965
    %v9256 = vunpack.c.l.b16 %v7966
    %v9257 = vunpack.c.h.b16 %v7966
    %v9258 = vunpack.c.l.b16 %v7967
    %v9259 = vunpack.c.h.b16 %v7967
    %v9260 = vunpack.c.l.b16 %v7968
    %v9261 = vunpack.c.h.b16 %v7968
    %v9262 = vunpack.c.l.b16 %v7969
    %v9263 = vunpack.c.h.b16 %v7969
    %v9264 = vunpack.c.l.b16 %v7970
    %v9265 = vunpack.c.h.b16 %v7970
    %v9266 = vunpack.c.l.b16 %v7971
    %v9267 = vunpack.c.h.b16 %v7971
    %v9268 = vunpack.c.l.b16 %v7972
    %v9269 = vunpack.c.h.b16 %v7972
    %v9270 = vunpack.c.l.b16 %v7973
    %v9271 = vunpack.c.h.b16 %v7973
    %v9272 = vunpack.c.l.b16 %v7974
    %v9273 = vunpack.c.h.b16 %v7974
    %v9274 = vunpack.c.l.b16 %v7975
    %v9275 = vunpack.c.h.b16 %v7975
    %v9276 = vunpack.c.l.b16 %v7976
    %v9277 = vunpack.c.h.b16 %v7976
    %v9278 = vunpack.c.l.b16 %v7977
    %v9279 = vunpack.c.h.b16 %v7977
    %v9280 = vunpack.c.l.b16 %v7978
    %v9281 = vunpack.c.h.b16 %v7978
    %v9282 = vunpack.c.l.b16 %v7979
    %v9283 = vunpack.c.h.b16 %v7979
    %v9284 = vunpack.c.l.b16 %v7980
    %v9285 = vunpack.c.h.b16 %v7980
    %v9286 = vunpack.c.l.b16 %v7981
    %v9287 = vunpack.c.h.b16 %v7981
    %v9288 = vunpack.c.l.b16 %v7982
    %v9289 = vunpack.c.h.b16 %v7982
    %v9290 = vunpack.c.l.b16 %v7983
    %v9291 = vunpack.c.h.b16 %v7983
    %v9292 = vunpack.c.l.b16 %v7984
    %v9293 = vunpack.c.h.b16 %v7984
    %v9294 = vunpack.c.l.b16 %v7985
    %v9295 = vunpack.c.h.b16 %v7985
    %v9296 = vunpack.c.l.b16 %v7986
    %v9297 = vunpack.c.h.b16 %v7986
    %v9298 = vunpack.c.l.b16 %v7987
    %v9299 = vunpack.c.h.b16 %v7987
    %v9300 = vunpack.c.l.b16 %v7988
    %v9301 = vunpack.c.h.b16 %v7988
    %v9302 = vunpack.c.l.b16 %v7989
    %v9303 = vunpack.c.h.b16 %v7989
    %v9304 = vunpack.c.l.b16 %v7990
    %v9305 = vunpack.c.h.b16 %v7990
    %v9306 = vunpack.c.l.b16 %v7991
    %v9307 = vunpack.c.h.b16 %v7991
    %v9308 = vunpack.c.l.b16 %v7992
    %v9309 = vunpack.c.h.b16 %v7992
    %v9310 = vunpack.c.l.b16 %v7993
    %v9311 = vunpack.c.h.b16 %v7993
    %v9312 = vunpack.c.l.b16 %v7994
    %v9313 = vunpack.c.h.b16 %v7994
    %v9314 = vunpack.c.l.b16 %v7995
    %v9315 = vunpack.c.h.b16 %v7995
    %v9316 = vunpack.c.l.b16 %v7996
    %v9317 = vunpack.c.h.b16 %v7996
    %v9318 = vunpack.c.l.b16 %v7997
    %v9319 = vunpack.c.h.b16 %v7997
    %v9320 = vunpack.c.l.b16 %v7998
    %v9321 = vunpack.c.h.b16 %v7998
    %v9322 = vunpack.c.l.b16 %v7999
    %v9323 = vunpack.c.h.b16 %v7999
    %v9324 = vunpack.c.l.b16 %v8000
    %v9325 = vunpack.c.h.b16 %v8000
    %v9326 = vunpack.c.l.b16 %v8001
    %v9327 = vunpack.c.h.b16 %v8001
    %v9328 = vunpack.c.l.b16 %v8002
    %v9329 = vunpack.c.h.b16 %v8002
    %v9330 = vunpack.c.l.b16 %v8003
    %v9331 = vunpack.c.h.b16 %v8003
    %v9332 = vunpack.c.l.b16 %v8004
    %v9333 = vunpack.c.h.b16 %v8004
    %v9334 = vunpack.c.l.b16 %v8005
    %v9335 = vunpack.c.h.b16 %v8005
    %v9336 = vunpack.c.l.b16 %v8006
    %v9337 = vunpack.c.h.b16 %v8006
    %v9338 = vunpack.c.l.b16 %v8007
    %v9339 = vunpack.c.h.b16 %v8007
    %v9340 = vunpack.c.l.b16 %v8008
    %v9341 = vunpack.c.h.b16 %v8008
    %v9342 = vunpack.c.l.b16 %v8009
    %v9343 = vunpack.c.h.b16 %v8009
    %v9344 = vunpack.c.l.b16 %v8010
    %v9345 = vunpack.c.h.b16 %v8010
    %v9346 = vunpack.c.l.b16 %v8011
    %v9347 = vunpack.c.h.b16 %v8011
    %v9348 = vunpack.c.l.b16 %v8012
    %v9349 = vunpack.c.h.b16 %v8012
    %v9350 = vunpack.c.l.b16 %v8013
    %v9351 = vunpack.c.h.b16 %v8013
    %v9352 = vunpack.c.l.b16 %v8014
    %v9353 = vunpack.c.h.b16 %v8014
    %v9354 = vunpack.c.l.b16 %v8015
    %v9355 = vunpack.c.h.b16 %v8015
    %v9356 = vunpack.c.l.b16 %v8016
    %v9357 = vunpack.c.h.b16 %v8016
    %v9358 = vunpack.c.l.b16 %v8017
    %v9359 = vunpack.c.h.b16 %v8017
    %v9360 = vunpack.c.l.b16 %v8018
    %v9361 = vunpack.c.h.b16 %v8018
    %v9362 = vunpack.c.l.b16 %v8019
    %v9363 = vunpack.c.h.b16 %v8019
    %v9364 = vunpack.c.l.b16 %v8020
    %v9365 = vunpack.c.h.b16 %v8020
    %v9366 = vunpack.c.l.b16 %v8021
    %v9367 = vunpack.c.h.b16 %v8021
    %v9368 = vunpack.c.l.b16 %v8022
    %v9369 = vunpack.c.h.b16 %v8022
    %v9370 = vunpack.c.l.b16 %v8023
    %v9371 = vunpack.c.h.b16 %v8023
    %v9372 = vunpack.c.l.b16 %v8024
    %v9373 = vunpack.c.h.b16 %v8024
    %v9374 = vunpack.c.l.b16 %v8025
    %v9375 = vunpack.c.h.b16 %v8025
    %v9376 = vunpack.c.l.b16 %v8026
    %v9377 = vunpack.c.h.b16 %v8026
    %v9378 = vunpack.c.l.b16 %v8027
    %v9379 = vunpack.c.h.b16 %v8027
    %v9380 = vunpack.c.l.b16 %v8028
    %v9381 = vunpack.c.h.b16 %v8028
    %v9382 = vunpack.c.l.b16 %v8029
    %v9383 = vunpack.c.h.b16 %v8029
    %v9384 = vunpack.c.l.b16 %v8030
    %v9385 = vunpack.c.h.b16 %v8030
    %v9386 = vunpack.c.l.b16 %v8031
    %v9387 = vunpack.c.h.b16 %v8031
    %v9388 = vunpack.c.l.b16 %v8032
    %v9389 = vunpack.c.h.b16 %v8032
    %v9390 = vunpack.c.l.b16 %v8033
    %v9391 = vunpack.c.h.b16 %v8033
    %v9392 = vunpack.c.l.b16 %v8034
    %v9393 = vunpack.c.h.b16 %v8034
    %v9394 = vunpack.c.l.b16 %v8035
    %v9395 = vunpack.c.h.b16 %v8035
    %v9396 = vunpack.c.l.b16 %v8036
    %v9397 = vunpack.c.h.b16 %v8036
    %v9398 = vunpack.c.l.b16 %v8037
    %v9399 = vunpack.c.h.b16 %v8037
    %v9400 = vunpack.c.l.b16 %v8038
    %v9401 = vunpack.c.h.b16 %v8038
    %v9402 = vunpack.c.l.b16 %v8039
    %v9403 = vunpack.c.h.b16 %v8039
    %v9404 = vunpack.c.l.b16 %v8040
    %v9405 = vunpack.c.h.b16 %v8040
    %v9406 = vunpack.c.l.b16 %v8041
    %v9407 = vunpack.c.h.b16 %v8041
    %v9408 = vunpack.c.l.b16 %v8042
    %v9409 = vunpack.c.h.b16 %v8042
    %v9410 = vunpack.c.l.b16 %v8043
    %v9411 = vunpack.c.h.b16 %v8043
    %v9412 = vunpack.c.l.b16 %v8044
    %v9413 = vunpack.c.h.b16 %v8044
    %v9414 = vunpack.c.l.b16 %v8045
    %v9415 = vunpack.c.h.b16 %v8045
    %v9416 = vunpack.c.l.b16 %v8046
    %v9417 = vunpack.c.h.b16 %v8046
    %v9418 = vunpack.c.l.b16 %v8047
    %v9419 = vunpack.c.h.b16 %v8047
    %v9420 = vunpack.c.l.b16 %v8048
    %v9421 = vunpack.c.h.b16 %v8048
    %v9422 = vunpack.c.l.b16 %v8049
    %v9423 = vunpack.c.h.b16 %v8049
    %v9424 = vunpack.c.l.b16 %v8050
    %v9425 = vunpack.c.h.b16 %v8050
    %v9426 = vunpack.c.l.b16 %v8051
    %v9427 = vunpack.c.h.b16 %v8051
    %v9428 = vunpack.c.l.b16 %v8052
    %v9429 = vunpack.c.h.b16 %v8052
    %v9430 = vunpack.c.l.b16 %v8053
    %v9431 = vunpack.c.h.b16 %v8053
    %v9432 = vunpack.c.l.b16 %v8054
    %v9433 = vunpack.c.h.b16 %v8054
    %v9434 = vunpack.c.l.b16 %v8055
    %v9435 = vunpack.c.h.b16 %v8055
    %v9436 = vunpack.c.l.b16 %v8056
    %v9437 = vunpack.c.h.b16 %v8056
    %v9438 = vunpack.c.l.b16 %v8057
    %v9439 = vunpack.c.h.b16 %v8057
    %v9440 = vunpack.c.l.b16 %v8058
    %v9441 = vunpack.c.h.b16 %v8058
    %v9442 = vunpack.c.l.b16 %v8059
    %v9443 = vunpack.c.h.b16 %v8059
    %v9444 = vunpack.c.l.b16 %v8060
    %v9445 = vunpack.c.h.b16 %v8060
    %v9446 = vunpack.c.l.b16 %v8061
    %v9447 = vunpack.c.h.b16 %v8061
    %v9448 = vunpack.c.l.b16 %v8062
    %v9449 = vunpack.c.h.b16 %v8062
    %v9450 = vunpack.c.l.b16 %v8063
    %v9451 = vunpack.c.h.b16 %v8063
    %v9452 = vunpack.c.l.b16 %v8064
    %v9453 = vunpack.c.h.b16 %v8064
    %v9454 = vunpack.c.l.b16 %v8065
    %v9455 = vunpack.c.h.b16 %v8065
    %v9456 = vunpack.c.l.b16 %v8066
    %v9457 = vunpack.c.h.b16 %v8066
    %v9458 = vunpack.c.l.b16 %v8067
    %v9459 = vunpack.c.h.b16 %v8067
    %v9460 = vunpack.c.l.b16 %v8068
    %v9461 = vunpack.c.h.b16 %v8068
    %v9462 = vunpack.c.l.b16 %v8069
    %v9463 = vunpack.c.h.b16 %v8069
    %v9464 = vunpack.c.l.b16 %v8070
    %v9465 = vunpack.c.h.b16 %v8070
    %v9466 = vunpack.c.l.b16 %v8071
    %v9467 = vunpack.c.h.b16 %v8071
    %v9468 = vunpack.c.l.b16 %v8072
    %v9469 = vunpack.c.h.b16 %v8072
    %v9470 = vunpack.c.l.b16 %v8073
    %v9471 = vunpack.c.h.b16 %v8073
    %v9472 = vunpack.c.l.b16 %v8074
    %v9473 = vunpack.c.h.b16 %v8074
    %v9474 = vunpack.c.l.b16 %v8075
    %v9475 = vunpack.c.h.b16 %v8075
    %v9476 = vunpack.c.l.b16 %v8076
    %v9477 = vunpack.c.h.b16 %v8076
    %v9478 = vunpack.c.l.b16 %v8077
    %v9479 = vunpack.c.h.b16 %v8077
    %v9480 = vunpack.c.l.b16 %v8078
    %v9481 = vunpack.c.h.b16 %v8078
    %v9482 = vunpack.c.l.b16 %v8079
    %v9483 = vunpack.c.h.b16 %v8079
    %v9484 = vunpack.c.l.b16 %v8080
    %v9485 = vunpack.c.h.b16 %v8080
    %v9486 = vunpack.c.l.b16 %v8081
    %v9487 = vunpack.c.h.b16 %v8081
    %v9488 = vunpack.c.l.b16 %v8082
    %v9489 = vunpack.c.h.b16 %v8082
    %v9490 = vunpack.c.l.b16 %v8083
    %v9491 = vunpack.c.h.b16 %v8083
    %v9492 = vunpack.c.l.b16 %v8084
    %v9493 = vunpack.c.h.b16 %v8084
    %v9494 = vunpack.c.l.b16 %v8085
    %v9495 = vunpack.c.h.b16 %v8085
    %v9496 = vunpack.c.l.b16 %v8086
    %v9497 = vunpack.c.h.b16 %v8086
    %v9498 = vunpack.c.l.b16 %v8087
    %v9499 = vunpack.c.h.b16 %v8087
    %v9500 = vunpack.c.l.b16 %v8088
    %v9501 = vunpack.c.h.b16 %v8088
    %v9502 = vunpack.c.l.b16 %v8089
    %v9503 = vunpack.c.h.b16 %v8089
    %v9504 = vunpack.c.l.b16 %v8090
    %v9505 = vunpack.c.h.b16 %v8090
    %v9506 = vunpack.c.l.b16 %v8091
    %v9507 = vunpack.c.h.b16 %v8091
    %v9508 = vunpack.c.l.b16 %v8092
    %v9509 = vunpack.c.h.b16 %v8092
    %v9510 = vunpack.c.l.b16 %v8093
    %v9511 = vunpack.c.h.b16 %v8093
    %v9512 = vunpack.c.l.b16 %v8094
    %v9513 = vunpack.c.h.b16 %v8094
    %v9514 = vunpack.c.l.b16 %v8095
    %v9515 = vunpack.c.h.b16 %v8095
    %v9516 = vunpack.c.l.b16 %v8096
    %v9517 = vunpack.c.h.b16 %v8096
    %v9518 = vunpack.c.l.b16 %v8097
    %v9519 = vunpack.c.h.b16 %v8097
    %v9520 = vunpack.c.l.b16 %v8098
    %v9521 = vunpack.c.h.b16 %v8098
    %v9522 = vunpack.c.l.b16 %v8099
    %v9523 = vunpack.c.h.b16 %v8099
    %v9524 = vunpack.c.l.b16 %v8100
    %v9525 = vunpack.c.h.b16 %v8100
    %v9526 = vunpack.c.l.b16 %v8101
    %v9527 = vunpack.c.h.b16 %v8101
    %v9528 = vunpack.c.l.b16 %v8102
    %v9529 = vunpack.c.h.b16 %v8102
    %v9530 = vunpack.c.l.b16 %v8103
    %v9531 = vunpack.c.h.b16 %v8103
    %v9532 = vunpack.c.l.b16 %v8104
    %v9533 = vunpack.c.h.b16 %v8104
    %v9534 = vunpack.c.l.b16 %v8105
    %v9535 = vunpack.c.h.b16 %v8105
    %v9536 = vunpack.c.l.b16 %v8106
    %v9537 = vunpack.c.h.b16 %v8106
    %v9538 = vunpack.c.l.b16 %v8107
    %v9539 = vunpack.c.h.b16 %v8107
    %v9540 = vunpack.c.l.b16 %v8108
    %v9541 = vunpack.c.h.b16 %v8108
    %v9542 = vunpack.c.l.b16 %v8109
    %v9543 = vunpack.c.h.b16 %v8109
    %v9544 = vunpack.c.l.b16 %v8110
    %v9545 = vunpack.c.h.b16 %v8110
    %v9546 = vunpack.c.l.b16 %v8111
    %v9547 = vunpack.c.h.b16 %v8111
    %v9548 = vunpack.c.l.b16 %v8112
    %v9549 = vunpack.c.h.b16 %v8112
    %v9550 = vunpack.c.l.b16 %v8113
    %v9551 = vunpack.c.h.b16 %v8113
    %v9552 = vunpack.c.l.b16 %v8114
    %v9553 = vunpack.c.h.b16 %v8114
    %v9554 = vunpack.c.l.b16 %v8115
    %v9555 = vunpack.c.h.b16 %v8115
    %v9556 = vunpack.c.l.b16 %v8116
    %v9557 = vunpack.c.h.b16 %v8116
    %v9558 = vunpack.c.l.b16 %v8117
    %v9559 = vunpack.c.h.b16 %v8117
    %v9560 = vunpack.c.l.b16 %v8118
    %v9561 = vunpack.c.h.b16 %v8118
    %v9562 = vunpack.c.l.b16 %v8119
    %v9563 = vunpack.c.h.b16 %v8119
    %v9564 = vunpack.c.l.b16 %v8120
    %v9565 = vunpack.c.h.b16 %v8120
    %v9566 = vunpack.c.l.b16 %v8121
    %v9567 = vunpack.c.h.b16 %v8121
    %v9568 = vunpack.c.l.b16 %v8122
    %v9569 = vunpack.c.h.b16 %v8122
    %v9570 = vunpack.c.l.b16 %v8123
    %v9571 = vunpack.c.h.b16 %v8123
    %v9572 = vunpack.c.l.b16 %v8124
    %v9573 = vunpack.c.h.b16 %v8124
    %v9574 = vunpack.c.l.b16 %v8125
    %v9575 = vunpack.c.h.b16 %v8125
    %v9576 = vunpack.c.l.b16 %v8126
    %v9577 = vunpack.c.h.b16 %v8126
    %v9578 = vunpack.c.l.b16 %v8127
    %v9579 = vunpack.c.h.b16 %v8127
    %v9580 = vunpack.c.l.b16 %v8128
    %v9581 = vunpack.c.h.b16 %v8128
    %v9582 = vunpack.c.l.b16 %v8129
    %v9583 = vunpack.c.h.b16 %v8129
    %v9584 = vunpack.c.l.b16 %v8130
    %v9585 = vunpack.c.h.b16 %v8130
    %v9586 = vunpack.c.l.b16 %v8131
    %v9587 = vunpack.c.h.b16 %v8131
    %v9588 = vunpack.c.l.b16 %v8132
    %v9589 = vunpack.c.h.b16 %v8132
    %v9590 = vunpack.c.l.b16 %v8133
    %v9591 = vunpack.c.h.b16 %v8133
    %v9592 = vunpack.c.l.b16 %v8134
    %v9593 = vunpack.c.h.b16 %v8134
    %v9594 = vunpack.c.l.b16 %v8135
    %v9595 = vunpack.c.h.b16 %v8135
    %v9596 = vunpack.c.l.b16 %v8136
    %v9597 = vunpack.c.h.b16 %v8136
    %v9598 = vunpack.c.l.b16 %v8137
    %v9599 = vunpack.c.h.b16 %v8137
    %v9600 = vunpack.c.l.b16 %v8138
    %v9601 = vunpack.c.h.b16 %v8138
    %v9602 = vunpack.c.l.b16 %v8139
    %v9603 = vunpack.c.h.b16 %v8139
    %v9604 = vunpack.c.l.b16 %v8140
    %v9605 = vunpack.c.h.b16 %v8140
    %v9606 = vunpack.c.l.b16 %v8141
    %v9607 = vunpack.c.h.b16 %v8141
    %v9608 = vunpack.c.l.b16 %v8142
    %v9609 = vunpack.c.h.b16 %v8142
    %v9610 = vunpack.c.l.b16 %v8143
    %v9611 = vunpack.c.h.b16 %v8143
    %v9612 = vunpack.c.l.b16 %v8144
    %v9613 = vunpack.c.h.b16 %v8144
    %v9614 = vunpack.c.l.b16 %v8145
    %v9615 = vunpack.c.h.b16 %v8145
    %v9616 = vunpack.c.l.b16 %v8146
    %v9617 = vunpack.c.h.b16 %v8146
    %v9618 = vunpack.c.l.b16 %v8147
    %v9619 = vunpack.c.h.b16 %v8147
    %v9620 = vunpack.c.l.b16 %v8148
    %v9621 = vunpack.c.h.b16 %v8148
    %v9622 = vunpack.c.l.b16 %v8149
    %v9623 = vunpack.c.h.b16 %v8149
    %v9624 = vunpack.c.l.b16 %v8150
    %v9625 = vunpack.c.h.b16 %v8150
    %v9626 = vunpack.c.l.b16 %v8151
    %v9627 = vunpack.c.h.b16 %v8151
    %v9628 = vunpack.c.l.b16 %v8152
    %v9629 = vunpack.c.h.b16 %v8152
    %v9630 = vunpack.c.l.b16 %v8153
    %v9631 = vunpack.c.h.b16 %v8153
    %v9632 = vunpack.c.l.b16 %v8154
    %v9633 = vunpack.c.h.b16 %v8154
    %v9634 = vunpack.c.l.b16 %v8155
    %v9635 = vunpack.c.h.b16 %v8155
    %v9636 = vunpack.c.l.b16 %v8156
    %v9637 = vunpack.c.h.b16 %v8156
    %v9638 = vunpack.c.l.b16 %v8157
    %v9639 = vunpack.c.h.b16 %v8157
    %v9640 = vunpack.c.l.b16 %v8158
    %v9641 = vunpack.c.h.b16 %v8158
    %v9642 = vunpack.c.l.b16 %v8159
    %v9643 = vunpack.c.h.b16 %v8159
    %v9644 = vunpack.c.l.b16 %v8160
    %v9645 = vunpack.c.h.b16 %v8160
    %v9646 = vunpack.c.l.b16 %v8161
    %v9647 = vunpack.c.h.b16 %v8161
    %v9648 = vunpack.c.l.b16 %v8162
    %v9649 = vunpack.c.h.b16 %v8162
    %v9650 = vunpack.c.l.b16 %v8163
    %v9651 = vunpack.c.h.b16 %v8163
    %v9652 = vunpack.c.l.b16 %v8164
    %v9653 = vunpack.c.h.b16 %v8164
    %v9654 = vunpack.c.l.b16 %v8165
    %v9655 = vunpack.c.h.b16 %v8165
    %v9656 = vunpack.c.l.b16 %v8166
    %v9657 = vunpack.c.h.b16 %v8166
    %v9658 = vunpack.c.l.b16 %v8167
    %v9659 = vunpack.c.h.b16 %v8167
    %v9660 = vunpack.c.l.b16 %v8168
    %v9661 = vunpack.c.h.b16 %v8168
    %v9662 = vunpack.c.l.b16 %v8169
    %v9663 = vunpack.c.h.b16 %v8169
    %v9664 = vunpack.c.l.b16 %v8170
    %v9665 = vunpack.c.h.b16 %v8170
    %v9666 = vunpack.c.l.b16 %v8171
    %v9667 = vunpack.c.h.b16 %v8171
    %v9668 = vunpack.c.l.b16 %v8172
    %v9669 = vunpack.c.h.b16 %v8172
    %v9670 = vunpack.c.l.b16 %v8173
    %v9671 = vunpack.c.h.b16 %v8173
    %v9672 = vunpack.c.l.b16 %v8174
    %v9673 = vunpack.c.h.b16 %v8174
    %v9674 = vunpack.c.l.b16 %v8175
    %v9675 = vunpack.c.h.b16 %v8175
    %v9676 = vunpack.c.l.b16 %v8176
    %v9677 = vunpack.c.h.b16 %v8176
    %v9678 = vunpack.c.l.b16 %v8177
    %v9679 = vunpack.c.h.b16 %v8177
    %v9680 = vunpack.c.l.b16 %v8178
    %v9681 = vunpack.c.h.b16 %v8178
    %v9682 = vunpack.c.l.b16 %v8179
    %v9683 = vunpack.c.h.b16 %v8179
    %v9684 = vunpack.c.l.b16 %v8180
    %v9685 = vunpack.c.h.b16 %v8180
    %v9686 = vunpack.c.l.b16 %v8181
    %v9687 = vunpack.c.h.b16 %v8181
    %v9688 = vunpack.c.l.b16 %v8182
    %v9689 = vunpack.c.h.b16 %v8182
    %v9690 = vunpack.c.l.b16 %v8183
    %v9691 = vunpack.c.h.b16 %v8183
    %v9692 = vunpack.c.l.b16 %v8184
    %v9693 = vunpack.c.h.b16 %v8184
    %v9694 = vunpack.c.l.b16 %v8185
    %v9695 = vunpack.c.h.b16 %v8185
    %v9696 = vunpack.c.l.b16 %v8186
    %v9697 = vunpack.c.h.b16 %v8186
    %v9698 = vunpack.c.l.b16 %v8187
    %v9699 = vunpack.c.h.b16 %v8187
    %v9700 = vunpack.c.l.b16 %v8188
    %v9701 = vunpack.c.h.b16 %v8188
    %v9702 = vunpack.c.l.b16 %v8189
    %v9703 = vunpack.c.h.b16 %v8189
    %v9704 = vunpack.c.l.b16 %v8190
    %v9705 = vunpack.c.h.b16 %v8190
    %v9706 = vunpack.c.l.b16 %v8191
    %v9707 = vunpack.c.h.b16 %v8191
    %v9708 = vunpack.c.l.b16 %v8192
    %v9709 = vunpack.c.h.b16 %v8192
    %v9710 = vunpack.c.l.b16 %v8193
    %v9711 = vunpack.c.h.b16 %v8193
    %v9712 = vunpack.c.l.b16 %v8194
    %v9713 = vunpack.c.h.b16 %v8194
    %v9714 = vunpack.c.l.b16 %v8195
    %v9715 = vunpack.c.h.b16 %v8195
    %v9716 = vunpack.c.l.b16 %v8196
    %v9717 = vunpack.c.h.b16 %v8196
    %v9718 = vunpack.c.l.b16 %v8197
    %v9719 = vunpack.c.h.b16 %v8197
    %v9720 = vunpack.c.l.b16 %v8198
    %v9721 = vunpack.c.h.b16 %v8198
    %v9722 = vunpack.c.l.b16 %v8199
    %v9723 = vunpack.c.h.b16 %v8199
    %v9724 = vunpack.c.l.b16 %v8200
    %v9725 = vunpack.c.h.b16 %v8200
    %v9726 = vunpack.c.l.b16 %v8201
    %v9727 = vunpack.c.h.b16 %v8201
    %v9728 = vunpack.c.l.b16 %v8202
    %v9729 = vunpack.c.h.b16 %v8202
    %v9730 = vunpack.c.l.b16 %v8203
    %v9731 = vunpack.c.h.b16 %v8203
    %v9732 = vunpack.c.l.b16 %v8204
    %v9733 = vunpack.c.h.b16 %v8204
    %v9734 = vunpack.c.l.b16 %v8205
    %v9735 = vunpack.c.h.b16 %v8205
    %v9736 = vunpack.c.l.b16 %v8206
    %v9737 = vunpack.c.h.b16 %v8206
    %v9738 = vunpack.c.l.b16 %v8207
    %v9739 = vunpack.c.h.b16 %v8207
    %v9740 = vunpack.c.l.b16 %v8208
    %v9741 = vunpack.c.h.b16 %v8208
    %v9742 = vunpack.c.l.b16 %v8209
    %v9743 = vunpack.c.h.b16 %v8209
    %v9744 = vunpack.c.l.b16 %v8210
    %v9745 = vunpack.c.h.b16 %v8210
    %v9746 = vunpack.c.l.b16 %v8211
    %v9747 = vunpack.c.h.b16 %v8211
    %v9748 = vunpack.c.l.b16 %v8212
    %v9749 = vunpack.c.h.b16 %v8212
    %v9750 = vunpack.c.l.b16 %v8213
    %v9751 = vunpack.c.h.b16 %v8213
    %v9752 = vunpack.c.l.b16 %v8214
    %v9753 = vunpack.c.h.b16 %v8214
    %v9754 = vunpack.c.l.b16 %v8215
    %v9755 = vunpack.c.h.b16 %v8215
    %v9756 = vunpack.c.l.b16 %v8216
    %v9757 = vunpack.c.h.b16 %v8216
    %v9758 = vunpack.c.l.b16 %v8217
    %v9759 = vunpack.c.h.b16 %v8217
    %v9760 = vunpack.c.l.b16 %v8218
    %v9761 = vunpack.c.h.b16 %v8218
    %v9762 = vunpack.c.l.b16 %v8219
    %v9763 = vunpack.c.h.b16 %v8219
    %v9764 = vunpack.c.l.b16 %v8220
    %v9765 = vunpack.c.h.b16 %v8220
    %v9766 = vunpack.c.l.b16 %v8221
    %v9767 = vunpack.c.h.b16 %v8221
    %v9768 = vunpack.c.l.b16 %v8222
    %v9769 = vunpack.c.h.b16 %v8222
    %v9770 = vunpack.c.l.b16 %v8223
    %v9771 = vunpack.c.h.b16 %v8223
    %v9772 = vunpack.c.l.b16 %v8224
    %v9773 = vunpack.c.h.b16 %v8224
    %v9774 = vunpack.c.l.b16 %v8225
    %v9775 = vunpack.c.h.b16 %v8225
    %v9776 = vunpack.c.l.b16 %v8226
    %v9777 = vunpack.c.h.b16 %v8226
    %v9778 = vunpack.c.l.b16 %v8227
    %v9779 = vunpack.c.h.b16 %v8227
    %v9780 = vunpack.c.l.b16 %v8228
    %v9781 = vunpack.c.h.b16 %v8228
    %v9782 = vunpack.c.l.b16 %v8229
    %v9783 = vunpack.c.h.b16 %v8229
    %v9784 = vunpack.c.l.b16 %v8230
    %v9785 = vunpack.c.h.b16 %v8230
    %v9786 = vunpack.c.l.b16 %v8231
    %v9787 = vunpack.c.h.b16 %v8231
    %v9788 = vunpack.c.l.b16 %v8232
    %v9789 = vunpack.c.h.b16 %v8232
    %v9790 = vunpack.c.l.b16 %v8233
    %v9791 = vunpack.c.h.b16 %v8233
    %v9792 = vunpack.c.l.b16 %v8234
    %v9793 = vunpack.c.h.b16 %v8234
    %v9794 = vunpack.c.l.b16 %v8235
    %v9795 = vunpack.c.h.b16 %v8235
    %v9796 = vunpack.c.l.b16 %v8236
    %v9797 = vunpack.c.h.b16 %v8236
    %v9798 = vunpack.c.l.b16 %v8237
    %v9799 = vunpack.c.h.b16 %v8237
    %v9800 = vunpack.c.l.b16 %v8238
    %v9801 = vunpack.c.h.b16 %v8238
    %v9802 = vunpack.c.l.b16 %v8239
    %v9803 = vunpack.c.h.b16 %v8239
    %v9804 = vunpack.c.l.b16 %v8240
    %v9805 = vunpack.c.h.b16 %v8240
    %v9806 = vunpack.c.l.b16 %v8241
    %v9807 = vunpack.c.h.b16 %v8241
    %v9808 = vunpack.c.l.b16 %v8242
    %v9809 = vunpack.c.h.b16 %v8242
    %v9810 = vunpack.c.l.b16 %v8243
    %v9811 = vunpack.c.h.b16 %v8243
    %v9812 = vunpack.c.l.b16 %v8244
    %v9813 = vunpack.c.h.b16 %v8244
    %v9814 = vunpack.c.l.b16 %v8245
    %v9815 = vunpack.c.h.b16 %v8245
    %v9816 = vunpack.c.l.b16 %v8246
    %v9817 = vunpack.c.h.b16 %v8246
    %v9818 = vunpack.c.l.b16 %v8247
    %v9819 = vunpack.c.h.b16 %v8247
    %v9820 = vunpack.c.l.b16 %v8248
    %v9821 = vunpack.c.h.b16 %v8248
    %v9822 = vunpack.c.l.b16 %v8249
    %v9823 = vunpack.c.h.b16 %v8249
    %v9824 = vunpack.c.l.b16 %v8250
    %v9825 = vunpack.c.h.b16 %v8250
    %v9826 = vunpack.c.l.b16 %v8251
    %v9827 = vunpack.c.h.b16 %v8251
    %v9828 = vunpack.c.l.b16 %v8252
    %v9829 = vunpack.c.h.b16 %v8252
    %v9830 = vunpack.c.l.b16 %v8253
    %v9831 = vunpack.c.h.b16 %v8253
    %v9832 = vpack.c.b16 %v8816, %v8808
    %v9833 = vpack.c.b16 %v8817, %v8809
    %v9834 = vpack.c.b16 %v8818, %v8810
    %v9835 = vpack.c.b16 %v8819, %v8811
    %v9836 = vpack.c.b16 %v8820, %v8812
    %v9837 = vpack.c.b16 %v8821, %v8813
    %v9838 = vpack.c.b16 %v8822, %v8814
    %v9839 = vpack.c.b16 %v8823, %v8815
    %v9840 = vpack.c.b16 %v8832, %v8824
    %v9841 = vpack.c.b16 %v8833, %v8825
    %v9842 = vpack.c.b16 %v8834, %v8826
    %v9843 = vpack.c.b16 %v8835, %v8827
    %v9844 = vpack.c.b16 %v8836, %v8828
    %v9845 = vpack.c.b16 %v8837, %v8829
    %v9846 = vpack.c.b16 %v8838, %v8830
    %v9847 = vpack.c.b16 %v8839, %v8831
    %v9848 = vpack.c.b16 %v8848, %v8840
    %v9849 = vpack.c.b16 %v8849, %v8841
    %v9850 = vpack.c.b16 %v8850, %v8842
    %v9851 = vpack.c.b16 %v8851, %v8843
    %v9852 = vpack.c.b16 %v8852, %v8844
    %v9853 = vpack.c.b16 %v8853, %v8845
    %v9854 = vpack.c.b16 %v8854, %v8846
    %v9855 = vpack.c.b16 %v8855, %v8847
    %v9856 = vpack.c.b16 %v8864, %v8856
    %v9857 = vpack.c.b16 %v8865, %v8857
    %v9858 = vpack.c.b16 %v8866, %v8858
    %v9859 = vpack.c.b16 %v8867, %v8859
    %v9860 = vpack.c.b16 %v8868, %v8860
    %v9861 = vpack.c.b16 %v8869, %v8861
    %v9862 = vpack.c.b16 %v8870, %v8862
    %v9863 = vpack.c.b16 %v8871, %v8863
    %v9864 = vpack.c.b16 %v8880, %v8872
    %v9865 = vpack.c.b16 %v8881, %v8873
    %v9866 = vpack.c.b16 %v8882, %v8874
    %v9867 = vpack.c.b16 %v8883, %v8875
    %v9868 = vpack.c.b16 %v8884, %v8876
    %v9869 = vpack.c.b16 %v8885, %v8877
    %v9870 = vpack.c.b16 %v8886, %v8878
    %v9871 = vpack.c.b16 %v8887, %v8879
    %v9872 = vpack.c.b16 %v8896, %v8888
    %v9873 = vpack.c.b16 %v8897, %v8889
    %v9874 = vpack.c.b16 %v8898, %v8890
    %v9875 = vpack.c.b16 %v8899, %v8891
    %v9876 = vpack.c.b16 %v8900, %v8892
    %v9877 = vpack.c.b16 %v8901, %v8893
    %v9878 = vpack.c.b16 %v8902, %v8894
    %v9879 = vpack.c.b16 %v8903, %v8895
    %v9880 = vpack.c.b16 %v8912, %v8904
    %v9881 = vpack.c.b16 %v8913, %v8905
    %v9882 = vpack.c.b16 %v8914, %v8906
    %v9883 = vpack.c.b16 %v8915, %v8907
    %v9884 = vpack.c.b16 %v8916, %v8908
    %v9885 = vpack.c.b16 %v8917, %v8909
    %v9886 = vpack.c.b16 %v8918, %v8910
    %v9887 = vpack.c.b16 %v8919, %v8911
    %v9888 = vpack.c.b16 %v8928, %v8920
    %v9889 = vpack.c.b16 %v8929, %v8921
    %v9890 = vpack.c.b16 %v8930, %v8922
    %v9891 = vpack.c.b16 %v8931, %v8923
    %v9892 = vpack.c.b16 %v8932, %v8924
    %v9893 = vpack.c.b16 %v8933, %v8925
    %v9894 = vpack.c.b16 %v8934, %v8926
    %v9895 = vpack.c.b16 %v8935, %v8927
    %v9896 = vpack.c.b16 %v8944, %v8936
    %v9897 = vpack.c.b16 %v8945, %v8937
    %v9898 = vpack.c.b16 %v8946, %v8938
    %v9899 = vpack.c.b16 %v8947, %v8939
    %v9900 = vpack.c.b16 %v8948, %v8940
    %v9901 = vpack.c.b16 %v8949, %v8941
    %v9902 = vpack.c.b16 %v8950, %v8942
    %v9903 = vpack.c.b16 %v8951, %v8943
    %v9904 = vpack.c.b16 %v8960, %v8952
    %v9905 = vpack.c.b16 %v8961, %v8953
    %v9906 = vpack.c.b16 %v8962, %v8954
    %v9907 = vpack.c.b16 %v8963, %v8955
    %v9908 = vpack.c.b16 %v8964, %v8956
    %v9909 = vpack.c.b16 %v8965, %v8957
    %v9910 = vpack.c.b16 %v8966, %v8958
    %v9911 = vpack.c.b16 %v8967, %v8959
    %v9912 = vpack.c.b16 %v8976, %v8968
    %v9913 = vpack.c.b16 %v8977, %v8969
    %v9914 = vpack.c.b16 %v8978, %v8970
    %v9915 = vpack.c.b16 %v8979, %v8971
    %v9916 = vpack.c.b16 %v8980, %v8972
    %v9917 = vpack.c.b16 %v8981, %v8973
    %v9918 = vpack.c.b16 %v8982, %v8974
    %v9919 = vpack.c.b16 %v8983, %v8975
    %v9920 = vpack.c.b16 %v8992, %v8984
    %v9921 = vpack.c.b16 %v8993, %v8985
    %v9922 = vpack.c.b16 %v8994, %v8986
    %v9923 = vpack.c.b16 %v8995, %v8987
    %v9924 = vpack.c.b16 %v8996, %v8988
    %v9925 = vpack.c.b16 %v8997, %v8989
    %v9926 = vpack.c.b16 %v8998, %v8990
    %v9927 = vpack.c.b16 %v8999, %v8991
    %v9928 = vpack.c.b16 %v9008, %v9000
    %v9929 = vpack.c.b16 %v9009, %v9001
    %v9930 = vpack.c.b16 %v9010, %v9002
    %v9931 = vpack.c.b16 %v9011, %v9003
    %v9932 = vpack.c.b16 %v9012, %v9004
    %v9933 = vpack.c.b16 %v9013, %v9005
    %v9934 = vpack.c.b16 %v9014, %v9006
    %v9935 = vpack.c.b16 %v9015, %v9007
    %v9936 = vpack.c.b16 %v9024, %v9016
    %v9937 = vpack.c.b16 %v9025, %v9017
    %v9938 = vpack.c.b16 %v9026, %v9018
    %v9939 = vpack.c.b16 %v9027, %v9019
    %v9940 = vpack.c.b16 %v9028, %v9020
    %v9941 = vpack.c.b16 %v9029, %v9021
    %v9942 = vpack.c.b16 %v9030, %v9022
    %v9943 = vpack.c.b16 %v9031, %v9023
    %v9944 = vpack.c.b16 %v9040, %v9032
    %v9945 = vpack.c.b16 %v9041, %v9033
    %v9946 = vpack.c.b16 %v9042, %v9034
    %v9947 = vpack.c.b16 %v9043, %v9035
    %v9948 = vpack.c.b16 %v9044, %v9036
    %v9949 = vpack.c.b16 %v9045, %v9037
    %v9950 = vpack.c.b16 %v9046, %v9038
    %v9951 = vpack.c.b16 %v9047, %v9039
    %v9952 = vpack.c.b16 %v9056, %v9048
    %v9953 = vpack.c.b16 %v9057, %v9049
    %v9954 = vpack.c.b16 %v9058, %v9050
    %v9955 = vpack.c.b16 %v9059, %v9051
    %v9956 = vpack.c.b16 %v9060, %v9052
    %v9957 = vpack.c.b16 %v9061, %v9053
    %v9958 = vpack.c.b16 %v9062, %v9054
    %v9959 = vpack.c.b16 %v9063, %v9055
    %v9960 = vpack.c.b16 %v9072, %v9064
    %v9961 = vpack.c.b16 %v9073, %v9065
    %v9962 = vpack.c.b16 %v9074, %v9066
    %v9963 = vpack.c.b16 %v9075, %v9067
    %v9964 = vpack.c.b16 %v9076, %v9068
    %v9965 = vpack.c.b16 %v9077, %v9069
    %v9966 = vpack.c.b16 %v9078, %v9070
    %v9967 = vpack.c.b16 %v9079, %v9071
    %v9968 = vpack.c.b16 %v9088, %v9080
    %v9969 = vpack.c.b16 %v9089, %v9081
    %v9970 = vpack.c.b16 %v9090, %v9082
    %v9971 = vpack.c.b16 %v9091, %v9083
    %v9972 = vpack.c.b16 %v9092, %v9084
    %v9973 = vpack.c.b16 %v9093, %v9085
    %v9974 = vpack.c.b16 %v9094, %v9086
    %v9975 = vpack.c.b16 %v9095, %v9087
    %v9976 = vpack.c.b16 %v9104, %v9096
    %v9977 = vpack.c.b16 %v9105, %v9097
    %v9978 = vpack.c.b16 %v9106, %v9098
    %v9979 = vpack.c.b16 %v9107, %v9099
    %v9980 = vpack.c.b16 %v9108, %v9100
    %v9981 = vpack.c.b16 %v9109, %v9101
    %v9982 = vpack.c.b16 %v9110, %v9102
    %v9983 = vpack.c.b16 %v9111, %v9103
    %v9984 = vpack.c.b16 %v9120, %v9112
    %v9985 = vpack.c.b16 %v9121, %v9113
    %v9986 = vpack.c.b16 %v9122, %v9114
    %v9987 = vpack.c.b16 %v9123, %v9115
    %v9988 = vpack.c.b16 %v9124, %v9116
    %v9989 = vpack.c.b16 %v9125, %v9117
    %v9990 = vpack.c.b16 %v9126, %v9118
    %v9991 = vpack.c.b16 %v9127, %v9119
    %v9992 = vpack.c.b16 %v9136, %v9128
    %v9993 = vpack.c.b16 %v9137, %v9129
    %v9994 = vpack.c.b16 %v9138, %v9130
    %v9995 = vpack.c.b16 %v9139, %v9131
    %v9996 = vpack.c.b16 %v9140, %v9132
    %v9997 = vpack.c.b16 %v9141, %v9133
    %v9998 = vpack.c.b16 %v9142, %v9134
    %v9999 = vpack.c.b16 %v9143, %v9135
    %v10000 = vpack.c.b16 %v9152, %v9144
    %v10001 = vpack.c.b16 %v9153, %v9145
    %v10002 = vpack.c.b16 %v9154, %v9146
    %v10003 = vpack.c.b16 %v9155, %v9147
    %v10004 = vpack.c.b16 %v9156, %v9148
    %v10005 = vpack.c.b16 %v9157, %v9149
    %v10006 = vpack.c.b16 %v9158, %v9150
    %v10007 = vpack.c.b16 %v9159, %v9151
    %v10008 = vpack.c.b16 %v9168, %v9160
    %v10009 = vpack.c.b16 %v9169, %v9161
    %v10010 = vpack.c.b16 %v9170, %v9162
    %v10011 = vpack.c.b16 %v9171, %v9163
    %v10012 = vpack.c.b16 %v9172, %v9164
    %v10013 = vpack.c.b16 %v9173, %v9165
    %v10014 = vpack.c.b16 %v9174, %v9166
    %v10015 = vpack.c.b16 %v9175, %v9167
    %v10016 = vpack.c.b16 %v9184, %v9176
    %v10017 = vpack.c.b16 %v9185, %v9177
    %v10018 = vpack.c.b16 %v9186, %v9178
    %v10019 = vpack.c.b16 %v9187, %v9179
    %v10020 = vpack.c.b16 %v9188, %v9180
    %v10021 = vpack.c.b16 %v9189, %v9181
    %v10022 = vpack.c.b16 %v9190, %v9182
    %v10023 = vpack.c.b16 %v9191, %v9183
    %v10024 = vpack.c.b16 %v9200, %v9192
    %v10025 = vpack.c.b16 %v9201, %v9193
    %v10026 = vpack.c.b16 %v9202, %v9194
    %v10027 = vpack.c.b16 %v9203, %v9195
    %v10028 = vpack.c.b16 %v9204, %v9196
    %v10029 = vpack.c.b16 %v9205, %v9197
    %v10030 = vpack.c.b16 %v9206, %v9198
    %v10031 = vpack.c.b16 %v9207, %v9199
    %v10032 = vpack.c.b16 %v9216, %v9208
    %v10033 = vpack.c.b16 %v9217, %v9209
    %v10034 = vpack.c.b16 %v9218, %v9210
    %v10035 = vpack.c.b16 %v9219, %v9211
    %v10036 = vpack.c.b16 %v9220, %v9212
    %v10037 = vpack.c.b16 %v9221, %v9213
    %v10038 = vpack.c.b16 %v9222, %v9214
    %v10039 = vpack.c.b16 %v9223, %v9215
    %v10040 = vpack.c.b16 %v9232, %v9224
    %v10041 = vpack.c.b16 %v9233, %v9225
    %v10042 = vpack.c.b16 %v9234, %v9226
    %v10043 = vpack.c.b16 %v9235, %v9227
    %v10044 = vpack.c.b16 %v9236, %v9228
    %v10045 = vpack.c.b16 %v9237, %v9229
    %v10046 = vpack.c.b16 %v9238, %v9230
    %v10047 = vpack.c.b16 %v9239, %v9231
    %v10048 = vpack.c.b16 %v9248, %v9240
    %v10049 = vpack.c.b16 %v9249, %v9241
    %v10050 = vpack.c.b16 %v9250, %v9242
    %v10051 = vpack.c.b16 %v9251, %v9243
    %v10052 = vpack.c.b16 %v9252, %v9244
    %v10053 = vpack.c.b16 %v9253, %v9245
    %v10054 = vpack.c.b16 %v9254, %v9246
    %v10055 = vpack.c.b16 %v9255, %v9247
    %v10056 = vpack.c.b16 %v9264, %v9256
    %v10057 = vpack.c.b16 %v9265, %v9257
    %v10058 = vpack.c.b16 %v9266, %v9258
    %v10059 = vpack.c.b16 %v9267, %v9259
    %v10060 = vpack.c.b16 %v9268, %v9260
    %v10061 = vpack.c.b16 %v9269, %v9261
    %v10062 = vpack.c.b16 %v9270, %v9262
    %v10063 = vpack.c.b16 %v9271, %v9263
    %v10064 = vpack.c.b16 %v9280, %v9272
    %v10065 = vpack.c.b16 %v9281, %v9273
    %v10066 = vpack.c.b16 %v9282, %v9274
    %v10067 = vpack.c.b16 %v9283, %v9275
    %v10068 = vpack.c.b16 %v9284, %v9276
    %v10069 = vpack.c.b16 %v9285, %v9277
    %v10070 = vpack.c.b16 %v9286, %v9278
    %v10071 = vpack.c.b16 %v9287, %v9279
    %v10072 = vpack.c.b16 %v9296, %v9288
    %v10073 = vpack.c.b16 %v9297, %v9289
    %v10074 = vpack.c.b16 %v9298, %v9290
    %v10075 = vpack.c.b16 %v9299, %v9291
    %v10076 = vpack.c.b16 %v9300, %v9292
    %v10077 = vpack.c.b16 %v9301, %v9293
    %v10078 = vpack.c.b16 %v9302, %v9294
    %v10079 = vpack.c.b16 %v9303, %v9295
    %v10080 = vpack.c.b16 %v9312, %v9304
    %v10081 = vpack.c.b16 %v9313, %v9305
    %v10082 = vpack.c.b16 %v9314, %v9306
    %v10083 = vpack.c.b16 %v9315, %v9307
    %v10084 = vpack.c.b16 %v9316, %v9308
    %v10085 = vpack.c.b16 %v9317, %v9309
    %v10086 = vpack.c.b16 %v9318, %v9310
    %v10087 = vpack.c.b16 %v9319, %v9311
    %v10088 = vpack.c.b16 %v9328, %v9320
    %v10089 = vpack.c.b16 %v9329, %v9321
    %v10090 = vpack.c.b16 %v9330, %v9322
    %v10091 = vpack.c.b16 %v9331, %v9323
    %v10092 = vpack.c.b16 %v9332, %v9324
    %v10093 = vpack.c.b16 %v9333, %v9325
    %v10094 = vpack.c.b16 %v9334, %v9326
    %v10095 = vpack.c.b16 %v9335, %v9327
    %v10096 = vpack.c.b16 %v9344, %v9336
    %v10097 = vpack.c.b16 %v9345, %v9337
    %v10098 = vpack.c.b16 %v9346, %v9338
    %v10099 = vpack.c.b16 %v9347, %v9339
    %v10100 = vpack.c.b16 %v9348, %v9340
    %v10101 = vpack.c.b16 %v9349, %v9341
    %v10102 = vpack.c.b16 %v9350, %v9342
    %v10103 = vpack.c.b16 %v9351, %v9343
    %v10104 = vpack.c.b16 %v9360, %v9352
    %v10105 = vpack.c.b16 %v9361, %v9353
    %v10106 = vpack.c.b16 %v9362, %v9354
    %v10107 = vpack.c.b16 %v9363, %v9355
    %v10108 = vpack.c.b16 %v9364, %v9356
    %v10109 = vpack.c.b16 %v9365, %v9357
    %v10110 = vpack.c.b16 %v9366, %v9358
    %v10111 = vpack.c.b16 %v9367, %v9359
    %v10112 = vpack.c.b16 %v9376, %v9368
    %v10113 = vpack.c.b16 %v9377, %v9369
    %v10114 = vpack.c.b16 %v9378, %v9370
    %v10115 = vpack.c.b16 %v9379, %v9371
    %v10116 = vpack.c.b16 %v9380, %v9372
    %v10117 = vpack.c.b16 %v9381, %v9373
    %v10118 = vpack.c.b16 %v9382, %v9374
    %v10119 = vpack.c.b16 %v9383, %v9375
    %v10120 = vpack.c.b16 %v9392, %v9384
    %v10121 = vpack.c.b16 %v9393, %v9385
    %v10122 = vpack.c.b16 %v9394, %v9386
    %v10123 = vpack.c.b16 %v9395, %v9387
    %v10124 = vpack.c.b16 %v9396, %v9388
    %v10125 = vpack.c.b16 %v9397, %v9389
    %v10126 = vpack.c.b16 %v9398, %v9390
    %v10127 = vpack.c.b16 %v9399, %v9391
    %v10128 = vpack.c.b16 %v9408, %v9400
    %v10129 = vpack.c.b16 %v9409, %v9401
    %v10130 = vpack.c.b16 %v9410, %v9402
    %v10131 = vpack.c.b16 %v9411, %v9403
    %v10132 = vpack.c.b16 %v9412, %v9404
    %v10133 = vpack.c.b16 %v9413, %v9405
    %v10134 = vpack.c.b16 %v9414, %v9406
    %v10135 = vpack.c.b16 %v9415, %v9407
    %v10136 = vpack.c.b16 %v9424, %v9416
    %v10137 = vpack.c.b16 %v9425, %v9417
    %v10138 = vpack.c.b16 %v9426, %v9418
    %v10139 = vpack.c.b16 %v9427, %v9419
    %v10140 = vpack.c.b16 %v9428, %v9420
    %v10141 = vpack.c.b16 %v9429, %v9421
    %v10142 = vpack.c.b16 %v9430, %v9422
    %v10143 = vpack.c.b16 %v9431, %v9423
    %v10144 = vpack.c.b16 %v9440, %v9432
    %v10145 = vpack.c.b16 %v9441, %v9433
    %v10146 = vpack.c.b16 %v9442, %v9434
    %v10147 = vpack.c.b16 %v9443, %v9435
    %v10148 = vpack.c.b16 %v9444, %v9436
    %v10149 = vpack.c.b16 %v9445, %v9437
    %v10150 = vpack.c.b16 %v9446, %v9438
    %v10151 = vpack.c.b16 %v9447, %v9439
    %v10152 = vpack.c.b16 %v9456, %v9448
    %v10153 = vpack.c.b16 %v9457, %v9449
    %v10154 = vpack.c.b16 %v9458, %v9450
    %v10155 = vpack.c.b16 %v9459, %v9451
    %v10156 = vpack.c.b16 %v9460, %v9452
    %v10157 = vpack.c.b16 %v9461, %v9453
    %v10158 = vpack.c.b16 %v9462, %v9454
    %v10159 = vpack.c.b16 %v9463, %v9455
    %v10160 = vpack.c.b16 %v9472, %v9464
    %v10161 = vpack.c.b16 %v9473, %v9465
    %v10162 = vpack.c.b16 %v9474, %v9466
    %v10163 = vpack.c.b16 %v9475, %v9467
    %v10164 = vpack.c.b16 %v9476, %v9468
    %v10165 = vpack.c.b16 %v9477, %v9469
    %v10166 = vpack.c.b16 %v9478, %v9470
    %v10167 = vpack.c.b16 %v9479, %v9471
    %v10168 = vpack.c.b16 %v9488, %v9480
    %v10169 = vpack.c.b16 %v9489, %v9481
    %v10170 = vpack.c.b16 %v9490, %v9482
    %v10171 = vpack.c.b16 %v9491, %v9483
    %v10172 = vpack.c.b16 %v9492, %v9484
    %v10173 = vpack.c.b16 %v9493, %v9485
    %v10174 = vpack.c.b16 %v9494, %v9486
    %v10175 = vpack.c.b16 %v9495, %v9487
    %v10176 = vpack.c.b16 %v9504, %v9496
    %v10177 = vpack.c.b16 %v9505, %v9497
    %v10178 = vpack.c.b16 %v9506, %v9498
    %v10179 = vpack.c.b16 %v9507, %v9499
    %v10180 = vpack.c.b16 %v9508, %v9500
    %v10181 = vpack.c.b16 %v9509, %v9501
    %v10182 = vpack.c.b16 %v9510, %v9502
    %v10183 = vpack.c.b16 %v9511, %v9503
    %v10184 = vpack.c.b16 %v9520, %v9512
    %v10185 = vpack.c.b16 %v9521, %v9513
    %v10186 = vpack.c.b16 %v9522, %v9514
    %v10187 = vpack.c.b16 %v9523, %v9515
    %v10188 = vpack.c.b16 %v9524, %v9516
    %v10189 = vpack.c.b16 %v9525, %v9517
    %v10190 = vpack.c.b16 %v9526, %v9518
    %v10191 = vpack.c.b16 %v9527, %v9519
    %v10192 = vpack.c.b16 %v9536, %v9528
    %v10193 = vpack.c.b16 %v9537, %v9529
    %v10194 = vpack.c.b16 %v9538, %v9530
    %v10195 = vpack.c.b16 %v9539, %v9531
    %v10196 = vpack.c.b16 %v9540, %v9532
    %v10197 = vpack.c.b16 %v9541, %v9533
    %v10198 = vpack.c.b16 %v9542, %v9534
    %v10199 = vpack.c.b16 %v9543, %v9535
    %v10200 = vpack.c.b16 %v9552, %v9544
    %v10201 = vpack.c.b16 %v9553, %v9545
    %v10202 = vpack.c.b16 %v9554, %v9546
    %v10203 = vpack.c.b16 %v9555, %v9547
    %v10204 = vpack.c.b16 %v9556, %v9548
    %v10205 = vpack.c.b16 %v9557, %v9549
    %v10206 = vpack.c.b16 %v9558, %v9550
    %v10207 = vpack.c.b16 %v9559, %v9551
    %v10208 = vpack.c.b16 %v9568, %v9560
    %v10209 = vpack.c.b16 %v9569, %v9561
    %v10210 = vpack.c.b16 %v9570, %v9562
    %v10211 = vpack.c.b16 %v9571, %v9563
    %v10212 = vpack.c.b16 %v9572, %v9564
    %v10213 = vpack.c.b16 %v9573, %v9565
    %v10214 = vpack.c.b16 %v9574, %v9566
    %v10215 = vpack.c.b16 %v9575, %v9567
    %v10216 = vpack.c.b16 %v9584, %v9576
    %v10217 = vpack.c.b16 %v9585, %v9577
    %v10218 = vpack.c.b16 %v9586, %v9578
    %v10219 = vpack.c.b16 %v9587, %v9579
    %v10220 = vpack.c.b16 %v9588, %v9580
    %v10221 = vpack.c.b16 %v9589, %v9581
    %v10222 = vpack.c.b16 %v9590, %v9582
    %v10223 = vpack.c.b16 %v9591, %v9583
    %v10224 = vpack.c.b16 %v9600, %v9592
    %v10225 = vpack.c.b16 %v9601, %v9593
    %v10226 = vpack.c.b16 %v9602, %v9594
    %v10227 = vpack.c.b16 %v9603, %v9595
    %v10228 = vpack.c.b16 %v9604, %v9596
    %v10229 = vpack.c.b16 %v9605, %v9597
    %v10230 = vpack.c.b16 %v9606, %v9598
    %v10231 = vpack.c.b16 %v9607, %v9599
    %v10232 = vpack.c.b16 %v9616, %v9608
    %v10233 = vpack.c.b16 %v9617, %v9609
    %v10234 = vpack.c.b16 %v9618, %v9610
    %v10235 = vpack.c.b16 %v9619, %v9611
    %v10236 = vpack.c.b16 %v9620, %v9612
    %v10237 = vpack.c.b16 %v9621, %v9613
    %v10238 = vpack.c.b16 %v9622, %v9614
    %v10239 = vpack.c.b16 %v9623, %v9615
    %v10240 = vpack.c.b16 %v9632, %v9624
    %v10241 = vpack.c.b16 %v9633, %v9625
    %v10242 = vpack.c.b16 %v9634, %v9626
    %v10243 = vpack.c.b16 %v9635, %v9627
    %v10244 = vpack.c.b16 %v9636, %v9628
    %v10245 = vpack.c.b16 %v9637, %v9629
    %v10246 = vpack.c.b16 %v9638, %v9630
    %v10247 = vpack.c.b16 %v9639, %v9631
    %v10248 = vpack.c.b16 %v9648, %v9640
    %v10249 = vpack.c.b16 %v9649, %v9641
    %v10250 = vpack.c.b16 %v9650, %v9642
    %v10251 = vpack.c.b16 %v9651, %v9643
    %v10252 = vpack.c.b16 %v9652, %v9644
    %v10253 = vpack.c.b16 %v9653, %v9645
    %v10254 = vpack.c.b16 %v9654, %v9646
    %v10255 = vpack.c.b16 %v9655, %v9647
    %v10256 = vpack.c.b16 %v9664, %v9656
    %v10257 = vpack.c.b16 %v9665, %v9657
    %v10258 = vpack.c.b16 %v9666, %v9658
    %v10259 = vpack.c.b16 %v9667, %v9659
    %v10260 = vpack.c.b16 %v9668, %v9660
    %v10261 = vpack.c.b16 %v9669, %v9661
    %v10262 = vpack.c.b16 %v9670, %v9662
    %v10263 = vpack.c.b16 %v9671, %v9663
    %v10264 = vpack.c.b16 %v9680, %v9672
    %v10265 = vpack.c.b16 %v9681, %v9673
    %v10266 = vpack.c.b16 %v9682, %v9674
    %v10267 = vpack.c.b16 %v9683, %v9675
    %v10268 = vpack.c.b16 %v9684, %v9676
    %v10269 = vpack.c.b16 %v9685, %v9677
    %v10270 = vpack.c.b16 %v9686, %v9678
    %v10271 = vpack.c.b16 %v9687, %v9679
    %v10272 = vpack.c.b16 %v9696, %v9688
    %v10273 = vpack.c.b16 %v9697, %v9689
    %v10274 = vpack.c.b16 %v9698, %v9690
    %v10275 = vpack.c.b16 %v9699, %v9691
    %v10276 = vpack.c.b16 %v9700, %v9692
    %v10277 = vpack.c.b16 %v9701, %v9693
    %v10278 = vpack.c.b16 %v9702, %v9694
    %v10279 = vpack.c.b16 %v9703, %v9695
    %v10280 = vpack.c.b16 %v9712, %v9704
    %v10281 = vpack.c.b16 %v9713, %v9705
    %v10282 = vpack.c.b16 %v9714, %v9706
    %v10283 = vpack.c.b16 %v9715, %v9707
    %v10284 = vpack.c.b16 %v9716, %v9708
    %v10285 = vpack.c.b16 %v9717, %v9709
    %v10286 = vpack.c.b16 %v9718, %v9710
    %v10287 = vpack.c.b16 %v9719, %v9711
    %v10288 = vpack.c.b16 %v9728, %v9720
    %v10289 = vpack.c.b16 %v9729, %v9721
    %v10290 = vpack.c.b16 %v9730, %v9722
    %v10291 = vpack.c.b16 %v9731, %v9723
    %v10292 = vpack.c.b16 %v9732, %v9724
    %v10293 = vpack.c.b16 %v9733, %v9725
    %v10294 = vpack.c.b16 %v9734, %v9726
    %v10295 = vpack.c.b16 %v9735, %v9727
    %v10296 = vpack.c.b16 %v9744, %v9736
    %v10297 = vpack.c.b16 %v9745, %v9737
    %v10298 = vpack.c.b16 %v9746, %v9738
    %v10299 = vpack.c.b16 %v9747, %v9739
    %v10300 = vpack.c.b16 %v9748, %v9740
    %v10301 = vpack.c.b16 %v9749, %v9741
    %v10302 = vpack.c.b16 %v9750, %v9742
    %v10303 = vpack.c.b16 %v9751, %v9743
    %v10304 = vpack.c.b16 %v9760, %v9752
    %v10305 = vpack.c.b16 %v9761, %v9753
    %v10306 = vpack.c.b16 %v9762, %v9754
    %v10307 = vpack.c.b16 %v9763, %v9755
    %v10308 = vpack.c.b16 %v9764, %v9756
    %v10309 = vpack.c.b16 %v9765, %v9757
    %v10310 = vpack.c.b16 %v9766, %v9758
    %v10311 = vpack.c.b16 %v9767, %v9759
    %v10312 = vpack.c.b16 %v9776, %v9768
    %v10313 = vpack.c.b16 %v9777, %v9769
    %v10314 = vpack.c.b16 %v9778, %v9770
    %v10315 = vpack.c.b16 %v9779, %v9771
    %v10316 = vpack.c.b16 %v9780, %v9772
    %v10317 = vpack.c.b16 %v9781, %v9773
    %v10318 = vpack.c.b16 %v9782, %v9774
    %v10319 = vpack.c.b16 %v9783, %v9775
    %v10320 = vpack.c.b16 %v9792, %v9784
    %v10321 = vpack.c.b16 %v9793, %v9785
    %v10322 = vpack.c.b16 %v9794, %v9786
    %v10323 = vpack.c.b16 %v9795, %v9787
    %v10324 = vpack.c.b16 %v9796, %v9788
    %v10325 = vpack.c.b16 %v9797, %v9789
    %v10326 = vpack.c.b16 %v9798, %v9790
    %v10327 = vpack.c.b16 %v9799, %v9791
    %v10328 = vpack.c.b16 %v9808, %v9800
    %v10329 = vpack.c.b16 %v9809, %v9801
    %v10330 = vpack.c.b16 %v9810, %v9802
    %v10331 = vpack.c.b16 %v9811, %v9803
    %v10332 = vpack.c.b16 %v9812, %v9804
    %v10333 = vpack.c.b16 %v9813, %v9805
    %v10334 = vpack.c.b16 %v9814, %v9806
    %v10335 = vpack.c.b16 %v9815, %v9807
    %v10336 = vpack.c.b16 %v9824, %v9816
    %v10337 = vpack.c.b16 %v9825, %v9817
    %v10338 = vpack.c.b16 %v9826, %v9818
    %v10339 = vpack.c.b16 %v9827, %v9819
    %v10340 = vpack.c.b16 %v9828, %v9820
    %v10341 = vpack.c.b16 %v9829, %v9821
    %v10342 = vpack.c.b16 %v9830, %v9822
    %v10343 = vpack.c.b16 %v9831, %v9823
    %10856 = vmatprep.subr.bf16.mxu0 %v9833
    %10857 = vmatpush1.bf16.msra.mxu0 %v9832
    %10858 = vmatprep.subr.bf16.mxu0 %v9841
    %10859 = vmatpush1.bf16.msra.mxu0 %v9840
    %10860 = vmatprep.subr.bf16.mxu0 %v9849
    %10861 = vmatpush1.bf16.msra.mxu0 %v9848
    %10862 = vmatprep.subr.bf16.mxu0 %v9857
    %10863 = vmatpush1.bf16.msra.mxu0 %v9856
    %10864 = vmatprep.subr.bf16.mxu0 %v9865
    %10865 = vmatpush1.bf16.msra.mxu0 %v9864
    %10866 = vmatprep.subr.bf16.mxu0 %v9873
    %10867 = vmatpush1.bf16.msra.mxu0 %v9872
    %10868 = vmatprep.subr.bf16.mxu0 %v9881
    %10869 = vmatpush1.bf16.msra.mxu0 %v9880
    %10870 = vmatprep.subr.bf16.mxu0 %v9889
    %10871 = vmatpush1.bf16.msra.mxu0 %v9888
    %10872 = vmatprep.subr.bf16.mxu0 %v9897
    %10873 = vmatpush1.bf16.msra.mxu0 %v9896
    %10874 = vmatprep.subr.bf16.mxu0 %v9905
    %10875 = vmatpush1.bf16.msra.mxu0 %v9904
    %10876 = vmatprep.subr.bf16.mxu0 %v9913
    %10877 = vmatpush1.bf16.msra.mxu0 %v9912
    %10878 = vmatprep.subr.bf16.mxu0 %v9921
    %10879 = vmatpush1.bf16.msra.mxu0 %v9920
    %10880 = vmatprep.subr.bf16.mxu0 %v9929
    %10881 = vmatpush1.bf16.msra.mxu0 %v9928
    %10882 = vmatprep.subr.bf16.mxu0 %v9937
    %10883 = vmatpush1.bf16.msra.mxu0 %v9936
    %10884 = vmatprep.subr.bf16.mxu0 %v9945
    %10885 = vmatpush1.bf16.msra.mxu0 %v9944
    %10886 = vmatprep.subr.bf16.mxu0 %v9953
    %10887 = vmatpush1.bf16.msra.mxu0 %v9952
    %10888 = vmatprep.mubr.bf16.mxu0 %v7735
    %10889 = vmatmul.mubr.bf16.gmra.mrb[0].mxu0 %v7734
    %v10890 = vpop.f32.mrb[0].mxu0
    %v10891 = vadd.f32 %v8259, %v10890
    %v10892 = vpop.f32.mrb[0].mxu0
    %v10893 = vadd.f32 %v8263, %v10892
    %v10894 = vpop.f32.mrb[0].mxu0
    %v10895 = vpop.f32.mrb[0].mxu0
    %10896 = vdwg.mxu0
    %10897 = vmatprep.subr.bf16.mxu0 %v9961
    %10898 = vmatpush1.bf16.msra.mxu0 %v9960
    %10899 = vmatprep.subr.bf16.mxu0 %v9969
    %10900 = vmatpush1.bf16.msra.mxu0 %v9968
    %10901 = vmatprep.subr.bf16.mxu0 %v9977
    %10902 = vmatpush1.bf16.msra.mxu0 %v9976
    %10903 = vmatprep.subr.bf16.mxu0 %v9985
    %10904 = vmatpush1.bf16.msra.mxu0 %v9984
    %10905 = vmatprep.subr.bf16.mxu0 %v9993
    %10906 = vmatpush1.bf16.msra.mxu0 %v9992
    %10907 = vmatprep.subr.bf16.mxu0 %v10001
    %10908 = vmatpush1.bf16.msra.mxu0 %v10000
    %10909 = vmatprep.subr.bf16.mxu0 %v10009
    %10910 = vmatpush1.bf16.msra.mxu0 %v10008
    %10911 = vmatprep.subr.bf16.mxu0 %v10017
    %10912 = vmatpush1.bf16.msra.mxu0 %v10016
    %10913 = vmatprep.subr.bf16.mxu0 %v10025
    %10914 = vmatpush1.bf16.msra.mxu0 %v10024
    %10915 = vmatprep.subr.bf16.mxu0 %v10033
    %10916 = vmatpush1.bf16.msra.mxu0 %v10032
    %10917 = vmatprep.subr.bf16.mxu0 %v10041
    %10918 = vmatpush1.bf16.msra.mxu0 %v10040
    %10919 = vmatprep.subr.bf16.mxu0 %v10049
    %10920 = vmatpush1.bf16.msra.mxu0 %v10048
    %10921 = vmatprep.subr.bf16.mxu0 %v10057
    %10922 = vmatpush1.bf16.msra.mxu0 %v10056
    %10923 = vmatprep.subr.bf16.mxu0 %v10065
    %10924 = vmatpush1.bf16.msra.mxu0 %v10064
    %10925 = vmatprep.subr.bf16.mxu0 %v10073
    %10926 = vmatpush1.bf16.msra.mxu0 %v10072
    %10927 = vmatprep.subr.bf16.mxu0 %v10081
    %10928 = vmatpush1.bf16.msra.mxu0 %v10080
    %10929 = vmatprep.mubr.bf16.mxu0 %v7737
    %10930 = vmatmul.mubr.bf16.gmra.mrb[0].mxu0 %v7736
    %v10931 = vpop.f32.mrb[0].mxu0
    %v10932 = vadd.f32 %v10891, %v10931
    %v10933 = vpop.f32.mrb[0].mxu0
    %v10934 = vadd.f32 %v10893, %v10933
    %v10935 = vpop.f32.mrb[0].mxu0
    %v10936 = vpop.f32.mrb[0].mxu0
    %10937 = vdwg.mxu0
    %10938 = vmatprep.subr.bf16.mxu0 %v10089
    %10939 = vmatpush1.bf16.msra.mxu0 %v10088
    %10940 = vmatprep.subr.bf16.mxu0 %v10097
    %10941 = vmatpush1.bf16.msra.mxu0 %v10096
    %10942 = vmatprep.subr.bf16.mxu0 %v10105
    %10943 = vmatpush1.bf16.msra.mxu0 %v10104
    %10944 = vmatprep.subr.bf16.mxu0 %v10113
    %10945 = vmatpush1.bf16.msra.mxu0 %v10112
    %10946 = vmatprep.subr.bf16.mxu0 %v10121
    %10947 = vmatpush1.bf16.msra.mxu0 %v10120
    %10948 = vmatprep.subr.bf16.mxu0 %v10129
    %10949 = vmatpush1.bf16.msra.mxu0 %v10128
    %10950 = vmatprep.subr.bf16.mxu0 %v10137
    %10951 = vmatpush1.bf16.msra.mxu0 %v10136
    %10952 = vmatprep.subr.bf16.mxu0 %v10145
    %10953 = vmatpush1.bf16.msra.mxu0 %v10144
    %10954 = vmatprep.subr.bf16.mxu0 %v10153
    %10955 = vmatpush1.bf16.msra.mxu0 %v10152
    %10956 = vmatprep.subr.bf16.mxu0 %v10161
    %10957 = vmatpush1.bf16.msra.mxu0 %v10160
    %10958 = vmatprep.subr.bf16.mxu0 %v10169
    %10959 = vmatpush1.bf16.msra.mxu0 %v10168
    %10960 = vmatprep.subr.bf16.mxu0 %v10177
    %10961 = vmatpush1.bf16.msra.mxu0 %v10176
    %10962 = vmatprep.subr.bf16.mxu0 %v10185
    %10963 = vmatpush1.bf16.msra.mxu0 %v10184
    %10964 = vmatprep.subr.bf16.mxu0 %v10193
    %10965 = vmatpush1.bf16.msra.mxu0 %v10192
    %10966 = vmatprep.subr.bf16.mxu0 %v10201
    %10967 = vmatpush1.bf16.msra.mxu0 %v10200
    %10968 = vmatprep.subr.bf16.mxu0 %v10209
    %10969 = vmatpush1.bf16.msra.mxu0 %v10208
    %10970 = vmatprep.mubr.bf16.mxu0 %v7739
    %10971 = vmatmul.mubr.bf16.gmra.mrb[0].mxu0 %v7738
    %v10972 = vpop.f32.mrb[0].mxu0
    %v10973 = vadd.f32 %v10932, %v10972
    %v10974 = vpop.f32.mrb[0].mxu0
    %v10975 = vadd.f32 %v10934, %v10974
    %v10976 = vpop.f32.mrb[0].mxu0
    %v10977 = vpop.f32.mrb[0].mxu0
    %10978 = vdwg.mxu0
    %10979 = vmatprep.subr.bf16.mxu0 %v10217
    %10980 = vmatpush1.bf16.msra.mxu0 %v10216
    %10981 = vmatprep.subr.bf16.mxu0 %v10225
    %10982 = vmatpush1.bf16.msra.mxu0 %v10224
    %10983 = vmatprep.subr.bf16.mxu0 %v10233
    %10984 = vmatpush1.bf16.msra.mxu0 %v10232
    %10985 = vmatprep.subr.bf16.mxu0 %v10241
    %10986 = vmatpush1.bf16.msra.mxu0 %v10240
    %10987 = vmatprep.subr.bf16.mxu0 %v10249
    %10988 = vmatpush1.bf16.msra.mxu0 %v10248
    %10989 = vmatprep.subr.bf16.mxu0 %v10257
    %10990 = vmatpush1.bf16.msra.mxu0 %v10256
    %10991 = vmatprep.subr.bf16.mxu0 %v10265
    %10992 = vmatpush1.bf16.msra.mxu0 %v10264
    %10993 = vmatprep.subr.bf16.mxu0 %v10273
    %10994 = vmatpush1.bf16.msra.mxu0 %v10272
    %10995 = vmatprep.subr.bf16.mxu0 %v10281
    %10996 = vmatpush1.bf16.msra.mxu0 %v10280
    %10997 = vmatprep.subr.bf16.mxu0 %v10289
    %10998 = vmatpush1.bf16.msra.mxu0 %v10288
    %10999 = vmatprep.subr.bf16.mxu0 %v10297
    %11000 = vmatpush1.bf16.msra.mxu0 %v10296
    %11001 = vmatprep.subr.bf16.mxu0 %v10305
    %11002 = vmatpush1.bf16.msra.mxu0 %v10304
    %11003 = vmatprep.subr.bf16.mxu0 %v10313
    %11004 = vmatpush1.bf16.msra.mxu0 %v10312
    %11005 = vmatprep.subr.bf16.mxu0 %v10321
    %11006 = vmatpush1.bf16.msra.mxu0 %v10320
    %11007 = vmatprep.subr.bf16.mxu0 %v10329
    %11008 = vmatpush1.bf16.msra.mxu0 %v10328
    %11009 = vmatprep.subr.bf16.mxu0 %v10337
    %11010 = vmatpush1.bf16.msra.mxu0 %v10336
    %11011 = vmatprep.mubr.bf16.mxu0 %v7741
    %11012 = vmatmul.mubr.bf16.gmra.mrb[0].mxu0 %v7740
    %v11013 = vpop.f32.mrb[0].mxu0
    %v11014 = vadd.f32 %v10973, %v11013
    %v11015 = vpop.f32.mrb[0].mxu0
    %v11016 = vadd.f32 %v10975, %v11015
    %v11017 = vpop.f32.mrb[0].mxu0
    %v11018 = vpop.f32.mrb[0].mxu0
    %11019 = vdwg.mxu0
    %11020 = vmatprep.subr.bf16.mxu0 %v9835
    %11021 = vmatpush1.bf16.msra.mxu0 %v9834
    %11022 = vmatprep.subr.bf16.mxu0 %v9843
    %11023 = vmatpush1.bf16.msra.mxu0 %v9842
    %11024 = vmatprep.subr.bf16.mxu0 %v9851
    %11025 = vmatpush1.bf16.msra.mxu0 %v9850
    %11026 = vmatprep.subr.bf16.mxu0 %v9859
    %11027 = vmatpush1.bf16.msra.mxu0 %v9858
    %11028 = vmatprep.subr.bf16.mxu0 %v9867
    %11029 = vmatpush1.bf16.msra.mxu0 %v9866
    %11030 = vmatprep.subr.bf16.mxu0 %v9875
    %11031 = vmatpush1.bf16.msra.mxu0 %v9874
    %11032 = vmatprep.subr.bf16.mxu0 %v9883
    %11033 = vmatpush1.bf16.msra.mxu0 %v9882
    %11034 = vmatprep.subr.bf16.mxu0 %v9891
    %11035 = vmatpush1.bf16.msra.mxu0 %v9890
    %11036 = vmatprep.subr.bf16.mxu0 %v9899
    %11037 = vmatpush1.bf16.msra.mxu0 %v9898
    %11038 = vmatprep.subr.bf16.mxu0 %v9907
    %11039 = vmatpush1.bf16.msra.mxu0 %v9906
    %11040 = vmatprep.subr.bf16.mxu0 %v9915
    %11041 = vmatpush1.bf16.msra.mxu0 %v9914
    %11042 = vmatprep.subr.bf16.mxu0 %v9923
    %11043 = vmatpush1.bf16.msra.mxu0 %v9922
    %11044 = vmatprep.subr.bf16.mxu0 %v9931
    %11045 = vmatpush1.bf16.msra.mxu0 %v9930
    %11046 = vmatprep.subr.bf16.mxu0 %v9939
    %11047 = vmatpush1.bf16.msra.mxu0 %v9938
    %11048 = vmatprep.subr.bf16.mxu0 %v9947
    %11049 = vmatpush1.bf16.msra.mxu0 %v9946
    %11050 = vmatprep.subr.bf16.mxu0 %v9955
    %11051 = vmatpush1.bf16.msra.mxu0 %v9954
    %11052 = vmatprep.mubr.bf16.mxu0 %v7735
    %11053 = vmatmul.mubr.bf16.gmra.mrb[0].mxu0 %v7734
    %v11054 = vpop.f32.mrb[0].mxu0
    %v11055 = vadd.f32 %v8267, %v11054
    %v11056 = vpop.f32.mrb[0].mxu0
    %v11057 = vadd.f32 %v8271, %v11056
    %v11058 = vpop.f32.mrb[0].mxu0
    %v11059 = vpop.f32.mrb[0].mxu0
    %11060 = vdwg.mxu0
    %11061 = vmatprep.subr.bf16.mxu0 %v9963
    %11062 = vmatpush1.bf16.msra.mxu0 %v9962
    %11063 = vmatprep.subr.bf16.mxu0 %v9971
    %11064 = vmatpush1.bf16.msra.mxu0 %v9970
    %11065 = vmatprep.subr.bf16.mxu0 %v9979
    %11066 = vmatpush1.bf16.msra.mxu0 %v9978
    %11067 = vmatprep.subr.bf16.mxu0 %v9987
    %11068 = vmatpush1.bf16.msra.mxu0 %v9986
    %11069 = vmatprep.subr.bf16.mxu0 %v9995
    %11070 = vmatpush1.bf16.msra.mxu0 %v9994
    %11071 = vmatprep.subr.bf16.mxu0 %v10003
    %11072 = vmatpush1.bf16.msra.mxu0 %v10002
    %11073 = vmatprep.subr.bf16.mxu0 %v10011
    %11074 = vmatpush1.bf16.msra.mxu0 %v10010
    %11075 = vmatprep.subr.bf16.mxu0 %v10019
    %11076 = vmatpush1.bf16.msra.mxu0 %v10018
    %11077 = vmatprep.subr.bf16.mxu0 %v10027
    %11078 = vmatpush1.bf16.msra.mxu0 %v10026
    %11079 = vmatprep.subr.bf16.mxu0 %v10035
    %11080 = vmatpush1.bf16.msra.mxu0 %v10034
    %11081 = vmatprep.subr.bf16.mxu0 %v10043
    %11082 = vmatpush1.bf16.msra.mxu0 %v10042
    %11083 = vmatprep.subr.bf16.mxu0 %v10051
    %11084 = vmatpush1.bf16.msra.mxu0 %v10050
    %11085 = vmatprep.subr.bf16.mxu0 %v10059
    %11086 = vmatpush1.bf16.msra.mxu0 %v10058
    %11087 = vmatprep.subr.bf16.mxu0 %v10067
    %11088 = vmatpush1.bf16.msra.mxu0 %v10066
    %11089 = vmatprep.subr.bf16.mxu0 %v10075
    %11090 = vmatpush1.bf16.msra.mxu0 %v10074
    %11091 = vmatprep.subr.bf16.mxu0 %v10083
    %11092 = vmatpush1.bf16.msra.mxu0 %v10082
    %11093 = vmatprep.mubr.bf16.mxu0 %v7737
    %11094 = vmatmul.mubr.bf16.gmra.mrb[0].mxu0 %v7736
    %v11095 = vpop.f32.mrb[0].mxu0
    %v11096 = vadd.f32 %v11055, %v11095
    %v11097 = vpop.f32.mrb[0].mxu0
    %v11098 = vadd.f32 %v11057, %v11097
    %v11099 = vpop.f32.mrb[0].mxu0
    %v11100 = vpop.f32.mrb[0].mxu0
    %11101 = vdwg.mxu0
    %11102 = vmatprep.subr.bf16.mxu0 %v10091
    %11103 = vmatpush1.bf16.msra.mxu0 %v10090
    %11104 = vmatprep.subr.bf16.mxu0 %v10099
    %11105 = vmatpush1.bf16.msra.mxu0 %v10098
    %11106 = vmatprep.subr.bf16.mxu0 %v10107
    %11107 = vmatpush1.bf16.msra.mxu0 %v10106
    %11108 = vmatprep.subr.bf16.mxu0 %v10115
    %11109 = vmatpush1.bf16.msra.mxu0 %v10114
    %11110 = vmatprep.subr.bf16.mxu0 %v10123
    %11111 = vmatpush1.bf16.msra.mxu0 %v10122
    %11112 = vmatprep.subr.bf16.mxu0 %v10131
    %11113 = vmatpush1.bf16.msra.mxu0 %v10130
    %11114 = vmatprep.subr.bf16.mxu0 %v10139
    %11115 = vmatpush1.bf16.msra.mxu0 %v10138
    %11116 = vmatprep.subr.bf16.mxu0 %v10147
    %11117 = vmatpush1.bf16.msra.mxu0 %v10146
    %11118 = vmatprep.subr.bf16.mxu0 %v10155
    %11119 = vmatpush1.bf16.msra.mxu0 %v10154
    %11120 = vmatprep.subr.bf16.mxu0 %v10163
    %11121 = vmatpush1.bf16.msra.mxu0 %v10162
    %11122 = vmatprep.subr.bf16.mxu0 %v10171
    %11123 = vmatpush1.bf16.msra.mxu0 %v10170
    %11124 = vmatprep.subr.bf16.mxu0 %v10179
    %11125 = vmatpush1.bf16.msra.mxu0 %v10178
    %11126 = vmatprep.subr.bf16.mxu0 %v10187
    %11127 = vmatpush1.bf16.msra.mxu0 %v10186
    %11128 = vmatprep.subr.bf16.mxu0 %v10195
    %11129 = vmatpush1.bf16.msra.mxu0 %v10194
    %11130 = vmatprep.subr.bf16.mxu0 %v10203
    %11131 = vmatpush1.bf16.msra.mxu0 %v10202
    %11132 = vmatprep.subr.bf16.mxu0 %v10211
    %11133 = vmatpush1.bf16.msra.mxu0 %v10210
    %11134 = vmatprep.mubr.bf16.mxu0 %v7739
    %11135 = vmatmul.mubr.bf16.gmra.mrb[0].mxu0 %v7738
    %v11136 = vpop.f32.mrb[0].mxu0
    %v11137 = vadd.f32 %v11096, %v11136
    %v11138 = vpop.f32.mrb[0].mxu0
    %v11139 = vadd.f32 %v11098, %v11138
    %v11140 = vpop.f32.mrb[0].mxu0
    %v11141 = vpop.f32.mrb[0].mxu0
    %11142 = vdwg.mxu0
    %11143 = vmatprep.subr.bf16.mxu0 %v10219
    %11144 = vmatpush1.bf16.msra.mxu0 %v10218
    %11145 = vmatprep.subr.bf16.mxu0 %v10227
    %11146 = vmatpush1.bf16.msra.mxu0 %v10226
    %11147 = vmatprep.subr.bf16.mxu0 %v10235
    %11148 = vmatpush1.bf16.msra.mxu0 %v10234
    %11149 = vmatprep.subr.bf16.mxu0 %v10243
    %11150 = vmatpush1.bf16.msra.mxu0 %v10242
    %11151 = vmatprep.subr.bf16.mxu0 %v10251
    %11152 = vmatpush1.bf16.msra.mxu0 %v10250
    %11153 = vmatprep.subr.bf16.mxu0 %v10259
    %11154 = vmatpush1.bf16.msra.mxu0 %v10258
    %11155 = vmatprep.subr.bf16.mxu0 %v10267
    %11156 = vmatpush1.bf16.msra.mxu0 %v10266
    %11157 = vmatprep.subr.bf16.mxu0 %v10275
    %11158 = vmatpush1.bf16.msra.mxu0 %v10274
    %11159 = vmatprep.subr.bf16.mxu0 %v10283
    %11160 = vmatpush1.bf16.msra.mxu0 %v10282
    %11161 = vmatprep.subr.bf16.mxu0 %v10291
    %11162 = vmatpush1.bf16.msra.mxu0 %v10290
    %11163 = vmatprep.subr.bf16.mxu0 %v10299
    %11164 = vmatpush1.bf16.msra.mxu0 %v10298
    %11165 = vmatprep.subr.bf16.mxu0 %v10307
    %11166 = vmatpush1.bf16.msra.mxu0 %v10306
    %11167 = vmatprep.subr.bf16.mxu0 %v10315
    %11168 = vmatpush1.bf16.msra.mxu0 %v10314
    %11169 = vmatprep.subr.bf16.mxu0 %v10323
    %11170 = vmatpush1.bf16.msra.mxu0 %v10322
    %11171 = vmatprep.subr.bf16.mxu0 %v10331
    %11172 = vmatpush1.bf16.msra.mxu0 %v10330
    %11173 = vmatprep.subr.bf16.mxu0 %v10339
    %11174 = vmatpush1.bf16.msra.mxu0 %v10338
    %11175 = vmatprep.mubr.bf16.mxu0 %v7741
    %11176 = vmatmul.mubr.bf16.gmra.mrb[0].mxu0 %v7740
    %v11177 = vpop.f32.mrb[0].mxu0
    %v11178 = vadd.f32 %v11137, %v11177
    %v11179 = vpop.f32.mrb[0].mxu0
    %v11180 = vadd.f32 %v11139, %v11179
    %v11181 = vpop.f32.mrb[0].mxu0
    %v11182 = vpop.f32.mrb[0].mxu0
    %11183 = vdwg.mxu0
    %11184 = vmatprep.subr.bf16.mxu0 %v9837
    %11185 = vmatpush1.bf16.msra.mxu0 %v9836
    %11186 = vmatprep.subr.bf16.mxu0 %v9845
    %11187 = vmatpush1.bf16.msra.mxu0 %v9844
    %11188 = vmatprep.subr.bf16.mxu0 %v9853
    %11189 = vmatpush1.bf16.msra.mxu0 %v9852
    %11190 = vmatprep.subr.bf16.mxu0 %v9861
    %11191 = vmatpush1.bf16.msra.mxu0 %v9860
    %11192 = vmatprep.subr.bf16.mxu0 %v9869
    %11193 = vmatpush1.bf16.msra.mxu0 %v9868
    %11194 = vmatprep.subr.bf16.mxu0 %v9877
    %11195 = vmatpush1.bf16.msra.mxu0 %v9876
    %11196 = vmatprep.subr.bf16.mxu0 %v9885
    %11197 = vmatpush1.bf16.msra.mxu0 %v9884
    %11198 = vmatprep.subr.bf16.mxu0 %v9893
    %11199 = vmatpush1.bf16.msra.mxu0 %v9892
    %11200 = vmatprep.subr.bf16.mxu0 %v9901
    %11201 = vmatpush1.bf16.msra.mxu0 %v9900
    %11202 = vmatprep.subr.bf16.mxu0 %v9909
    %11203 = vmatpush1.bf16.msra.mxu0 %v9908
    %11204 = vmatprep.subr.bf16.mxu0 %v9917
    %11205 = vmatpush1.bf16.msra.mxu0 %v9916
    %11206 = vmatprep.subr.bf16.mxu0 %v9925
    %11207 = vmatpush1.bf16.msra.mxu0 %v9924
    %11208 = vmatprep.subr.bf16.mxu0 %v9933
    %11209 = vmatpush1.bf16.msra.mxu0 %v9932
    %11210 = vmatprep.subr.bf16.mxu0 %v9941
    %11211 = vmatpush1.bf16.msra.mxu0 %v9940
    %11212 = vmatprep.subr.bf16.mxu0 %v9949
    %11213 = vmatpush1.bf16.msra.mxu0 %v9948
    %11214 = vmatprep.subr.bf16.mxu0 %v9957
    %11215 = vmatpush1.bf16.msra.mxu0 %v9956
    %11216 = vmatprep.mubr.bf16.mxu0 %v7735
    %11217 = vmatmul.mubr.bf16.gmra.mrb[0].mxu0 %v7734
    %v11218 = vpop.f32.mrb[0].mxu0
    %v11219 = vadd.f32 %v8275, %v11218
    %v11220 = vpop.f32.mrb[0].mxu0
    %v11221 = vadd.f32 %v8279, %v11220
    %v11222 = vpop.f32.mrb[0].mxu0
    %v11223 = vpop.f32.mrb[0].mxu0
    %11224 = vdwg.mxu0
    %11225 = vmatprep.subr.bf16.mxu0 %v9965
    %11226 = vmatpush1.bf16.msra.mxu0 %v9964
    %11227 = vmatprep.subr.bf16.mxu0 %v9973
    %11228 = vmatpush1.bf16.msra.mxu0 %v9972
    %11229 = vmatprep.subr.bf16.mxu0 %v9981
    %11230 = vmatpush1.bf16.msra.mxu0 %v9980
    %11231 = vmatprep.subr.bf16.mxu0 %v9989
    %11232 = vmatpush1.bf16.msra.mxu0 %v9988
    %11233 = vmatprep.subr.bf16.mxu0 %v9997
    %11234 = vmatpush1.bf16.msra.mxu0 %v9996
    %11235 = vmatprep.subr.bf16.mxu0 %v10005
    %11236 = vmatpush1.bf16.msra.mxu0 %v10004
    %11237 = vmatprep.subr.bf16.mxu0 %v10013
    %11238 = vmatpush1.bf16.msra.mxu0 %v10012
    %11239 = vmatprep.subr.bf16.mxu0 %v10021
    %11240 = vmatpush1.bf16.msra.mxu0 %v10020
    %11241 = vmatprep.subr.bf16.mxu0 %v10029
    %11242 = vmatpush1.bf16.msra.mxu0 %v10028
    %11243 = vmatprep.subr.bf16.mxu0 %v10037
    %11244 = vmatpush1.bf16.msra.mxu0 %v10036
    %11245 = vmatprep.subr.bf16.mxu0 %v10045
    %11246 = vmatpush1.bf16.msra.mxu0 %v10044
    %11247 = vmatprep.subr.bf16.mxu0 %v10053
    %11248 = vmatpush1.bf16.msra.mxu0 %v10052
    %11249 = vmatprep.subr.bf16.mxu0 %v10061
    %11250 = vmatpush1.bf16.msra.mxu0 %v10060
    %11251 = vmatprep.subr.bf16.mxu0 %v10069
    %11252 = vmatpush1.bf16.msra.mxu0 %v10068
    %11253 = vmatprep.subr.bf16.mxu0 %v10077
    %11254 = vmatpush1.bf16.msra.mxu0 %v10076
    %11255 = vmatprep.subr.bf16.mxu0 %v10085
    %11256 = vmatpush1.bf16.msra.mxu0 %v10084
    %11257 = vmatprep.mubr.bf16.mxu0 %v7737
    %11258 = vmatmul.mubr.bf16.gmra.mrb[0].mxu0 %v7736
    %v11259 = vpop.f32.mrb[0].mxu0
    %v11260 = vadd.f32 %v11219, %v11259
    %v11261 = vpop.f32.mrb[0].mxu0
    %v11262 = vadd.f32 %v11221, %v11261
    %v11263 = vpop.f32.mrb[0].mxu0
    %v11264 = vpop.f32.mrb[0].mxu0
    %11265 = vdwg.mxu0
    %11266 = vmatprep.subr.bf16.mxu0 %v10093
    %11267 = vmatpush1.bf16.msra.mxu0 %v10092
    %11268 = vmatprep.subr.bf16.mxu0 %v10101
    %11269 = vmatpush1.bf16.msra.mxu0 %v10100
    %11270 = vmatprep.subr.bf16.mxu0 %v10109
    %11271 = vmatpush1.bf16.msra.mxu0 %v10108
    %11272 = vmatprep.subr.bf16.mxu0 %v10117
    %11273 = vmatpush1.bf16.msra.mxu0 %v10116
    %11274 = vmatprep.subr.bf16.mxu0 %v10125
    %11275 = vmatpush1.bf16.msra.mxu0 %v10124
    %11276 = vmatprep.subr.bf16.mxu0 %v10133
    %11277 = vmatpush1.bf16.msra.mxu0 %v10132
    %11278 = vmatprep.subr.bf16.mxu0 %v10141
    %11279 = vmatpush1.bf16.msra.mxu0 %v10140
    %11280 = vmatprep.subr.bf16.mxu0 %v10149
    %11281 = vmatpush1.bf16.msra.mxu0 %v10148
    %11282 = vmatprep.subr.bf16.mxu0 %v10157
    %11283 = vmatpush1.bf16.msra.mxu0 %v10156
    %11284 = vmatprep.subr.bf16.mxu0 %v10165
    %11285 = vmatpush1.bf16.msra.mxu0 %v10164
    %11286 = vmatprep.subr.bf16.mxu0 %v10173
    %11287 = vmatpush1.bf16.msra.mxu0 %v10172
    %11288 = vmatprep.subr.bf16.mxu0 %v10181
    %11289 = vmatpush1.bf16.msra.mxu0 %v10180
    %11290 = vmatprep.subr.bf16.mxu0 %v10189
    %11291 = vmatpush1.bf16.msra.mxu0 %v10188
    %11292 = vmatprep.subr.bf16.mxu0 %v10197
    %11293 = vmatpush1.bf16.msra.mxu0 %v10196
    %11294 = vmatprep.subr.bf16.mxu0 %v10205
    %11295 = vmatpush1.bf16.msra.mxu0 %v10204
    %11296 = vmatprep.subr.bf16.mxu0 %v10213
    %11297 = vmatpush1.bf16.msra.mxu0 %v10212
    %11298 = vmatprep.mubr.bf16.mxu0 %v7739
    %11299 = vmatmul.mubr.bf16.gmra.mrb[0].mxu0 %v7738
    %v11300 = vpop.f32.mrb[0].mxu0
    %v11301 = vadd.f32 %v11260, %v11300
    %v11302 = vpop.f32.mrb[0].mxu0
    %v11303 = vadd.f32 %v11262, %v11302
    %v11304 = vpop.f32.mrb[0].mxu0
    %v11305 = vpop.f32.mrb[0].mxu0
    %11306 = vdwg.mxu0
    %11307 = vmatprep.subr.bf16.mxu0 %v10221
    %11308 = vmatpush1.bf16.msra.mxu0 %v10220
    %11309 = vmatprep.subr.bf16.mxu0 %v10229
    %11310 = vmatpush1.bf16.msra.mxu0 %v10228
    %11311 = vmatprep.subr.bf16.mxu0 %v10237
    %11312 = vmatpush1.bf16.msra.mxu0 %v10236
    %11313 = vmatprep.subr.bf16.mxu0 %v10245
    %11314 = vmatpush1.bf16.msra.mxu0 %v10244
    %11315 = vmatprep.subr.bf16.mxu0 %v10253
    %11316 = vmatpush1.bf16.msra.mxu0 %v10252
    %11317 = vmatprep.subr.bf16.mxu0 %v10261
    %11318 = vmatpush1.bf16.msra.mxu0 %v10260
    %11319 = vmatprep.subr.bf16.mxu0 %v10269
    %11320 = vmatpush1.bf16.msra.mxu0 %v10268
    %11321 = vmatprep.subr.bf16.mxu0 %v10277
    %11322 = vmatpush1.bf16.msra.mxu0 %v10276
    %11323 = vmatprep.subr.bf16.mxu0 %v10285
    %11324 = vmatpush1.bf16.msra.mxu0 %v10284
    %11325 = vmatprep.subr.bf16.mxu0 %v10293
    %11326 = vmatpush1.bf16.msra.mxu0 %v10292
    %11327 = vmatprep.subr.bf16.mxu0 %v10301
    %11328 = vmatpush1.bf16.msra.mxu0 %v10300
    %11329 = vmatprep.subr.bf16.mxu0 %v10309
    %11330 = vmatpush1.bf16.msra.mxu0 %v10308
    %11331 = vmatprep.subr.bf16.mxu0 %v10317
    %11332 = vmatpush1.bf16.msra.mxu0 %v10316
    %11333 = vmatprep.subr.bf16.mxu0 %v10325
    %11334 = vmatpush1.bf16.msra.mxu0 %v10324
    %11335 = vmatprep.subr.bf16.mxu0 %v10333
    %11336 = vmatpush1.bf16.msra.mxu0 %v10332
    %11337 = vmatprep.subr.bf16.mxu0 %v10341
    %11338 = vmatpush1.bf16.msra.mxu0 %v10340
    %11339 = vmatprep.mubr.bf16.mxu0 %v7741
    %11340 = vmatmul.mubr.bf16.gmra.mrb[0].mxu0 %v7740
    %v11341 = vpop.f32.mrb[0].mxu0
    %v11342 = vadd.f32 %v11301, %v11341
    %v11343 = vpop.f32.mrb[0].mxu0
    %v11344 = vadd.f32 %v11303, %v11343
    %v11345 = vpop.f32.mrb[0].mxu0
    %v11346 = vpop.f32.mrb[0].mxu0
    %11347 = vdwg.mxu0
    %11348 = vmatprep.subr.bf16.mxu0 %v9839
    %11349 = vmatpush1.bf16.msra.mxu0 %v9838
    %11350 = vmatprep.subr.bf16.mxu0 %v9847
    %11351 = vmatpush1.bf16.msra.mxu0 %v9846
    %11352 = vmatprep.subr.bf16.mxu0 %v9855
    %11353 = vmatpush1.bf16.msra.mxu0 %v9854
    %11354 = vmatprep.subr.bf16.mxu0 %v9863
    %11355 = vmatpush1.bf16.msra.mxu0 %v9862
    %11356 = vmatprep.subr.bf16.mxu0 %v9871
    %11357 = vmatpush1.bf16.msra.mxu0 %v9870
    %11358 = vmatprep.subr.bf16.mxu0 %v9879
    %11359 = vmatpush1.bf16.msra.mxu0 %v9878
    %11360 = vmatprep.subr.bf16.mxu0 %v9887
    %11361 = vmatpush1.bf16.msra.mxu0 %v9886
    %11362 = vmatprep.subr.bf16.mxu0 %v9895
    %11363 = vmatpush1.bf16.msra.mxu0 %v9894
    %11364 = vmatprep.subr.bf16.mxu0 %v9903
    %11365 = vmatpush1.bf16.msra.mxu0 %v9902
    %11366 = vmatprep.subr.bf16.mxu0 %v9911
    %11367 = vmatpush1.bf16.msra.mxu0 %v9910
    %11368 = vmatprep.subr.bf16.mxu0 %v9919
    %11369 = vmatpush1.bf16.msra.mxu0 %v9918
    %11370 = vmatprep.subr.bf16.mxu0 %v9927
    %11371 = vmatpush1.bf16.msra.mxu0 %v9926
    %11372 = vmatprep.subr.bf16.mxu0 %v9935
    %11373 = vmatpush1.bf16.msra.mxu0 %v9934
    %11374 = vmatprep.subr.bf16.mxu0 %v9943
    %11375 = vmatpush1.bf16.msra.mxu0 %v9942
    %11376 = vmatprep.subr.bf16.mxu0 %v9951
    %11377 = vmatpush1.bf16.msra.mxu0 %v9950
    %11378 = vmatprep.subr.bf16.mxu0 %v9959
    %11379 = vmatpush1.bf16.msra.mxu0 %v9958
    %11380 = vmatprep.mubr.bf16.mxu0 %v7735
    %11381 = vmatmul.mubr.bf16.gmra.mrb[0].mxu0 %v7734
    %v11382 = vpop.f32.mrb[0].mxu0
    %v11383 = vadd.f32 %v8283, %v11382
    %v11384 = vpop.f32.mrb[0].mxu0
    %v11385 = vadd.f32 %v8287, %v11384
    %v11386 = vpop.f32.mrb[0].mxu0
    %v11387 = vpop.f32.mrb[0].mxu0
    %11388 = vdwg.mxu0
    %11389 = vmatprep.subr.bf16.mxu0 %v9967
    %11390 = vmatpush1.bf16.msra.mxu0 %v9966
    %11391 = vmatprep.subr.bf16.mxu0 %v9975
    %11392 = vmatpush1.bf16.msra.mxu0 %v9974
    %11393 = vmatprep.subr.bf16.mxu0 %v9983
    %11394 = vmatpush1.bf16.msra.mxu0 %v9982
    %11395 = vmatprep.subr.bf16.mxu0 %v9991
    %11396 = vmatpush1.bf16.msra.mxu0 %v9990
    %11397 = vmatprep.subr.bf16.mxu0 %v9999
    %11398 = vmatpush1.bf16.msra.mxu0 %v9998
    %11399 = vmatprep.subr.bf16.mxu0 %v10007
    %11400 = vmatpush1.bf16.msra.mxu0 %v10006
    %11401 = vmatprep.subr.bf16.mxu0 %v10015
    %11402 = vmatpush1.bf16.msra.mxu0 %v10014
    %11403 = vmatprep.subr.bf16.mxu0 %v10023
    %11404 = vmatpush1.bf16.msra.mxu0 %v10022
    %11405 = vmatprep.subr.bf16.mxu0 %v10031
    %11406 = vmatpush1.bf16.msra.mxu0 %v10030
    %11407 = vmatprep.subr.bf16.mxu0 %v10039
    %11408 = vmatpush1.bf16.msra.mxu0 %v10038
    %11409 = vmatprep.subr.bf16.mxu0 %v10047
    %11410 = vmatpush1.bf16.msra.mxu0 %v10046
    %11411 = vmatprep.subr.bf16.mxu0 %v10055
    %11412 = vmatpush1.bf16.msra.mxu0 %v10054
    %11413 = vmatprep.subr.bf16.mxu0 %v10063
    %11414 = vmatpush1.bf16.msra.mxu0 %v10062
    %11415 = vmatprep.subr.bf16.mxu0 %v10071
    %11416 = vmatpush1.bf16.msra.mxu0 %v10070
    %11417 = vmatprep.subr.bf16.mxu0 %v10079
    %11418 = vmatpush1.bf16.msra.mxu0 %v10078
    %11419 = vmatprep.subr.bf16.mxu0 %v10087
    %11420 = vmatpush1.bf16.msra.mxu0 %v10086
    %11421 = vmatprep.mubr.bf16.mxu0 %v7737
    %11422 = vmatmul.mubr.bf16.gmra.mrb[0].mxu0 %v7736
    %v11423 = vpop.f32.mrb[0].mxu0
    %v11424 = vadd.f32 %v11383, %v11423
    %v11425 = vpop.f32.mrb[0].mxu0
    %v11426 = vadd.f32 %v11385, %v11425
    %v11427 = vpop.f32.mrb[0].mxu0
    %v11428 = vpop.f32.mrb[0].mxu0
    %11429 = vdwg.mxu0
    %11430 = vmatprep.subr.bf16.mxu0 %v10095
    %11431 = vmatpush1.bf16.msra.mxu0 %v10094
    %11432 = vmatprep.subr.bf16.mxu0 %v10103
    %11433 = vmatpush1.bf16.msra.mxu0 %v10102
    %11434 = vmatprep.subr.bf16.mxu0 %v10111
    %11435 = vmatpush1.bf16.msra.mxu0 %v10110
    %11436 = vmatprep.subr.bf16.mxu0 %v10119
    %11437 = vmatpush1.bf16.msra.mxu0 %v10118
    %11438 = vmatprep.subr.bf16.mxu0 %v10127
    %11439 = vmatpush1.bf16.msra.mxu0 %v10126
    %11440 = vmatprep.subr.bf16.mxu0 %v10135
    %11441 = vmatpush1.bf16.msra.mxu0 %v10134
    %11442 = vmatprep.subr.bf16.mxu0 %v10143
    %11443 = vmatpush1.bf16.msra.mxu0 %v10142
    %11444 = vmatprep.subr.bf16.mxu0 %v10151
    %11445 = vmatpush1.bf16.msra.mxu0 %v10150
    %11446 = vmatprep.subr.bf16.mxu0 %v10159
    %11447 = vmatpush1.bf16.msra.mxu0 %v10158
    %11448 = vmatprep.subr.bf16.mxu0 %v10167
    %11449 = vmatpush1.bf16.msra.mxu0 %v10166
    %11450 = vmatprep.subr.bf16.mxu0 %v10175
    %11451 = vmatpush1.bf16.msra.mxu0 %v10174
    %11452 = vmatprep.subr.bf16.mxu0 %v10183
    %11453 = vmatpush1.bf16.msra.mxu0 %v10182
    %11454 = vmatprep.subr.bf16.mxu0 %v10191
    %11455 = vmatpush1.bf16.msra.mxu0 %v10190
    %11456 = vmatprep.subr.bf16.mxu0 %v10199
    %11457 = vmatpush1.bf16.msra.mxu0 %v10198
    %11458 = vmatprep.subr.bf16.mxu0 %v10207
    %11459 = vmatpush1.bf16.msra.mxu0 %v10206
    %11460 = vmatprep.subr.bf16.mxu0 %v10215
    %11461 = vmatpush1.bf16.msra.mxu0 %v10214
    %11462 = vmatprep.mubr.bf16.mxu0 %v7739
    %11463 = vmatmul.mubr.bf16.gmra.mrb[0].mxu0 %v7738
    %v11464 = vpop.f32.mrb[0].mxu0
    %v11465 = vadd.f32 %v11424, %v11464
    %v11466 = vpop.f32.mrb[0].mxu0
    %v11467 = vadd.f32 %v11426, %v11466
    %v11468 = vpop.f32.mrb[0].mxu0
    %v11469 = vpop.f32.mrb[0].mxu0
    %11470 = vdwg.mxu0
    %11471 = vmatprep.subr.bf16.mxu0 %v10223
    %11472 = vmatpush1.bf16.msra.mxu0 %v10222
    %11473 = vmatprep.subr.bf16.mxu0 %v10231
    %11474 = vmatpush1.bf16.msra.mxu0 %v10230
    %11475 = vmatprep.subr.bf16.mxu0 %v10239
    %11476 = vmatpush1.bf16.msra.mxu0 %v10238
    %11477 = vmatprep.subr.bf16.mxu0 %v10247
    %11478 = vmatpush1.bf16.msra.mxu0 %v10246
    %11479 = vmatprep.subr.bf16.mxu0 %v10255
    %11480 = vmatpush1.bf16.msra.mxu0 %v10254
    %11481 = vmatprep.subr.bf16.mxu0 %v10263
    %11482 = vmatpush1.bf16.msra.mxu0 %v10262
    %11483 = vmatprep.subr.bf16.mxu0 %v10271
    %11484 = vmatpush1.bf16.msra.mxu0 %v10270
    %11485 = vmatprep.subr.bf16.mxu0 %v10279
    %11486 = vmatpush1.bf16.msra.mxu0 %v10278
    %11487 = vmatprep.subr.bf16.mxu0 %v10287
    %11488 = vmatpush1.bf16.msra.mxu0 %v10286
    %11489 = vmatprep.subr.bf16.mxu0 %v10295
    %11490 = vmatpush1.bf16.msra.mxu0 %v10294
    %11491 = vmatprep.subr.bf16.mxu0 %v10303
    %11492 = vmatpush1.bf16.msra.mxu0 %v10302
    %11493 = vmatprep.subr.bf16.mxu0 %v10311
    %11494 = vmatpush1.bf16.msra.mxu0 %v10310
    %11495 = vmatprep.subr.bf16.mxu0 %v10319
    %11496 = vmatpush1.bf16.msra.mxu0 %v10318
    %11497 = vmatprep.subr.bf16.mxu0 %v10327
    %11498 = vmatpush1.bf16.msra.mxu0 %v10326
    %11499 = vmatprep.subr.bf16.mxu0 %v10335
    %11500 = vmatpush1.bf16.msra.mxu0 %v10334
    %11501 = vmatprep.subr.bf16.mxu0 %v10343
    %11502 = vmatpush1.bf16.msra.mxu0 %v10342
    %11503 = vmatprep.mubr.bf16.mxu0 %v7741
    %11504 = vmatmul.mubr.bf16.gmra.mrb[0].mxu0 %v7740
    %v11505 = vpop.f32.mrb[0].mxu0
    %v11506 = vadd.f32 %v11465, %v11505
    %v11507 = vpop.f32.mrb[0].mxu0
    %v11508 = vadd.f32 %v11467, %v11507
    %v11509 = vpop.f32.mrb[0].mxu0
    %v11510 = vpop.f32.mrb[0].mxu0
    %11511 = vdwg.mxu0
    %v11512 = vmax.f32 %v11014, 0.0
    %v11513 = vmax.f32 %v11016, 0.0
    %v11514 = vmax.f32 %v11178, 0.0
    %v11515 = vmax.f32 %v11180, 0.0
    %v11516 = vmax.f32 %v11342, 0.0
    %v11517 = vmax.f32 %v11344, 0.0
    %v11518 = vmax.f32 %v11506, 0.0
    %v11519 = vmax.f32 %v11508, 0.0
    %v11520 = vpack.c.bf16 %v11512, %v11512
    %v11521 = vpack.c.bf16 %v11513, %v11513
    %v11522 = vpack.c.bf16 %v11514, %v11514
    %v11523 = vpack.c.bf16 %v11515, %v11515
    %v11524 = vpack.c.bf16 %v11516, %v11516
    %v11525 = vpack.c.bf16 %v11517, %v11517
    %v11526 = vpack.c.bf16 %v11518, %v11518
    %v11527 = vpack.c.bf16 %v11519, %v11519
    %v11528 = vld [vmem:[#allocation10] sm:$0xff]
    %v11529 = vld [vmem:[#allocation10 + $0x8] sm:$0xff]
    %v11530 = vld [vmem:[#allocation10 + $0x10] sm:$0xff]
    %v11531 = vld [vmem:[#allocation10 + $0x18] sm:$0xff]
    %v11532 = vld [vmem:[#allocation10 + $0x20] sm:$0xff]
    %v11533 = vld [vmem:[#allocation10 + $0x28] sm:$0xff]
    %v11534 = vld [vmem:[#allocation10 + $0x30] sm:$0xff]
    %v11535 = vld [vmem:[#allocation10 + $0x38] sm:$0xff]
    %v11536 = vld [vmem:[#allocation10 + $0x40] sm:$0xff]
    %v11537 = vld [vmem:[#allocation10 + $0x48] sm:$0xff]
    %v11538 = vld [vmem:[#allocation10 + $0x50] sm:$0xff]
    %v11539 = vld [vmem:[#allocation10 + $0x58] sm:$0xff]
    %v11540 = vld [vmem:[#allocation10 + $0x60] sm:$0xff]
    %v11541 = vld [vmem:[#allocation10 + $0x68] sm:$0xff]
    %v11542 = vld [vmem:[#allocation10 + $0x70] sm:$0xff]
    %v11543 = vld [vmem:[#allocation10 + $0x78] sm:$0xff]
    %v11544 = vld [vmem:[#allocation10 + $0x80] sm:$0xff]
    %v11545 = vld [vmem:[#allocation10 + $0x88] sm:$0xff]
    %v11546 = vld [vmem:[#allocation10 + $0x90] sm:$0xff]
    %v11547 = vld [vmem:[#allocation10 + $0x98] sm:$0xff]
    %v11548 = vld [vmem:[#allocation10 + $0xa0] sm:$0xff]
    %v11549 = vld [vmem:[#allocation10 + $0xa8] sm:$0xff]
    %v11550 = vld [vmem:[#allocation10 + $0xb0] sm:$0xff]
    %v11551 = vld [vmem:[#allocation10 + $0xb8] sm:$0xff]
    %v11552 = vld [vmem:[#allocation10 + $0xc0] sm:$0xff]
    %v11553 = vld [vmem:[#allocation10 + $0xc8] sm:$0xff]
    %v11554 = vld [vmem:[#allocation10 + $0xd0] sm:$0xff]
    %v11555 = vld [vmem:[#allocation10 + $0xd8] sm:$0xff]
    %v11556 = vld [vmem:[#allocation10 + $0xe0] sm:$0xff]
    %v11557 = vld [vmem:[#allocation10 + $0xe8] sm:$0xff]
    %v11558 = vld [vmem:[#allocation10 + $0xf0] sm:$0xff]
    %v11559 = vld [vmem:[#allocation10 + $0xf8] sm:$0xff]
    %v11560 = vld [vmem:[#allocation10 + $0x100] sm:$0xff]
    %v11561 = vld [vmem:[#allocation10 + $0x108] sm:$0xff]
    %v11562 = vld [vmem:[#allocation10 + $0x110] sm:$0xff]
    %v11563 = vld [vmem:[#allocation10 + $0x118] sm:$0xff]
    %v11564 = vld [vmem:[#allocation10 + $0x120] sm:$0xff]
    %v11565 = vld [vmem:[#allocation10 + $0x128] sm:$0xff]
    %v11566 = vld [vmem:[#allocation10 + $0x130] sm:$0xff]
    %v11567 = vld [vmem:[#allocation10 + $0x138] sm:$0xff]
    %v11568 = vld [vmem:[#allocation10 + $0x140] sm:$0xff]
    %v11569 = vld [vmem:[#allocation10 + $0x148] sm:$0xff]
    %v11570 = vld [vmem:[#allocation10 + $0x150] sm:$0xff]
    %v11571 = vld [vmem:[#allocation10 + $0x158] sm:$0xff]
    %v11572 = vld [vmem:[#allocation10 + $0x160] sm:$0xff]
    %v11573 = vld [vmem:[#allocation10 + $0x168] sm:$0xff]
    %v11574 = vld [vmem:[#allocation10 + $0x170] sm:$0xff]
    %v11575 = vld [vmem:[#allocation10 + $0x178] sm:$0xff]
    %v11576 = vld [vmem:[#allocation10 + $0x180] sm:$0xff]
    %v11577 = vld [vmem:[#allocation10 + $0x188] sm:$0xff]
    %v11578 = vld [vmem:[#allocation10 + $0x190] sm:$0xff]
    %v11579 = vld [vmem:[#allocation10 + $0x198] sm:$0xff]
    %v11580 = vld [vmem:[#allocation10 + $0x1a0] sm:$0xff]
    %v11581 = vld [vmem:[#allocation10 + $0x1a8] sm:$0xff]
    %v11582 = vld [vmem:[#allocation10 + $0x1b0] sm:$0xff]
    %v11583 = vld [vmem:[#allocation10 + $0x1b8] sm:$0xff]
    %v11584 = vld [vmem:[#allocation10 + $0x1c0] sm:$0xff]
    %v11585 = vld [vmem:[#allocation10 + $0x1c8] sm:$0xff]
    %v11586 = vld [vmem:[#allocation10 + $0x1d0] sm:$0xff]
    %v11587 = vld [vmem:[#allocation10 + $0x1d8] sm:$0xff]
    %v11588 = vld [vmem:[#allocation10 + $0x1e0] sm:$0xff]
    %v11589 = vld [vmem:[#allocation10 + $0x1e8] sm:$0xff]
    %v11590 = vld [vmem:[#allocation10 + $0x1f0] sm:$0xff]
    %v11591 = vld [vmem:[#allocation10 + $0x1f8] sm:$0xff]
    %v11592 = vld [vmem:[#allocation10 + $0x200] sm:$0xff]
    %v11593 = vld [vmem:[#allocation10 + $0x208] sm:$0xff]
    %v11594 = vld [vmem:[#allocation10 + $0x210] sm:$0xff]
    %v11595 = vld [vmem:[#allocation10 + $0x218] sm:$0xff]
    %v11596 = vld [vmem:[#allocation10 + $0x220] sm:$0xff]
    %v11597 = vld [vmem:[#allocation10 + $0x228] sm:$0xff]
    %v11598 = vld [vmem:[#allocation10 + $0x230] sm:$0xff]
    %v11599 = vld [vmem:[#allocation10 + $0x238] sm:$0xff]
    %v11600 = vld [vmem:[#allocation10 + $0x240] sm:$0xff]
    %v11601 = vld [vmem:[#allocation10 + $0x248] sm:$0xff]
    %v11602 = vld [vmem:[#allocation10 + $0x250] sm:$0xff]
    %v11603 = vld [vmem:[#allocation10 + $0x258] sm:$0xff]
    %v11604 = vld [vmem:[#allocation10 + $0x260] sm:$0xff]
    %v11605 = vld [vmem:[#allocation10 + $0x268] sm:$0xff]
    %v11606 = vld [vmem:[#allocation10 + $0x270] sm:$0xff]
    %v11607 = vld [vmem:[#allocation10 + $0x278] sm:$0xff]
    %v11608 = vld [vmem:[#allocation10 + $0x280] sm:$0xff]
    %v11609 = vld [vmem:[#allocation10 + $0x288] sm:$0xff]
    %v11610 = vld [vmem:[#allocation10 + $0x290] sm:$0xff]
    %v11611 = vld [vmem:[#allocation10 + $0x298] sm:$0xff]
    %v11612 = vld [vmem:[#allocation10 + $0x2a0] sm:$0xff]
    %v11613 = vld [vmem:[#allocation10 + $0x2a8] sm:$0xff]
    %v11614 = vld [vmem:[#allocation10 + $0x2b0] sm:$0xff]
    %v11615 = vld [vmem:[#allocation10 + $0x2b8] sm:$0xff]
    %v11616 = vld [vmem:[#allocation10 + $0x2c0] sm:$0xff]
    %v11617 = vld [vmem:[#allocation10 + $0x2c8] sm:$0xff]
    %v11618 = vld [vmem:[#allocation10 + $0x2d0] sm:$0xff]
    %v11619 = vld [vmem:[#allocation10 + $0x2d8] sm:$0xff]
    %v11620 = vld [vmem:[#allocation10 + $0x2e0] sm:$0xff]
    %v11621 = vld [vmem:[#allocation10 + $0x2e8] sm:$0xff]
    %v11622 = vld [vmem:[#allocation10 + $0x2f0] sm:$0xff]
    %v11623 = vld [vmem:[#allocation10 + $0x2f8] sm:$0xff]
    %v11624 = vld [vmem:[#allocation10 + $0x300] sm:$0xff]
    %v11625 = vld [vmem:[#allocation10 + $0x308] sm:$0xff]
    %v11626 = vld [vmem:[#allocation10 + $0x310] sm:$0xff]
    %v11627 = vld [vmem:[#allocation10 + $0x318] sm:$0xff]
    %v11628 = vld [vmem:[#allocation10 + $0x320] sm:$0xff]
    %v11629 = vld [vmem:[#allocation10 + $0x328] sm:$0xff]
    %v11630 = vld [vmem:[#allocation10 + $0x330] sm:$0xff]
    %v11631 = vld [vmem:[#allocation10 + $0x338] sm:$0xff]
    %v11632 = vld [vmem:[#allocation10 + $0x340] sm:$0xff]
    %v11633 = vld [vmem:[#allocation10 + $0x348] sm:$0xff]
    %v11634 = vld [vmem:[#allocation10 + $0x350] sm:$0xff]
    %v11635 = vld [vmem:[#allocation10 + $0x358] sm:$0xff]
    %v11636 = vld [vmem:[#allocation10 + $0x360] sm:$0xff]
    %v11637 = vld [vmem:[#allocation10 + $0x368] sm:$0xff]
    %v11638 = vld [vmem:[#allocation10 + $0x370] sm:$0xff]
    %v11639 = vld [vmem:[#allocation10 + $0x378] sm:$0xff]
    %v11640 = vld [vmem:[#allocation10 + $0x380] sm:$0xff]
    %v11641 = vld [vmem:[#allocation10 + $0x388] sm:$0xff]
    %v11642 = vld [vmem:[#allocation10 + $0x390] sm:$0xff]
    %v11643 = vld [vmem:[#allocation10 + $0x398] sm:$0xff]
    %v11644 = vld [vmem:[#allocation10 + $0x3a0] sm:$0xff]
    %v11645 = vld [vmem:[#allocation10 + $0x3a8] sm:$0xff]
    %v11646 = vld [vmem:[#allocation10 + $0x3b0] sm:$0xff]
    %v11647 = vld [vmem:[#allocation10 + $0x3b8] sm:$0xff]
    %v11648 = vld [vmem:[#allocation10 + $0x3c0] sm:$0xff]
    %v11649 = vld [vmem:[#allocation10 + $0x3c8] sm:$0xff]
    %v11650 = vld [vmem:[#allocation10 + $0x3d0] sm:$0xff]
    %v11651 = vld [vmem:[#allocation10 + $0x3d8] sm:$0xff]
    %v11652 = vld [vmem:[#allocation10 + $0x3e0] sm:$0xff]
    %v11653 = vld [vmem:[#allocation10 + $0x3e8] sm:$0xff]
    %v11654 = vld [vmem:[#allocation10 + $0x3f0] sm:$0xff]
    %v11655 = vld [vmem:[#allocation10 + $0x3f8] sm:$0xff]
    %v11656 = vld [vmem:[#allocation10 + $0x400] sm:$0xff]
    %v11657 = vld [vmem:[#allocation10 + $0x408] sm:$0xff]
    %v11658 = vld [vmem:[#allocation10 + $0x410] sm:$0xff]
    %v11659 = vld [vmem:[#allocation10 + $0x418] sm:$0xff]
    %v11660 = vld [vmem:[#allocation10 + $0x420] sm:$0xff]
    %v11661 = vld [vmem:[#allocation10 + $0x428] sm:$0xff]
    %v11662 = vld [vmem:[#allocation10 + $0x430] sm:$0xff]
    %v11663 = vld [vmem:[#allocation10 + $0x438] sm:$0xff]
    %v11664 = vld [vmem:[#allocation10 + $0x440] sm:$0xff]
    %v11665 = vld [vmem:[#allocation10 + $0x448] sm:$0xff]
    %v11666 = vld [vmem:[#allocation10 + $0x450] sm:$0xff]
    %v11667 = vld [vmem:[#allocation10 + $0x458] sm:$0xff]
    %v11668 = vld [vmem:[#allocation10 + $0x460] sm:$0xff]
    %v11669 = vld [vmem:[#allocation10 + $0x468] sm:$0xff]
    %v11670 = vld [vmem:[#allocation10 + $0x470] sm:$0xff]
    %v11671 = vld [vmem:[#allocation10 + $0x478] sm:$0xff]
    %v11672 = vld [vmem:[#allocation10 + $0x480] sm:$0xff]
    %v11673 = vld [vmem:[#allocation10 + $0x488] sm:$0xff]
    %v11674 = vld [vmem:[#allocation10 + $0x490] sm:$0xff]
    %v11675 = vld [vmem:[#allocation10 + $0x498] sm:$0xff]
    %v11676 = vld [vmem:[#allocation10 + $0x4a0] sm:$0xff]
    %v11677 = vld [vmem:[#allocation10 + $0x4a8] sm:$0xff]
    %v11678 = vld [vmem:[#allocation10 + $0x4b0] sm:$0xff]
    %v11679 = vld [vmem:[#allocation10 + $0x4b8] sm:$0xff]
    %v11680 = vld [vmem:[#allocation10 + $0x4c0] sm:$0xff]
    %v11681 = vld [vmem:[#allocation10 + $0x4c8] sm:$0xff]
    %v11682 = vld [vmem:[#allocation10 + $0x4d0] sm:$0xff]
    %v11683 = vld [vmem:[#allocation10 + $0x4d8] sm:$0xff]
    %v11684 = vld [vmem:[#allocation10 + $0x4e0] sm:$0xff]
    %v11685 = vld [vmem:[#allocation10 + $0x4e8] sm:$0xff]
    %v11686 = vld [vmem:[#allocation10 + $0x4f0] sm:$0xff]
    %v11687 = vld [vmem:[#allocation10 + $0x4f8] sm:$0xff]
    %v11688 = vld [vmem:[#allocation10 + $0x500] sm:$0xff]
    %v11689 = vld [vmem:[#allocation10 + $0x508] sm:$0xff]
    %v11690 = vld [vmem:[#allocation10 + $0x510] sm:$0xff]
    %v11691 = vld [vmem:[#allocation10 + $0x518] sm:$0xff]
    %v11692 = vld [vmem:[#allocation10 + $0x520] sm:$0xff]
    %v11693 = vld [vmem:[#allocation10 + $0x528] sm:$0xff]
    %v11694 = vld [vmem:[#allocation10 + $0x530] sm:$0xff]
    %v11695 = vld [vmem:[#allocation10 + $0x538] sm:$0xff]
    %v11696 = vld [vmem:[#allocation10 + $0x540] sm:$0xff]
    %v11697 = vld [vmem:[#allocation10 + $0x548] sm:$0xff]
    %v11698 = vld [vmem:[#allocation10 + $0x550] sm:$0xff]
    %v11699 = vld [vmem:[#allocation10 + $0x558] sm:$0xff]
    %v11700 = vld [vmem:[#allocation10 + $0x560] sm:$0xff]
    %v11701 = vld [vmem:[#allocation10 + $0x568] sm:$0xff]
    %v11702 = vld [vmem:[#allocation10 + $0x570] sm:$0xff]
    %v11703 = vld [vmem:[#allocation10 + $0x578] sm:$0xff]
    %v11704 = vld [vmem:[#allocation10 + $0x580] sm:$0xff]
    %v11705 = vld [vmem:[#allocation10 + $0x588] sm:$0xff]
    %v11706 = vld [vmem:[#allocation10 + $0x590] sm:$0xff]
    %v11707 = vld [vmem:[#allocation10 + $0x598] sm:$0xff]
    %v11708 = vld [vmem:[#allocation10 + $0x5a0] sm:$0xff]
    %v11709 = vld [vmem:[#allocation10 + $0x5a8] sm:$0xff]
    %v11710 = vld [vmem:[#allocation10 + $0x5b0] sm:$0xff]
    %v11711 = vld [vmem:[#allocation10 + $0x5b8] sm:$0xff]
    %v11712 = vld [vmem:[#allocation10 + $0x5c0] sm:$0xff]
    %v11713 = vld [vmem:[#allocation10 + $0x5c8] sm:$0xff]
    %v11714 = vld [vmem:[#allocation10 + $0x5d0] sm:$0xff]
    %v11715 = vld [vmem:[#allocation10 + $0x5d8] sm:$0xff]
    %v11716 = vld [vmem:[#allocation10 + $0x5e0] sm:$0xff]
    %v11717 = vld [vmem:[#allocation10 + $0x5e8] sm:$0xff]
    %v11718 = vld [vmem:[#allocation10 + $0x5f0] sm:$0xff]
    %v11719 = vld [vmem:[#allocation10 + $0x5f8] sm:$0xff]
    %v11720 = vld [vmem:[#allocation10 + $0x600] sm:$0xff]
    %v11721 = vld [vmem:[#allocation10 + $0x608] sm:$0xff]
    %v11722 = vld [vmem:[#allocation10 + $0x610] sm:$0xff]
    %v11723 = vld [vmem:[#allocation10 + $0x618] sm:$0xff]
    %v11724 = vld [vmem:[#allocation10 + $0x620] sm:$0xff]
    %v11725 = vld [vmem:[#allocation10 + $0x628] sm:$0xff]
    %v11726 = vld [vmem:[#allocation10 + $0x630] sm:$0xff]
    %v11727 = vld [vmem:[#allocation10 + $0x638] sm:$0xff]
    %v11728 = vld [vmem:[#allocation10 + $0x640] sm:$0xff]
    %v11729 = vld [vmem:[#allocation10 + $0x648] sm:$0xff]
    %v11730 = vld [vmem:[#allocation10 + $0x650] sm:$0xff]
    %v11731 = vld [vmem:[#allocation10 + $0x658] sm:$0xff]
    %v11732 = vld [vmem:[#allocation10 + $0x660] sm:$0xff]
    %v11733 = vld [vmem:[#allocation10 + $0x668] sm:$0xff]
    %v11734 = vld [vmem:[#allocation10 + $0x670] sm:$0xff]
    %v11735 = vld [vmem:[#allocation10 + $0x678] sm:$0xff]
    %v11736 = vld [vmem:[#allocation10 + $0x680] sm:$0xff]
    %v11737 = vld [vmem:[#allocation10 + $0x688] sm:$0xff]
    %v11738 = vld [vmem:[#allocation10 + $0x690] sm:$0xff]
    %v11739 = vld [vmem:[#allocation10 + $0x698] sm:$0xff]
    %v11740 = vld [vmem:[#allocation10 + $0x6a0] sm:$0xff]
    %v11741 = vld [vmem:[#allocation10 + $0x6a8] sm:$0xff]
    %v11742 = vld [vmem:[#allocation10 + $0x6b0] sm:$0xff]
    %v11743 = vld [vmem:[#allocation10 + $0x6b8] sm:$0xff]
    %v11744 = vld [vmem:[#allocation10 + $0x6c0] sm:$0xff]
    %v11745 = vld [vmem:[#allocation10 + $0x6c8] sm:$0xff]
    %v11746 = vld [vmem:[#allocation10 + $0x6d0] sm:$0xff]
    %v11747 = vld [vmem:[#allocation10 + $0x6d8] sm:$0xff]
    %v11748 = vld [vmem:[#allocation10 + $0x6e0] sm:$0xff]
    %v11749 = vld [vmem:[#allocation10 + $0x6e8] sm:$0xff]
    %v11750 = vld [vmem:[#allocation10 + $0x6f0] sm:$0xff]
    %v11751 = vld [vmem:[#allocation10 + $0x6f8] sm:$0xff]
    %v11752 = vld [vmem:[#allocation10 + $0x700] sm:$0xff]
    %v11753 = vld [vmem:[#allocation10 + $0x708] sm:$0xff]
    %v11754 = vld [vmem:[#allocation10 + $0x710] sm:$0xff]
    %v11755 = vld [vmem:[#allocation10 + $0x718] sm:$0xff]
    %v11756 = vld [vmem:[#allocation10 + $0x720] sm:$0xff]
    %v11757 = vld [vmem:[#allocation10 + $0x728] sm:$0xff]
    %v11758 = vld [vmem:[#allocation10 + $0x730] sm:$0xff]
    %v11759 = vld [vmem:[#allocation10 + $0x738] sm:$0xff]
    %v11760 = vld [vmem:[#allocation10 + $0x740] sm:$0xff]
    %v11761 = vld [vmem:[#allocation10 + $0x748] sm:$0xff]
    %v11762 = vld [vmem:[#allocation10 + $0x750] sm:$0xff]
    %v11763 = vld [vmem:[#allocation10 + $0x758] sm:$0xff]
    %v11764 = vld [vmem:[#allocation10 + $0x760] sm:$0xff]
    %v11765 = vld [vmem:[#allocation10 + $0x768] sm:$0xff]
    %v11766 = vld [vmem:[#allocation10 + $0x770] sm:$0xff]
    %v11767 = vld [vmem:[#allocation10 + $0x778] sm:$0xff]
    %v11768 = vld [vmem:[#allocation10 + $0x780] sm:$0xff]
    %v11769 = vld [vmem:[#allocation10 + $0x788] sm:$0xff]
    %v11770 = vld [vmem:[#allocation10 + $0x790] sm:$0xff]
    %v11771 = vld [vmem:[#allocation10 + $0x798] sm:$0xff]
    %v11772 = vld [vmem:[#allocation10 + $0x7a0] sm:$0xff]
    %v11773 = vld [vmem:[#allocation10 + $0x7a8] sm:$0xff]
    %v11774 = vld [vmem:[#allocation10 + $0x7b0] sm:$0xff]
    %v11775 = vld [vmem:[#allocation10 + $0x7b8] sm:$0xff]
    %v11776 = vld [vmem:[#allocation10 + $0x7c0] sm:$0xff]
    %v11777 = vld [vmem:[#allocation10 + $0x7c8] sm:$0xff]
    %v11778 = vld [vmem:[#allocation10 + $0x7d0] sm:$0xff]
    %v11779 = vld [vmem:[#allocation10 + $0x7d8] sm:$0xff]
    %v11780 = vld [vmem:[#allocation10 + $0x7e0] sm:$0xff]
    %v11781 = vld [vmem:[#allocation10 + $0x7e8] sm:$0xff]
    %v11782 = vld [vmem:[#allocation10 + $0x7f0] sm:$0xff]
    %v11783 = vld [vmem:[#allocation10 + $0x7f8] sm:$0xff]
    %v11784 = vld [vmem:[#allocation11] sm:$0xf]
    %v11786 = vlaneseq
    %v11787 = vshrl.u32 %v11786, 7
    %v11788 = vsub.s32 0, %v11787
    %v11789 = vrot.slane %v11784, %v11788
    %v11790 = vlaneseq
    %v11791 = vshrl.u32 %v11790, 7
    %v11792 = vsub.s32 1, %v11791
    %v11793 = vrot.slane %v11784, %v11792
    %v11794 = vlaneseq
    %v11795 = vshrl.u32 %v11794, 7
    %v11796 = vsub.s32 2, %v11795
    %v11797 = vrot.slane %v11784, %v11796
    %v11798 = vlaneseq
    %v11799 = vshrl.u32 %v11798, 7
    %v11800 = vsub.s32 3, %v11799
    %v11801 = vrot.slane %v11784, %v11800
    %v12062 = vunpack.c.l.b16 %v11528
    %v12063 = vunpack.c.h.b16 %v11528
    %v12064 = vunpack.c.l.b16 %v11529
    %v12065 = vunpack.c.h.b16 %v11529
    %v12066 = vunpack.c.l.b16 %v11530
    %v12067 = vunpack.c.h.b16 %v11530
    %v12068 = vunpack.c.l.b16 %v11531
    %v12069 = vunpack.c.h.b16 %v11531
    %v12070 = vunpack.c.l.b16 %v11532
    %v12071 = vunpack.c.h.b16 %v11532
    %v12072 = vunpack.c.l.b16 %v11533
    %v12073 = vunpack.c.h.b16 %v11533
    %v12074 = vunpack.c.l.b16 %v11534
    %v12075 = vunpack.c.h.b16 %v11534
    %v12076 = vunpack.c.l.b16 %v11535
    %v12077 = vunpack.c.h.b16 %v11535
    %v12078 = vunpack.c.l.b16 %v11536
    %v12079 = vunpack.c.h.b16 %v11536
    %v12080 = vunpack.c.l.b16 %v11537
    %v12081 = vunpack.c.h.b16 %v11537
    %v12082 = vunpack.c.l.b16 %v11538
    %v12083 = vunpack.c.h.b16 %v11538
    %v12084 = vunpack.c.l.b16 %v11539
    %v12085 = vunpack.c.h.b16 %v11539
    %v12086 = vunpack.c.l.b16 %v11540
    %v12087 = vunpack.c.h.b16 %v11540
    %v12088 = vunpack.c.l.b16 %v11541
    %v12089 = vunpack.c.h.b16 %v11541
    %v12090 = vunpack.c.l.b16 %v11542
    %v12091 = vunpack.c.h.b16 %v11542
    %v12092 = vunpack.c.l.b16 %v11543
    %v12093 = vunpack.c.h.b16 %v11543
    %v12094 = vunpack.c.l.b16 %v11544
    %v12095 = vunpack.c.h.b16 %v11544
    %v12096 = vunpack.c.l.b16 %v11545
    %v12097 = vunpack.c.h.b16 %v11545
    %v12098 = vunpack.c.l.b16 %v11546
    %v12099 = vunpack.c.h.b16 %v11546
    %v12100 = vunpack.c.l.b16 %v11547
    %v12101 = vunpack.c.h.b16 %v11547
    %v12102 = vunpack.c.l.b16 %v11548
    %v12103 = vunpack.c.h.b16 %v11548
    %v12104 = vunpack.c.l.b16 %v11549
    %v12105 = vunpack.c.h.b16 %v11549
    %v12106 = vunpack.c.l.b16 %v11550
    %v12107 = vunpack.c.h.b16 %v11550
    %v12108 = vunpack.c.l.b16 %v11551
    %v12109 = vunpack.c.h.b16 %v11551
    %v12110 = vunpack.c.l.b16 %v11552
    %v12111 = vunpack.c.h.b16 %v11552
    %v12112 = vunpack.c.l.b16 %v11553
    %v12113 = vunpack.c.h.b16 %v11553
    %v12114 = vunpack.c.l.b16 %v11554
    %v12115 = vunpack.c.h.b16 %v11554
    %v12116 = vunpack.c.l.b16 %v11555
    %v12117 = vunpack.c.h.b16 %v11555
    %v12118 = vunpack.c.l.b16 %v11556
    %v12119 = vunpack.c.h.b16 %v11556
    %v12120 = vunpack.c.l.b16 %v11557
    %v12121 = vunpack.c.h.b16 %v11557
    %v12122 = vunpack.c.l.b16 %v11558
    %v12123 = vunpack.c.h.b16 %v11558
    %v12124 = vunpack.c.l.b16 %v11559
    %v12125 = vunpack.c.h.b16 %v11559
    %v12126 = vunpack.c.l.b16 %v11560
    %v12127 = vunpack.c.h.b16 %v11560
    %v12128 = vunpack.c.l.b16 %v11561
    %v12129 = vunpack.c.h.b16 %v11561
    %v12130 = vunpack.c.l.b16 %v11562
    %v12131 = vunpack.c.h.b16 %v11562
    %v12132 = vunpack.c.l.b16 %v11563
    %v12133 = vunpack.c.h.b16 %v11563
    %v12134 = vunpack.c.l.b16 %v11564
    %v12135 = vunpack.c.h.b16 %v11564
    %v12136 = vunpack.c.l.b16 %v11565
    %v12137 = vunpack.c.h.b16 %v11565
    %v12138 = vunpack.c.l.b16 %v11566
    %v12139 = vunpack.c.h.b16 %v11566
    %v12140 = vunpack.c.l.b16 %v11567
    %v12141 = vunpack.c.h.b16 %v11567
    %v12142 = vunpack.c.l.b16 %v11568
    %v12143 = vunpack.c.h.b16 %v11568
    %v12144 = vunpack.c.l.b16 %v11569
    %v12145 = vunpack.c.h.b16 %v11569
    %v12146 = vunpack.c.l.b16 %v11570
    %v12147 = vunpack.c.h.b16 %v11570
    %v12148 = vunpack.c.l.b16 %v11571
    %v12149 = vunpack.c.h.b16 %v11571
    %v12150 = vunpack.c.l.b16 %v11572
    %v12151 = vunpack.c.h.b16 %v11572
    %v12152 = vunpack.c.l.b16 %v11573
    %v12153 = vunpack.c.h.b16 %v11573
    %v12154 = vunpack.c.l.b16 %v11574
    %v12155 = vunpack.c.h.b16 %v11574
    %v12156 = vunpack.c.l.b16 %v11575
    %v12157 = vunpack.c.h.b16 %v11575
    %v12158 = vunpack.c.l.b16 %v11576
    %v12159 = vunpack.c.h.b16 %v11576
    %v12160 = vunpack.c.l.b16 %v11577
    %v12161 = vunpack.c.h.b16 %v11577
    %v12162 = vunpack.c.l.b16 %v11578
    %v12163 = vunpack.c.h.b16 %v11578
    %v12164 = vunpack.c.l.b16 %v11579
    %v12165 = vunpack.c.h.b16 %v11579
    %v12166 = vunpack.c.l.b16 %v11580
    %v12167 = vunpack.c.h.b16 %v11580
    %v12168 = vunpack.c.l.b16 %v11581
    %v12169 = vunpack.c.h.b16 %v11581
    %v12170 = vunpack.c.l.b16 %v11582
    %v12171 = vunpack.c.h.b16 %v11582
    %v12172 = vunpack.c.l.b16 %v11583
    %v12173 = vunpack.c.h.b16 %v11583
    %v12174 = vunpack.c.l.b16 %v11584
    %v12175 = vunpack.c.h.b16 %v11584
    %v12176 = vunpack.c.l.b16 %v11585
    %v12177 = vunpack.c.h.b16 %v11585
    %v12178 = vunpack.c.l.b16 %v11586
    %v12179 = vunpack.c.h.b16 %v11586
    %v12180 = vunpack.c.l.b16 %v11587
    %v12181 = vunpack.c.h.b16 %v11587
    %v12182 = vunpack.c.l.b16 %v11588
    %v12183 = vunpack.c.h.b16 %v11588
    %v12184 = vunpack.c.l.b16 %v11589
    %v12185 = vunpack.c.h.b16 %v11589
    %v12186 = vunpack.c.l.b16 %v11590
    %v12187 = vunpack.c.h.b16 %v11590
    %v12188 = vunpack.c.l.b16 %v11591
    %v12189 = vunpack.c.h.b16 %v11591
    %v12190 = vunpack.c.l.b16 %v11592
    %v12191 = vunpack.c.h.b16 %v11592
    %v12192 = vunpack.c.l.b16 %v11593
    %v12193 = vunpack.c.h.b16 %v11593
    %v12194 = vunpack.c.l.b16 %v11594
    %v12195 = vunpack.c.h.b16 %v11594
    %v12196 = vunpack.c.l.b16 %v11595
    %v12197 = vunpack.c.h.b16 %v11595
    %v12198 = vunpack.c.l.b16 %v11596
    %v12199 = vunpack.c.h.b16 %v11596
    %v12200 = vunpack.c.l.b16 %v11597
    %v12201 = vunpack.c.h.b16 %v11597
    %v12202 = vunpack.c.l.b16 %v11598
    %v12203 = vunpack.c.h.b16 %v11598
    %v12204 = vunpack.c.l.b16 %v11599
    %v12205 = vunpack.c.h.b16 %v11599
    %v12206 = vunpack.c.l.b16 %v11600
    %v12207 = vunpack.c.h.b16 %v11600
    %v12208 = vunpack.c.l.b16 %v11601
    %v12209 = vunpack.c.h.b16 %v11601
    %v12210 = vunpack.c.l.b16 %v11602
    %v12211 = vunpack.c.h.b16 %v11602
    %v12212 = vunpack.c.l.b16 %v11603
    %v12213 = vunpack.c.h.b16 %v11603
    %v12214 = vunpack.c.l.b16 %v11604
    %v12215 = vunpack.c.h.b16 %v11604
    %v12216 = vunpack.c.l.b16 %v11605
    %v12217 = vunpack.c.h.b16 %v11605
    %v12218 = vunpack.c.l.b16 %v11606
    %v12219 = vunpack.c.h.b16 %v11606
    %v12220 = vunpack.c.l.b16 %v11607
    %v12221 = vunpack.c.h.b16 %v11607
    %v12222 = vunpack.c.l.b16 %v11608
    %v12223 = vunpack.c.h.b16 %v11608
    %v12224 = vunpack.c.l.b16 %v11609
    %v12225 = vunpack.c.h.b16 %v11609
    %v12226 = vunpack.c.l.b16 %v11610
    %v12227 = vunpack.c.h.b16 %v11610
    %v12228 = vunpack.c.l.b16 %v11611
    %v12229 = vunpack.c.h.b16 %v11611
    %v12230 = vunpack.c.l.b16 %v11612
    %v12231 = vunpack.c.h.b16 %v11612
    %v12232 = vunpack.c.l.b16 %v11613
    %v12233 = vunpack.c.h.b16 %v11613
    %v12234 = vunpack.c.l.b16 %v11614
    %v12235 = vunpack.c.h.b16 %v11614
    %v12236 = vunpack.c.l.b16 %v11615
    %v12237 = vunpack.c.h.b16 %v11615
    %v12238 = vunpack.c.l.b16 %v11616
    %v12239 = vunpack.c.h.b16 %v11616
    %v12240 = vunpack.c.l.b16 %v11617
    %v12241 = vunpack.c.h.b16 %v11617
    %v12242 = vunpack.c.l.b16 %v11618
    %v12243 = vunpack.c.h.b16 %v11618
    %v12244 = vunpack.c.l.b16 %v11619
    %v12245 = vunpack.c.h.b16 %v11619
    %v12246 = vunpack.c.l.b16 %v11620
    %v12247 = vunpack.c.h.b16 %v11620
    %v12248 = vunpack.c.l.b16 %v11621
    %v12249 = vunpack.c.h.b16 %v11621
    %v12250 = vunpack.c.l.b16 %v11622
    %v12251 = vunpack.c.h.b16 %v11622
    %v12252 = vunpack.c.l.b16 %v11623
    %v12253 = vunpack.c.h.b16 %v11623
    %v12254 = vunpack.c.l.b16 %v11624
    %v12255 = vunpack.c.h.b16 %v11624
    %v12256 = vunpack.c.l.b16 %v11625
    %v12257 = vunpack.c.h.b16 %v11625
    %v12258 = vunpack.c.l.b16 %v11626
    %v12259 = vunpack.c.h.b16 %v11626
    %v12260 = vunpack.c.l.b16 %v11627
    %v12261 = vunpack.c.h.b16 %v11627
    %v12262 = vunpack.c.l.b16 %v11628
    %v12263 = vunpack.c.h.b16 %v11628
    %v12264 = vunpack.c.l.b16 %v11629
    %v12265 = vunpack.c.h.b16 %v11629
    %v12266 = vunpack.c.l.b16 %v11630
    %v12267 = vunpack.c.h.b16 %v11630
    %v12268 = vunpack.c.l.b16 %v11631
    %v12269 = vunpack.c.h.b16 %v11631
    %v12270 = vunpack.c.l.b16 %v11632
    %v12271 = vunpack.c.h.b16 %v11632
    %v12272 = vunpack.c.l.b16 %v11633
    %v12273 = vunpack.c.h.b16 %v11633
    %v12274 = vunpack.c.l.b16 %v11634
    %v12275 = vunpack.c.h.b16 %v11634
    %v12276 = vunpack.c.l.b16 %v11635
    %v12277 = vunpack.c.h.b16 %v11635
    %v12278 = vunpack.c.l.b16 %v11636
    %v12279 = vunpack.c.h.b16 %v11636
    %v12280 = vunpack.c.l.b16 %v11637
    %v12281 = vunpack.c.h.b16 %v11637
    %v12282 = vunpack.c.l.b16 %v11638
    %v12283 = vunpack.c.h.b16 %v11638
    %v12284 = vunpack.c.l.b16 %v11639
    %v12285 = vunpack.c.h.b16 %v11639
    %v12286 = vunpack.c.l.b16 %v11640
    %v12287 = vunpack.c.h.b16 %v11640
    %v12288 = vunpack.c.l.b16 %v11641
    %v12289 = vunpack.c.h.b16 %v11641
    %v12290 = vunpack.c.l.b16 %v11642
    %v12291 = vunpack.c.h.b16 %v11642
    %v12292 = vunpack.c.l.b16 %v11643
    %v12293 = vunpack.c.h.b16 %v11643
    %v12294 = vunpack.c.l.b16 %v11644
    %v12295 = vunpack.c.h.b16 %v11644
    %v12296 = vunpack.c.l.b16 %v11645
    %v12297 = vunpack.c.h.b16 %v11645
    %v12298 = vunpack.c.l.b16 %v11646
    %v12299 = vunpack.c.h.b16 %v11646
    %v12300 = vunpack.c.l.b16 %v11647
    %v12301 = vunpack.c.h.b16 %v11647
    %v12302 = vunpack.c.l.b16 %v11648
    %v12303 = vunpack.c.h.b16 %v11648
    %v12304 = vunpack.c.l.b16 %v11649
    %v12305 = vunpack.c.h.b16 %v11649
    %v12306 = vunpack.c.l.b16 %v11650
    %v12307 = vunpack.c.h.b16 %v11650
    %v12308 = vunpack.c.l.b16 %v11651
    %v12309 = vunpack.c.h.b16 %v11651
    %v12310 = vunpack.c.l.b16 %v11652
    %v12311 = vunpack.c.h.b16 %v11652
    %v12312 = vunpack.c.l.b16 %v11653
    %v12313 = vunpack.c.h.b16 %v11653
    %v12314 = vunpack.c.l.b16 %v11654
    %v12315 = vunpack.c.h.b16 %v11654
    %v12316 = vunpack.c.l.b16 %v11655
    %v12317 = vunpack.c.h.b16 %v11655
    %v12318 = vunpack.c.l.b16 %v11656
    %v12319 = vunpack.c.h.b16 %v11656
    %v12320 = vunpack.c.l.b16 %v11657
    %v12321 = vunpack.c.h.b16 %v11657
    %v12322 = vunpack.c.l.b16 %v11658
    %v12323 = vunpack.c.h.b16 %v11658
    %v12324 = vunpack.c.l.b16 %v11659
    %v12325 = vunpack.c.h.b16 %v11659
    %v12326 = vunpack.c.l.b16 %v11660
    %v12327 = vunpack.c.h.b16 %v11660
    %v12328 = vunpack.c.l.b16 %v11661
    %v12329 = vunpack.c.h.b16 %v11661
    %v12330 = vunpack.c.l.b16 %v11662
    %v12331 = vunpack.c.h.b16 %v11662
    %v12332 = vunpack.c.l.b16 %v11663
    %v12333 = vunpack.c.h.b16 %v11663
    %v12334 = vunpack.c.l.b16 %v11664
    %v12335 = vunpack.c.h.b16 %v11664
    %v12336 = vunpack.c.l.b16 %v11665
    %v12337 = vunpack.c.h.b16 %v11665
    %v12338 = vunpack.c.l.b16 %v11666
    %v12339 = vunpack.c.h.b16 %v11666
    %v12340 = vunpack.c.l.b16 %v11667
    %v12341 = vunpack.c.h.b16 %v11667
    %v12342 = vunpack.c.l.b16 %v11668
    %v12343 = vunpack.c.h.b16 %v11668
    %v12344 = vunpack.c.l.b16 %v11669
    %v12345 = vunpack.c.h.b16 %v11669
    %v12346 = vunpack.c.l.b16 %v11670
    %v12347 = vunpack.c.h.b16 %v11670
    %v12348 = vunpack.c.l.b16 %v11671
    %v12349 = vunpack.c.h.b16 %v11671
    %v12350 = vunpack.c.l.b16 %v11672
    %v12351 = vunpack.c.h.b16 %v11672
    %v12352 = vunpack.c.l.b16 %v11673
    %v12353 = vunpack.c.h.b16 %v11673
    %v12354 = vunpack.c.l.b16 %v11674
    %v12355 = vunpack.c.h.b16 %v11674
    %v12356 = vunpack.c.l.b16 %v11675
    %v12357 = vunpack.c.h.b16 %v11675
    %v12358 = vunpack.c.l.b16 %v11676
    %v12359 = vunpack.c.h.b16 %v11676
    %v12360 = vunpack.c.l.b16 %v11677
    %v12361 = vunpack.c.h.b16 %v11677
    %v12362 = vunpack.c.l.b16 %v11678
    %v12363 = vunpack.c.h.b16 %v11678
    %v12364 = vunpack.c.l.b16 %v11679
    %v12365 = vunpack.c.h.b16 %v11679
    %v12366 = vunpack.c.l.b16 %v11680
    %v12367 = vunpack.c.h.b16 %v11680
    %v12368 = vunpack.c.l.b16 %v11681
    %v12369 = vunpack.c.h.b16 %v11681
    %v12370 = vunpack.c.l.b16 %v11682
    %v12371 = vunpack.c.h.b16 %v11682
    %v12372 = vunpack.c.l.b16 %v11683
    %v12373 = vunpack.c.h.b16 %v11683
    %v12374 = vunpack.c.l.b16 %v11684
    %v12375 = vunpack.c.h.b16 %v11684
    %v12376 = vunpack.c.l.b16 %v11685
    %v12377 = vunpack.c.h.b16 %v11685
    %v12378 = vunpack.c.l.b16 %v11686
    %v12379 = vunpack.c.h.b16 %v11686
    %v12380 = vunpack.c.l.b16 %v11687
    %v12381 = vunpack.c.h.b16 %v11687
    %v12382 = vunpack.c.l.b16 %v11688
    %v12383 = vunpack.c.h.b16 %v11688
    %v12384 = vunpack.c.l.b16 %v11689
    %v12385 = vunpack.c.h.b16 %v11689
    %v12386 = vunpack.c.l.b16 %v11690
    %v12387 = vunpack.c.h.b16 %v11690
    %v12388 = vunpack.c.l.b16 %v11691
    %v12389 = vunpack.c.h.b16 %v11691
    %v12390 = vunpack.c.l.b16 %v11692
    %v12391 = vunpack.c.h.b16 %v11692
    %v12392 = vunpack.c.l.b16 %v11693
    %v12393 = vunpack.c.h.b16 %v11693
    %v12394 = vunpack.c.l.b16 %v11694
    %v12395 = vunpack.c.h.b16 %v11694
    %v12396 = vunpack.c.l.b16 %v11695
    %v12397 = vunpack.c.h.b16 %v11695
    %v12398 = vunpack.c.l.b16 %v11696
    %v12399 = vunpack.c.h.b16 %v11696
    %v12400 = vunpack.c.l.b16 %v11697
    %v12401 = vunpack.c.h.b16 %v11697
    %v12402 = vunpack.c.l.b16 %v11698
    %v12403 = vunpack.c.h.b16 %v11698
    %v12404 = vunpack.c.l.b16 %v11699
    %v12405 = vunpack.c.h.b16 %v11699
    %v12406 = vunpack.c.l.b16 %v11700
    %v12407 = vunpack.c.h.b16 %v11700
    %v12408 = vunpack.c.l.b16 %v11701
    %v12409 = vunpack.c.h.b16 %v11701
    %v12410 = vunpack.c.l.b16 %v11702
    %v12411 = vunpack.c.h.b16 %v11702
    %v12412 = vunpack.c.l.b16 %v11703
    %v12413 = vunpack.c.h.b16 %v11703
    %v12414 = vunpack.c.l.b16 %v11704
    %v12415 = vunpack.c.h.b16 %v11704
    %v12416 = vunpack.c.l.b16 %v11705
    %v12417 = vunpack.c.h.b16 %v11705
    %v12418 = vunpack.c.l.b16 %v11706
    %v12419 = vunpack.c.h.b16 %v11706
    %v12420 = vunpack.c.l.b16 %v11707
    %v12421 = vunpack.c.h.b16 %v11707
    %v12422 = vunpack.c.l.b16 %v11708
    %v12423 = vunpack.c.h.b16 %v11708
    %v12424 = vunpack.c.l.b16 %v11709
    %v12425 = vunpack.c.h.b16 %v11709
    %v12426 = vunpack.c.l.b16 %v11710
    %v12427 = vunpack.c.h.b16 %v11710
    %v12428 = vunpack.c.l.b16 %v11711
    %v12429 = vunpack.c.h.b16 %v11711
    %v12430 = vunpack.c.l.b16 %v11712
    %v12431 = vunpack.c.h.b16 %v11712
    %v12432 = vunpack.c.l.b16 %v11713
    %v12433 = vunpack.c.h.b16 %v11713
    %v12434 = vunpack.c.l.b16 %v11714
    %v12435 = vunpack.c.h.b16 %v11714
    %v12436 = vunpack.c.l.b16 %v11715
    %v12437 = vunpack.c.h.b16 %v11715
    %v12438 = vunpack.c.l.b16 %v11716
    %v12439 = vunpack.c.h.b16 %v11716
    %v12440 = vunpack.c.l.b16 %v11717
    %v12441 = vunpack.c.h.b16 %v11717
    %v12442 = vunpack.c.l.b16 %v11718
    %v12443 = vunpack.c.h.b16 %v11718
    %v12444 = vunpack.c.l.b16 %v11719
    %v12445 = vunpack.c.h.b16 %v11719
    %v12446 = vunpack.c.l.b16 %v11720
    %v12447 = vunpack.c.h.b16 %v11720
    %v12448 = vunpack.c.l.b16 %v11721
    %v12449 = vunpack.c.h.b16 %v11721
    %v12450 = vunpack.c.l.b16 %v11722
    %v12451 = vunpack.c.h.b16 %v11722
    %v12452 = vunpack.c.l.b16 %v11723
    %v12453 = vunpack.c.h.b16 %v11723
    %v12454 = vunpack.c.l.b16 %v11724
    %v12455 = vunpack.c.h.b16 %v11724
    %v12456 = vunpack.c.l.b16 %v11725
    %v12457 = vunpack.c.h.b16 %v11725
    %v12458 = vunpack.c.l.b16 %v11726
    %v12459 = vunpack.c.h.b16 %v11726
    %v12460 = vunpack.c.l.b16 %v11727
    %v12461 = vunpack.c.h.b16 %v11727
    %v12462 = vunpack.c.l.b16 %v11728
    %v12463 = vunpack.c.h.b16 %v11728
    %v12464 = vunpack.c.l.b16 %v11729
    %v12465 = vunpack.c.h.b16 %v11729
    %v12466 = vunpack.c.l.b16 %v11730
    %v12467 = vunpack.c.h.b16 %v11730
    %v12468 = vunpack.c.l.b16 %v11731
    %v12469 = vunpack.c.h.b16 %v11731
    %v12470 = vunpack.c.l.b16 %v11732
    %v12471 = vunpack.c.h.b16 %v11732
    %v12472 = vunpack.c.l.b16 %v11733
    %v12473 = vunpack.c.h.b16 %v11733
    %v12474 = vunpack.c.l.b16 %v11734
    %v12475 = vunpack.c.h.b16 %v11734
    %v12476 = vunpack.c.l.b16 %v11735
    %v12477 = vunpack.c.h.b16 %v11735
    %v12478 = vunpack.c.l.b16 %v11736
    %v12479 = vunpack.c.h.b16 %v11736
    %v12480 = vunpack.c.l.b16 %v11737
    %v12481 = vunpack.c.h.b16 %v11737
    %v12482 = vunpack.c.l.b16 %v11738
    %v12483 = vunpack.c.h.b16 %v11738
    %v12484 = vunpack.c.l.b16 %v11739
    %v12485 = vunpack.c.h.b16 %v11739
    %v12486 = vunpack.c.l.b16 %v11740
    %v12487 = vunpack.c.h.b16 %v11740
    %v12488 = vunpack.c.l.b16 %v11741
    %v12489 = vunpack.c.h.b16 %v11741
    %v12490 = vunpack.c.l.b16 %v11742
    %v12491 = vunpack.c.h.b16 %v11742
    %v12492 = vunpack.c.l.b16 %v11743
    %v12493 = vunpack.c.h.b16 %v11743
    %v12494 = vunpack.c.l.b16 %v11744
    %v12495 = vunpack.c.h.b16 %v11744
    %v12496 = vunpack.c.l.b16 %v11745
    %v12497 = vunpack.c.h.b16 %v11745
    %v12498 = vunpack.c.l.b16 %v11746
    %v12499 = vunpack.c.h.b16 %v11746
    %v12500 = vunpack.c.l.b16 %v11747
    %v12501 = vunpack.c.h.b16 %v11747
    %v12502 = vunpack.c.l.b16 %v11748
    %v12503 = vunpack.c.h.b16 %v11748
    %v12504 = vunpack.c.l.b16 %v11749
    %v12505 = vunpack.c.h.b16 %v11749
    %v12506 = vunpack.c.l.b16 %v11750
    %v12507 = vunpack.c.h.b16 %v11750
    %v12508 = vunpack.c.l.b16 %v11751
    %v12509 = vunpack.c.h.b16 %v11751
    %v12510 = vunpack.c.l.b16 %v11752
    %v12511 = vunpack.c.h.b16 %v11752
    %v12512 = vunpack.c.l.b16 %v11753
    %v12513 = vunpack.c.h.b16 %v11753
    %v12514 = vunpack.c.l.b16 %v11754
    %v12515 = vunpack.c.h.b16 %v11754
    %v12516 = vunpack.c.l.b16 %v11755
    %v12517 = vunpack.c.h.b16 %v11755
    %v12518 = vunpack.c.l.b16 %v11756
    %v12519 = vunpack.c.h.b16 %v11756
    %v12520 = vunpack.c.l.b16 %v11757
    %v12521 = vunpack.c.h.b16 %v11757
    %v12522 = vunpack.c.l.b16 %v11758
    %v12523 = vunpack.c.h.b16 %v11758
    %v12524 = vunpack.c.l.b16 %v11759
    %v12525 = vunpack.c.h.b16 %v11759
    %v12526 = vunpack.c.l.b16 %v11760
    %v12527 = vunpack.c.h.b16 %v11760
    %v12528 = vunpack.c.l.b16 %v11761
    %v12529 = vunpack.c.h.b16 %v11761
    %v12530 = vunpack.c.l.b16 %v11762
    %v12531 = vunpack.c.h.b16 %v11762
    %v12532 = vunpack.c.l.b16 %v11763
    %v12533 = vunpack.c.h.b16 %v11763
    %v12534 = vunpack.c.l.b16 %v11764
    %v12535 = vunpack.c.h.b16 %v11764
    %v12536 = vunpack.c.l.b16 %v11765
    %v12537 = vunpack.c.h.b16 %v11765
    %v12538 = vunpack.c.l.b16 %v11766
    %v12539 = vunpack.c.h.b16 %v11766
    %v12540 = vunpack.c.l.b16 %v11767
    %v12541 = vunpack.c.h.b16 %v11767
    %v12542 = vunpack.c.l.b16 %v11768
    %v12543 = vunpack.c.h.b16 %v11768
    %v12544 = vunpack.c.l.b16 %v11769
    %v12545 = vunpack.c.h.b16 %v11769
    %v12546 = vunpack.c.l.b16 %v11770
    %v12547 = vunpack.c.h.b16 %v11770
    %v12548 = vunpack.c.l.b16 %v11771
    %v12549 = vunpack.c.h.b16 %v11771
    %v12550 = vunpack.c.l.b16 %v11772
    %v12551 = vunpack.c.h.b16 %v11772
    %v12552 = vunpack.c.l.b16 %v11773
    %v12553 = vunpack.c.h.b16 %v11773
    %v12554 = vunpack.c.l.b16 %v11774
    %v12555 = vunpack.c.h.b16 %v11774
    %v12556 = vunpack.c.l.b16 %v11775
    %v12557 = vunpack.c.h.b16 %v11775
    %v12558 = vunpack.c.l.b16 %v11776
    %v12559 = vunpack.c.h.b16 %v11776
    %v12560 = vunpack.c.l.b16 %v11777
    %v12561 = vunpack.c.h.b16 %v11777
    %v12562 = vunpack.c.l.b16 %v11778
    %v12563 = vunpack.c.h.b16 %v11778
    %v12564 = vunpack.c.l.b16 %v11779
    %v12565 = vunpack.c.h.b16 %v11779
    %v12566 = vunpack.c.l.b16 %v11780
    %v12567 = vunpack.c.h.b16 %v11780
    %v12568 = vunpack.c.l.b16 %v11781
    %v12569 = vunpack.c.h.b16 %v11781
    %v12570 = vunpack.c.l.b16 %v11782
    %v12571 = vunpack.c.h.b16 %v11782
    %v12572 = vunpack.c.l.b16 %v11783
    %v12573 = vunpack.c.h.b16 %v11783
    %v12574 = vpack.c.b16 %v12066, %v12062
    %v12575 = vpack.c.b16 %v12067, %v12063
    %v12576 = vpack.c.b16 %v12068, %v12064
    %v12577 = vpack.c.b16 %v12069, %v12065
    %v12578 = vpack.c.b16 %v12074, %v12070
    %v12579 = vpack.c.b16 %v12075, %v12071
    %v12580 = vpack.c.b16 %v12076, %v12072
    %v12581 = vpack.c.b16 %v12077, %v12073
    %v12582 = vpack.c.b16 %v12082, %v12078
    %v12583 = vpack.c.b16 %v12083, %v12079
    %v12584 = vpack.c.b16 %v12084, %v12080
    %v12585 = vpack.c.b16 %v12085, %v12081
    %v12586 = vpack.c.b16 %v12090, %v12086
    %v12587 = vpack.c.b16 %v12091, %v12087
    %v12588 = vpack.c.b16 %v12092, %v12088
    %v12589 = vpack.c.b16 %v12093, %v12089
    %v12590 = vpack.c.b16 %v12098, %v12094
    %v12591 = vpack.c.b16 %v12099, %v12095
    %v12592 = vpack.c.b16 %v12100, %v12096
    %v12593 = vpack.c.b16 %v12101, %v12097
    %v12594 = vpack.c.b16 %v12106, %v12102
    %v12595 = vpack.c.b16 %v12107, %v12103
    %v12596 = vpack.c.b16 %v12108, %v12104
    %v12597 = vpack.c.b16 %v12109, %v12105
    %v12598 = vpack.c.b16 %v12114, %v12110
    %v12599 = vpack.c.b16 %v12115, %v12111
    %v12600 = vpack.c.b16 %v12116, %v12112
    %v12601 = vpack.c.b16 %v12117, %v12113
    %v12602 = vpack.c.b16 %v12122, %v12118
    %v12603 = vpack.c.b16 %v12123, %v12119
    %v12604 = vpack.c.b16 %v12124, %v12120
    %v12605 = vpack.c.b16 %v12125, %v12121
    %v12606 = vpack.c.b16 %v12130, %v12126
    %v12607 = vpack.c.b16 %v12131, %v12127
    %v12608 = vpack.c.b16 %v12132, %v12128
    %v12609 = vpack.c.b16 %v12133, %v12129
    %v12610 = vpack.c.b16 %v12138, %v12134
    %v12611 = vpack.c.b16 %v12139, %v12135
    %v12612 = vpack.c.b16 %v12140, %v12136
    %v12613 = vpack.c.b16 %v12141, %v12137
    %v12614 = vpack.c.b16 %v12146, %v12142
    %v12615 = vpack.c.b16 %v12147, %v12143
    %v12616 = vpack.c.b16 %v12148, %v12144
    %v12617 = vpack.c.b16 %v12149, %v12145
    %v12618 = vpack.c.b16 %v12154, %v12150
    %v12619 = vpack.c.b16 %v12155, %v12151
    %v12620 = vpack.c.b16 %v12156, %v12152
    %v12621 = vpack.c.b16 %v12157, %v12153
    %v12622 = vpack.c.b16 %v12162, %v12158
    %v12623 = vpack.c.b16 %v12163, %v12159
    %v12624 = vpack.c.b16 %v12164, %v12160
    %v12625 = vpack.c.b16 %v12165, %v12161
    %v12626 = vpack.c.b16 %v12170, %v12166
    %v12627 = vpack.c.b16 %v12171, %v12167
    %v12628 = vpack.c.b16 %v12172, %v12168
    %v12629 = vpack.c.b16 %v12173, %v12169
    %v12630 = vpack.c.b16 %v12178, %v12174
    %v12631 = vpack.c.b16 %v12179, %v12175
    %v12632 = vpack.c.b16 %v12180, %v12176
    %v12633 = vpack.c.b16 %v12181, %v12177
    %v12634 = vpack.c.b16 %v12186, %v12182
    %v12635 = vpack.c.b16 %v12187, %v12183
    %v12636 = vpack.c.b16 %v12188, %v12184
    %v12637 = vpack.c.b16 %v12189, %v12185
    %v12638 = vpack.c.b16 %v12194, %v12190
    %v12639 = vpack.c.b16 %v12195, %v12191
    %v12640 = vpack.c.b16 %v12196, %v12192
    %v12641 = vpack.c.b16 %v12197, %v12193
    %v12642 = vpack.c.b16 %v12202, %v12198
    %v12643 = vpack.c.b16 %v12203, %v12199
    %v12644 = vpack.c.b16 %v12204, %v12200
    %v12645 = vpack.c.b16 %v12205, %v12201
    %v12646 = vpack.c.b16 %v12210, %v12206
    %v12647 = vpack.c.b16 %v12211, %v12207
    %v12648 = vpack.c.b16 %v12212, %v12208
    %v12649 = vpack.c.b16 %v12213, %v12209
    %v12650 = vpack.c.b16 %v12218, %v12214
    %v12651 = vpack.c.b16 %v12219, %v12215
    %v12652 = vpack.c.b16 %v12220, %v12216
    %v12653 = vpack.c.b16 %v12221, %v12217
    %v12654 = vpack.c.b16 %v12226, %v12222
    %v12655 = vpack.c.b16 %v12227, %v12223
    %v12656 = vpack.c.b16 %v12228, %v12224
    %v12657 = vpack.c.b16 %v12229, %v12225
    %v12658 = vpack.c.b16 %v12234, %v12230
    %v12659 = vpack.c.b16 %v12235, %v12231
    %v12660 = vpack.c.b16 %v12236, %v12232
    %v12661 = vpack.c.b16 %v12237, %v12233
    %v12662 = vpack.c.b16 %v12242, %v12238
    %v12663 = vpack.c.b16 %v12243, %v12239
    %v12664 = vpack.c.b16 %v12244, %v12240
    %v12665 = vpack.c.b16 %v12245, %v12241
    %v12666 = vpack.c.b16 %v12250, %v12246
    %v12667 = vpack.c.b16 %v12251, %v12247
    %v12668 = vpack.c.b16 %v12252, %v12248
    %v12669 = vpack.c.b16 %v12253, %v12249
    %v12670 = vpack.c.b16 %v12258, %v12254
    %v12671 = vpack.c.b16 %v12259, %v12255
    %v12672 = vpack.c.b16 %v12260, %v12256
    %v12673 = vpack.c.b16 %v12261, %v12257
    %v12674 = vpack.c.b16 %v12266, %v12262
    %v12675 = vpack.c.b16 %v12267, %v12263
    %v12676 = vpack.c.b16 %v12268, %v12264
    %v12677 = vpack.c.b16 %v12269, %v12265
    %v12678 = vpack.c.b16 %v12274, %v12270
    %v12679 = vpack.c.b16 %v12275, %v12271
    %v12680 = vpack.c.b16 %v12276, %v12272
    %v12681 = vpack.c.b16 %v12277, %v12273
    %v12682 = vpack.c.b16 %v12282, %v12278
    %v12683 = vpack.c.b16 %v12283, %v12279
    %v12684 = vpack.c.b16 %v12284, %v12280
    %v12685 = vpack.c.b16 %v12285, %v12281
    %v12686 = vpack.c.b16 %v12290, %v12286
    %v12687 = vpack.c.b16 %v12291, %v12287
    %v12688 = vpack.c.b16 %v12292, %v12288
    %v12689 = vpack.c.b16 %v12293, %v12289
    %v12690 = vpack.c.b16 %v12298, %v12294
    %v12691 = vpack.c.b16 %v12299, %v12295
    %v12692 = vpack.c.b16 %v12300, %v12296
    %v12693 = vpack.c.b16 %v12301, %v12297
    %v12694 = vpack.c.b16 %v12306, %v12302
    %v12695 = vpack.c.b16 %v12307, %v12303
    %v12696 = vpack.c.b16 %v12308, %v12304
    %v12697 = vpack.c.b16 %v12309, %v12305
    %v12698 = vpack.c.b16 %v12314, %v12310
    %v12699 = vpack.c.b16 %v12315, %v12311
    %v12700 = vpack.c.b16 %v12316, %v12312
    %v12701 = vpack.c.b16 %v12317, %v12313
    %v12702 = vpack.c.b16 %v12322, %v12318
    %v12703 = vpack.c.b16 %v12323, %v12319
    %v12704 = vpack.c.b16 %v12324, %v12320
    %v12705 = vpack.c.b16 %v12325, %v12321
    %v12706 = vpack.c.b16 %v12330, %v12326
    %v12707 = vpack.c.b16 %v12331, %v12327
    %v12708 = vpack.c.b16 %v12332, %v12328
    %v12709 = vpack.c.b16 %v12333, %v12329
    %v12710 = vpack.c.b16 %v12338, %v12334
    %v12711 = vpack.c.b16 %v12339, %v12335
    %v12712 = vpack.c.b16 %v12340, %v12336
    %v12713 = vpack.c.b16 %v12341, %v12337
    %v12714 = vpack.c.b16 %v12346, %v12342
    %v12715 = vpack.c.b16 %v12347, %v12343
    %v12716 = vpack.c.b16 %v12348, %v12344
    %v12717 = vpack.c.b16 %v12349, %v12345
    %v12718 = vpack.c.b16 %v12354, %v12350
    %v12719 = vpack.c.b16 %v12355, %v12351
    %v12720 = vpack.c.b16 %v12356, %v12352
    %v12721 = vpack.c.b16 %v12357, %v12353
    %v12722 = vpack.c.b16 %v12362, %v12358
    %v12723 = vpack.c.b16 %v12363, %v12359
    %v12724 = vpack.c.b16 %v12364, %v12360
    %v12725 = vpack.c.b16 %v12365, %v12361
    %v12726 = vpack.c.b16 %v12370, %v12366
    %v12727 = vpack.c.b16 %v12371, %v12367
    %v12728 = vpack.c.b16 %v12372, %v12368
    %v12729 = vpack.c.b16 %v12373, %v12369
    %v12730 = vpack.c.b16 %v12378, %v12374
    %v12731 = vpack.c.b16 %v12379, %v12375
    %v12732 = vpack.c.b16 %v12380, %v12376
    %v12733 = vpack.c.b16 %v12381, %v12377
    %v12734 = vpack.c.b16 %v12386, %v12382
    %v12735 = vpack.c.b16 %v12387, %v12383
    %v12736 = vpack.c.b16 %v12388, %v12384
    %v12737 = vpack.c.b16 %v12389, %v12385
    %v12738 = vpack.c.b16 %v12394, %v12390
    %v12739 = vpack.c.b16 %v12395, %v12391
    %v12740 = vpack.c.b16 %v12396, %v12392
    %v12741 = vpack.c.b16 %v12397, %v12393
    %v12742 = vpack.c.b16 %v12402, %v12398
    %v12743 = vpack.c.b16 %v12403, %v12399
    %v12744 = vpack.c.b16 %v12404, %v12400
    %v12745 = vpack.c.b16 %v12405, %v12401
    %v12746 = vpack.c.b16 %v12410, %v12406
    %v12747 = vpack.c.b16 %v12411, %v12407
    %v12748 = vpack.c.b16 %v12412, %v12408
    %v12749 = vpack.c.b16 %v12413, %v12409
    %v12750 = vpack.c.b16 %v12418, %v12414
    %v12751 = vpack.c.b16 %v12419, %v12415
    %v12752 = vpack.c.b16 %v12420, %v12416
    %v12753 = vpack.c.b16 %v12421, %v12417
    %v12754 = vpack.c.b16 %v12426, %v12422
    %v12755 = vpack.c.b16 %v12427, %v12423
    %v12756 = vpack.c.b16 %v12428, %v12424
    %v12757 = vpack.c.b16 %v12429, %v12425
    %v12758 = vpack.c.b16 %v12434, %v12430
    %v12759 = vpack.c.b16 %v12435, %v12431
    %v12760 = vpack.c.b16 %v12436, %v12432
    %v12761 = vpack.c.b16 %v12437, %v12433
    %v12762 = vpack.c.b16 %v12442, %v12438
    %v12763 = vpack.c.b16 %v12443, %v12439
    %v12764 = vpack.c.b16 %v12444, %v12440
    %v12765 = vpack.c.b16 %v12445, %v12441
    %v12766 = vpack.c.b16 %v12450, %v12446
    %v12767 = vpack.c.b16 %v12451, %v12447
    %v12768 = vpack.c.b16 %v12452, %v12448
    %v12769 = vpack.c.b16 %v12453, %v12449
    %v12770 = vpack.c.b16 %v12458, %v12454
    %v12771 = vpack.c.b16 %v12459, %v12455
    %v12772 = vpack.c.b16 %v12460, %v12456
    %v12773 = vpack.c.b16 %v12461, %v12457
    %v12774 = vpack.c.b16 %v12466, %v12462
    %v12775 = vpack.c.b16 %v12467, %v12463
    %v12776 = vpack.c.b16 %v12468, %v12464
    %v12777 = vpack.c.b16 %v12469, %v12465
    %v12778 = vpack.c.b16 %v12474, %v12470
    %v12779 = vpack.c.b16 %v12475, %v12471
    %v12780 = vpack.c.b16 %v12476, %v12472
    %v12781 = vpack.c.b16 %v12477, %v12473
    %v12782 = vpack.c.b16 %v12482, %v12478
    %v12783 = vpack.c.b16 %v12483, %v12479
    %v12784 = vpack.c.b16 %v12484, %v12480
    %v12785 = vpack.c.b16 %v12485, %v12481
    %v12786 = vpack.c.b16 %v12490, %v12486
    %v12787 = vpack.c.b16 %v12491, %v12487
    %v12788 = vpack.c.b16 %v12492, %v12488
    %v12789 = vpack.c.b16 %v12493, %v12489
    %v12790 = vpack.c.b16 %v12498, %v12494
    %v12791 = vpack.c.b16 %v12499, %v12495
    %v12792 = vpack.c.b16 %v12500, %v12496
    %v12793 = vpack.c.b16 %v12501, %v12497
    %v12794 = vpack.c.b16 %v12506, %v12502
    %v12795 = vpack.c.b16 %v12507, %v12503
    %v12796 = vpack.c.b16 %v12508, %v12504
    %v12797 = vpack.c.b16 %v12509, %v12505
    %v12798 = vpack.c.b16 %v12514, %v12510
    %v12799 = vpack.c.b16 %v12515, %v12511
    %v12800 = vpack.c.b16 %v12516, %v12512
    %v12801 = vpack.c.b16 %v12517, %v12513
    %v12802 = vpack.c.b16 %v12522, %v12518
    %v12803 = vpack.c.b16 %v12523, %v12519
    %v12804 = vpack.c.b16 %v12524, %v12520
    %v12805 = vpack.c.b16 %v12525, %v12521
    %v12806 = vpack.c.b16 %v12530, %v12526
    %v12807 = vpack.c.b16 %v12531, %v12527
    %v12808 = vpack.c.b16 %v12532, %v12528
    %v12809 = vpack.c.b16 %v12533, %v12529
    %v12810 = vpack.c.b16 %v12538, %v12534
    %v12811 = vpack.c.b16 %v12539, %v12535
    %v12812 = vpack.c.b16 %v12540, %v12536
    %v12813 = vpack.c.b16 %v12541, %v12537
    %v12814 = vpack.c.b16 %v12546, %v12542
    %v12815 = vpack.c.b16 %v12547, %v12543
    %v12816 = vpack.c.b16 %v12548, %v12544
    %v12817 = vpack.c.b16 %v12549, %v12545
    %v12818 = vpack.c.b16 %v12554, %v12550
    %v12819 = vpack.c.b16 %v12555, %v12551
    %v12820 = vpack.c.b16 %v12556, %v12552
    %v12821 = vpack.c.b16 %v12557, %v12553
    %v12822 = vpack.c.b16 %v12562, %v12558
    %v12823 = vpack.c.b16 %v12563, %v12559
    %v12824 = vpack.c.b16 %v12564, %v12560
    %v12825 = vpack.c.b16 %v12565, %v12561
    %v12826 = vpack.c.b16 %v12570, %v12566
    %v12827 = vpack.c.b16 %v12571, %v12567
    %v12828 = vpack.c.b16 %v12572, %v12568
    %v12829 = vpack.c.b16 %v12573, %v12569
    %13086 = vmatprep.subr.bf16.mxu0 %v12575
    %13087 = vmatpush1.bf16.msra.mxu0 %v12574
    %13088 = vmatprep.subr.bf16.mxu0 %v12579
    %13089 = vmatpush1.bf16.msra.mxu0 %v12578
    %13090 = vmatprep.subr.bf16.mxu0 %v12583
    %13091 = vmatpush1.bf16.msra.mxu0 %v12582
    %13092 = vmatprep.subr.bf16.mxu0 %v12587
    %13093 = vmatpush1.bf16.msra.mxu0 %v12586
    %13094 = vmatprep.subr.bf16.mxu0 %v12591
    %13095 = vmatpush1.bf16.msra.mxu0 %v12590
    %13096 = vmatprep.subr.bf16.mxu0 %v12595
    %13097 = vmatpush1.bf16.msra.mxu0 %v12594
    %13098 = vmatprep.subr.bf16.mxu0 %v12599
    %13099 = vmatpush1.bf16.msra.mxu0 %v12598
    %13100 = vmatprep.subr.bf16.mxu0 %v12603
    %13101 = vmatpush1.bf16.msra.mxu0 %v12602
    %13102 = vmatprep.subr.bf16.mxu0 %v12607
    %13103 = vmatpush1.bf16.msra.mxu0 %v12606
    %13104 = vmatprep.subr.bf16.mxu0 %v12611
    %13105 = vmatpush1.bf16.msra.mxu0 %v12610
    %13106 = vmatprep.subr.bf16.mxu0 %v12615
    %13107 = vmatpush1.bf16.msra.mxu0 %v12614
    %13108 = vmatprep.subr.bf16.mxu0 %v12619
    %13109 = vmatpush1.bf16.msra.mxu0 %v12618
    %13110 = vmatprep.subr.bf16.mxu0 %v12623
    %13111 = vmatpush1.bf16.msra.mxu0 %v12622
    %13112 = vmatprep.subr.bf16.mxu0 %v12627
    %13113 = vmatpush1.bf16.msra.mxu0 %v12626
    %13114 = vmatprep.subr.bf16.mxu0 %v12631
    %13115 = vmatpush1.bf16.msra.mxu0 %v12630
    %13116 = vmatprep.subr.bf16.mxu0 %v12635
    %13117 = vmatpush1.bf16.msra.mxu0 %v12634
    %13118 = vmatprep.mubr.bf16.mxu0 %v11521
    %13119 = vmatmul.mubr.bf16.gmra.mrb[0].mxu0 %v11520
    %v13120 = vpop.f32.mrb[0].mxu0
    %v13121 = vadd.f32 %v11789, %v13120
    %v13122 = vpop.f32.mrb[0].mxu0
    %v13123 = vadd.f32 %v11793, %v13122
    %v13124 = vpop.f32.mrb[0].mxu0
    %v13125 = vpop.f32.mrb[0].mxu0
    %13126 = vdwg.mxu0
    %13127 = vmatprep.subr.bf16.mxu0 %v12639
    %13128 = vmatpush1.bf16.msra.mxu0 %v12638
    %13129 = vmatprep.subr.bf16.mxu0 %v12643
    %13130 = vmatpush1.bf16.msra.mxu0 %v12642
    %13131 = vmatprep.subr.bf16.mxu0 %v12647
    %13132 = vmatpush1.bf16.msra.mxu0 %v12646
    %13133 = vmatprep.subr.bf16.mxu0 %v12651
    %13134 = vmatpush1.bf16.msra.mxu0 %v12650
    %13135 = vmatprep.subr.bf16.mxu0 %v12655
    %13136 = vmatpush1.bf16.msra.mxu0 %v12654
    %13137 = vmatprep.subr.bf16.mxu0 %v12659
    %13138 = vmatpush1.bf16.msra.mxu0 %v12658
    %13139 = vmatprep.subr.bf16.mxu0 %v12663
    %13140 = vmatpush1.bf16.msra.mxu0 %v12662
    %13141 = vmatprep.subr.bf16.mxu0 %v12667
    %13142 = vmatpush1.bf16.msra.mxu0 %v12666
    %13143 = vmatprep.subr.bf16.mxu0 %v12671
    %13144 = vmatpush1.bf16.msra.mxu0 %v12670
    %13145 = vmatprep.subr.bf16.mxu0 %v12675
    %13146 = vmatpush1.bf16.msra.mxu0 %v12674
    %13147 = vmatprep.subr.bf16.mxu0 %v12679
    %13148 = vmatpush1.bf16.msra.mxu0 %v12678
    %13149 = vmatprep.subr.bf16.mxu0 %v12683
    %13150 = vmatpush1.bf16.msra.mxu0 %v12682
    %13151 = vmatprep.subr.bf16.mxu0 %v12687
    %13152 = vmatpush1.bf16.msra.mxu0 %v12686
    %13153 = vmatprep.subr.bf16.mxu0 %v12691
    %13154 = vmatpush1.bf16.msra.mxu0 %v12690
    %13155 = vmatprep.subr.bf16.mxu0 %v12695
    %13156 = vmatpush1.bf16.msra.mxu0 %v12694
    %13157 = vmatprep.subr.bf16.mxu0 %v12699
    %13158 = vmatpush1.bf16.msra.mxu0 %v12698
    %13159 = vmatprep.mubr.bf16.mxu0 %v11523
    %13160 = vmatmul.mubr.bf16.gmra.mrb[0].mxu0 %v11522
    %v13161 = vpop.f32.mrb[0].mxu0
    %v13162 = vadd.f32 %v13121, %v13161
    %v13163 = vpop.f32.mrb[0].mxu0
    %v13164 = vadd.f32 %v13123, %v13163
    %v13165 = vpop.f32.mrb[0].mxu0
    %v13166 = vpop.f32.mrb[0].mxu0
    %13167 = vdwg.mxu0
    %13168 = vmatprep.subr.bf16.mxu0 %v12703
    %13169 = vmatpush1.bf16.msra.mxu0 %v12702
    %13170 = vmatprep.subr.bf16.mxu0 %v12707
    %13171 = vmatpush1.bf16.msra.mxu0 %v12706
    %13172 = vmatprep.subr.bf16.mxu0 %v12711
    %13173 = vmatpush1.bf16.msra.mxu0 %v12710
    %13174 = vmatprep.subr.bf16.mxu0 %v12715
    %13175 = vmatpush1.bf16.msra.mxu0 %v12714
    %13176 = vmatprep.subr.bf16.mxu0 %v12719
    %13177 = vmatpush1.bf16.msra.mxu0 %v12718
    %13178 = vmatprep.subr.bf16.mxu0 %v12723
    %13179 = vmatpush1.bf16.msra.mxu0 %v12722
    %13180 = vmatprep.subr.bf16.mxu0 %v12727
    %13181 = vmatpush1.bf16.msra.mxu0 %v12726
    %13182 = vmatprep.subr.bf16.mxu0 %v12731
    %13183 = vmatpush1.bf16.msra.mxu0 %v12730
    %13184 = vmatprep.subr.bf16.mxu0 %v12735
    %13185 = vmatpush1.bf16.msra.mxu0 %v12734
    %13186 = vmatprep.subr.bf16.mxu0 %v12739
    %13187 = vmatpush1.bf16.msra.mxu0 %v12738
    %13188 = vmatprep.subr.bf16.mxu0 %v12743
    %13189 = vmatpush1.bf16.msra.mxu0 %v12742
    %13190 = vmatprep.subr.bf16.mxu0 %v12747
    %13191 = vmatpush1.bf16.msra.mxu0 %v12746
    %13192 = vmatprep.subr.bf16.mxu0 %v12751
    %13193 = vmatpush1.bf16.msra.mxu0 %v12750
    %13194 = vmatprep.subr.bf16.mxu0 %v12755
    %13195 = vmatpush1.bf16.msra.mxu0 %v12754
    %13196 = vmatprep.subr.bf16.mxu0 %v12759
    %13197 = vmatpush1.bf16.msra.mxu0 %v12758
    %13198 = vmatprep.subr.bf16.mxu0 %v12763
    %13199 = vmatpush1.bf16.msra.mxu0 %v12762
    %13200 = vmatprep.mubr.bf16.mxu0 %v11525
    %13201 = vmatmul.mubr.bf16.gmra.mrb[0].mxu0 %v11524
    %v13202 = vpop.f32.mrb[0].mxu0
    %v13203 = vadd.f32 %v13162, %v13202
    %v13204 = vpop.f32.mrb[0].mxu0
    %v13205 = vadd.f32 %v13164, %v13204
    %v13206 = vpop.f32.mrb[0].mxu0
    %v13207 = vpop.f32.mrb[0].mxu0
    %13208 = vdwg.mxu0
    %13209 = vmatprep.subr.bf16.mxu0 %v12767
    %13210 = vmatpush1.bf16.msra.mxu0 %v12766
    %13211 = vmatprep.subr.bf16.mxu0 %v12771
    %13212 = vmatpush1.bf16.msra.mxu0 %v12770
    %13213 = vmatprep.subr.bf16.mxu0 %v12775
    %13214 = vmatpush1.bf16.msra.mxu0 %v12774
    %13215 = vmatprep.subr.bf16.mxu0 %v12779
    %13216 = vmatpush1.bf16.msra.mxu0 %v12778
    %13217 = vmatprep.subr.bf16.mxu0 %v12783
    %13218 = vmatpush1.bf16.msra.mxu0 %v12782
    %13219 = vmatprep.subr.bf16.mxu0 %v12787
    %13220 = vmatpush1.bf16.msra.mxu0 %v12786
    %13221 = vmatprep.subr.bf16.mxu0 %v12791
    %13222 = vmatpush1.bf16.msra.mxu0 %v12790
    %13223 = vmatprep.subr.bf16.mxu0 %v12795
    %13224 = vmatpush1.bf16.msra.mxu0 %v12794
    %13225 = vmatprep.subr.bf16.mxu0 %v12799
    %13226 = vmatpush1.bf16.msra.mxu0 %v12798
    %13227 = vmatprep.subr.bf16.mxu0 %v12803
    %13228 = vmatpush1.bf16.msra.mxu0 %v12802
    %13229 = vmatprep.subr.bf16.mxu0 %v12807
    %13230 = vmatpush1.bf16.msra.mxu0 %v12806
    %13231 = vmatprep.subr.bf16.mxu0 %v12811
    %13232 = vmatpush1.bf16.msra.mxu0 %v12810
    %13233 = vmatprep.subr.bf16.mxu0 %v12815
    %13234 = vmatpush1.bf16.msra.mxu0 %v12814
    %13235 = vmatprep.subr.bf16.mxu0 %v12819
    %13236 = vmatpush1.bf16.msra.mxu0 %v12818
    %13237 = vmatprep.subr.bf16.mxu0 %v12823
    %13238 = vmatpush1.bf16.msra.mxu0 %v12822
    %13239 = vmatprep.subr.bf16.mxu0 %v12827
    %13240 = vmatpush1.bf16.msra.mxu0 %v12826
    %13241 = vmatprep.mubr.bf16.mxu0 %v11527
    %13242 = vmatmul.mubr.bf16.gmra.mrb[0].mxu0 %v11526
    %v13243 = vpop.f32.mrb[0].mxu0
    %v13244 = vadd.f32 %v13203, %v13243
    %v13245 = vpop.f32.mrb[0].mxu0
    %v13246 = vadd.f32 %v13205, %v13245
    %v13247 = vpop.f32.mrb[0].mxu0
    %v13248 = vpop.f32.mrb[0].mxu0
    %13249 = vdwg.mxu0
    %13250 = vmatprep.subr.bf16.mxu0 %v12577
    %13251 = vmatpush1.bf16.msra.mxu0 %v12576
    %13252 = vmatprep.subr.bf16.mxu0 %v12581
    %13253 = vmatpush1.bf16.msra.mxu0 %v12580
    %13254 = vmatprep.subr.bf16.mxu0 %v12585
    %13255 = vmatpush1.bf16.msra.mxu0 %v12584
    %13256 = vmatprep.subr.bf16.mxu0 %v12589
    %13257 = vmatpush1.bf16.msra.mxu0 %v12588
    %13258 = vmatprep.subr.bf16.mxu0 %v12593
    %13259 = vmatpush1.bf16.msra.mxu0 %v12592
    %13260 = vmatprep.subr.bf16.mxu0 %v12597
    %13261 = vmatpush1.bf16.msra.mxu0 %v12596
    %13262 = vmatprep.subr.bf16.mxu0 %v12601
    %13263 = vmatpush1.bf16.msra.mxu0 %v12600
    %13264 = vmatprep.subr.bf16.mxu0 %v12605
    %13265 = vmatpush1.bf16.msra.mxu0 %v12604
    %13266 = vmatprep.subr.bf16.mxu0 %v12609
    %13267 = vmatpush1.bf16.msra.mxu0 %v12608
    %13268 = vmatprep.subr.bf16.mxu0 %v12613
    %13269 = vmatpush1.bf16.msra.mxu0 %v12612
    %13270 = vmatprep.subr.bf16.mxu0 %v12617
    %13271 = vmatpush1.bf16.msra.mxu0 %v12616
    %13272 = vmatprep.subr.bf16.mxu0 %v12621
    %13273 = vmatpush1.bf16.msra.mxu0 %v12620
    %13274 = vmatprep.subr.bf16.mxu0 %v12625
    %13275 = vmatpush1.bf16.msra.mxu0 %v12624
    %13276 = vmatprep.subr.bf16.mxu0 %v12629
    %13277 = vmatpush1.bf16.msra.mxu0 %v12628
    %13278 = vmatprep.subr.bf16.mxu0 %v12633
    %13279 = vmatpush1.bf16.msra.mxu0 %v12632
    %13280 = vmatprep.subr.bf16.mxu0 %v12637
    %13281 = vmatpush1.bf16.msra.mxu0 %v12636
    %13282 = vmatprep.mubr.bf16.mxu0 %v11521
    %13283 = vmatmul.mubr.bf16.gmra.mrb[0].mxu0 %v11520
    %v13284 = vpop.f32.mrb[0].mxu0
    %v13285 = vadd.f32 %v11797, %v13284
    %v13286 = vpop.f32.mrb[0].mxu0
    %v13287 = vadd.f32 %v11801, %v13286
    %v13288 = vpop.f32.mrb[0].mxu0
    %v13289 = vpop.f32.mrb[0].mxu0
    %13290 = vdwg.mxu0
    %13291 = vmatprep.subr.bf16.mxu0 %v12641
    %13292 = vmatpush1.bf16.msra.mxu0 %v12640
    %13293 = vmatprep.subr.bf16.mxu0 %v12645
    %13294 = vmatpush1.bf16.msra.mxu0 %v12644
    %13295 = vmatprep.subr.bf16.mxu0 %v12649
    %13296 = vmatpush1.bf16.msra.mxu0 %v12648
    %13297 = vmatprep.subr.bf16.mxu0 %v12653
    %13298 = vmatpush1.bf16.msra.mxu0 %v12652
    %13299 = vmatprep.subr.bf16.mxu0 %v12657
    %13300 = vmatpush1.bf16.msra.mxu0 %v12656
    %13301 = vmatprep.subr.bf16.mxu0 %v12661
    %13302 = vmatpush1.bf16.msra.mxu0 %v12660
    %13303 = vmatprep.subr.bf16.mxu0 %v12665
    %13304 = vmatpush1.bf16.msra.mxu0 %v12664
    %13305 = vmatprep.subr.bf16.mxu0 %v12669
    %13306 = vmatpush1.bf16.msra.mxu0 %v12668
    %13307 = vmatprep.subr.bf16.mxu0 %v12673
    %13308 = vmatpush1.bf16.msra.mxu0 %v12672
    %13309 = vmatprep.subr.bf16.mxu0 %v12677
    %13310 = vmatpush1.bf16.msra.mxu0 %v12676
    %13311 = vmatprep.subr.bf16.mxu0 %v12681
    %13312 = vmatpush1.bf16.msra.mxu0 %v12680
    %13313 = vmatprep.subr.bf16.mxu0 %v12685
    %13314 = vmatpush1.bf16.msra.mxu0 %v12684
    %13315 = vmatprep.subr.bf16.mxu0 %v12689
    %13316 = vmatpush1.bf16.msra.mxu0 %v12688
    %13317 = vmatprep.subr.bf16.mxu0 %v12693
    %13318 = vmatpush1.bf16.msra.mxu0 %v12692
    %13319 = vmatprep.subr.bf16.mxu0 %v12697
    %13320 = vmatpush1.bf16.msra.mxu0 %v12696
    %13321 = vmatprep.subr.bf16.mxu0 %v12701
    %13322 = vmatpush1.bf16.msra.mxu0 %v12700
    %13323 = vmatprep.mubr.bf16.mxu0 %v11523
    %13324 = vmatmul.mubr.bf16.gmra.mrb[0].mxu0 %v11522
    %v13325 = vpop.f32.mrb[0].mxu0
    %v13326 = vadd.f32 %v13285, %v13325
    %v13327 = vpop.f32.mrb[0].mxu0
    %v13328 = vadd.f32 %v13287, %v13327
    %v13329 = vpop.f32.mrb[0].mxu0
    %v13330 = vpop.f32.mrb[0].mxu0
    %13331 = vdwg.mxu0
    %13332 = vmatprep.subr.bf16.mxu0 %v12705
    %13333 = vmatpush1.bf16.msra.mxu0 %v12704
    %13334 = vmatprep.subr.bf16.mxu0 %v12709
    %13335 = vmatpush1.bf16.msra.mxu0 %v12708
    %13336 = vmatprep.subr.bf16.mxu0 %v12713
    %13337 = vmatpush1.bf16.msra.mxu0 %v12712
    %13338 = vmatprep.subr.bf16.mxu0 %v12717
    %13339 = vmatpush1.bf16.msra.mxu0 %v12716
    %13340 = vmatprep.subr.bf16.mxu0 %v12721
    %13341 = vmatpush1.bf16.msra.mxu0 %v12720
    %13342 = vmatprep.subr.bf16.mxu0 %v12725
    %13343 = vmatpush1.bf16.msra.mxu0 %v12724
    %13344 = vmatprep.subr.bf16.mxu0 %v12729
    %13345 = vmatpush1.bf16.msra.mxu0 %v12728
    %13346 = vmatprep.subr.bf16.mxu0 %v12733
    %13347 = vmatpush1.bf16.msra.mxu0 %v12732
    %13348 = vmatprep.subr.bf16.mxu0 %v12737
    %13349 = vmatpush1.bf16.msra.mxu0 %v12736
    %13350 = vmatprep.subr.bf16.mxu0 %v12741
    %13351 = vmatpush1.bf16.msra.mxu0 %v12740
    %13352 = vmatprep.subr.bf16.mxu0 %v12745
    %13353 = vmatpush1.bf16.msra.mxu0 %v12744
    %13354 = vmatprep.subr.bf16.mxu0 %v12749
    %13355 = vmatpush1.bf16.msra.mxu0 %v12748
    %13356 = vmatprep.subr.bf16.mxu0 %v12753
    %13357 = vmatpush1.bf16.msra.mxu0 %v12752
    %13358 = vmatprep.subr.bf16.mxu0 %v12757
    %13359 = vmatpush1.bf16.msra.mxu0 %v12756
    %13360 = vmatprep.subr.bf16.mxu0 %v12761
    %13361 = vmatpush1.bf16.msra.mxu0 %v12760
    %13362 = vmatprep.subr.bf16.mxu0 %v12765
    %13363 = vmatpush1.bf16.msra.mxu0 %v12764
    %13364 = vmatprep.mubr.bf16.mxu0 %v11525
    %13365 = vmatmul.mubr.bf16.gmra.mrb[0].mxu0 %v11524
    %v13366 = vpop.f32.mrb[0].mxu0
    %v13367 = vadd.f32 %v13326, %v13366
    %v13368 = vpop.f32.mrb[0].mxu0
    %v13369 = vadd.f32 %v13328, %v13368
    %v13370 = vpop.f32.mrb[0].mxu0
    %v13371 = vpop.f32.mrb[0].mxu0
    %13372 = vdwg.mxu0
    %13373 = vmatprep.subr.bf16.mxu0 %v12769
    %13374 = vmatpush1.bf16.msra.mxu0 %v12768
    %13375 = vmatprep.subr.bf16.mxu0 %v12773
    %13376 = vmatpush1.bf16.msra.mxu0 %v12772
    %13377 = vmatprep.subr.bf16.mxu0 %v12777
    %13378 = vmatpush1.bf16.msra.mxu0 %v12776
    %13379 = vmatprep.subr.bf16.mxu0 %v12781
    %13380 = vmatpush1.bf16.msra.mxu0 %v12780
    %13381 = vmatprep.subr.bf16.mxu0 %v12785
    %13382 = vmatpush1.bf16.msra.mxu0 %v12784
    %13383 = vmatprep.subr.bf16.mxu0 %v12789
    %13384 = vmatpush1.bf16.msra.mxu0 %v12788
    %13385 = vmatprep.subr.bf16.mxu0 %v12793
    %13386 = vmatpush1.bf16.msra.mxu0 %v12792
    %13387 = vmatprep.subr.bf16.mxu0 %v12797
    %13388 = vmatpush1.bf16.msra.mxu0 %v12796
    %13389 = vmatprep.subr.bf16.mxu0 %v12801
    %13390 = vmatpush1.bf16.msra.mxu0 %v12800
    %13391 = vmatprep.subr.bf16.mxu0 %v12805
    %13392 = vmatpush1.bf16.msra.mxu0 %v12804
    %13393 = vmatprep.subr.bf16.mxu0 %v12809
    %13394 = vmatpush1.bf16.msra.mxu0 %v12808
    %13395 = vmatprep.subr.bf16.mxu0 %v12813
    %13396 = vmatpush1.bf16.msra.mxu0 %v12812
    %13397 = vmatprep.subr.bf16.mxu0 %v12817
    %13398 = vmatpush1.bf16.msra.mxu0 %v12816
    %13399 = vmatprep.subr.bf16.mxu0 %v12821
    %13400 = vmatpush1.bf16.msra.mxu0 %v12820
    %13401 = vmatprep.subr.bf16.mxu0 %v12825
    %13402 = vmatpush1.bf16.msra.mxu0 %v12824
    %13403 = vmatprep.subr.bf16.mxu0 %v12829
    %13404 = vmatpush1.bf16.msra.mxu0 %v12828
    %13405 = vmatprep.mubr.bf16.mxu0 %v11527
    %13406 = vmatmul.mubr.bf16.gmra.mrb[0].mxu0 %v11526
    %v13407 = vpop.f32.mrb[0].mxu0
    %v13408 = vadd.f32 %v13367, %v13407
    %v13409 = vpop.f32.mrb[0].mxu0
    %v13410 = vadd.f32 %v13369, %v13409
    %v13411 = vpop.f32.mrb[0].mxu0
    %v13412 = vpop.f32.mrb[0].mxu0
    %13413 = vdwg.mxu0
    %v13414 = vmax.f32 %v13244, 0.0
    %v13415 = vmax.f32 %v13246, 0.0
    %v13416 = vmax.f32 %v13408, 0.0
    %v13417 = vmax.f32 %v13410, 0.0
    %v13418 = vld [vmem:[#allocation13] sm:$0xf]
    %v13419 = vunpack.c.l.bf16 %v13418
    %v13421 = vlaneseq
    %v13422 = vshrl.u32 %v13421, 7
    %v13423 = vsub.s32 0, %v13422
    %v13424 = vrot.slane %v13419, %v13423
    %v13425 = vlaneseq
    %v13426 = vshrl.u32 %v13425, 7
    %v13427 = vsub.s32 2, %v13426
    %v13428 = vrot.slane %v13419, %v13427
    %v13429 = vlaneseq
    %v13430 = vshrl.u32 %v13429, 7
    %v13431 = vsub.s32 4, %v13430
    %v13432 = vrot.slane %v13419, %v13431
    %v13433 = vlaneseq
    %v13434 = vshrl.u32 %v13433, 7
    %v13435 = vsub.s32 6, %v13434
    %v13436 = vrot.slane %v13419, %v13435
    %v13441 = vlaneseq
    %v13442 = vshrl.u32 %v13441, 7
    %v13443 = vsub.s32 0, %v13442
    %v13444 = vrot.slane %v13424, %v13443
    %v13445 = vlaneseq
    %v13446 = vshrl.u32 %v13445, 7
    %v13447 = vsub.s32 0, %v13446
    %v13448 = vrot.slane %v13428, %v13447
    %v13449 = vlaneseq
    %v13450 = vshrl.u32 %v13449, 7
    %v13451 = vsub.s32 0, %v13450
    %v13452 = vrot.slane %v13432, %v13451
    %v13453 = vlaneseq
    %v13454 = vshrl.u32 %v13453, 7
    %v13455 = vsub.s32 0, %v13454
    %v13456 = vrot.slane %v13436, %v13455
    %v13457 = vmul.f32 %v13414, %v13444
    %v13458 = vmul.f32 %v13415, %v13448
    %v13459 = vmul.f32 %v13416, %v13452
    %v13460 = vmul.f32 %v13417, %v13456
    %vm13461 = vcmask 1041408
    %v13462 = vsel %vm13461, %v13457, 0.0
    %v13463 = vsel %vm13461, %v13458, 0.0
    %v13464 = vadd.f32 %v13462, %v13463
    %v13465 = vsel %vm13461, %v13459, 0.0
    %v13466 = vadd.f32 %v13464, %v13465
    %v13467 = vsel %vm13461, %v13460, 0.0
    %v13468 = vadd.f32 %v13466, %v13467
    %13469 = vadd.xlane.f32.xlu0 %v13468
    %v13470 = vpop.xlane.xlu0 %13469
    %s13471 = sld [smem:[#allocation2]]
    %v13472 = vstv %s13471
    %v13473 = vadd.f32 %v13470, %v13472
    %vm13474 = vcmask 1024
    %13475 = vst.msk [vmem:[%s9] sm:$0x3] %vm13474, %v13473
    // Predicated region
    $region66: #{attnmodel1_forward.1} parent=1 // pred_check
      _
    $region67: #{attnmodel1_forward.1} parent=1 // pred_check_branch
      %13477 = sbr.rel (0) target = $region69
    $region68: #{attnmodel1_forward.1} parent=1 // pred_region
      _
    $region69: #{attnmodel1_forward.1} parent=1 // pred_fallthru
      _
    // Predicated region
    $region70: #{attnmodel1_forward.1} parent=1 // pred_check
      _
    $region71: #{attnmodel1_forward.1} parent=1 // pred_check_branch
      %13479 = sbr.rel (0) target = $region73
    $region72: #{attnmodel1_forward.1} parent=1 // pred_region
      _
    $region73: #{attnmodel1_forward.1} parent=1 // pred_fallthru
      _
    %13480 = vsyncpa [#allocation4], 1
    %13481 = vsyncpa [#allocation6], 1
    %13482 = vsyncpa [#allocation9], 1
    %13483 = vsyncpa [#allocation12], 1

</llo_original>
